<compile_context>
chip_gen: v5e
topology: v5e:2x2
jax: 0.10.0
libtpu: 0.0.40
codegen_flags: <defaults>
</compile_context>

<pallas_src>
import functools
import math

import jax
import jax.numpy as jnp
from jax.experimental import pallas as pl
from jax.experimental.pallas import tpu as pltpu

# ---- model hyper-parameters (defaults of the PyTorch module) ----
IMG, PATCH, CIN, NCLS = 28, 4, 1, 10
DMODEL, DEPTH, NHEADS, MLP_RATIO = 64, 3, 4, 4.0
NPATCH = (IMG // PATCH) ** 2           # 49
PATCH_DIM = CIN * PATCH * PATCH        # 16
SEQ = NPATCH + 1                       # 50  (cls token + patches)
SEQ_PAD = 56                           # padded to a sublane multiple (8 | 56)
DMLP = int(DMODEL * MLP_RATIO)         # 256
NCLS_PAD = 128                         # lane-dense logits (sliced to NCLS in wrapper)
LN_EPS = 1e-5


def _layernorm(x, g, b):
    mu = jnp.mean(x, axis=-1, keepdims=True)
    var = jnp.mean((x - mu) ** 2, axis=-1, keepdims=True)
    return (x - mu) * jax.lax.rsqrt(var + LN_EPS) * g + b


def _erf(x):
    # Abramowitz & Stegun 7.1.26, max abs error ~1.5e-7 -> keeps nn.GELU's exact erf
    # semantics while only using exp / div / where (guaranteed Mosaic lowerings).
    a1, a2, a3, a4, a5 = 0.254829592, -0.284496736, 1.421413741, -1.453152027, 1.061405429
    p = 0.3275911
    ax = jnp.abs(x)
    t = 1.0 / (1.0 + p * ax)
    poly = ((((a5 * t + a4) * t + a3) * t + a2) * t + a1) * t
    y = 1.0 - poly * jnp.exp(-ax * ax)
    return jnp.where(x >= 0, y, -y)


def _gelu_erf(x):
    return 0.5 * x * (1.0 + _erf(x * (1.0 / math.sqrt(2.0))))


# ------------------------- fused forward kernel -------------------------
def _vit_fused_kernel(patches_ref, pw_ref, embed_ref,
                      ln1g_ref, ln1b_ref, wqkv_ref, bqkv_ref, wo_ref, bo_ref,
                      ln2g_ref, ln2b_ref, w1_ref, b1_ref, w2_ref, b2_ref,
                      lng_ref, lnb_ref, wh_ref, bh_ref,
                      o_ref, ctx_scr, *, tb, num_heads, depth):
    D = DMODEL
    hd = D // num_heads
    S = SEQ_PAD
    M = tb * S
    bf16 = jnp.bfloat16

    # ---- patch embedding; cls token / pos embed / patch bias pre-folded into embed ----
    proj = jnp.dot(patches_ref[...], pw_ref[...], preferred_element_type=jnp.float32)
    x = (proj.reshape(tb, S, D) + embed_ref[...][None]).reshape(M, D)   # f32, pad rows = 0
    # TODO(synk): all nn.Dropout layers are identity here (eval-mode semantics).

    # Additive key mask for padded positions (SEQ..SEQ_PAD-1), built once and hoisted.
    kidx = jax.lax.broadcasted_iota(jnp.int32, (1, 1, S), 2)
    kmask = jnp.where(kidx < SEQ, jnp.float32(0.0), jnp.float32(-1e30))

    # ---- transformer blocks (static unroll, weights indexed per depth) ----
    for d in range(depth):
        # --- multi-head self-attention (pre-norm); fused QKV matmul ---
        h = _layernorm(x, ln1g_ref[d], ln1b_ref[d]).astype(bf16)
        qkv = jnp.dot(h, wqkv_ref[d], preferred_element_type=jnp.float32) + bqkv_ref[d]
        q = qkv[:, 0:D].reshape(tb, S, D).astype(bf16)        # 1/sqrt(hd) folded into wq
        k = qkv[:, D:2 * D].reshape(tb, S, D).astype(bf16)
        v = qkv[:, 2 * D:3 * D].reshape(tb, S, D).astype(bf16)
        for hix in range(num_heads):
            lo = hix * hd
            s = jnp.einsum("bqd,bkd->bqk", q[:, :, lo:lo + hd], k[:, :, lo:lo + hd],
                           preferred_element_type=jnp.float32)       # (tb, S, S) f32
            s = s + kmask                                            # mask pad keys
            s = s - jnp.max(s, axis=-1, keepdims=True)
            e = jnp.exp(s)
            pr = e * pl.reciprocal(jnp.sum(e, axis=-1, keepdims=True), approx=True)
            ctx_scr[:, :, lo:lo + hd] = jnp.einsum(
                "bqk,bkd->bqd", pr.astype(bf16), v[:, :, lo:lo + hd],
                preferred_element_type=jnp.float32)
        attn = jnp.dot(ctx_scr[...].reshape(M, D).astype(bf16), wo_ref[d],
                       preferred_element_type=jnp.float32) + bo_ref[d]
        x = x + attn

        # --- MLP (pre-norm); exact erf-GELU kept in f32 (portable across v5e/v6e/v7x) ---
        h2 = _layernorm(x, ln2g_ref[d], ln2b_ref[d]).astype(bf16)
        m = jnp.dot(h2, w1_ref[d], preferred_element_type=jnp.float32) + b1_ref[d]
        m = _gelu_erf(m)
        m = jnp.dot(m.astype(bf16), w2_ref[d],
                    preferred_element_type=jnp.float32) + b2_ref[d]
        x = x + m

    # ---- final LayerNorm on cls rows only (per-token LN commutes with slicing) + head ----
    cls_fin = x.reshape(tb, S, D)[:, 0, :]                            # (tb, D)
    hcls = _layernorm(cls_fin, lng_ref[...], lnb_ref[...]).astype(bf16)
    o_ref[0] = jnp.dot(hcls, wh_ref[...],
                       preferred_element_type=jnp.float32) + bh_ref[...]


# ------------------------------ wrapper ------------------------------
def _full_spec(shape):
    zeros = (0,) * len(shape)
    return pl.BlockSpec(shape, lambda i, _z=zeros: _z)


def _pick_batch_tile(batch, cap=64):
    divs = [t for t in range(1, min(batch, cap) + 1) if batch % t == 0]
    even_steps = [t for t in divs if (batch // t) % 2 == 0]
    return max(even_steps) if even_steps else max(divs)


def _extract_patches(img):
    # nn.Unfold(kernel_size=PATCH, stride=PATCH) -> (B, C*P*P, nh*nw), then the PyTorch
    # module does a RAW reshape to (B, NPATCH, PATCH_DIM) (not a transpose).
    B, C, H, W = img.shape
    nh, nw = H // PATCH, W // PATCH
    unf = img.reshape(B, C, nh, PATCH, nw, PATCH).transpose(0, 1, 3, 5, 2, 4)
    unf = unf.reshape(B, C * PATCH * PATCH, nh * nw)
    return unf.reshape(B, NPATCH, PATCH_DIM)


def vit_forward(img, params, batch_tile=None):
    B = img.shape[0]
    patches = _extract_patches(img)                                   # (B, 49, 16) f32

    # Sequence-padded, bf16, flat patch slab: row 0 = cls slot (zeros), rows 1..49 =
    # patches, rows 50..55 = zeros.  One aligned matmul in-kernel covers all rows.
    patches_pad = jnp.zeros((B, SEQ_PAD, PATCH_DIM), jnp.bfloat16)
    patches_pad = patches_pad.at[:, 1:SEQ, :].set(patches.astype(jnp.bfloat16))
    patches_flat = patches_pad.reshape(B * SEQ_PAD, PATCH_DIM)

    # Fold cls token + positional embedding + patch-linear bias into one additive table.
    embed = jnp.zeros((SEQ_PAD, DMODEL), jnp.float32)
    embed = embed.at[0, :].set((params["cls"] + params["pos"][0:1, :])[0])
    embed = embed.at[1:SEQ, :].set(params["pos"][1:SEQ, :] + params["patch_b"])

    tb = batch_tile if batch_tile is not None else _pick_batch_tile(B)
    assert B % tb == 0
    nsteps = B // tb

    kern = functools.partial(_vit_fused_kernel, tb=tb, num_heads=NHEADS, depth=DEPTH)
    args = (patches_flat,
            params["patch_w_t"], embed,
            params["ln1_g"], params["ln1_b"], params["wqkv_t"], params["bqkv"],
            params["wo_t"], params["bo"], params["ln2_g"], params["ln2_b"],
            params["w1_t"], params["b1"], params["w2_t"], params["b2"],
            params["ln_g"], params["ln_b"], params["head_w_t"], params["head_b"])

    in_specs = [pl.BlockSpec((tb * SEQ_PAD, PATCH_DIM), lambda i: (i, 0))]
    in_specs += [_full_spec(a.shape) for a in args[1:]]               # weights stay resident

    out = pl.pallas_call(
        kern,
        out_shape=jax.ShapeDtypeStruct((nsteps, tb, NCLS_PAD), jnp.float32),
        grid=(nsteps,),
        in_specs=in_specs,
        out_specs=pl.BlockSpec((1, tb, NCLS_PAD), lambda i: (i, 0, 0)),
        scratch_shapes=[pltpu.VMEM((tb, SEQ_PAD, DMODEL), jnp.float32)],
        compiler_params=pltpu.CompilerParams(
            dimension_semantics=("parallel",),
            vmem_limit_bytes=48 * 1024 * 1024),
    )(*args)
    return out.reshape(B, NCLS_PAD)[:, :NCLS]


# ----------------------------- parameter init -----------------------------
def _xavier(key, fan_out, fan_in):
    bound = math.sqrt(6.0 / (fan_in + fan_out))
    return jax.random.uniform(key, (fan_out, fan_in), jnp.float32, -bound, bound)


def init_params(key):
    keys = iter(jax.random.split(key, 32))
    bf16 = jnp.bfloat16
    hd = DMODEL // NHEADS
    scale = 1.0 / math.sqrt(hd)
    p = {
        "patch_w_t": _xavier(next(keys), DMODEL, PATCH_DIM).T.astype(bf16),  # Linear(16,64)
        "patch_b": jnp.zeros((1, DMODEL), jnp.float32),
        "cls": 0.02 * jax.random.normal(next(keys), (1, DMODEL), jnp.float32),
        "pos": 0.02 * jax.random.normal(next(keys), (SEQ, DMODEL), jnp.float32),
        "ln_g": jnp.ones((1, DMODEL), jnp.float32),
        "ln_b": jnp.zeros((1, DMODEL), jnp.float32),
    }
    head_w = _xavier(next(keys), NCLS, DMODEL)                               # Linear(64,10)
    p["head_w_t"] = (jnp.zeros((DMODEL, NCLS_PAD), jnp.float32)
                     .at[:, :NCLS].set(head_w.T)).astype(bf16)               # lane-padded
    p["head_b"] = jnp.zeros((1, NCLS_PAD), jnp.float32)

    wqkv, wo, w1, w2 = [], [], [], []
    for _ in range(DEPTH):
        wt = _xavier(next(keys), 3 * DMODEL, DMODEL).T                       # (D, 3D) [q|k|v]
        wt = wt.at[:, 0:DMODEL].multiply(scale)                              # fold 1/sqrt(hd)
        wqkv.append(wt)
        wo.append(_xavier(next(keys), DMODEL, DMODEL).T)                     # out_proj
        w1.append(_xavier(next(keys), DMLP, DMODEL).T)                       # Linear(64,256)
        w2.append(_xavier(next(keys), DMODEL, DMLP).T)                       # Linear(256,64)
    p.update({
        "ln1_g": jnp.ones((DEPTH, 1, DMODEL), jnp.float32),
        "ln1_b": jnp.zeros((DEPTH, 1, DMODEL), jnp.float32),
        "wqkv_t": jnp.stack(wqkv).astype(bf16),
        "bqkv": jnp.zeros((DEPTH, 1, 3 * DMODEL), jnp.float32),              # q-part pre-scaled
        "wo_t": jnp.stack(wo).astype(bf16),
        "bo": jnp.zeros((DEPTH, 1, DMODEL), jnp.float32),
        "ln2_g": jnp.ones((DEPTH, 1, DMODEL), jnp.float32),
        "ln2_b": jnp.zeros((DEPTH, 1, DMODEL), jnp.float32),
        "w1_t": jnp.stack(w1).astype(bf16),
        "b1": jnp.zeros((DEPTH, 1, DMLP), jnp.float32),
        "w2_t": jnp.stack(w2).astype(bf16),
        "b2": jnp.zeros((DEPTH, 1, DMODEL), jnp.float32),
    })
    return p


# -------------------- pure-JAX reference (same bf16 math, unpadded) --------------------
def vit_forward_ref(img, params):
    bf16 = jnp.bfloat16
    B = img.shape[0]
    patches = _extract_patches(img)
    proj = jnp.einsum("bnp,pd->bnd", patches.astype(bf16), params["patch_w_t"],
                      preferred_element_type=jnp.float32) + params["patch_b"]
    cls = jnp.broadcast_to(params["cls"][None], (B, 1, DMODEL))
    x = jnp.concatenate([cls, proj], axis=1) + params["pos"][None]

    hd = DMODEL // NHEADS
    for d in range(DEPTH):
        h = _layernorm(x, params["ln1_g"][d], params["ln1_b"][d]).astype(bf16)
        qkv = jnp.einsum("bsd,de->bse", h, params["wqkv_t"][d],
                         preferred_element_type=jnp.float32) + params["bqkv"][d]
        q = qkv[..., 0:DMODEL].reshape(B, SEQ, NHEADS, hd).astype(bf16)
        k = qkv[..., DMODEL:2 * DMODEL].reshape(B, SEQ, NHEADS, hd).astype(bf16)
        v = qkv[..., 2 * DMODEL:].reshape(B, SEQ, NHEADS, hd).astype(bf16)
        s = jnp.einsum("bqhd,bkhd->bhqk", q, k, preferred_element_type=jnp.float32)
        pr = jax.nn.softmax(s, axis=-1)
        ctx = jnp.einsum("bhqk,bkhd->bqhd", pr.astype(bf16), v,
                         preferred_element_type=jnp.float32).reshape(B, SEQ, DMODEL)
        attn = jnp.einsum("bsd,df->bsf", ctx.astype(bf16), params["wo_t"][d],
                          preferred_element_type=jnp.float32) + params["bo"][d]
        x = x + attn
        h2 = _layernorm(x, params["ln2_g"][d], params["ln2_b"][d]).astype(bf16)
        m = jnp.einsum("bsd,df->bsf", h2, params["w1_t"][d],
                       preferred_element_type=jnp.float32) + params["b1"][d]
        m = jax.nn.gelu(m, approximate=False)
        m = jnp.einsum("bsd,df->bsf", m.astype(bf16), params["w2_t"][d],
                       preferred_element_type=jnp.float32) + params["b2"][d]
        x = x + m
    cls_fin = _layernorm(x[:, 0, :], params["ln_g"], params["ln_b"]).astype(bf16)
    return jnp.dot(cls_fin, params["head_w_t"][:, :NCLS],
                   preferred_element_type=jnp.float32) + params["head_b"][:, :NCLS]


if __name__ == "__main__":
    key = jax.random.PRNGKey(0)
    pkey, xkey = jax.random.split(key)
    params = init_params(pkey)
    img = jax.random.normal(xkey, (2, CIN, IMG, IMG), jnp.float32)   # NCHW like PyTorch
    logits = jax.block_until_ready(jax.jit(vit_forward)(img, params))
    assert logits.shape == (2, NCLS) and bool(jnp.all(jnp.isfinite(logits)))
    ref = jax.block_until_ready(jax.jit(vit_forward_ref)(img, params))
    err = float(jnp.max(jnp.abs(logits - ref)))
    assert err < 5e-2, f"mismatch vs reference: {err}"
    print("KERNEL_OK")
</pallas_src>

<mosaic_0001>
module attributes {stable_mosaic.version = 11 : i64} {
  func.func @_vit_fused_kernel(%arg0: i32, %arg1: memref<56x16xbf16, #tpu.memory_space<vmem>>, %arg2: memref<16x64xbf16, #tpu.memory_space<vmem>>, %arg3: memref<56x64xf32, #tpu.memory_space<vmem>>, %arg4: memref<3x1x64xf32, #tpu.memory_space<vmem>>, %arg5: memref<3x1x64xf32, #tpu.memory_space<vmem>>, %arg6: memref<3x64x192xbf16, #tpu.memory_space<vmem>>, %arg7: memref<3x1x192xf32, #tpu.memory_space<vmem>>, %arg8: memref<3x64x64xbf16, #tpu.memory_space<vmem>>, %arg9: memref<3x1x64xf32, #tpu.memory_space<vmem>>, %arg10: memref<3x1x64xf32, #tpu.memory_space<vmem>>, %arg11: memref<3x1x64xf32, #tpu.memory_space<vmem>>, %arg12: memref<3x64x256xbf16, #tpu.memory_space<vmem>>, %arg13: memref<3x1x256xf32, #tpu.memory_space<vmem>>, %arg14: memref<3x256x64xbf16, #tpu.memory_space<vmem>>, %arg15: memref<3x1x64xf32, #tpu.memory_space<vmem>>, %arg16: memref<1x64xf32, #tpu.memory_space<vmem>>, %arg17: memref<1x64xf32, #tpu.memory_space<vmem>>, %arg18: memref<64x128xbf16, #tpu.memory_space<vmem>>, %arg19: memref<1x128xf32, #tpu.memory_space<vmem>>, %arg20: memref<1x1x128xf32, #tpu.memory_space<vmem>>, %arg21: memref<1x56x64xf32, #tpu.memory_space<vmem>>) attributes {dimension_semantics = [#tpu.dimension_semantics<parallel>], iteration_bounds = array<i64: 2>, scalar_prefetch = 0 : i64, scratch_operands = 1 : i64, tpu.core_type = #tpu.core_type<tc>, window_params = [{transform_indices = @transform_0, window_bounds = array<i64: 56, 16>}, {pipeline_mode = #tpu.pipeline_mode<synchronous>, transform_indices = @transform_1, window_bounds = array<i64: 16, 64>}, {pipeline_mode = #tpu.pipeline_mode<synchronous>, transform_indices = @transform_2, window_bounds = array<i64: 56, 64>}, {pipeline_mode = #tpu.pipeline_mode<synchronous>, transform_indices = @transform_3, window_bounds = array<i64: 3, 1, 64>}, {pipeline_mode = #tpu.pipeline_mode<synchronous>, transform_indices = @transform_4, window_bounds = array<i64: 3, 1, 64>}, {pipeline_mode = #tpu.pipeline_mode<synchronous>, transform_indices = @transform_5, window_bounds = array<i64: 3, 64, 192>}, {pipeline_mode = #tpu.pipeline_mode<synchronous>, transform_indices = @transform_6, window_bounds = array<i64: 3, 1, 192>}, {pipeline_mode = #tpu.pipeline_mode<synchronous>, transform_indices = @transform_7, window_bounds = array<i64: 3, 64, 64>}, {pipeline_mode = #tpu.pipeline_mode<synchronous>, transform_indices = @transform_8, window_bounds = array<i64: 3, 1, 64>}, {pipeline_mode = #tpu.pipeline_mode<synchronous>, transform_indices = @transform_9, window_bounds = array<i64: 3, 1, 64>}, {pipeline_mode = #tpu.pipeline_mode<synchronous>, transform_indices = @transform_10, window_bounds = array<i64: 3, 1, 64>}, {pipeline_mode = #tpu.pipeline_mode<synchronous>, transform_indices = @transform_11, window_bounds = array<i64: 3, 64, 256>}, {pipeline_mode = #tpu.pipeline_mode<synchronous>, transform_indices = @transform_12, window_bounds = array<i64: 3, 1, 256>}, {pipeline_mode = #tpu.pipeline_mode<synchronous>, transform_indices = @transform_13, window_bounds = array<i64: 3, 256, 64>}, {pipeline_mode = #tpu.pipeline_mode<synchronous>, transform_indices = @transform_14, window_bounds = array<i64: 3, 1, 64>}, {pipeline_mode = #tpu.pipeline_mode<synchronous>, transform_indices = @transform_15, window_bounds = array<i64: 1, 64>}, {pipeline_mode = #tpu.pipeline_mode<synchronous>, transform_indices = @transform_16, window_bounds = array<i64: 1, 64>}, {pipeline_mode = #tpu.pipeline_mode<synchronous>, transform_indices = @transform_17, window_bounds = array<i64: 64, 128>}, {pipeline_mode = #tpu.pipeline_mode<synchronous>, transform_indices = @transform_18, window_bounds = array<i64: 1, 128>}, {transform_indices = @transform_19, window_bounds = array<i64: 1, 1, 128>}]} {
    %c0 = arith.constant 0 : index
    %c0_0 = arith.constant 0 : index
    %0 = vector.load %arg1[%c0, %c0_0] : memref<56x16xbf16, #tpu.memory_space<vmem>>, vector<56x16xbf16>
    %c0_1 = arith.constant 0 : index
    %c0_2 = arith.constant 0 : index
    %1 = vector.load %arg2[%c0_1, %c0_2] : memref<16x64xbf16, #tpu.memory_space<vmem>>, vector<16x64xbf16>
    %cst = arith.constant dense<0.000000e+00> : vector<56x64xf32>
    %2 = tpu.matmul %0, %1, %cst {dimension_numbers = #tpu.dot_dimension_numbers<[1], [0], [0], [1], [0, 0, 1, 1], [], []>} : vector<56x16xbf16>, vector<16x64xbf16>, vector<56x64xf32> -> vector<56x64xf32>
    %3 = vector.shape_cast %2 : vector<56x64xf32> to vector<1x56x64xf32>
    %c0_3 = arith.constant 0 : index
    %c0_4 = arith.constant 0 : index
    %4 = vector.load %arg3[%c0_3, %c0_4] : memref<56x64xf32, #tpu.memory_space<vmem>>, vector<56x64xf32>
    %5 = vector.shape_cast %4 : vector<56x64xf32> to vector<1x56x64xf32>
    %6 = arith.addf %3, %5 : vector<1x56x64xf32>
    %7 = vector.shape_cast %6 : vector<1x56x64xf32> to vector<56x64xf32>
    %8 = tpu.iota {dimensions = array<i32: 2>} : vector<1x1x56xi32>
    %c50_i32 = arith.constant 50 : i32
    %9 = vector.broadcast %c50_i32 : i32 to vector<1x1x56xi32>
    %10 = arith.cmpi slt, %8, %9 : vector<1x1x56xi32>
    %cst_5 = arith.constant 0.000000e+00 : f32
    %cst_6 = arith.constant -1.000000e+30 : f32
    %11 = vector.broadcast %cst_5 : f32 to vector<1x1x56xf32>
    %12 = vector.broadcast %cst_6 : f32 to vector<1x1x56xf32>
    %13 = arith.select %10, %11, %12 : vector<1x1x56xi1>, vector<1x1x56xf32>
    %c0_7 = arith.constant 0 : index
    %c0_8 = arith.constant 0 : index
    %c0_9 = arith.constant 0 : index
    %14 = vector.load %arg4[%c0_7, %c0_8, %c0_9] : memref<3x1x64xf32, #tpu.memory_space<vmem>>, vector<1x1x64xf32>
    %15 = vector.shape_cast %14 : vector<1x1x64xf32> to vector<1x64xf32>
    %c0_10 = arith.constant 0 : index
    %c0_11 = arith.constant 0 : index
    %c0_12 = arith.constant 0 : index
    %16 = vector.load %arg5[%c0_10, %c0_11, %c0_12] : memref<3x1x64xf32, #tpu.memory_space<vmem>>, vector<1x1x64xf32>
    %17 = vector.shape_cast %16 : vector<1x1x64xf32> to vector<1x64xf32>
    %cst_13 = arith.constant dense<0.000000e+00> : vector<56xf32>
    %18 = vector.multi_reduction <add>, %7, %cst_13 [1] : vector<56x64xf32> to vector<56xf32>
    %19 = vector.shape_cast %18 : vector<56xf32> to vector<56x1xf32>
    %cst_14 = arith.constant 6.400000e+01 : f32
    %20 = vector.broadcast %cst_14 : f32 to vector<56x1xf32>
    %21 = arith.divf %19, %20 : vector<56x1xf32>
    %22 = vector.broadcast %21 : vector<56x1xf32> to vector<56x64xf32>
    %23 = arith.subf %7, %22 : vector<56x64xf32>
    %24 = arith.mulf %23, %23 : vector<56x64xf32>
    %cst_15 = arith.constant dense<0.000000e+00> : vector<56xf32>
    %25 = vector.multi_reduction <add>, %24, %cst_15 [1] : vector<56x64xf32> to vector<56xf32>
    %26 = vector.shape_cast %25 : vector<56xf32> to vector<56x1xf32>
    %cst_16 = arith.constant 6.400000e+01 : f32
    %27 = vector.broadcast %cst_16 : f32 to vector<56x1xf32>
    %28 = arith.divf %26, %27 : vector<56x1xf32>
    %29 = vector.broadcast %21 : vector<56x1xf32> to vector<56x64xf32>
    %30 = arith.subf %7, %29 : vector<56x64xf32>
    %cst_17 = arith.constant 9.99999974E-6 : f32
    %31 = vector.broadcast %cst_17 : f32 to vector<56x1xf32>
    %32 = arith.addf %28, %31 : vector<56x1xf32>
    %33 = math.rsqrt %32 : vector<56x1xf32>
    %34 = vector.broadcast %33 : vector<56x1xf32> to vector<56x64xf32>
    %35 = arith.mulf %30, %34 : vector<56x64xf32>
    %36 = vector.broadcast %15 : vector<1x64xf32> to vector<56x64xf32>
    %37 = arith.mulf %35, %36 : vector<56x64xf32>
    %38 = vector.broadcast %17 : vector<1x64xf32> to vector<56x64xf32>
    %39 = arith.addf %37, %38 : vector<56x64xf32>
    %40 = arith.truncf %39 : vector<56x64xf32> to vector<56x64xbf16>
    %c0_18 = arith.constant 0 : index
    %c0_19 = arith.constant 0 : index
    %c0_20 = arith.constant 0 : index
    %41 = vector.load %arg6[%c0_18, %c0_19, %c0_20] : memref<3x64x192xbf16, #tpu.memory_space<vmem>>, vector<1x64x192xbf16>
    %42 = vector.shape_cast %41 : vector<1x64x192xbf16> to vector<64x192xbf16>
    %cst_21 = arith.constant dense<0.000000e+00> : vector<56x192xf32>
    %43 = tpu.matmul %40, %42, %cst_21 {dimension_numbers = #tpu.dot_dimension_numbers<[1], [0], [0], [1], [0, 0, 1, 1], [], []>} : vector<56x64xbf16>, vector<64x192xbf16>, vector<56x192xf32> -> vector<56x192xf32>
    %c0_22 = arith.constant 0 : index
    %c0_23 = arith.constant 0 : index
    %c0_24 = arith.constant 0 : index
    %44 = vector.load %arg7[%c0_22, %c0_23, %c0_24] : memref<3x1x192xf32, #tpu.memory_space<vmem>>, vector<1x1x192xf32>
    %45 = vector.shape_cast %44 : vector<1x1x192xf32> to vector<1x192xf32>
    %46 = vector.broadcast %45 : vector<1x192xf32> to vector<56x192xf32>
    %47 = arith.addf %43, %46 : vector<56x192xf32>
    %48 = vector.extract_strided_slice %47 {offsets = [0, 0], sizes = [56, 64], strides = [1, 1]} : vector<56x192xf32> to vector<56x64xf32>
    %49 = vector.shape_cast %48 : vector<56x64xf32> to vector<1x56x64xf32>
    %50 = arith.truncf %49 : vector<1x56x64xf32> to vector<1x56x64xbf16>
    %51 = vector.extract_strided_slice %47 {offsets = [0, 64], sizes = [56, 64], strides = [1, 1]} : vector<56x192xf32> to vector<56x64xf32>
    %52 = vector.shape_cast %51 : vector<56x64xf32> to vector<1x56x64xf32>
    %53 = arith.truncf %52 : vector<1x56x64xf32> to vector<1x56x64xbf16>
    %54 = vector.extract_strided_slice %47 {offsets = [0, 128], sizes = [56, 64], strides = [1, 1]} : vector<56x192xf32> to vector<56x64xf32>
    %55 = vector.shape_cast %54 : vector<56x64xf32> to vector<1x56x64xf32>
    %56 = arith.truncf %55 : vector<1x56x64xf32> to vector<1x56x64xbf16>
    %57 = vector.extract_strided_slice %50 {offsets = [0, 0, 0], sizes = [1, 56, 16], strides = [1, 1, 1]} : vector<1x56x64xbf16> to vector<1x56x16xbf16>
    %58 = vector.extract_strided_slice %53 {offsets = [0, 0, 0], sizes = [1, 56, 16], strides = [1, 1, 1]} : vector<1x56x64xbf16> to vector<1x56x16xbf16>
    "tpu.trace_start"() <{level = 10 : i32, message = "bqd,bkd->bqk"}> : () -> ()
    %cst_25 = arith.constant dense<0.000000e+00> : vector<1x56x56xf32>
    %59 = tpu.matmul %57, %58, %cst_25 {dimension_numbers = #tpu.dot_dimension_numbers<[2], [2], [1], [1], [0, 0, 0, 1, 1, 1], [0], [0]>} : vector<1x56x16xbf16>, vector<1x56x16xbf16>, vector<1x56x56xf32> -> vector<1x56x56xf32>
    "tpu.trace_stop"() : () -> ()
    %60 = vector.broadcast %13 : vector<1x1x56xf32> to vector<1x56x56xf32>
    %61 = arith.addf %59, %60 : vector<1x56x56xf32>
    %cst_26 = arith.constant dense<0xFF800000> : vector<1x56xf32>
    %62 = vector.multi_reduction <maximumf>, %61, %cst_26 [2] : vector<1x56x56xf32> to vector<1x56xf32>
    %63 = vector.shape_cast %62 : vector<1x56xf32> to vector<1x56x1xf32>
    %64 = vector.broadcast %63 : vector<1x56x1xf32> to vector<1x56x56xf32>
    %65 = arith.subf %61, %64 : vector<1x56x56xf32>
    %66 = math.exp %65 : vector<1x56x56xf32>
    %cst_27 = arith.constant dense<0.000000e+00> : vector<1x56xf32>
    %67 = vector.multi_reduction <add>, %66, %cst_27 [2] : vector<1x56x56xf32> to vector<1x56xf32>
    %68 = vector.shape_cast %67 : vector<1x56xf32> to vector<1x56x1xf32>
    %69 = tpu.reciprocal %68 {approx = true} : vector<1x56x1xf32> -> vector<1x56x1xf32>
    %70 = vector.broadcast %69 : vector<1x56x1xf32> to vector<1x56x56xf32>
    %71 = arith.mulf %66, %70 : vector<1x56x56xf32>
    %72 = arith.truncf %71 : vector<1x56x56xf32> to vector<1x56x56xbf16>
    %73 = vector.extract_strided_slice %56 {offsets = [0, 0, 0], sizes = [1, 56, 16], strides = [1, 1, 1]} : vector<1x56x64xbf16> to vector<1x56x16xbf16>
    "tpu.trace_start"() <{level = 10 : i32, message = "bqk,bkd->bqd"}> : () -> ()
    %cst_28 = arith.constant dense<0.000000e+00> : vector<1x56x16xf32>
    %74 = tpu.matmul %72, %73, %cst_28 {dimension_numbers = #tpu.dot_dimension_numbers<[2], [1], [1], [2], [0, 0, 0, 1, 1, 2], [0], [0]>} : vector<1x56x56xbf16>, vector<1x56x16xbf16>, vector<1x56x16xf32> -> vector<1x56x16xf32>
    "tpu.trace_stop"() : () -> ()
    %c0_29 = arith.constant 0 : index
    %c0_30 = arith.constant 0 : index
    %c0_31 = arith.constant 0 : index
    %75 = vector.load %arg21[%c0_29, %c0_30, %c0_31] : memref<1x56x64xf32, #tpu.memory_space<vmem>>, vector<1x56x16xf32>
    tpu.vector_store %arg21[%c0_29, %c0_30, %c0_31], %74 {strides = array<i32>} : memref<1x56x64xf32, #tpu.memory_space<vmem>>, vector<1x56x16xf32>,
    %76 = vector.extract_strided_slice %50 {offsets = [0, 0, 16], sizes = [1, 56, 16], strides = [1, 1, 1]} : vector<1x56x64xbf16> to vector<1x56x16xbf16>
    %77 = vector.extract_strided_slice %53 {offsets = [0, 0, 16], sizes = [1, 56, 16], strides = [1, 1, 1]} : vector<1x56x64xbf16> to vector<1x56x16xbf16>
    "tpu.trace_start"() <{level = 10 : i32, message = "bqd,bkd->bqk"}> : () -> ()
    %cst_32 = arith.constant dense<0.000000e+00> : vector<1x56x56xf32>
    %78 = tpu.matmul %76, %77, %cst_32 {dimension_numbers = #tpu.dot_dimension_numbers<[2], [2], [1], [1], [0, 0, 0, 1, 1, 1], [0], [0]>} : vector<1x56x16xbf16>, vector<1x56x16xbf16>, vector<1x56x56xf32> -> vector<1x56x56xf32>
    "tpu.trace_stop"() : () -> ()
    %79 = vector.broadcast %13 : vector<1x1x56xf32> to vector<1x56x56xf32>
    %80 = arith.addf %78, %79 : vector<1x56x56xf32>
    %cst_33 = arith.constant dense<0xFF800000> : vector<1x56xf32>
    %81 = vector.multi_reduction <maximumf>, %80, %cst_33 [2] : vector<1x56x56xf32> to vector<1x56xf32>
    %82 = vector.shape_cast %81 : vector<1x56xf32> to vector<1x56x1xf32>
    %83 = vector.broadcast %82 : vector<1x56x1xf32> to vector<1x56x56xf32>
    %84 = arith.subf %80, %83 : vector<1x56x56xf32>
    %85 = math.exp %84 : vector<1x56x56xf32>
    %cst_34 = arith.constant dense<0.000000e+00> : vector<1x56xf32>
    %86 = vector.multi_reduction <add>, %85, %cst_34 [2] : vector<1x56x56xf32> to vector<1x56xf32>
    %87 = vector.shape_cast %86 : vector<1x56xf32> to vector<1x56x1xf32>
    %88 = tpu.reciprocal %87 {approx = true} : vector<1x56x1xf32> -> vector<1x56x1xf32>
    %89 = vector.broadcast %88 : vector<1x56x1xf32> to vector<1x56x56xf32>
    %90 = arith.mulf %85, %89 : vector<1x56x56xf32>
    %91 = arith.truncf %90 : vector<1x56x56xf32> to vector<1x56x56xbf16>
    %92 = vector.extract_strided_slice %56 {offsets = [0, 0, 16], sizes = [1, 56, 16], strides = [1, 1, 1]} : vector<1x56x64xbf16> to vector<1x56x16xbf16>
    "tpu.trace_start"() <{level = 10 : i32, message = "bqk,bkd->bqd"}> : () -> ()
    %cst_35 = arith.constant dense<0.000000e+00> : vector<1x56x16xf32>
    %93 = tpu.matmul %91, %92, %cst_35 {dimension_numbers = #tpu.dot_dimension_numbers<[2], [1], [1], [2], [0, 0, 0, 1, 1, 2], [0], [0]>} : vector<1x56x56xbf16>, vector<1x56x16xbf16>, vector<1x56x16xf32> -> vector<1x56x16xf32>
    "tpu.trace_stop"() : () -> ()
    %c0_36 = arith.constant 0 : index
    %c0_37 = arith.constant 0 : index
    %c16 = arith.constant 16 : index
    %94 = vector.load %arg21[%c0_36, %c0_37, %c16] : memref<1x56x64xf32, #tpu.memory_space<vmem>>, vector<1x56x16xf32>
    tpu.vector_store %arg21[%c0_36, %c0_37, %c16], %93 {strides = array<i32>} : memref<1x56x64xf32, #tpu.memory_space<vmem>>, vector<1x56x16xf32>,
    %95 = vector.extract_strided_slice %50 {offsets = [0, 0, 32], sizes = [1, 56, 16], strides = [1, 1, 1]} : vector<1x56x64xbf16> to vector<1x56x16xbf16>
    %96 = vector.extract_strided_slice %53 {offsets = [0, 0, 32], sizes = [1, 56, 16], strides = [1, 1, 1]} : vector<1x56x64xbf16> to vector<1x56x16xbf16>
    "tpu.trace_start"() <{level = 10 : i32, message = "bqd,bkd->bqk"}> : () -> ()
    %cst_38 = arith.constant dense<0.000000e+00> : vector<1x56x56xf32>
    %97 = tpu.matmul %95, %96, %cst_38 {dimension_numbers = #tpu.dot_dimension_numbers<[2], [2], [1], [1], [0, 0, 0, 1, 1, 1], [0], [0]>} : vector<1x56x16xbf16>, vector<1x56x16xbf16>, vector<1x56x56xf32> -> vector<1x56x56xf32>
    "tpu.trace_stop"() : () -> ()
    %98 = vector.broadcast %13 : vector<1x1x56xf32> to vector<1x56x56xf32>
    %99 = arith.addf %97, %98 : vector<1x56x56xf32>
    %cst_39 = arith.constant dense<0xFF800000> : vector<1x56xf32>
    %100 = vector.multi_reduction <maximumf>, %99, %cst_39 [2] : vector<1x56x56xf32> to vector<1x56xf32>
    %101 = vector.shape_cast %100 : vector<1x56xf32> to vector<1x56x1xf32>
    %102 = vector.broadcast %101 : vector<1x56x1xf32> to vector<1x56x56xf32>
    %103 = arith.subf %99, %102 : vector<1x56x56xf32>
    %104 = math.exp %103 : vector<1x56x56xf32>
    %cst_40 = arith.constant dense<0.000000e+00> : vector<1x56xf32>
    %105 = vector.multi_reduction <add>, %104, %cst_40 [2] : vector<1x56x56xf32> to vector<1x56xf32>
    %106 = vector.shape_cast %105 : vector<1x56xf32> to vector<1x56x1xf32>
    %107 = tpu.reciprocal %106 {approx = true} : vector<1x56x1xf32> -> vector<1x56x1xf32>
    %108 = vector.broadcast %107 : vector<1x56x1xf32> to vector<1x56x56xf32>
    %109 = arith.mulf %104, %108 : vector<1x56x56xf32>
    %110 = arith.truncf %109 : vector<1x56x56xf32> to vector<1x56x56xbf16>
    %111 = vector.extract_strided_slice %56 {offsets = [0, 0, 32], sizes = [1, 56, 16], strides = [1, 1, 1]} : vector<1x56x64xbf16> to vector<1x56x16xbf16>
    "tpu.trace_start"() <{level = 10 : i32, message = "bqk,bkd->bqd"}> : () -> ()
    %cst_41 = arith.constant dense<0.000000e+00> : vector<1x56x16xf32>
    %112 = tpu.matmul %110, %111, %cst_41 {dimension_numbers = #tpu.dot_dimension_numbers<[2], [1], [1], [2], [0, 0, 0, 1, 1, 2], [0], [0]>} : vector<1x56x56xbf16>, vector<1x56x16xbf16>, vector<1x56x16xf32> -> vector<1x56x16xf32>
    "tpu.trace_stop"() : () -> ()
    %c0_42 = arith.constant 0 : index
    %c0_43 = arith.constant 0 : index
    %c32 = arith.constant 32 : index
    %113 = vector.load %arg21[%c0_42, %c0_43, %c32] : memref<1x56x64xf32, #tpu.memory_space<vmem>>, vector<1x56x16xf32>
    tpu.vector_store %arg21[%c0_42, %c0_43, %c32], %112 {strides = array<i32>} : memref<1x56x64xf32, #tpu.memory_space<vmem>>, vector<1x56x16xf32>,
    %114 = vector.extract_strided_slice %50 {offsets = [0, 0, 48], sizes = [1, 56, 16], strides = [1, 1, 1]} : vector<1x56x64xbf16> to vector<1x56x16xbf16>
    %115 = vector.extract_strided_slice %53 {offsets = [0, 0, 48], sizes = [1, 56, 16], strides = [1, 1, 1]} : vector<1x56x64xbf16> to vector<1x56x16xbf16>
    "tpu.trace_start"() <{level = 10 : i32, message = "bqd,bkd->bqk"}> : () -> ()
    %cst_44 = arith.constant dense<0.000000e+00> : vector<1x56x56xf32>
    %116 = tpu.matmul %114, %115, %cst_44 {dimension_numbers = #tpu.dot_dimension_numbers<[2], [2], [1], [1], [0, 0, 0, 1, 1, 1], [0], [0]>} : vector<1x56x16xbf16>, vector<1x56x16xbf16>, vector<1x56x56xf32> -> vector<1x56x56xf32>
    "tpu.trace_stop"() : () -> ()
    %117 = vector.broadcast %13 : vector<1x1x56xf32> to vector<1x56x56xf32>
    %118 = arith.addf %116, %117 : vector<1x56x56xf32>
    %cst_45 = arith.constant dense<0xFF800000> : vector<1x56xf32>
    %119 = vector.multi_reduction <maximumf>, %118, %cst_45 [2] : vector<1x56x56xf32> to vector<1x56xf32>
    %120 = vector.shape_cast %119 : vector<1x56xf32> to vector<1x56x1xf32>
    %121 = vector.broadcast %120 : vector<1x56x1xf32> to vector<1x56x56xf32>
    %122 = arith.subf %118, %121 : vector<1x56x56xf32>
    %123 = math.exp %122 : vector<1x56x56xf32>
    %cst_46 = arith.constant dense<0.000000e+00> : vector<1x56xf32>
    %124 = vector.multi_reduction <add>, %123, %cst_46 [2] : vector<1x56x56xf32> to vector<1x56xf32>
    %125 = vector.shape_cast %124 : vector<1x56xf32> to vector<1x56x1xf32>
    %126 = tpu.reciprocal %125 {approx = true} : vector<1x56x1xf32> -> vector<1x56x1xf32>
    %127 = vector.broadcast %126 : vector<1x56x1xf32> to vector<1x56x56xf32>
    %128 = arith.mulf %123, %127 : vector<1x56x56xf32>
    %129 = arith.truncf %128 : vector<1x56x56xf32> to vector<1x56x56xbf16>
    %130 = vector.extract_strided_slice %56 {offsets = [0, 0, 48], sizes = [1, 56, 16], strides = [1, 1, 1]} : vector<1x56x64xbf16> to vector<1x56x16xbf16>
    "tpu.trace_start"() <{level = 10 : i32, message = "bqk,bkd->bqd"}> : () -> ()
    %cst_47 = arith.constant dense<0.000000e+00> : vector<1x56x16xf32>
    %131 = tpu.matmul %129, %130, %cst_47 {dimension_numbers = #tpu.dot_dimension_numbers<[2], [1], [1], [2], [0, 0, 0, 1, 1, 2], [0], [0]>} : vector<1x56x56xbf16>, vector<1x56x16xbf16>, vector<1x56x16xf32> -> vector<1x56x16xf32>
    "tpu.trace_stop"() : () -> ()
    %c0_48 = arith.constant 0 : index
    %c0_49 = arith.constant 0 : index
    %c48 = arith.constant 48 : index
    %132 = vector.load %arg21[%c0_48, %c0_49, %c48] : memref<1x56x64xf32, #tpu.memory_space<vmem>>, vector<1x56x16xf32>
    tpu.vector_store %arg21[%c0_48, %c0_49, %c48], %131 {strides = array<i32>} : memref<1x56x64xf32, #tpu.memory_space<vmem>>, vector<1x56x16xf32>,
    %c0_50 = arith.constant 0 : index
    %c0_51 = arith.constant 0 : index
    %c0_52 = arith.constant 0 : index
    %133 = vector.load %arg21[%c0_50, %c0_51, %c0_52] : memref<1x56x64xf32, #tpu.memory_space<vmem>>, vector<1x56x64xf32>
    %134 = vector.shape_cast %133 : vector<1x56x64xf32> to vector<56x64xf32>
    %135 = arith.truncf %134 : vector<56x64xf32> to vector<56x64xbf16>
    %c0_53 = arith.constant 0 : index
    %c0_54 = arith.constant 0 : index
    %c0_55 = arith.constant 0 : index
    %136 = vector.load %arg8[%c0_53, %c0_54, %c0_55] : memref<3x64x64xbf16, #tpu.memory_space<vmem>>, vector<1x64x64xbf16>
    %137 = vector.shape_cast %136 : vector<1x64x64xbf16> to vector<64x64xbf16>
    %cst_56 = arith.constant dense<0.000000e+00> : vector<56x64xf32>
    %138 = tpu.matmul %135, %137, %cst_56 {dimension_numbers = #tpu.dot_dimension_numbers<[1], [0], [0], [1], [0, 0, 1, 1], [], []>} : vector<56x64xbf16>, vector<64x64xbf16>, vector<56x64xf32> -> vector<56x64xf32>
    %c0_57 = arith.constant 0 : index
    %c0_58 = arith.constant 0 : index
    %c0_59 = arith.constant 0 : index
    %139 = vector.load %arg9[%c0_57, %c0_58, %c0_59] : memref<3x1x64xf32, #tpu.memory_space<vmem>>, vector<1x1x64xf32>
    %140 = vector.shape_cast %139 : vector<1x1x64xf32> to vector<1x64xf32>
    %141 = vector.broadcast %140 : vector<1x64xf32> to vector<56x64xf32>
    %142 = arith.addf %138, %141 : vector<56x64xf32>
    %143 = arith.addf %7, %142 : vector<56x64xf32>
    %c0_60 = arith.constant 0 : index
    %c0_61 = arith.constant 0 : index
    %c0_62 = arith.constant 0 : index
    %144 = vector.load %arg10[%c0_60, %c0_61, %c0_62] : memref<3x1x64xf32, #tpu.memory_space<vmem>>, vector<1x1x64xf32>
    %145 = vector.shape_cast %144 : vector<1x1x64xf32> to vector<1x64xf32>
    %c0_63 = arith.constant 0 : index
    %c0_64 = arith.constant 0 : index
    %c0_65 = arith.constant 0 : index
    %146 = vector.load %arg11[%c0_63, %c0_64, %c0_65] : memref<3x1x64xf32, #tpu.memory_space<vmem>>, vector<1x1x64xf32>
    %147 = vector.shape_cast %146 : vector<1x1x64xf32> to vector<1x64xf32>
    %cst_66 = arith.constant dense<0.000000e+00> : vector<56xf32>
    %148 = vector.multi_reduction <add>, %143, %cst_66 [1] : vector<56x64xf32> to vector<56xf32>
    %149 = vector.shape_cast %148 : vector<56xf32> to vector<56x1xf32>
    %cst_67 = arith.constant 6.400000e+01 : f32
    %150 = vector.broadcast %cst_67 : f32 to vector<56x1xf32>
    %151 = arith.divf %149, %150 : vector<56x1xf32>
    %152 = vector.broadcast %151 : vector<56x1xf32> to vector<56x64xf32>
    %153 = arith.subf %143, %152 : vector<56x64xf32>
    %154 = arith.mulf %153, %153 : vector<56x64xf32>
    %cst_68 = arith.constant dense<0.000000e+00> : vector<56xf32>
    %155 = vector.multi_reduction <add>, %154, %cst_68 [1] : vector<56x64xf32> to vector<56xf32>
    %156 = vector.shape_cast %155 : vector<56xf32> to vector<56x1xf32>
    %cst_69 = arith.constant 6.400000e+01 : f32
    %157 = vector.broadcast %cst_69 : f32 to vector<56x1xf32>
    %158 = arith.divf %156, %157 : vector<56x1xf32>
    %159 = vector.broadcast %151 : vector<56x1xf32> to vector<56x64xf32>
    %160 = arith.subf %143, %159 : vector<56x64xf32>
    %cst_70 = arith.constant 9.99999974E-6 : f32
    %161 = vector.broadcast %cst_70 : f32 to vector<56x1xf32>
    %162 = arith.addf %158, %161 : vector<56x1xf32>
    %163 = math.rsqrt %162 : vector<56x1xf32>
    %164 = vector.broadcast %163 : vector<56x1xf32> to vector<56x64xf32>
    %165 = arith.mulf %160, %164 : vector<56x64xf32>
    %166 = vector.broadcast %145 : vector<1x64xf32> to vector<56x64xf32>
    %167 = arith.mulf %165, %166 : vector<56x64xf32>
    %168 = vector.broadcast %147 : vector<1x64xf32> to vector<56x64xf32>
    %169 = arith.addf %167, %168 : vector<56x64xf32>
    %170 = arith.truncf %169 : vector<56x64xf32> to vector<56x64xbf16>
    %c0_71 = arith.constant 0 : index
    %c0_72 = arith.constant 0 : index
    %c0_73 = arith.constant 0 : index
    %171 = vector.load %arg12[%c0_71, %c0_72, %c0_73] : memref<3x64x256xbf16, #tpu.memory_space<vmem>>, vector<1x64x256xbf16>
    %172 = vector.shape_cast %171 : vector<1x64x256xbf16> to vector<64x256xbf16>
    %cst_74 = arith.constant dense<0.000000e+00> : vector<56x256xf32>
    %173 = tpu.matmul %170, %172, %cst_74 {dimension_numbers = #tpu.dot_dimension_numbers<[1], [0], [0], [1], [0, 0, 1, 1], [], []>} : vector<56x64xbf16>, vector<64x256xbf16>, vector<56x256xf32> -> vector<56x256xf32>
    %c0_75 = arith.constant 0 : index
    %c0_76 = arith.constant 0 : index
    %c0_77 = arith.constant 0 : index
    %174 = vector.load %arg13[%c0_75, %c0_76, %c0_77] : memref<3x1x256xf32, #tpu.memory_space<vmem>>, vector<1x1x256xf32>
    %175 = vector.shape_cast %174 : vector<1x1x256xf32> to vector<1x256xf32>
    %176 = vector.broadcast %175 : vector<1x256xf32> to vector<56x256xf32>
    %177 = arith.addf %173, %176 : vector<56x256xf32>
    %cst_78 = arith.constant 5.000000e-01 : f32
    %178 = vector.broadcast %cst_78 : f32 to vector<56x256xf32>
    %179 = arith.mulf %178, %177 : vector<56x256xf32>
    %cst_79 = arith.constant 0.707106769 : f32
    %180 = vector.broadcast %cst_79 : f32 to vector<56x256xf32>
    %181 = arith.mulf %177, %180 : vector<56x256xf32>
    %182 = math.absf %181 : vector<56x256xf32>
    %cst_80 = arith.constant 0.327591091 : f32
    %183 = vector.broadcast %cst_80 : f32 to vector<56x256xf32>
    %184 = arith.mulf %183, %182 : vector<56x256xf32>
    %cst_81 = arith.constant 1.000000e+00 : f32
    %185 = vector.broadcast %cst_81 : f32 to vector<56x256xf32>
    %186 = arith.addf %185, %184 : vector<56x256xf32>
    %cst_82 = arith.constant 1.000000e+00 : f32
    %187 = vector.broadcast %cst_82 : f32 to vector<56x256xf32>
    %188 = arith.divf %187, %186 : vector<56x256xf32>
    %cst_83 = arith.constant 1.06140542 : f32
    %189 = vector.broadcast %cst_83 : f32 to vector<56x256xf32>
    %190 = arith.mulf %189, %188 : vector<56x256xf32>
    %cst_84 = arith.constant -1.45315206 : f32
    %191 = vector.broadcast %cst_84 : f32 to vector<56x256xf32>
    %192 = arith.addf %190, %191 : vector<56x256xf32>
    %193 = arith.mulf %192, %188 : vector<56x256xf32>
    %cst_85 = arith.constant 1.42141378 : f32
    %194 = vector.broadcast %cst_85 : f32 to vector<56x256xf32>
    %195 = arith.addf %193, %194 : vector<56x256xf32>
    %196 = arith.mulf %195, %188 : vector<56x256xf32>
    %cst_86 = arith.constant -0.284496725 : f32
    %197 = vector.broadcast %cst_86 : f32 to vector<56x256xf32>
    %198 = arith.addf %196, %197 : vector<56x256xf32>
    %199 = arith.mulf %198, %188 : vector<56x256xf32>
    %cst_87 = arith.constant 0.254829586 : f32
    %200 = vector.broadcast %cst_87 : f32 to vector<56x256xf32>
    %201 = arith.addf %199, %200 : vector<56x256xf32>
    %202 = arith.mulf %201, %188 : vector<56x256xf32>
    %cst_88 = arith.constant 0.000000e+00 : f32
    %203 = vector.broadcast %cst_88 : f32 to vector<56x256xf32>
    %204 = arith.subf %203, %182 : vector<56x256xf32>
    %205 = arith.mulf %204, %182 : vector<56x256xf32>
    %206 = math.exp %205 : vector<56x256xf32>
    %207 = arith.mulf %202, %206 : vector<56x256xf32>
    %cst_89 = arith.constant 1.000000e+00 : f32
    %208 = vector.broadcast %cst_89 : f32 to vector<56x256xf32>
    %209 = arith.subf %208, %207 : vector<56x256xf32>
    %cst_90 = arith.constant 0.000000e+00 : f32
    %210 = vector.broadcast %cst_90 : f32 to vector<56x256xf32>
    %211 = arith.cmpf oge, %181, %210 : vector<56x256xf32>
    %cst_91 = arith.constant 0.000000e+00 : f32
    %212 = vector.broadcast %cst_91 : f32 to vector<56x256xf32>
    %213 = arith.subf %212, %209 : vector<56x256xf32>
    %214 = arith.select %211, %209, %213 : vector<56x256xi1>, vector<56x256xf32>
    %cst_92 = arith.constant 1.000000e+00 : f32
    %215 = vector.broadcast %cst_92 : f32 to vector<56x256xf32>
    %216 = arith.addf %215, %214 : vector<56x256xf32>
    %217 = arith.mulf %179, %216 : vector<56x256xf32>
    %218 = arith.truncf %217 : vector<56x256xf32> to vector<56x256xbf16>
    %c0_93 = arith.constant 0 : index
    %c0_94 = arith.constant 0 : index
    %c0_95 = arith.constant 0 : index
    %219 = vector.load %arg14[%c0_93, %c0_94, %c0_95] : memref<3x256x64xbf16, #tpu.memory_space<vmem>>, vector<1x256x64xbf16>
    %220 = vector.shape_cast %219 : vector<1x256x64xbf16> to vector<256x64xbf16>
    %cst_96 = arith.constant dense<0.000000e+00> : vector<56x64xf32>
    %221 = tpu.matmul %218, %220, %cst_96 {dimension_numbers = #tpu.dot_dimension_numbers<[1], [0], [0], [1], [0, 0, 1, 1], [], []>} : vector<56x256xbf16>, vector<256x64xbf16>, vector<56x64xf32> -> vector<56x64xf32>
    %c0_97 = arith.constant 0 : index
    %c0_98 = arith.constant 0 : index
    %c0_99 = arith.constant 0 : index
    %222 = vector.load %arg15[%c0_97, %c0_98, %c0_99] : memref<3x1x64xf32, #tpu.memory_space<vmem>>, vector<1x1x64xf32>
    %223 = vector.shape_cast %222 : vector<1x1x64xf32> to vector<1x64xf32>
    %224 = vector.broadcast %223 : vector<1x64xf32> to vector<56x64xf32>
    %225 = arith.addf %221, %224 : vector<56x64xf32>
    %226 = arith.addf %143, %225 : vector<56x64xf32>
    %c1 = arith.constant 1 : index
    %c0_100 = arith.constant 0 : index
    %c0_101 = arith.constant 0 : index
    %227 = vector.load %arg4[%c1, %c0_100, %c0_101] : memref<3x1x64xf32, #tpu.memory_space<vmem>>, vector<1x1x64xf32>
    %228 = vector.shape_cast %227 : vector<1x1x64xf32> to vector<1x64xf32>
    %c1_102 = arith.constant 1 : index
    %c0_103 = arith.constant 0 : index
    %c0_104 = arith.constant 0 : index
    %229 = vector.load %arg5[%c1_102, %c0_103, %c0_104] : memref<3x1x64xf32, #tpu.memory_space<vmem>>, vector<1x1x64xf32>
    %230 = vector.shape_cast %229 : vector<1x1x64xf32> to vector<1x64xf32>
    %cst_105 = arith.constant dense<0.000000e+00> : vector<56xf32>
    %231 = vector.multi_reduction <add>, %226, %cst_105 [1] : vector<56x64xf32> to vector<56xf32>
    %232 = vector.shape_cast %231 : vector<56xf32> to vector<56x1xf32>
    %cst_106 = arith.constant 6.400000e+01 : f32
    %233 = vector.broadcast %cst_106 : f32 to vector<56x1xf32>
    %234 = arith.divf %232, %233 : vector<56x1xf32>
    %235 = vector.broadcast %234 : vector<56x1xf32> to vector<56x64xf32>
    %236 = arith.subf %226, %235 : vector<56x64xf32>
    %237 = arith.mulf %236, %236 : vector<56x64xf32>
    %cst_107 = arith.constant dense<0.000000e+00> : vector<56xf32>
    %238 = vector.multi_reduction <add>, %237, %cst_107 [1] : vector<56x64xf32> to vector<56xf32>
    %239 = vector.shape_cast %238 : vector<56xf32> to vector<56x1xf32>
    %cst_108 = arith.constant 6.400000e+01 : f32
    %240 = vector.broadcast %cst_108 : f32 to vector<56x1xf32>
    %241 = arith.divf %239, %240 : vector<56x1xf32>
    %242 = vector.broadcast %234 : vector<56x1xf32> to vector<56x64xf32>
    %243 = arith.subf %226, %242 : vector<56x64xf32>
    %cst_109 = arith.constant 9.99999974E-6 : f32
    %244 = vector.broadcast %cst_109 : f32 to vector<56x1xf32>
    %245 = arith.addf %241, %244 : vector<56x1xf32>
    %246 = math.rsqrt %245 : vector<56x1xf32>
    %247 = vector.broadcast %246 : vector<56x1xf32> to vector<56x64xf32>
    %248 = arith.mulf %243, %247 : vector<56x64xf32>
    %249 = vector.broadcast %228 : vector<1x64xf32> to vector<56x64xf32>
    %250 = arith.mulf %248, %249 : vector<56x64xf32>
    %251 = vector.broadcast %230 : vector<1x64xf32> to vector<56x64xf32>
    %252 = arith.addf %250, %251 : vector<56x64xf32>
    %253 = arith.truncf %252 : vector<56x64xf32> to vector<56x64xbf16>
    %c1_110 = arith.constant 1 : index
    %c0_111 = arith.constant 0 : index
    %c0_112 = arith.constant 0 : index
    %254 = vector.load %arg6[%c1_110, %c0_111, %c0_112] : memref<3x64x192xbf16, #tpu.memory_space<vmem>>, vector<1x64x192xbf16>
    %255 = vector.shape_cast %254 : vector<1x64x192xbf16> to vector<64x192xbf16>
    %cst_113 = arith.constant dense<0.000000e+00> : vector<56x192xf32>
    %256 = tpu.matmul %253, %255, %cst_113 {dimension_numbers = #tpu.dot_dimension_numbers<[1], [0], [0], [1], [0, 0, 1, 1], [], []>} : vector<56x64xbf16>, vector<64x192xbf16>, vector<56x192xf32> -> vector<56x192xf32>
    %c1_114 = arith.constant 1 : index
    %c0_115 = arith.constant 0 : index
    %c0_116 = arith.constant 0 : index
    %257 = vector.load %arg7[%c1_114, %c0_115, %c0_116] : memref<3x1x192xf32, #tpu.memory_space<vmem>>, vector<1x1x192xf32>
    %258 = vector.shape_cast %257 : vector<1x1x192xf32> to vector<1x192xf32>
    %259 = vector.broadcast %258 : vector<1x192xf32> to vector<56x192xf32>
    %260 = arith.addf %256, %259 : vector<56x192xf32>
    %261 = vector.extract_strided_slice %260 {offsets = [0, 0], sizes = [56, 64], strides = [1, 1]} : vector<56x192xf32> to vector<56x64xf32>
    %262 = vector.shape_cast %261 : vector<56x64xf32> to vector<1x56x64xf32>
    %263 = arith.truncf %262 : vector<1x56x64xf32> to vector<1x56x64xbf16>
    %264 = vector.extract_strided_slice %260 {offsets = [0, 64], sizes = [56, 64], strides = [1, 1]} : vector<56x192xf32> to vector<56x64xf32>
    %265 = vector.shape_cast %264 : vector<56x64xf32> to vector<1x56x64xf32>
    %266 = arith.truncf %265 : vector<1x56x64xf32> to vector<1x56x64xbf16>
    %267 = vector.extract_strided_slice %260 {offsets = [0, 128], sizes = [56, 64], strides = [1, 1]} : vector<56x192xf32> to vector<56x64xf32>
    %268 = vector.shape_cast %267 : vector<56x64xf32> to vector<1x56x64xf32>
    %269 = arith.truncf %268 : vector<1x56x64xf32> to vector<1x56x64xbf16>
    %270 = vector.extract_strided_slice %263 {offsets = [0, 0, 0], sizes = [1, 56, 16], strides = [1, 1, 1]} : vector<1x56x64xbf16> to vector<1x56x16xbf16>
    %271 = vector.extract_strided_slice %266 {offsets = [0, 0, 0], sizes = [1, 56, 16], strides = [1, 1, 1]} : vector<1x56x64xbf16> to vector<1x56x16xbf16>
    "tpu.trace_start"() <{level = 10 : i32, message = "bqd,bkd->bqk"}> : () -> ()
    %cst_117 = arith.constant dense<0.000000e+00> : vector<1x56x56xf32>
    %272 = tpu.matmul %270, %271, %cst_117 {dimension_numbers = #tpu.dot_dimension_numbers<[2], [2], [1], [1], [0, 0, 0, 1, 1, 1], [0], [0]>} : vector<1x56x16xbf16>, vector<1x56x16xbf16>, vector<1x56x56xf32> -> vector<1x56x56xf32>
    "tpu.trace_stop"() : () -> ()
    %273 = vector.broadcast %13 : vector<1x1x56xf32> to vector<1x56x56xf32>
    %274 = arith.addf %272, %273 : vector<1x56x56xf32>
    %cst_118 = arith.constant dense<0xFF800000> : vector<1x56xf32>
    %275 = vector.multi_reduction <maximumf>, %274, %cst_118 [2] : vector<1x56x56xf32> to vector<1x56xf32>
    %276 = vector.shape_cast %275 : vector<1x56xf32> to vector<1x56x1xf32>
    %277 = vector.broadcast %276 : vector<1x56x1xf32> to vector<1x56x56xf32>
    %278 = arith.subf %274, %277 : vector<1x56x56xf32>
    %279 = math.exp %278 : vector<1x56x56xf32>
    %cst_119 = arith.constant dense<0.000000e+00> : vector<1x56xf32>
    %280 = vector.multi_reduction <add>, %279, %cst_119 [2] : vector<1x56x56xf32> to vector<1x56xf32>
    %281 = vector.shape_cast %280 : vector<1x56xf32> to vector<1x56x1xf32>
    %282 = tpu.reciprocal %281 {approx = true} : vector<1x56x1xf32> -> vector<1x56x1xf32>
    %283 = vector.broadcast %282 : vector<1x56x1xf32> to vector<1x56x56xf32>
    %284 = arith.mulf %279, %283 : vector<1x56x56xf32>
    %285 = arith.truncf %284 : vector<1x56x56xf32> to vector<1x56x56xbf16>
    %286 = vector.extract_strided_slice %269 {offsets = [0, 0, 0], sizes = [1, 56, 16], strides = [1, 1, 1]} : vector<1x56x64xbf16> to vector<1x56x16xbf16>
    "tpu.trace_start"() <{level = 10 : i32, message = "bqk,bkd->bqd"}> : () -> ()
    %cst_120 = arith.constant dense<0.000000e+00> : vector<1x56x16xf32>
    %287 = tpu.matmul %285, %286, %cst_120 {dimension_numbers = #tpu.dot_dimension_numbers<[2], [1], [1], [2], [0, 0, 0, 1, 1, 2], [0], [0]>} : vector<1x56x56xbf16>, vector<1x56x16xbf16>, vector<1x56x16xf32> -> vector<1x56x16xf32>
    "tpu.trace_stop"() : () -> ()
    %c0_121 = arith.constant 0 : index
    %c0_122 = arith.constant 0 : index
    %c0_123 = arith.constant 0 : index
    %288 = vector.load %arg21[%c0_121, %c0_122, %c0_123] : memref<1x56x64xf32, #tpu.memory_space<vmem>>, vector<1x56x16xf32>
    tpu.vector_store %arg21[%c0_121, %c0_122, %c0_123], %287 {strides = array<i32>} : memref<1x56x64xf32, #tpu.memory_space<vmem>>, vector<1x56x16xf32>,
    %289 = vector.extract_strided_slice %263 {offsets = [0, 0, 16], sizes = [1, 56, 16], strides = [1, 1, 1]} : vector<1x56x64xbf16> to vector<1x56x16xbf16>
    %290 = vector.extract_strided_slice %266 {offsets = [0, 0, 16], sizes = [1, 56, 16], strides = [1, 1, 1]} : vector<1x56x64xbf16> to vector<1x56x16xbf16>
    "tpu.trace_start"() <{level = 10 : i32, message = "bqd,bkd->bqk"}> : () -> ()
    %cst_124 = arith.constant dense<0.000000e+00> : vector<1x56x56xf32>
    %291 = tpu.matmul %289, %290, %cst_124 {dimension_numbers = #tpu.dot_dimension_numbers<[2], [2], [1], [1], [0, 0, 0, 1, 1, 1], [0], [0]>} : vector<1x56x16xbf16>, vector<1x56x16xbf16>, vector<1x56x56xf32> -> vector<1x56x56xf32>
    "tpu.trace_stop"() : () -> ()
    %292 = vector.broadcast %13 : vector<1x1x56xf32> to vector<1x56x56xf32>
    %293 = arith.addf %291, %292 : vector<1x56x56xf32>
    %cst_125 = arith.constant dense<0xFF800000> : vector<1x56xf32>
    %294 = vector.multi_reduction <maximumf>, %293, %cst_125 [2] : vector<1x56x56xf32> to vector<1x56xf32>
    %295 = vector.shape_cast %294 : vector<1x56xf32> to vector<1x56x1xf32>
    %296 = vector.broadcast %295 : vector<1x56x1xf32> to vector<1x56x56xf32>
    %297 = arith.subf %293, %296 : vector<1x56x56xf32>
    %298 = math.exp %297 : vector<1x56x56xf32>
    %cst_126 = arith.constant dense<0.000000e+00> : vector<1x56xf32>
    %299 = vector.multi_reduction <add>, %298, %cst_126 [2] : vector<1x56x56xf32> to vector<1x56xf32>
    %300 = vector.shape_cast %299 : vector<1x56xf32> to vector<1x56x1xf32>
    %301 = tpu.reciprocal %300 {approx = true} : vector<1x56x1xf32> -> vector<1x56x1xf32>
    %302 = vector.broadcast %301 : vector<1x56x1xf32> to vector<1x56x56xf32>
    %303 = arith.mulf %298, %302 : vector<1x56x56xf32>
    %304 = arith.truncf %303 : vector<1x56x56xf32> to vector<1x56x56xbf16>
    %305 = vector.extract_strided_slice %269 {offsets = [0, 0, 16], sizes = [1, 56, 16], strides = [1, 1, 1]} : vector<1x56x64xbf16> to vector<1x56x16xbf16>
    "tpu.trace_start"() <{level = 10 : i32, message = "bqk,bkd->bqd"}> : () -> ()
    %cst_127 = arith.constant dense<0.000000e+00> : vector<1x56x16xf32>
    %306 = tpu.matmul %304, %305, %cst_127 {dimension_numbers = #tpu.dot_dimension_numbers<[2], [1], [1], [2], [0, 0, 0, 1, 1, 2], [0], [0]>} : vector<1x56x56xbf16>, vector<1x56x16xbf16>, vector<1x56x16xf32> -> vector<1x56x16xf32>
    "tpu.trace_stop"() : () -> ()
    %c0_128 = arith.constant 0 : index
    %c0_129 = arith.constant 0 : index
    %c16_130 = arith.constant 16 : index
    %307 = vector.load %arg21[%c0_128, %c0_129, %c16_130] : memref<1x56x64xf32, #tpu.memory_space<vmem>>, vector<1x56x16xf32>
    tpu.vector_store %arg21[%c0_128, %c0_129, %c16_130], %306 {strides = array<i32>} : memref<1x56x64xf32, #tpu.memory_space<vmem>>, vector<1x56x16xf32>,
    %308 = vector.extract_strided_slice %263 {offsets = [0, 0, 32], sizes = [1, 56, 16], strides = [1, 1, 1]} : vector<1x56x64xbf16> to vector<1x56x16xbf16>
    %309 = vector.extract_strided_slice %266 {offsets = [0, 0, 32], sizes = [1, 56, 16], strides = [1, 1, 1]} : vector<1x56x64xbf16> to vector<1x56x16xbf16>
    "tpu.trace_start"() <{level = 10 : i32, message = "bqd,bkd->bqk"}> : () -> ()
    %cst_131 = arith.constant dense<0.000000e+00> : vector<1x56x56xf32>
    %310 = tpu.matmul %308, %309, %cst_131 {dimension_numbers = #tpu.dot_dimension_numbers<[2], [2], [1], [1], [0, 0, 0, 1, 1, 1], [0], [0]>} : vector<1x56x16xbf16>, vector<1x56x16xbf16>, vector<1x56x56xf32> -> vector<1x56x56xf32>
    "tpu.trace_stop"() : () -> ()
    %311 = vector.broadcast %13 : vector<1x1x56xf32> to vector<1x56x56xf32>
    %312 = arith.addf %310, %311 : vector<1x56x56xf32>
    %cst_132 = arith.constant dense<0xFF800000> : vector<1x56xf32>
    %313 = vector.multi_reduction <maximumf>, %312, %cst_132 [2] : vector<1x56x56xf32> to vector<1x56xf32>
    %314 = vector.shape_cast %313 : vector<1x56xf32> to vector<1x56x1xf32>
    %315 = vector.broadcast %314 : vector<1x56x1xf32> to vector<1x56x56xf32>
    %316 = arith.subf %312, %315 : vector<1x56x56xf32>
    %317 = math.exp %316 : vector<1x56x56xf32>
    %cst_133 = arith.constant dense<0.000000e+00> : vector<1x56xf32>
    %318 = vector.multi_reduction <add>, %317, %cst_133 [2] : vector<1x56x56xf32> to vector<1x56xf32>
    %319 = vector.shape_cast %318 : vector<1x56xf32> to vector<1x56x1xf32>
    %320 = tpu.reciprocal %319 {approx = true} : vector<1x56x1xf32> -> vector<1x56x1xf32>
    %321 = vector.broadcast %320 : vector<1x56x1xf32> to vector<1x56x56xf32>
    %322 = arith.mulf %317, %321 : vector<1x56x56xf32>
    %323 = arith.truncf %322 : vector<1x56x56xf32> to vector<1x56x56xbf16>
    %324 = vector.extract_strided_slice %269 {offsets = [0, 0, 32], sizes = [1, 56, 16], strides = [1, 1, 1]} : vector<1x56x64xbf16> to vector<1x56x16xbf16>
    "tpu.trace_start"() <{level = 10 : i32, message = "bqk,bkd->bqd"}> : () -> ()
    %cst_134 = arith.constant dense<0.000000e+00> : vector<1x56x16xf32>
    %325 = tpu.matmul %323, %324, %cst_134 {dimension_numbers = #tpu.dot_dimension_numbers<[2], [1], [1], [2], [0, 0, 0, 1, 1, 2], [0], [0]>} : vector<1x56x56xbf16>, vector<1x56x16xbf16>, vector<1x56x16xf32> -> vector<1x56x16xf32>
    "tpu.trace_stop"() : () -> ()
    %c0_135 = arith.constant 0 : index
    %c0_136 = arith.constant 0 : index
    %c32_137 = arith.constant 32 : index
    %326 = vector.load %arg21[%c0_135, %c0_136, %c32_137] : memref<1x56x64xf32, #tpu.memory_space<vmem>>, vector<1x56x16xf32>
    tpu.vector_store %arg21[%c0_135, %c0_136, %c32_137], %325 {strides = array<i32>} : memref<1x56x64xf32, #tpu.memory_space<vmem>>, vector<1x56x16xf32>,
    %327 = vector.extract_strided_slice %263 {offsets = [0, 0, 48], sizes = [1, 56, 16], strides = [1, 1, 1]} : vector<1x56x64xbf16> to vector<1x56x16xbf16>
    %328 = vector.extract_strided_slice %266 {offsets = [0, 0, 48], sizes = [1, 56, 16], strides = [1, 1, 1]} : vector<1x56x64xbf16> to vector<1x56x16xbf16>
    "tpu.trace_start"() <{level = 10 : i32, message = "bqd,bkd->bqk"}> : () -> ()
    %cst_138 = arith.constant dense<0.000000e+00> : vector<1x56x56xf32>
    %329 = tpu.matmul %327, %328, %cst_138 {dimension_numbers = #tpu.dot_dimension_numbers<[2], [2], [1], [1], [0, 0, 0, 1, 1, 1], [0], [0]>} : vector<1x56x16xbf16>, vector<1x56x16xbf16>, vector<1x56x56xf32> -> vector<1x56x56xf32>
    "tpu.trace_stop"() : () -> ()
    %330 = vector.broadcast %13 : vector<1x1x56xf32> to vector<1x56x56xf32>
    %331 = arith.addf %329, %330 : vector<1x56x56xf32>
    %cst_139 = arith.constant dense<0xFF800000> : vector<1x56xf32>
    %332 = vector.multi_reduction <maximumf>, %331, %cst_139 [2] : vector<1x56x56xf32> to vector<1x56xf32>
    %333 = vector.shape_cast %332 : vector<1x56xf32> to vector<1x56x1xf32>
    %334 = vector.broadcast %333 : vector<1x56x1xf32> to vector<1x56x56xf32>
    %335 = arith.subf %331, %334 : vector<1x56x56xf32>
    %336 = math.exp %335 : vector<1x56x56xf32>
    %cst_140 = arith.constant dense<0.000000e+00> : vector<1x56xf32>
    %337 = vector.multi_reduction <add>, %336, %cst_140 [2] : vector<1x56x56xf32> to vector<1x56xf32>
    %338 = vector.shape_cast %337 : vector<1x56xf32> to vector<1x56x1xf32>
    %339 = tpu.reciprocal %338 {approx = true} : vector<1x56x1xf32> -> vector<1x56x1xf32>
    %340 = vector.broadcast %339 : vector<1x56x1xf32> to vector<1x56x56xf32>
    %341 = arith.mulf %336, %340 : vector<1x56x56xf32>
    %342 = arith.truncf %341 : vector<1x56x56xf32> to vector<1x56x56xbf16>
    %343 = vector.extract_strided_slice %269 {offsets = [0, 0, 48], sizes = [1, 56, 16], strides = [1, 1, 1]} : vector<1x56x64xbf16> to vector<1x56x16xbf16>
    "tpu.trace_start"() <{level = 10 : i32, message = "bqk,bkd->bqd"}> : () -> ()
    %cst_141 = arith.constant dense<0.000000e+00> : vector<1x56x16xf32>
    %344 = tpu.matmul %342, %343, %cst_141 {dimension_numbers = #tpu.dot_dimension_numbers<[2], [1], [1], [2], [0, 0, 0, 1, 1, 2], [0], [0]>} : vector<1x56x56xbf16>, vector<1x56x16xbf16>, vector<1x56x16xf32> -> vector<1x56x16xf32>
    "tpu.trace_stop"() : () -> ()
    %c0_142 = arith.constant 0 : index
    %c0_143 = arith.constant 0 : index
    %c48_144 = arith.constant 48 : index
    %345 = vector.load %arg21[%c0_142, %c0_143, %c48_144] : memref<1x56x64xf32, #tpu.memory_space<vmem>>, vector<1x56x16xf32>
    tpu.vector_store %arg21[%c0_142, %c0_143, %c48_144], %344 {strides = array<i32>} : memref<1x56x64xf32, #tpu.memory_space<vmem>>, vector<1x56x16xf32>,
    %c0_145 = arith.constant 0 : index
    %c0_146 = arith.constant 0 : index
    %c0_147 = arith.constant 0 : index
    %346 = vector.load %arg21[%c0_145, %c0_146, %c0_147] : memref<1x56x64xf32, #tpu.memory_space<vmem>>, vector<1x56x64xf32>
    %347 = vector.shape_cast %346 : vector<1x56x64xf32> to vector<56x64xf32>
    %348 = arith.truncf %347 : vector<56x64xf32> to vector<56x64xbf16>
    %c1_148 = arith.constant 1 : index
    %c0_149 = arith.constant 0 : index
    %c0_150 = arith.constant 0 : index
    %349 = vector.load %arg8[%c1_148, %c0_149, %c0_150] : memref<3x64x64xbf16, #tpu.memory_space<vmem>>, vector<1x64x64xbf16>
    %350 = vector.shape_cast %349 : vector<1x64x64xbf16> to vector<64x64xbf16>
    %cst_151 = arith.constant dense<0.000000e+00> : vector<56x64xf32>
    %351 = tpu.matmul %348, %350, %cst_151 {dimension_numbers = #tpu.dot_dimension_numbers<[1], [0], [0], [1], [0, 0, 1, 1], [], []>} : vector<56x64xbf16>, vector<64x64xbf16>, vector<56x64xf32> -> vector<56x64xf32>
    %c1_152 = arith.constant 1 : index
    %c0_153 = arith.constant 0 : index
    %c0_154 = arith.constant 0 : index
    %352 = vector.load %arg9[%c1_152, %c0_153, %c0_154] : memref<3x1x64xf32, #tpu.memory_space<vmem>>, vector<1x1x64xf32>
    %353 = vector.shape_cast %352 : vector<1x1x64xf32> to vector<1x64xf32>
    %354 = vector.broadcast %353 : vector<1x64xf32> to vector<56x64xf32>
    %355 = arith.addf %351, %354 : vector<56x64xf32>
    %356 = arith.addf %226, %355 : vector<56x64xf32>
    %c1_155 = arith.constant 1 : index
    %c0_156 = arith.constant 0 : index
    %c0_157 = arith.constant 0 : index
    %357 = vector.load %arg10[%c1_155, %c0_156, %c0_157] : memref<3x1x64xf32, #tpu.memory_space<vmem>>, vector<1x1x64xf32>
    %358 = vector.shape_cast %357 : vector<1x1x64xf32> to vector<1x64xf32>
    %c1_158 = arith.constant 1 : index
    %c0_159 = arith.constant 0 : index
    %c0_160 = arith.constant 0 : index
    %359 = vector.load %arg11[%c1_158, %c0_159, %c0_160] : memref<3x1x64xf32, #tpu.memory_space<vmem>>, vector<1x1x64xf32>
    %360 = vector.shape_cast %359 : vector<1x1x64xf32> to vector<1x64xf32>
    %cst_161 = arith.constant dense<0.000000e+00> : vector<56xf32>
    %361 = vector.multi_reduction <add>, %356, %cst_161 [1] : vector<56x64xf32> to vector<56xf32>
    %362 = vector.shape_cast %361 : vector<56xf32> to vector<56x1xf32>
    %cst_162 = arith.constant 6.400000e+01 : f32
    %363 = vector.broadcast %cst_162 : f32 to vector<56x1xf32>
    %364 = arith.divf %362, %363 : vector<56x1xf32>
    %365 = vector.broadcast %364 : vector<56x1xf32> to vector<56x64xf32>
    %366 = arith.subf %356, %365 : vector<56x64xf32>
    %367 = arith.mulf %366, %366 : vector<56x64xf32>
    %cst_163 = arith.constant dense<0.000000e+00> : vector<56xf32>
    %368 = vector.multi_reduction <add>, %367, %cst_163 [1] : vector<56x64xf32> to vector<56xf32>
    %369 = vector.shape_cast %368 : vector<56xf32> to vector<56x1xf32>
    %cst_164 = arith.constant 6.400000e+01 : f32
    %370 = vector.broadcast %cst_164 : f32 to vector<56x1xf32>
    %371 = arith.divf %369, %370 : vector<56x1xf32>
    %372 = vector.broadcast %364 : vector<56x1xf32> to vector<56x64xf32>
    %373 = arith.subf %356, %372 : vector<56x64xf32>
    %cst_165 = arith.constant 9.99999974E-6 : f32
    %374 = vector.broadcast %cst_165 : f32 to vector<56x1xf32>
    %375 = arith.addf %371, %374 : vector<56x1xf32>
    %376 = math.rsqrt %375 : vector<56x1xf32>
    %377 = vector.broadcast %376 : vector<56x1xf32> to vector<56x64xf32>
    %378 = arith.mulf %373, %377 : vector<56x64xf32>
    %379 = vector.broadcast %358 : vector<1x64xf32> to vector<56x64xf32>
    %380 = arith.mulf %378, %379 : vector<56x64xf32>
    %381 = vector.broadcast %360 : vector<1x64xf32> to vector<56x64xf32>
    %382 = arith.addf %380, %381 : vector<56x64xf32>
    %383 = arith.truncf %382 : vector<56x64xf32> to vector<56x64xbf16>
    %c1_166 = arith.constant 1 : index
    %c0_167 = arith.constant 0 : index
    %c0_168 = arith.constant 0 : index
    %384 = vector.load %arg12[%c1_166, %c0_167, %c0_168] : memref<3x64x256xbf16, #tpu.memory_space<vmem>>, vector<1x64x256xbf16>
    %385 = vector.shape_cast %384 : vector<1x64x256xbf16> to vector<64x256xbf16>
    %cst_169 = arith.constant dense<0.000000e+00> : vector<56x256xf32>
    %386 = tpu.matmul %383, %385, %cst_169 {dimension_numbers = #tpu.dot_dimension_numbers<[1], [0], [0], [1], [0, 0, 1, 1], [], []>} : vector<56x64xbf16>, vector<64x256xbf16>, vector<56x256xf32> -> vector<56x256xf32>
    %c1_170 = arith.constant 1 : index
    %c0_171 = arith.constant 0 : index
    %c0_172 = arith.constant 0 : index
    %387 = vector.load %arg13[%c1_170, %c0_171, %c0_172] : memref<3x1x256xf32, #tpu.memory_space<vmem>>, vector<1x1x256xf32>
    %388 = vector.shape_cast %387 : vector<1x1x256xf32> to vector<1x256xf32>
    %389 = vector.broadcast %388 : vector<1x256xf32> to vector<56x256xf32>
    %390 = arith.addf %386, %389 : vector<56x256xf32>
    %cst_173 = arith.constant 5.000000e-01 : f32
    %391 = vector.broadcast %cst_173 : f32 to vector<56x256xf32>
    %392 = arith.mulf %391, %390 : vector<56x256xf32>
    %cst_174 = arith.constant 0.707106769 : f32
    %393 = vector.broadcast %cst_174 : f32 to vector<56x256xf32>
    %394 = arith.mulf %390, %393 : vector<56x256xf32>
    %395 = math.absf %394 : vector<56x256xf32>
    %cst_175 = arith.constant 0.327591091 : f32
    %396 = vector.broadcast %cst_175 : f32 to vector<56x256xf32>
    %397 = arith.mulf %396, %395 : vector<56x256xf32>
    %cst_176 = arith.constant 1.000000e+00 : f32
    %398 = vector.broadcast %cst_176 : f32 to vector<56x256xf32>
    %399 = arith.addf %398, %397 : vector<56x256xf32>
    %cst_177 = arith.constant 1.000000e+00 : f32
    %400 = vector.broadcast %cst_177 : f32 to vector<56x256xf32>
    %401 = arith.divf %400, %399 : vector<56x256xf32>
    %cst_178 = arith.constant 1.06140542 : f32
    %402 = vector.broadcast %cst_178 : f32 to vector<56x256xf32>
    %403 = arith.mulf %402, %401 : vector<56x256xf32>
    %cst_179 = arith.constant -1.45315206 : f32
    %404 = vector.broadcast %cst_179 : f32 to vector<56x256xf32>
    %405 = arith.addf %403, %404 : vector<56x256xf32>
    %406 = arith.mulf %405, %401 : vector<56x256xf32>
    %cst_180 = arith.constant 1.42141378 : f32
    %407 = vector.broadcast %cst_180 : f32 to vector<56x256xf32>
    %408 = arith.addf %406, %407 : vector<56x256xf32>
    %409 = arith.mulf %408, %401 : vector<56x256xf32>
    %cst_181 = arith.constant -0.284496725 : f32
    %410 = vector.broadcast %cst_181 : f32 to vector<56x256xf32>
    %411 = arith.addf %409, %410 : vector<56x256xf32>
    %412 = arith.mulf %411, %401 : vector<56x256xf32>
    %cst_182 = arith.constant 0.254829586 : f32
    %413 = vector.broadcast %cst_182 : f32 to vector<56x256xf32>
    %414 = arith.addf %412, %413 : vector<56x256xf32>
    %415 = arith.mulf %414, %401 : vector<56x256xf32>
    %cst_183 = arith.constant 0.000000e+00 : f32
    %416 = vector.broadcast %cst_183 : f32 to vector<56x256xf32>
    %417 = arith.subf %416, %395 : vector<56x256xf32>
    %418 = arith.mulf %417, %395 : vector<56x256xf32>
    %419 = math.exp %418 : vector<56x256xf32>
    %420 = arith.mulf %415, %419 : vector<56x256xf32>
    %cst_184 = arith.constant 1.000000e+00 : f32
    %421 = vector.broadcast %cst_184 : f32 to vector<56x256xf32>
    %422 = arith.subf %421, %420 : vector<56x256xf32>
    %cst_185 = arith.constant 0.000000e+00 : f32
    %423 = vector.broadcast %cst_185 : f32 to vector<56x256xf32>
    %424 = arith.cmpf oge, %394, %423 : vector<56x256xf32>
    %cst_186 = arith.constant 0.000000e+00 : f32
    %425 = vector.broadcast %cst_186 : f32 to vector<56x256xf32>
    %426 = arith.subf %425, %422 : vector<56x256xf32>
    %427 = arith.select %424, %422, %426 : vector<56x256xi1>, vector<56x256xf32>
    %cst_187 = arith.constant 1.000000e+00 : f32
    %428 = vector.broadcast %cst_187 : f32 to vector<56x256xf32>
    %429 = arith.addf %428, %427 : vector<56x256xf32>
    %430 = arith.mulf %392, %429 : vector<56x256xf32>
    %431 = arith.truncf %430 : vector<56x256xf32> to vector<56x256xbf16>
    %c1_188 = arith.constant 1 : index
    %c0_189 = arith.constant 0 : index
    %c0_190 = arith.constant 0 : index
    %432 = vector.load %arg14[%c1_188, %c0_189, %c0_190] : memref<3x256x64xbf16, #tpu.memory_space<vmem>>, vector<1x256x64xbf16>
    %433 = vector.shape_cast %432 : vector<1x256x64xbf16> to vector<256x64xbf16>
    %cst_191 = arith.constant dense<0.000000e+00> : vector<56x64xf32>
    %434 = tpu.matmul %431, %433, %cst_191 {dimension_numbers = #tpu.dot_dimension_numbers<[1], [0], [0], [1], [0, 0, 1, 1], [], []>} : vector<56x256xbf16>, vector<256x64xbf16>, vector<56x64xf32> -> vector<56x64xf32>
    %c1_192 = arith.constant 1 : index
    %c0_193 = arith.constant 0 : index
    %c0_194 = arith.constant 0 : index
    %435 = vector.load %arg15[%c1_192, %c0_193, %c0_194] : memref<3x1x64xf32, #tpu.memory_space<vmem>>, vector<1x1x64xf32>
    %436 = vector.shape_cast %435 : vector<1x1x64xf32> to vector<1x64xf32>
    %437 = vector.broadcast %436 : vector<1x64xf32> to vector<56x64xf32>
    %438 = arith.addf %434, %437 : vector<56x64xf32>
    %439 = arith.addf %356, %438 : vector<56x64xf32>
    %c2 = arith.constant 2 : index
    %c0_195 = arith.constant 0 : index
    %c0_196 = arith.constant 0 : index
    %440 = vector.load %arg4[%c2, %c0_195, %c0_196] : memref<3x1x64xf32, #tpu.memory_space<vmem>>, vector<1x1x64xf32>
    %441 = vector.shape_cast %440 : vector<1x1x64xf32> to vector<1x64xf32>
    %c2_197 = arith.constant 2 : index
    %c0_198 = arith.constant 0 : index
    %c0_199 = arith.constant 0 : index
    %442 = vector.load %arg5[%c2_197, %c0_198, %c0_199] : memref<3x1x64xf32, #tpu.memory_space<vmem>>, vector<1x1x64xf32>
    %443 = vector.shape_cast %442 : vector<1x1x64xf32> to vector<1x64xf32>
    %cst_200 = arith.constant dense<0.000000e+00> : vector<56xf32>
    %444 = vector.multi_reduction <add>, %439, %cst_200 [1] : vector<56x64xf32> to vector<56xf32>
    %445 = vector.shape_cast %444 : vector<56xf32> to vector<56x1xf32>
    %cst_201 = arith.constant 6.400000e+01 : f32
    %446 = vector.broadcast %cst_201 : f32 to vector<56x1xf32>
    %447 = arith.divf %445, %446 : vector<56x1xf32>
    %448 = vector.broadcast %447 : vector<56x1xf32> to vector<56x64xf32>
    %449 = arith.subf %439, %448 : vector<56x64xf32>
    %450 = arith.mulf %449, %449 : vector<56x64xf32>
    %cst_202 = arith.constant dense<0.000000e+00> : vector<56xf32>
    %451 = vector.multi_reduction <add>, %450, %cst_202 [1] : vector<56x64xf32> to vector<56xf32>
    %452 = vector.shape_cast %451 : vector<56xf32> to vector<56x1xf32>
    %cst_203 = arith.constant 6.400000e+01 : f32
    %453 = vector.broadcast %cst_203 : f32 to vector<56x1xf32>
    %454 = arith.divf %452, %453 : vector<56x1xf32>
    %455 = vector.broadcast %447 : vector<56x1xf32> to vector<56x64xf32>
    %456 = arith.subf %439, %455 : vector<56x64xf32>
    %cst_204 = arith.constant 9.99999974E-6 : f32
    %457 = vector.broadcast %cst_204 : f32 to vector<56x1xf32>
    %458 = arith.addf %454, %457 : vector<56x1xf32>
    %459 = math.rsqrt %458 : vector<56x1xf32>
    %460 = vector.broadcast %459 : vector<56x1xf32> to vector<56x64xf32>
    %461 = arith.mulf %456, %460 : vector<56x64xf32>
    %462 = vector.broadcast %441 : vector<1x64xf32> to vector<56x64xf32>
    %463 = arith.mulf %461, %462 : vector<56x64xf32>
    %464 = vector.broadcast %443 : vector<1x64xf32> to vector<56x64xf32>
    %465 = arith.addf %463, %464 : vector<56x64xf32>
    %466 = arith.truncf %465 : vector<56x64xf32> to vector<56x64xbf16>
    %c2_205 = arith.constant 2 : index
    %c0_206 = arith.constant 0 : index
    %c0_207 = arith.constant 0 : index
    %467 = vector.load %arg6[%c2_205, %c0_206, %c0_207] : memref<3x64x192xbf16, #tpu.memory_space<vmem>>, vector<1x64x192xbf16>
    %468 = vector.shape_cast %467 : vector<1x64x192xbf16> to vector<64x192xbf16>
    %cst_208 = arith.constant dense<0.000000e+00> : vector<56x192xf32>
    %469 = tpu.matmul %466, %468, %cst_208 {dimension_numbers = #tpu.dot_dimension_numbers<[1], [0], [0], [1], [0, 0, 1, 1], [], []>} : vector<56x64xbf16>, vector<64x192xbf16>, vector<56x192xf32> -> vector<56x192xf32>
    %c2_209 = arith.constant 2 : index
    %c0_210 = arith.constant 0 : index
    %c0_211 = arith.constant 0 : index
    %470 = vector.load %arg7[%c2_209, %c0_210, %c0_211] : memref<3x1x192xf32, #tpu.memory_space<vmem>>, vector<1x1x192xf32>
    %471 = vector.shape_cast %470 : vector<1x1x192xf32> to vector<1x192xf32>
    %472 = vector.broadcast %471 : vector<1x192xf32> to vector<56x192xf32>
    %473 = arith.addf %469, %472 : vector<56x192xf32>
    %474 = vector.extract_strided_slice %473 {offsets = [0, 0], sizes = [56, 64], strides = [1, 1]} : vector<56x192xf32> to vector<56x64xf32>
    %475 = vector.shape_cast %474 : vector<56x64xf32> to vector<1x56x64xf32>
    %476 = arith.truncf %475 : vector<1x56x64xf32> to vector<1x56x64xbf16>
    %477 = vector.extract_strided_slice %473 {offsets = [0, 64], sizes = [56, 64], strides = [1, 1]} : vector<56x192xf32> to vector<56x64xf32>
    %478 = vector.shape_cast %477 : vector<56x64xf32> to vector<1x56x64xf32>
    %479 = arith.truncf %478 : vector<1x56x64xf32> to vector<1x56x64xbf16>
    %480 = vector.extract_strided_slice %473 {offsets = [0, 128], sizes = [56, 64], strides = [1, 1]} : vector<56x192xf32> to vector<56x64xf32>
    %481 = vector.shape_cast %480 : vector<56x64xf32> to vector<1x56x64xf32>
    %482 = arith.truncf %481 : vector<1x56x64xf32> to vector<1x56x64xbf16>
    %483 = vector.extract_strided_slice %476 {offsets = [0, 0, 0], sizes = [1, 56, 16], strides = [1, 1, 1]} : vector<1x56x64xbf16> to vector<1x56x16xbf16>
    %484 = vector.extract_strided_slice %479 {offsets = [0, 0, 0], sizes = [1, 56, 16], strides = [1, 1, 1]} : vector<1x56x64xbf16> to vector<1x56x16xbf16>
    "tpu.trace_start"() <{level = 10 : i32, message = "bqd,bkd->bqk"}> : () -> ()
    %cst_212 = arith.constant dense<0.000000e+00> : vector<1x56x56xf32>
    %485 = tpu.matmul %483, %484, %cst_212 {dimension_numbers = #tpu.dot_dimension_numbers<[2], [2], [1], [1], [0, 0, 0, 1, 1, 1], [0], [0]>} : vector<1x56x16xbf16>, vector<1x56x16xbf16>, vector<1x56x56xf32> -> vector<1x56x56xf32>
    "tpu.trace_stop"() : () -> ()
    %486 = vector.broadcast %13 : vector<1x1x56xf32> to vector<1x56x56xf32>
    %487 = arith.addf %485, %486 : vector<1x56x56xf32>
    %cst_213 = arith.constant dense<0xFF800000> : vector<1x56xf32>
    %488 = vector.multi_reduction <maximumf>, %487, %cst_213 [2] : vector<1x56x56xf32> to vector<1x56xf32>
    %489 = vector.shape_cast %488 : vector<1x56xf32> to vector<1x56x1xf32>
    %490 = vector.broadcast %489 : vector<1x56x1xf32> to vector<1x56x56xf32>
    %491 = arith.subf %487, %490 : vector<1x56x56xf32>
    %492 = math.exp %491 : vector<1x56x56xf32>
    %cst_214 = arith.constant dense<0.000000e+00> : vector<1x56xf32>
    %493 = vector.multi_reduction <add>, %492, %cst_214 [2] : vector<1x56x56xf32> to vector<1x56xf32>
    %494 = vector.shape_cast %493 : vector<1x56xf32> to vector<1x56x1xf32>
    %495 = tpu.reciprocal %494 {approx = true} : vector<1x56x1xf32> -> vector<1x56x1xf32>
    %496 = vector.broadcast %495 : vector<1x56x1xf32> to vector<1x56x56xf32>
    %497 = arith.mulf %492, %496 : vector<1x56x56xf32>
    %498 = arith.truncf %497 : vector<1x56x56xf32> to vector<1x56x56xbf16>
    %499 = vector.extract_strided_slice %482 {offsets = [0, 0, 0], sizes = [1, 56, 16], strides = [1, 1, 1]} : vector<1x56x64xbf16> to vector<1x56x16xbf16>
    "tpu.trace_start"() <{level = 10 : i32, message = "bqk,bkd->bqd"}> : () -> ()
    %cst_215 = arith.constant dense<0.000000e+00> : vector<1x56x16xf32>
    %500 = tpu.matmul %498, %499, %cst_215 {dimension_numbers = #tpu.dot_dimension_numbers<[2], [1], [1], [2], [0, 0, 0, 1, 1, 2], [0], [0]>} : vector<1x56x56xbf16>, vector<1x56x16xbf16>, vector<1x56x16xf32> -> vector<1x56x16xf32>
    "tpu.trace_stop"() : () -> ()
    %c0_216 = arith.constant 0 : index
    %c0_217 = arith.constant 0 : index
    %c0_218 = arith.constant 0 : index
    %501 = vector.load %arg21[%c0_216, %c0_217, %c0_218] : memref<1x56x64xf32, #tpu.memory_space<vmem>>, vector<1x56x16xf32>
    tpu.vector_store %arg21[%c0_216, %c0_217, %c0_218], %500 {strides = array<i32>} : memref<1x56x64xf32, #tpu.memory_space<vmem>>, vector<1x56x16xf32>,
    %502 = vector.extract_strided_slice %476 {offsets = [0, 0, 16], sizes = [1, 56, 16], strides = [1, 1, 1]} : vector<1x56x64xbf16> to vector<1x56x16xbf16>
    %503 = vector.extract_strided_slice %479 {offsets = [0, 0, 16], sizes = [1, 56, 16], strides = [1, 1, 1]} : vector<1x56x64xbf16> to vector<1x56x16xbf16>
    "tpu.trace_start"() <{level = 10 : i32, message = "bqd,bkd->bqk"}> : () -> ()
    %cst_219 = arith.constant dense<0.000000e+00> : vector<1x56x56xf32>
    %504 = tpu.matmul %502, %503, %cst_219 {dimension_numbers = #tpu.dot_dimension_numbers<[2], [2], [1], [1], [0, 0, 0, 1, 1, 1], [0], [0]>} : vector<1x56x16xbf16>, vector<1x56x16xbf16>, vector<1x56x56xf32> -> vector<1x56x56xf32>
    "tpu.trace_stop"() : () -> ()
    %505 = vector.broadcast %13 : vector<1x1x56xf32> to vector<1x56x56xf32>
    %506 = arith.addf %504, %505 : vector<1x56x56xf32>
    %cst_220 = arith.constant dense<0xFF800000> : vector<1x56xf32>
    %507 = vector.multi_reduction <maximumf>, %506, %cst_220 [2] : vector<1x56x56xf32> to vector<1x56xf32>
    %508 = vector.shape_cast %507 : vector<1x56xf32> to vector<1x56x1xf32>
    %509 = vector.broadcast %508 : vector<1x56x1xf32> to vector<1x56x56xf32>
    %510 = arith.subf %506, %509 : vector<1x56x56xf32>
    %511 = math.exp %510 : vector<1x56x56xf32>
    %cst_221 = arith.constant dense<0.000000e+00> : vector<1x56xf32>
    %512 = vector.multi_reduction <add>, %511, %cst_221 [2] : vector<1x56x56xf32> to vector<1x56xf32>
    %513 = vector.shape_cast %512 : vector<1x56xf32> to vector<1x56x1xf32>
    %514 = tpu.reciprocal %513 {approx = true} : vector<1x56x1xf32> -> vector<1x56x1xf32>
    %515 = vector.broadcast %514 : vector<1x56x1xf32> to vector<1x56x56xf32>
    %516 = arith.mulf %511, %515 : vector<1x56x56xf32>
    %517 = arith.truncf %516 : vector<1x56x56xf32> to vector<1x56x56xbf16>
    %518 = vector.extract_strided_slice %482 {offsets = [0, 0, 16], sizes = [1, 56, 16], strides = [1, 1, 1]} : vector<1x56x64xbf16> to vector<1x56x16xbf16>
    "tpu.trace_start"() <{level = 10 : i32, message = "bqk,bkd->bqd"}> : () -> ()
    %cst_222 = arith.constant dense<0.000000e+00> : vector<1x56x16xf32>
    %519 = tpu.matmul %517, %518, %cst_222 {dimension_numbers = #tpu.dot_dimension_numbers<[2], [1], [1], [2], [0, 0, 0, 1, 1, 2], [0], [0]>} : vector<1x56x56xbf16>, vector<1x56x16xbf16>, vector<1x56x16xf32> -> vector<1x56x16xf32>
    "tpu.trace_stop"() : () -> ()
    %c0_223 = arith.constant 0 : index
    %c0_224 = arith.constant 0 : index
    %c16_225 = arith.constant 16 : index
    %520 = vector.load %arg21[%c0_223, %c0_224, %c16_225] : memref<1x56x64xf32, #tpu.memory_space<vmem>>, vector<1x56x16xf32>
    tpu.vector_store %arg21[%c0_223, %c0_224, %c16_225], %519 {strides = array<i32>} : memref<1x56x64xf32, #tpu.memory_space<vmem>>, vector<1x56x16xf32>,
    %521 = vector.extract_strided_slice %476 {offsets = [0, 0, 32], sizes = [1, 56, 16], strides = [1, 1, 1]} : vector<1x56x64xbf16> to vector<1x56x16xbf16>
    %522 = vector.extract_strided_slice %479 {offsets = [0, 0, 32], sizes = [1, 56, 16], strides = [1, 1, 1]} : vector<1x56x64xbf16> to vector<1x56x16xbf16>
    "tpu.trace_start"() <{level = 10 : i32, message = "bqd,bkd->bqk"}> : () -> ()
    %cst_226 = arith.constant dense<0.000000e+00> : vector<1x56x56xf32>
    %523 = tpu.matmul %521, %522, %cst_226 {dimension_numbers = #tpu.dot_dimension_numbers<[2], [2], [1], [1], [0, 0, 0, 1, 1, 1], [0], [0]>} : vector<1x56x16xbf16>, vector<1x56x16xbf16>, vector<1x56x56xf32> -> vector<1x56x56xf32>
    "tpu.trace_stop"() : () -> ()
    %524 = vector.broadcast %13 : vector<1x1x56xf32> to vector<1x56x56xf32>
    %525 = arith.addf %523, %524 : vector<1x56x56xf32>
    %cst_227 = arith.constant dense<0xFF800000> : vector<1x56xf32>
    %526 = vector.multi_reduction <maximumf>, %525, %cst_227 [2] : vector<1x56x56xf32> to vector<1x56xf32>
    %527 = vector.shape_cast %526 : vector<1x56xf32> to vector<1x56x1xf32>
    %528 = vector.broadcast %527 : vector<1x56x1xf32> to vector<1x56x56xf32>
    %529 = arith.subf %525, %528 : vector<1x56x56xf32>
    %530 = math.exp %529 : vector<1x56x56xf32>
    %cst_228 = arith.constant dense<0.000000e+00> : vector<1x56xf32>
    %531 = vector.multi_reduction <add>, %530, %cst_228 [2] : vector<1x56x56xf32> to vector<1x56xf32>
    %532 = vector.shape_cast %531 : vector<1x56xf32> to vector<1x56x1xf32>
    %533 = tpu.reciprocal %532 {approx = true} : vector<1x56x1xf32> -> vector<1x56x1xf32>
    %534 = vector.broadcast %533 : vector<1x56x1xf32> to vector<1x56x56xf32>
    %535 = arith.mulf %530, %534 : vector<1x56x56xf32>
    %536 = arith.truncf %535 : vector<1x56x56xf32> to vector<1x56x56xbf16>
    %537 = vector.extract_strided_slice %482 {offsets = [0, 0, 32], sizes = [1, 56, 16], strides = [1, 1, 1]} : vector<1x56x64xbf16> to vector<1x56x16xbf16>
    "tpu.trace_start"() <{level = 10 : i32, message = "bqk,bkd->bqd"}> : () -> ()
    %cst_229 = arith.constant dense<0.000000e+00> : vector<1x56x16xf32>
    %538 = tpu.matmul %536, %537, %cst_229 {dimension_numbers = #tpu.dot_dimension_numbers<[2], [1], [1], [2], [0, 0, 0, 1, 1, 2], [0], [0]>} : vector<1x56x56xbf16>, vector<1x56x16xbf16>, vector<1x56x16xf32> -> vector<1x56x16xf32>
    "tpu.trace_stop"() : () -> ()
    %c0_230 = arith.constant 0 : index
    %c0_231 = arith.constant 0 : index
    %c32_232 = arith.constant 32 : index
    %539 = vector.load %arg21[%c0_230, %c0_231, %c32_232] : memref<1x56x64xf32, #tpu.memory_space<vmem>>, vector<1x56x16xf32>
    tpu.vector_store %arg21[%c0_230, %c0_231, %c32_232], %538 {strides = array<i32>} : memref<1x56x64xf32, #tpu.memory_space<vmem>>, vector<1x56x16xf32>,
    %540 = vector.extract_strided_slice %476 {offsets = [0, 0, 48], sizes = [1, 56, 16], strides = [1, 1, 1]} : vector<1x56x64xbf16> to vector<1x56x16xbf16>
    %541 = vector.extract_strided_slice %479 {offsets = [0, 0, 48], sizes = [1, 56, 16], strides = [1, 1, 1]} : vector<1x56x64xbf16> to vector<1x56x16xbf16>
    "tpu.trace_start"() <{level = 10 : i32, message = "bqd,bkd->bqk"}> : () -> ()
    %cst_233 = arith.constant dense<0.000000e+00> : vector<1x56x56xf32>
    %542 = tpu.matmul %540, %541, %cst_233 {dimension_numbers = #tpu.dot_dimension_numbers<[2], [2], [1], [1], [0, 0, 0, 1, 1, 1], [0], [0]>} : vector<1x56x16xbf16>, vector<1x56x16xbf16>, vector<1x56x56xf32> -> vector<1x56x56xf32>
    "tpu.trace_stop"() : () -> ()
    %543 = vector.broadcast %13 : vector<1x1x56xf32> to vector<1x56x56xf32>
    %544 = arith.addf %542, %543 : vector<1x56x56xf32>
    %cst_234 = arith.constant dense<0xFF800000> : vector<1x56xf32>
    %545 = vector.multi_reduction <maximumf>, %544, %cst_234 [2] : vector<1x56x56xf32> to vector<1x56xf32>
    %546 = vector.shape_cast %545 : vector<1x56xf32> to vector<1x56x1xf32>
    %547 = vector.broadcast %546 : vector<1x56x1xf32> to vector<1x56x56xf32>
    %548 = arith.subf %544, %547 : vector<1x56x56xf32>
    %549 = math.exp %548 : vector<1x56x56xf32>
    %cst_235 = arith.constant dense<0.000000e+00> : vector<1x56xf32>
    %550 = vector.multi_reduction <add>, %549, %cst_235 [2] : vector<1x56x56xf32> to vector<1x56xf32>
    %551 = vector.shape_cast %550 : vector<1x56xf32> to vector<1x56x1xf32>
    %552 = tpu.reciprocal %551 {approx = true} : vector<1x56x1xf32> -> vector<1x56x1xf32>
    %553 = vector.broadcast %552 : vector<1x56x1xf32> to vector<1x56x56xf32>
    %554 = arith.mulf %549, %553 : vector<1x56x56xf32>
    %555 = arith.truncf %554 : vector<1x56x56xf32> to vector<1x56x56xbf16>
    %556 = vector.extract_strided_slice %482 {offsets = [0, 0, 48], sizes = [1, 56, 16], strides = [1, 1, 1]} : vector<1x56x64xbf16> to vector<1x56x16xbf16>
    "tpu.trace_start"() <{level = 10 : i32, message = "bqk,bkd->bqd"}> : () -> ()
    %cst_236 = arith.constant dense<0.000000e+00> : vector<1x56x16xf32>
    %557 = tpu.matmul %555, %556, %cst_236 {dimension_numbers = #tpu.dot_dimension_numbers<[2], [1], [1], [2], [0, 0, 0, 1, 1, 2], [0], [0]>} : vector<1x56x56xbf16>, vector<1x56x16xbf16>, vector<1x56x16xf32> -> vector<1x56x16xf32>
    "tpu.trace_stop"() : () -> ()
    %c0_237 = arith.constant 0 : index
    %c0_238 = arith.constant 0 : index
    %c48_239 = arith.constant 48 : index
    %558 = vector.load %arg21[%c0_237, %c0_238, %c48_239] : memref<1x56x64xf32, #tpu.memory_space<vmem>>, vector<1x56x16xf32>
    tpu.vector_store %arg21[%c0_237, %c0_238, %c48_239], %557 {strides = array<i32>} : memref<1x56x64xf32, #tpu.memory_space<vmem>>, vector<1x56x16xf32>,
    %c0_240 = arith.constant 0 : index
    %c0_241 = arith.constant 0 : index
    %c0_242 = arith.constant 0 : index
    %559 = vector.load %arg21[%c0_240, %c0_241, %c0_242] : memref<1x56x64xf32, #tpu.memory_space<vmem>>, vector<1x56x64xf32>
    %560 = vector.shape_cast %559 : vector<1x56x64xf32> to vector<56x64xf32>
    %561 = arith.truncf %560 : vector<56x64xf32> to vector<56x64xbf16>
    %c2_243 = arith.constant 2 : index
    %c0_244 = arith.constant 0 : index
    %c0_245 = arith.constant 0 : index
    %562 = vector.load %arg8[%c2_243, %c0_244, %c0_245] : memref<3x64x64xbf16, #tpu.memory_space<vmem>>, vector<1x64x64xbf16>
    %563 = vector.shape_cast %562 : vector<1x64x64xbf16> to vector<64x64xbf16>
    %cst_246 = arith.constant dense<0.000000e+00> : vector<56x64xf32>
    %564 = tpu.matmul %561, %563, %cst_246 {dimension_numbers = #tpu.dot_dimension_numbers<[1], [0], [0], [1], [0, 0, 1, 1], [], []>} : vector<56x64xbf16>, vector<64x64xbf16>, vector<56x64xf32> -> vector<56x64xf32>
    %c2_247 = arith.constant 2 : index
    %c0_248 = arith.constant 0 : index
    %c0_249 = arith.constant 0 : index
    %565 = vector.load %arg9[%c2_247, %c0_248, %c0_249] : memref<3x1x64xf32, #tpu.memory_space<vmem>>, vector<1x1x64xf32>
    %566 = vector.shape_cast %565 : vector<1x1x64xf32> to vector<1x64xf32>
    %567 = vector.broadcast %566 : vector<1x64xf32> to vector<56x64xf32>
    %568 = arith.addf %564, %567 : vector<56x64xf32>
    %569 = arith.addf %439, %568 : vector<56x64xf32>
    %c2_250 = arith.constant 2 : index
    %c0_251 = arith.constant 0 : index
    %c0_252 = arith.constant 0 : index
    %570 = vector.load %arg10[%c2_250, %c0_251, %c0_252] : memref<3x1x64xf32, #tpu.memory_space<vmem>>, vector<1x1x64xf32>
    %571 = vector.shape_cast %570 : vector<1x1x64xf32> to vector<1x64xf32>
    %c2_253 = arith.constant 2 : index
    %c0_254 = arith.constant 0 : index
    %c0_255 = arith.constant 0 : index
    %572 = vector.load %arg11[%c2_253, %c0_254, %c0_255] : memref<3x1x64xf32, #tpu.memory_space<vmem>>, vector<1x1x64xf32>
    %573 = vector.shape_cast %572 : vector<1x1x64xf32> to vector<1x64xf32>
    %cst_256 = arith.constant dense<0.000000e+00> : vector<56xf32>
    %574 = vector.multi_reduction <add>, %569, %cst_256 [1] : vector<56x64xf32> to vector<56xf32>
    %575 = vector.shape_cast %574 : vector<56xf32> to vector<56x1xf32>
    %cst_257 = arith.constant 6.400000e+01 : f32
    %576 = vector.broadcast %cst_257 : f32 to vector<56x1xf32>
    %577 = arith.divf %575, %576 : vector<56x1xf32>
    %578 = vector.broadcast %577 : vector<56x1xf32> to vector<56x64xf32>
    %579 = arith.subf %569, %578 : vector<56x64xf32>
    %580 = arith.mulf %579, %579 : vector<56x64xf32>
    %cst_258 = arith.constant dense<0.000000e+00> : vector<56xf32>
    %581 = vector.multi_reduction <add>, %580, %cst_258 [1] : vector<56x64xf32> to vector<56xf32>
    %582 = vector.shape_cast %581 : vector<56xf32> to vector<56x1xf32>
    %cst_259 = arith.constant 6.400000e+01 : f32
    %583 = vector.broadcast %cst_259 : f32 to vector<56x1xf32>
    %584 = arith.divf %582, %583 : vector<56x1xf32>
    %585 = vector.broadcast %577 : vector<56x1xf32> to vector<56x64xf32>
    %586 = arith.subf %569, %585 : vector<56x64xf32>
    %cst_260 = arith.constant 9.99999974E-6 : f32
    %587 = vector.broadcast %cst_260 : f32 to vector<56x1xf32>
    %588 = arith.addf %584, %587 : vector<56x1xf32>
    %589 = math.rsqrt %588 : vector<56x1xf32>
    %590 = vector.broadcast %589 : vector<56x1xf32> to vector<56x64xf32>
    %591 = arith.mulf %586, %590 : vector<56x64xf32>
    %592 = vector.broadcast %571 : vector<1x64xf32> to vector<56x64xf32>
    %593 = arith.mulf %591, %592 : vector<56x64xf32>
    %594 = vector.broadcast %573 : vector<1x64xf32> to vector<56x64xf32>
    %595 = arith.addf %593, %594 : vector<56x64xf32>
    %596 = arith.truncf %595 : vector<56x64xf32> to vector<56x64xbf16>
    %c2_261 = arith.constant 2 : index
    %c0_262 = arith.constant 0 : index
    %c0_263 = arith.constant 0 : index
    %597 = vector.load %arg12[%c2_261, %c0_262, %c0_263] : memref<3x64x256xbf16, #tpu.memory_space<vmem>>, vector<1x64x256xbf16>
    %598 = vector.shape_cast %597 : vector<1x64x256xbf16> to vector<64x256xbf16>
    %cst_264 = arith.constant dense<0.000000e+00> : vector<56x256xf32>
    %599 = tpu.matmul %596, %598, %cst_264 {dimension_numbers = #tpu.dot_dimension_numbers<[1], [0], [0], [1], [0, 0, 1, 1], [], []>} : vector<56x64xbf16>, vector<64x256xbf16>, vector<56x256xf32> -> vector<56x256xf32>
    %c2_265 = arith.constant 2 : index
    %c0_266 = arith.constant 0 : index
    %c0_267 = arith.constant 0 : index
    %600 = vector.load %arg13[%c2_265, %c0_266, %c0_267] : memref<3x1x256xf32, #tpu.memory_space<vmem>>, vector<1x1x256xf32>
    %601 = vector.shape_cast %600 : vector<1x1x256xf32> to vector<1x256xf32>
    %602 = vector.broadcast %601 : vector<1x256xf32> to vector<56x256xf32>
    %603 = arith.addf %599, %602 : vector<56x256xf32>
    %cst_268 = arith.constant 5.000000e-01 : f32
    %604 = vector.broadcast %cst_268 : f32 to vector<56x256xf32>
    %605 = arith.mulf %604, %603 : vector<56x256xf32>
    %cst_269 = arith.constant 0.707106769 : f32
    %606 = vector.broadcast %cst_269 : f32 to vector<56x256xf32>
    %607 = arith.mulf %603, %606 : vector<56x256xf32>
    %608 = math.absf %607 : vector<56x256xf32>
    %cst_270 = arith.constant 0.327591091 : f32
    %609 = vector.broadcast %cst_270 : f32 to vector<56x256xf32>
    %610 = arith.mulf %609, %608 : vector<56x256xf32>
    %cst_271 = arith.constant 1.000000e+00 : f32
    %611 = vector.broadcast %cst_271 : f32 to vector<56x256xf32>
    %612 = arith.addf %611, %610 : vector<56x256xf32>
    %cst_272 = arith.constant 1.000000e+00 : f32
    %613 = vector.broadcast %cst_272 : f32 to vector<56x256xf32>
    %614 = arith.divf %613, %612 : vector<56x256xf32>
    %cst_273 = arith.constant 1.06140542 : f32
    %615 = vector.broadcast %cst_273 : f32 to vector<56x256xf32>
    %616 = arith.mulf %615, %614 : vector<56x256xf32>
    %cst_274 = arith.constant -1.45315206 : f32
    %617 = vector.broadcast %cst_274 : f32 to vector<56x256xf32>
    %618 = arith.addf %616, %617 : vector<56x256xf32>
    %619 = arith.mulf %618, %614 : vector<56x256xf32>
    %cst_275 = arith.constant 1.42141378 : f32
    %620 = vector.broadcast %cst_275 : f32 to vector<56x256xf32>
    %621 = arith.addf %619, %620 : vector<56x256xf32>
    %622 = arith.mulf %621, %614 : vector<56x256xf32>
    %cst_276 = arith.constant -0.284496725 : f32
    %623 = vector.broadcast %cst_276 : f32 to vector<56x256xf32>
    %624 = arith.addf %622, %623 : vector<56x256xf32>
    %625 = arith.mulf %624, %614 : vector<56x256xf32>
    %cst_277 = arith.constant 0.254829586 : f32
    %626 = vector.broadcast %cst_277 : f32 to vector<56x256xf32>
    %627 = arith.addf %625, %626 : vector<56x256xf32>
    %628 = arith.mulf %627, %614 : vector<56x256xf32>
    %cst_278 = arith.constant 0.000000e+00 : f32
    %629 = vector.broadcast %cst_278 : f32 to vector<56x256xf32>
    %630 = arith.subf %629, %608 : vector<56x256xf32>
    %631 = arith.mulf %630, %608 : vector<56x256xf32>
    %632 = math.exp %631 : vector<56x256xf32>
    %633 = arith.mulf %628, %632 : vector<56x256xf32>
    %cst_279 = arith.constant 1.000000e+00 : f32
    %634 = vector.broadcast %cst_279 : f32 to vector<56x256xf32>
    %635 = arith.subf %634, %633 : vector<56x256xf32>
    %cst_280 = arith.constant 0.000000e+00 : f32
    %636 = vector.broadcast %cst_280 : f32 to vector<56x256xf32>
    %637 = arith.cmpf oge, %607, %636 : vector<56x256xf32>
    %cst_281 = arith.constant 0.000000e+00 : f32
    %638 = vector.broadcast %cst_281 : f32 to vector<56x256xf32>
    %639 = arith.subf %638, %635 : vector<56x256xf32>
    %640 = arith.select %637, %635, %639 : vector<56x256xi1>, vector<56x256xf32>
    %cst_282 = arith.constant 1.000000e+00 : f32
    %641 = vector.broadcast %cst_282 : f32 to vector<56x256xf32>
    %642 = arith.addf %641, %640 : vector<56x256xf32>
    %643 = arith.mulf %605, %642 : vector<56x256xf32>
    %644 = arith.truncf %643 : vector<56x256xf32> to vector<56x256xbf16>
    %c2_283 = arith.constant 2 : index
    %c0_284 = arith.constant 0 : index
    %c0_285 = arith.constant 0 : index
    %645 = vector.load %arg14[%c2_283, %c0_284, %c0_285] : memref<3x256x64xbf16, #tpu.memory_space<vmem>>, vector<1x256x64xbf16>
    %646 = vector.shape_cast %645 : vector<1x256x64xbf16> to vector<256x64xbf16>
    %cst_286 = arith.constant dense<0.000000e+00> : vector<56x64xf32>
    %647 = tpu.matmul %644, %646, %cst_286 {dimension_numbers = #tpu.dot_dimension_numbers<[1], [0], [0], [1], [0, 0, 1, 1], [], []>} : vector<56x256xbf16>, vector<256x64xbf16>, vector<56x64xf32> -> vector<56x64xf32>
    %c2_287 = arith.constant 2 : index
    %c0_288 = arith.constant 0 : index
    %c0_289 = arith.constant 0 : index
    %648 = vector.load %arg15[%c2_287, %c0_288, %c0_289] : memref<3x1x64xf32, #tpu.memory_space<vmem>>, vector<1x1x64xf32>
    %649 = vector.shape_cast %648 : vector<1x1x64xf32> to vector<1x64xf32>
    %650 = vector.broadcast %649 : vector<1x64xf32> to vector<56x64xf32>
    %651 = arith.addf %647, %650 : vector<56x64xf32>
    %652 = arith.addf %569, %651 : vector<56x64xf32>
    %653 = vector.shape_cast %652 : vector<56x64xf32> to vector<1x56x64xf32>
    %654 = vector.extract_strided_slice %653 {offsets = [0, 0, 0], sizes = [1, 1, 64], strides = [1, 1, 1]} : vector<1x56x64xf32> to vector<1x1x64xf32>
    %655 = vector.shape_cast %654 : vector<1x1x64xf32> to vector<1x64xf32>
    %c0_290 = arith.constant 0 : index
    %c0_291 = arith.constant 0 : index
    %656 = vector.load %arg16[%c0_290, %c0_291] : memref<1x64xf32, #tpu.memory_space<vmem>>, vector<1x64xf32>
    %c0_292 = arith.constant 0 : index
    %c0_293 = arith.constant 0 : index
    %657 = vector.load %arg17[%c0_292, %c0_293] : memref<1x64xf32, #tpu.memory_space<vmem>>, vector<1x64xf32>
    %cst_294 = arith.constant dense<0.000000e+00> : vector<1xf32>
    %658 = vector.multi_reduction <add>, %655, %cst_294 [1] : vector<1x64xf32> to vector<1xf32>
    %659 = vector.shape_cast %658 : vector<1xf32> to vector<1x1xf32>
    %cst_295 = arith.constant 6.400000e+01 : f32
    %660 = vector.broadcast %cst_295 : f32 to vector<1x1xf32>
    %661 = arith.divf %659, %660 : vector<1x1xf32>
    %662 = vector.broadcast %661 : vector<1x1xf32> to vector<1x64xf32>
    %663 = arith.subf %655, %662 : vector<1x64xf32>
    %664 = arith.mulf %663, %663 : vector<1x64xf32>
    %cst_296 = arith.constant dense<0.000000e+00> : vector<1xf32>
    %665 = vector.multi_reduction <add>, %664, %cst_296 [1] : vector<1x64xf32> to vector<1xf32>
    %666 = vector.shape_cast %665 : vector<1xf32> to vector<1x1xf32>
    %cst_297 = arith.constant 6.400000e+01 : f32
    %667 = vector.broadcast %cst_297 : f32 to vector<1x1xf32>
    %668 = arith.divf %666, %667 : vector<1x1xf32>
    %669 = vector.broadcast %661 : vector<1x1xf32> to vector<1x64xf32>
    %670 = arith.subf %655, %669 : vector<1x64xf32>
    %cst_298 = arith.constant 9.99999974E-6 : f32
    %671 = vector.broadcast %cst_298 : f32 to vector<1x1xf32>
    %672 = arith.addf %668, %671 : vector<1x1xf32>
    %673 = math.rsqrt %672 : vector<1x1xf32>
    %674 = vector.broadcast %673 : vector<1x1xf32> to vector<1x64xf32>
    %675 = arith.mulf %670, %674 : vector<1x64xf32>
    %676 = arith.mulf %675, %656 : vector<1x64xf32>
    %677 = arith.addf %676, %657 : vector<1x64xf32>
    %678 = arith.truncf %677 : vector<1x64xf32> to vector<1x64xbf16>
    %c0_299 = arith.constant 0 : index
    %c0_300 = arith.constant 0 : index
    %679 = vector.load %arg18[%c0_299, %c0_300] : memref<64x128xbf16, #tpu.memory_space<vmem>>, vector<64x128xbf16>
    %cst_301 = arith.constant dense<0.000000e+00> : vector<1x128xf32>
    %680 = tpu.matmul %678, %679, %cst_301 {dimension_numbers = #tpu.dot_dimension_numbers<[1], [0], [0], [1], [0, 0, 1, 1], [], []>} : vector<1x64xbf16>, vector<64x128xbf16>, vector<1x128xf32> -> vector<1x128xf32>
    %c0_302 = arith.constant 0 : index
    %c0_303 = arith.constant 0 : index
    %681 = vector.load %arg19[%c0_302, %c0_303] : memref<1x128xf32, #tpu.memory_space<vmem>>, vector<1x128xf32>
    %682 = arith.addf %680, %681 : vector<1x128xf32>
    %c0_304 = arith.constant 0 : index
    %c0_305 = arith.constant 0 : index
    %c0_306 = arith.constant 0 : index
    %683 = vector.load %arg20[%c0_304, %c0_305, %c0_306] : memref<1x1x128xf32, #tpu.memory_space<vmem>>, vector<1x1x128xf32>
    %684 = vector.shape_cast %683 : vector<1x1x128xf32> to vector<1x128xf32>
    %685 = vector.shape_cast %682 : vector<1x128xf32> to vector<1x1x128xf32>
    tpu.vector_store %arg20[%c0_304, %c0_305, %c0_306], %685 {strides = array<i32>} : memref<1x1x128xf32, #tpu.memory_space<vmem>>, vector<1x1x128xf32>,
    return
  }
  func.func @transform_0(%arg0: i32) -> (i32, i32) {
    %c0_i32 = arith.constant 0 : i32
    %c0_i32_0 = arith.constant 0 : i32
    return %arg0, %c0_i32 : i32, i32
  }
  func.func @transform_1(%arg0: i32) -> (i32, i32) {
    %c0_i32 = arith.constant 0 : i32
    %c0_i32_0 = arith.constant 0 : i32
    %c0_i32_1 = arith.constant 0 : i32
    return %c0_i32, %c0_i32_0 : i32, i32
  }
  func.func @transform_2(%arg0: i32) -> (i32, i32) {
    %c0_i32 = arith.constant 0 : i32
    %c0_i32_0 = arith.constant 0 : i32
    %c0_i32_1 = arith.constant 0 : i32
    return %c0_i32, %c0_i32_0 : i32, i32
  }
  func.func @transform_3(%arg0: i32) -> (i32, i32, i32) {
    %c0_i32 = arith.constant 0 : i32
    %c0_i32_0 = arith.constant 0 : i32
    %c0_i32_1 = arith.constant 0 : i32
    %c0_i32_2 = arith.constant 0 : i32
    return %c0_i32, %c0_i32_0, %c0_i32_1 : i32, i32, i32
  }
  func.func @transform_4(%arg0: i32) -> (i32, i32, i32) {
    %c0_i32 = arith.constant 0 : i32
    %c0_i32_0 = arith.constant 0 : i32
    %c0_i32_1 = arith.constant 0 : i32
    %c0_i32_2 = arith.constant 0 : i32
    return %c0_i32, %c0_i32_0, %c0_i32_1 : i32, i32, i32
  }
  func.func @transform_5(%arg0: i32) -> (i32, i32, i32) {
    %c0_i32 = arith.constant 0 : i32
    %c0_i32_0 = arith.constant 0 : i32
    %c0_i32_1 = arith.constant 0 : i32
    %c0_i32_2 = arith.constant 0 : i32
    return %c0_i32, %c0_i32_0, %c0_i32_1 : i32, i32, i32
  }
  func.func @transform_6(%arg0: i32) -> (i32, i32, i32) {
    %c0_i32 = arith.constant 0 : i32
    %c0_i32_0 = arith.constant 0 : i32
    %c0_i32_1 = arith.constant 0 : i32
    %c0_i32_2 = arith.constant 0 : i32
    return %c0_i32, %c0_i32_0, %c0_i32_1 : i32, i32, i32
  }
  func.func @transform_7(%arg0: i32) -> (i32, i32, i32) {
    %c0_i32 = arith.constant 0 : i32
    %c0_i32_0 = arith.constant 0 : i32
    %c0_i32_1 = arith.constant 0 : i32
    %c0_i32_2 = arith.constant 0 : i32
    return %c0_i32, %c0_i32_0, %c0_i32_1 : i32, i32, i32
  }
  func.func @transform_8(%arg0: i32) -> (i32, i32, i32) {
    %c0_i32 = arith.constant 0 : i32
    %c0_i32_0 = arith.constant 0 : i32
    %c0_i32_1 = arith.constant 0 : i32
    %c0_i32_2 = arith.constant 0 : i32
    return %c0_i32, %c0_i32_0, %c0_i32_1 : i32, i32, i32
  }
  func.func @transform_9(%arg0: i32) -> (i32, i32, i32) {
    %c0_i32 = arith.constant 0 : i32
    %c0_i32_0 = arith.constant 0 : i32
    %c0_i32_1 = arith.constant 0 : i32
    %c0_i32_2 = arith.constant 0 : i32
    return %c0_i32, %c0_i32_0, %c0_i32_1 : i32, i32, i32
  }
  func.func @transform_10(%arg0: i32) -> (i32, i32, i32) {
    %c0_i32 = arith.constant 0 : i32
    %c0_i32_0 = arith.constant 0 : i32
    %c0_i32_1 = arith.constant 0 : i32
    %c0_i32_2 = arith.constant 0 : i32
    return %c0_i32, %c0_i32_0, %c0_i32_1 : i32, i32, i32
  }
  func.func @transform_11(%arg0: i32) -> (i32, i32, i32) {
    %c0_i32 = arith.constant 0 : i32
    %c0_i32_0 = arith.constant 0 : i32
    %c0_i32_1 = arith.constant 0 : i32
    %c0_i32_2 = arith.constant 0 : i32
    return %c0_i32, %c0_i32_0, %c0_i32_1 : i32, i32, i32
  }
  func.func @transform_12(%arg0: i32) -> (i32, i32, i32) {
    %c0_i32 = arith.constant 0 : i32
    %c0_i32_0 = arith.constant 0 : i32
    %c0_i32_1 = arith.constant 0 : i32
    %c0_i32_2 = arith.constant 0 : i32
    return %c0_i32, %c0_i32_0, %c0_i32_1 : i32, i32, i32
  }
  func.func @transform_13(%arg0: i32) -> (i32, i32, i32) {
    %c0_i32 = arith.constant 0 : i32
    %c0_i32_0 = arith.constant 0 : i32
    %c0_i32_1 = arith.constant 0 : i32
    %c0_i32_2 = arith.constant 0 : i32
    return %c0_i32, %c0_i32_0, %c0_i32_1 : i32, i32, i32
  }
  func.func @transform_14(%arg0: i32) -> (i32, i32, i32) {
    %c0_i32 = arith.constant 0 : i32
    %c0_i32_0 = arith.constant 0 : i32
    %c0_i32_1 = arith.constant 0 : i32
    %c0_i32_2 = arith.constant 0 : i32
    return %c0_i32, %c0_i32_0, %c0_i32_1 : i32, i32, i32
  }
  func.func @transform_15(%arg0: i32) -> (i32, i32) {
    %c0_i32 = arith.constant 0 : i32
    %c0_i32_0 = arith.constant 0 : i32
    %c0_i32_1 = arith.constant 0 : i32
    return %c0_i32, %c0_i32_0 : i32, i32
  }
  func.func @transform_16(%arg0: i32) -> (i32, i32) {
    %c0_i32 = arith.constant 0 : i32
    %c0_i32_0 = arith.constant 0 : i32
    %c0_i32_1 = arith.constant 0 : i32
    return %c0_i32, %c0_i32_0 : i32, i32
  }
  func.func @transform_17(%arg0: i32) -> (i32, i32) {
    %c0_i32 = arith.constant 0 : i32
    %c0_i32_0 = arith.constant 0 : i32
    %c0_i32_1 = arith.constant 0 : i32
    return %c0_i32, %c0_i32_0 : i32, i32
  }
  func.func @transform_18(%arg0: i32) -> (i32, i32) {
    %c0_i32 = arith.constant 0 : i32
    %c0_i32_0 = arith.constant 0 : i32
    %c0_i32_1 = arith.constant 0 : i32
    return %c0_i32, %c0_i32_0 : i32, i32
  }
  func.func @transform_19(%arg0: i32) -> (i32, i32, i32) {
    %c0_i32 = arith.constant 0 : i32
    %c0_i32_0 = arith.constant 0 : i32
    %c0_i32_1 = arith.constant 0 : i32
    return %arg0, %c0_i32, %c0_i32_0 : i32, i32, i32
  }
}

</mosaic_0001>

<llo_original>
// kernel: vit_forward.1
$region0: #{vit_forward.1}
  #allocation0 [shape = 'u32[]', space=smem, size = 0x4, offset = 0x4, fixed_abs, tag = 'smem constant byte address 0x4 - core index']
  #allocation1 [shape = 'u32[72,128]{1,0:T(1,128)}', space=vmem, size = 0x9000, scoped, tag = 'internal scratch']
  #allocation2 [shape = 'f32[1,56,64]{2,1,0:T(8,128)}', space=vmem, size = 0x7000, scoped, tag = 'scratch operand']
  %s0 = inlined_call_operand.vmem [shape: bf16[112,16], index: 0, kind: input, shape index: {}]
  %s1 = inlined_call_operand.vmem [shape: bf16[16,64], index: 1, kind: input, shape index: {}]
  %s2 = inlined_call_operand.vmem [shape: f32[56,64], index: 2, kind: input, shape index: {}]
  %s3 = inlined_call_operand.vmem [shape: f32[3,1,64], index: 3, kind: input, shape index: {}]
  %s4 = inlined_call_operand.vmem [shape: f32[3,1,64], index: 4, kind: input, shape index: {}]
  %s5 = inlined_call_operand.vmem [shape: bf16[3,64,192], index: 5, kind: input, shape index: {}]
  %s6 = inlined_call_operand.vmem [shape: f32[3,1,192], index: 6, kind: input, shape index: {}]
  %s7 = inlined_call_operand.vmem [shape: bf16[3,64,64], index: 7, kind: input, shape index: {}]
  %s8 = inlined_call_operand.vmem [shape: f32[3,1,64], index: 8, kind: input, shape index: {}]
  %s9 = inlined_call_operand.vmem [shape: f32[3,1,64], index: 9, kind: input, shape index: {}]
  %s10 = inlined_call_operand.vmem [shape: f32[3,1,64], index: 10, kind: input, shape index: {}]
  %s11 = inlined_call_operand.vmem [shape: bf16[3,64,256], index: 11, kind: input, shape index: {}]
  %s12 = inlined_call_operand.vmem [shape: f32[3,1,256], index: 12, kind: input, shape index: {}]
  %s13 = inlined_call_operand.vmem [shape: bf16[3,256,64], index: 13, kind: input, shape index: {}]
  %s14 = inlined_call_operand.vmem [shape: f32[3,1,64], index: 14, kind: input, shape index: {}]
  %s15 = inlined_call_operand.vmem [shape: f32[1,64], index: 15, kind: input, shape index: {}]
  %s16 = inlined_call_operand.vmem [shape: f32[1,64], index: 16, kind: input, shape index: {}]
  %s17 = inlined_call_operand.vmem [shape: bf16[64,128], index: 17, kind: input, shape index: {}]
  %s18 = inlined_call_operand.vmem [shape: f32[1,128], index: 18, kind: input, shape index: {}]
  %s19 = inlined_call_operand.hbm [shape: f32[2,1,128], index: 19, kind: output, shape index: {}]
  %s20 = sld [smem:[#allocation0]]
  $region109: #{vit_forward.1} parent=0
    _
  %s22 = ssub.s32 1, %s20
  %s23 = scalar_select 0, %s22, %s20
  $region1: #{vit_forward.1} parent=0
    #allocation3 [shape = 'u8[1024]{0}', space=vmem, size = 0x400, scoped, tag = 'output window, operand 0']
    #allocation4 [shape = 's32[2]{0}', space=sflag, size = 0x8, scoped, tag = 'scoped memory for vit_forward.1']
    %24 = vsyncpa [#allocation4], 0
    %s25 = scalar_lea.sflag [#allocation4], 1
    %26 = vsyncpa %s25, 0
    loop: start=0, step=1, limit=4
    $region2: #{vit_forward.1} parent=1 // loop_pre_header
      _
    $region3: #{vit_forward.1} parent=1 // loop_header
      %s28 = sphi 0, %s32
      %p29 = scmp.ge.s32.totalorder %s28, 4
      %s38 = sphi 0, %s40
      %s41 = sphi 0, %s38
      %s42 = sphi 0, %s41
      %s58 = sphi 0, %s42
      %s62 = sphi 0, %s62
      %s64 = sphi 0, %s62
      %s65 = sphi 0, %s64
      %s79 = sphi 0, %s65
      %s83 = sphi 0, %s83
      %s85 = sphi 0, %s83
      %s86 = sphi 0, %s85
      %s100 = sphi 0, %s86
      %s104 = sphi 0, %s104
      %s106 = sphi 0, %s104
      %s107 = sphi 0, %s106
      %s121 = sphi 0, %s107
      %s125 = sphi 0, %s125
      %s127 = sphi 0, %s125
      %s128 = sphi 0, %s127
      %s142 = sphi 0, %s128
      %s146 = sphi 0, %s146
      %s148 = sphi 0, %s146
      %s149 = sphi 0, %s148
      %s163 = sphi 0, %s149
      %s167 = sphi 0, %s167
      %s169 = sphi 0, %s167
      %s170 = sphi 0, %s169
      %s184 = sphi 0, %s170
      %s188 = sphi 0, %s188
      %s190 = sphi 0, %s188
      %s191 = sphi 0, %s190
      %s205 = sphi 0, %s191
      %s209 = sphi 0, %s209
      %s211 = sphi 0, %s209
      %s212 = sphi 0, %s211
      %s226 = sphi 0, %s212
      %s230 = sphi 0, %s230
      %s232 = sphi 0, %s230
      %s233 = sphi 0, %s232
      %s247 = sphi 0, %s233
      %s251 = sphi 0, %s251
      %s253 = sphi 0, %s251
      %s254 = sphi 0, %s253
      %s268 = sphi 0, %s254
      %s272 = sphi 0, %s272
      %s274 = sphi 0, %s272
      %s275 = sphi 0, %s274
      %s289 = sphi 0, %s275
      %s293 = sphi 0, %s293
      %s295 = sphi 0, %s293
      %s296 = sphi 0, %s295
      %s310 = sphi 0, %s296
      %s314 = sphi 0, %s314
      %s316 = sphi 0, %s314
      %s317 = sphi 0, %s316
      %s331 = sphi 0, %s317
      %s335 = sphi 0, %s335
      %s337 = sphi 0, %s335
      %s338 = sphi 0, %s337
      %s352 = sphi 0, %s338
      %s356 = sphi 0, %s356
      %s358 = sphi 0, %s356
      %s359 = sphi 0, %s358
      %s373 = sphi 0, %s359
      %s377 = sphi 0, %s377
      %s379 = sphi 0, %s377
      %s380 = sphi 0, %s379
      %s394 = sphi 0, %s380
      %s398 = sphi 0, %s398
      %s400 = sphi 0, %s398
      %s401 = sphi 0, %s400
      %s415 = sphi 0, %s401
      %s419 = sphi 0, %s419
      %s421 = sphi 0, %s419
      %s422 = sphi 0, %s421
      %s436 = sphi 0, %s422
      %s442 = sphi 0, %s444
      %s445 = sphi 0, %s442
      %s446 = sphi 0, %s445
      %s462 = sphi 0, %s446
    $region4: #{vit_forward.1} parent=1 // loop_header_branch
      %31 = sbr.rel (%p29) target = $region8
    $region5: #{vit_forward.1} parent=1 // loop_body
      %s33 = ssub.s32 %s28, 1
      %s34 = ssub.s32 %s28, 2
      %s35 = sadd.s32 %s28, 1
      %s36 = ssub.s32 %s28, %s35
      %p37 = scmp.eq.s32.totalorder %s36, 0
      %s39 = sadd.s32 %s38, 1
      %s40 = scalar_select %p37, %s38, %s39
      %p43 = pneg %p37
      %p44 = scmp.eq.s32.totalorder %s28, 1
      %p45 = por %p43, %p44
      %p46 = scmp.ne.s32.totalorder %s38, %s41
      %p47 = scmp.eq.s32.totalorder %s28, 0
      %p48 = por %p46, %p47
      %p49 = scmp.ne.s32.totalorder %s38, %s41
      %p50 = scmp.eq.s32.totalorder %s33, 1
      %p51 = por %p49, %p50
      %p52 = scmp.ne.s32.totalorder %s41, %s42
      %p53 = scmp.eq.s32.totalorder %s33, 0
      %p54 = por %p52, %p53
      %p55 = scmp.ne.s32.totalorder %s41, %s42
      %p56 = scmp.eq.s32.totalorder %s34, 1
      %p57 = por %p55, %p56
      %p59 = scmp.ne.s32.totalorder %s42, %s58
      %p60 = scmp.eq.s32.totalorder %s34, 0
      %p61 = por %p59, %p60
      %s63 = sadd.s32 %s62, 1
      %p66 = scmp.eq.s32.totalorder %s28, 1
      %p67 = scmp.ne.s32.totalorder %s62, %s64
      %p68 = scmp.eq.s32.totalorder %s28, 0
      %p69 = por %p67, %p68
      %p70 = scmp.ne.s32.totalorder %s62, %s64
      %p71 = scmp.eq.s32.totalorder %s33, 1
      %p72 = por %p70, %p71
      %p73 = scmp.ne.s32.totalorder %s64, %s65
      %p74 = scmp.eq.s32.totalorder %s33, 0
      %p75 = por %p73, %p74
      %p76 = scmp.ne.s32.totalorder %s64, %s65
      %p77 = scmp.eq.s32.totalorder %s34, 1
      %p78 = por %p76, %p77
      %p80 = scmp.ne.s32.totalorder %s65, %s79
      %p81 = scmp.eq.s32.totalorder %s34, 0
      %p82 = por %p80, %p81
      %s84 = sadd.s32 %s83, 1
      %p87 = scmp.eq.s32.totalorder %s28, 1
      %p88 = scmp.ne.s32.totalorder %s83, %s85
      %p89 = scmp.eq.s32.totalorder %s28, 0
      %p90 = por %p88, %p89
      %p91 = scmp.ne.s32.totalorder %s83, %s85
      %p92 = scmp.eq.s32.totalorder %s33, 1
      %p93 = por %p91, %p92
      %p94 = scmp.ne.s32.totalorder %s85, %s86
      %p95 = scmp.eq.s32.totalorder %s33, 0
      %p96 = por %p94, %p95
      %p97 = scmp.ne.s32.totalorder %s85, %s86
      %p98 = scmp.eq.s32.totalorder %s34, 1
      %p99 = por %p97, %p98
      %p101 = scmp.ne.s32.totalorder %s86, %s100
      %p102 = scmp.eq.s32.totalorder %s34, 0
      %p103 = por %p101, %p102
      %s105 = sadd.s32 %s104, 1
      %p108 = scmp.eq.s32.totalorder %s28, 1
      %p109 = scmp.ne.s32.totalorder %s104, %s106
      %p110 = scmp.eq.s32.totalorder %s28, 0
      %p111 = por %p109, %p110
      %p112 = scmp.ne.s32.totalorder %s104, %s106
      %p113 = scmp.eq.s32.totalorder %s33, 1
      %p114 = por %p112, %p113
      %p115 = scmp.ne.s32.totalorder %s106, %s107
      %p116 = scmp.eq.s32.totalorder %s33, 0
      %p117 = por %p115, %p116
      %p118 = scmp.ne.s32.totalorder %s106, %s107
      %p119 = scmp.eq.s32.totalorder %s34, 1
      %p120 = por %p118, %p119
      %p122 = scmp.ne.s32.totalorder %s107, %s121
      %p123 = scmp.eq.s32.totalorder %s34, 0
      %p124 = por %p122, %p123
      %s126 = sadd.s32 %s125, 1
      %p129 = scmp.eq.s32.totalorder %s28, 1
      %p130 = scmp.ne.s32.totalorder %s125, %s127
      %p131 = scmp.eq.s32.totalorder %s28, 0
      %p132 = por %p130, %p131
      %p133 = scmp.ne.s32.totalorder %s125, %s127
      %p134 = scmp.eq.s32.totalorder %s33, 1
      %p135 = por %p133, %p134
      %p136 = scmp.ne.s32.totalorder %s127, %s128
      %p137 = scmp.eq.s32.totalorder %s33, 0
      %p138 = por %p136, %p137
      %p139 = scmp.ne.s32.totalorder %s127, %s128
      %p140 = scmp.eq.s32.totalorder %s34, 1
      %p141 = por %p139, %p140
      %p143 = scmp.ne.s32.totalorder %s128, %s142
      %p144 = scmp.eq.s32.totalorder %s34, 0
      %p145 = por %p143, %p144
      %s147 = sadd.s32 %s146, 1
      %p150 = scmp.eq.s32.totalorder %s28, 1
      %p151 = scmp.ne.s32.totalorder %s146, %s148
      %p152 = scmp.eq.s32.totalorder %s28, 0
      %p153 = por %p151, %p152
      %p154 = scmp.ne.s32.totalorder %s146, %s148
      %p155 = scmp.eq.s32.totalorder %s33, 1
      %p156 = por %p154, %p155
      %p157 = scmp.ne.s32.totalorder %s148, %s149
      %p158 = scmp.eq.s32.totalorder %s33, 0
      %p159 = por %p157, %p158
      %p160 = scmp.ne.s32.totalorder %s148, %s149
      %p161 = scmp.eq.s32.totalorder %s34, 1
      %p162 = por %p160, %p161
      %p164 = scmp.ne.s32.totalorder %s149, %s163
      %p165 = scmp.eq.s32.totalorder %s34, 0
      %p166 = por %p164, %p165
      %s168 = sadd.s32 %s167, 1
      %p171 = scmp.eq.s32.totalorder %s28, 1
      %p172 = scmp.ne.s32.totalorder %s167, %s169
      %p173 = scmp.eq.s32.totalorder %s28, 0
      %p174 = por %p172, %p173
      %p175 = scmp.ne.s32.totalorder %s167, %s169
      %p176 = scmp.eq.s32.totalorder %s33, 1
      %p177 = por %p175, %p176
      %p178 = scmp.ne.s32.totalorder %s169, %s170
      %p179 = scmp.eq.s32.totalorder %s33, 0
      %p180 = por %p178, %p179
      %p181 = scmp.ne.s32.totalorder %s169, %s170
      %p182 = scmp.eq.s32.totalorder %s34, 1
      %p183 = por %p181, %p182
      %p185 = scmp.ne.s32.totalorder %s170, %s184
      %p186 = scmp.eq.s32.totalorder %s34, 0
      %p187 = por %p185, %p186
      %s189 = sadd.s32 %s188, 1
      %p192 = scmp.eq.s32.totalorder %s28, 1
      %p193 = scmp.ne.s32.totalorder %s188, %s190
      %p194 = scmp.eq.s32.totalorder %s28, 0
      %p195 = por %p193, %p194
      %p196 = scmp.ne.s32.totalorder %s188, %s190
      %p197 = scmp.eq.s32.totalorder %s33, 1
      %p198 = por %p196, %p197
      %p199 = scmp.ne.s32.totalorder %s190, %s191
      %p200 = scmp.eq.s32.totalorder %s33, 0
      %p201 = por %p199, %p200
      %p202 = scmp.ne.s32.totalorder %s190, %s191
      %p203 = scmp.eq.s32.totalorder %s34, 1
      %p204 = por %p202, %p203
      %p206 = scmp.ne.s32.totalorder %s191, %s205
      %p207 = scmp.eq.s32.totalorder %s34, 0
      %p208 = por %p206, %p207
      %s210 = sadd.s32 %s209, 1
      %p213 = scmp.eq.s32.totalorder %s28, 1
      %p214 = scmp.ne.s32.totalorder %s209, %s211
      %p215 = scmp.eq.s32.totalorder %s28, 0
      %p216 = por %p214, %p215
      %p217 = scmp.ne.s32.totalorder %s209, %s211
      %p218 = scmp.eq.s32.totalorder %s33, 1
      %p219 = por %p217, %p218
      %p220 = scmp.ne.s32.totalorder %s211, %s212
      %p221 = scmp.eq.s32.totalorder %s33, 0
      %p222 = por %p220, %p221
      %p223 = scmp.ne.s32.totalorder %s211, %s212
      %p224 = scmp.eq.s32.totalorder %s34, 1
      %p225 = por %p223, %p224
      %p227 = scmp.ne.s32.totalorder %s212, %s226
      %p228 = scmp.eq.s32.totalorder %s34, 0
      %p229 = por %p227, %p228
      %s231 = sadd.s32 %s230, 1
      %p234 = scmp.eq.s32.totalorder %s28, 1
      %p235 = scmp.ne.s32.totalorder %s230, %s232
      %p236 = scmp.eq.s32.totalorder %s28, 0
      %p237 = por %p235, %p236
      %p238 = scmp.ne.s32.totalorder %s230, %s232
      %p239 = scmp.eq.s32.totalorder %s33, 1
      %p240 = por %p238, %p239
      %p241 = scmp.ne.s32.totalorder %s232, %s233
      %p242 = scmp.eq.s32.totalorder %s33, 0
      %p243 = por %p241, %p242
      %p244 = scmp.ne.s32.totalorder %s232, %s233
      %p245 = scmp.eq.s32.totalorder %s34, 1
      %p246 = por %p244, %p245
      %p248 = scmp.ne.s32.totalorder %s233, %s247
      %p249 = scmp.eq.s32.totalorder %s34, 0
      %p250 = por %p248, %p249
      %s252 = sadd.s32 %s251, 1
      %p255 = scmp.eq.s32.totalorder %s28, 1
      %p256 = scmp.ne.s32.totalorder %s251, %s253
      %p257 = scmp.eq.s32.totalorder %s28, 0
      %p258 = por %p256, %p257
      %p259 = scmp.ne.s32.totalorder %s251, %s253
      %p260 = scmp.eq.s32.totalorder %s33, 1
      %p261 = por %p259, %p260
      %p262 = scmp.ne.s32.totalorder %s253, %s254
      %p263 = scmp.eq.s32.totalorder %s33, 0
      %p264 = por %p262, %p263
      %p265 = scmp.ne.s32.totalorder %s253, %s254
      %p266 = scmp.eq.s32.totalorder %s34, 1
      %p267 = por %p265, %p266
      %p269 = scmp.ne.s32.totalorder %s254, %s268
      %p270 = scmp.eq.s32.totalorder %s34, 0
      %p271 = por %p269, %p270
      %s273 = sadd.s32 %s272, 1
      %p276 = scmp.eq.s32.totalorder %s28, 1
      %p277 = scmp.ne.s32.totalorder %s272, %s274
      %p278 = scmp.eq.s32.totalorder %s28, 0
      %p279 = por %p277, %p278
      %p280 = scmp.ne.s32.totalorder %s272, %s274
      %p281 = scmp.eq.s32.totalorder %s33, 1
      %p282 = por %p280, %p281
      %p283 = scmp.ne.s32.totalorder %s274, %s275
      %p284 = scmp.eq.s32.totalorder %s33, 0
      %p285 = por %p283, %p284
      %p286 = scmp.ne.s32.totalorder %s274, %s275
      %p287 = scmp.eq.s32.totalorder %s34, 1
      %p288 = por %p286, %p287
      %p290 = scmp.ne.s32.totalorder %s275, %s289
      %p291 = scmp.eq.s32.totalorder %s34, 0
      %p292 = por %p290, %p291
      %s294 = sadd.s32 %s293, 1
      %p297 = scmp.eq.s32.totalorder %s28, 1
      %p298 = scmp.ne.s32.totalorder %s293, %s295
      %p299 = scmp.eq.s32.totalorder %s28, 0
      %p300 = por %p298, %p299
      %p301 = scmp.ne.s32.totalorder %s293, %s295
      %p302 = scmp.eq.s32.totalorder %s33, 1
      %p303 = por %p301, %p302
      %p304 = scmp.ne.s32.totalorder %s295, %s296
      %p305 = scmp.eq.s32.totalorder %s33, 0
      %p306 = por %p304, %p305
      %p307 = scmp.ne.s32.totalorder %s295, %s296
      %p308 = scmp.eq.s32.totalorder %s34, 1
      %p309 = por %p307, %p308
      %p311 = scmp.ne.s32.totalorder %s296, %s310
      %p312 = scmp.eq.s32.totalorder %s34, 0
      %p313 = por %p311, %p312
      %s315 = sadd.s32 %s314, 1
      %p318 = scmp.eq.s32.totalorder %s28, 1
      %p319 = scmp.ne.s32.totalorder %s314, %s316
      %p320 = scmp.eq.s32.totalorder %s28, 0
      %p321 = por %p319, %p320
      %p322 = scmp.ne.s32.totalorder %s314, %s316
      %p323 = scmp.eq.s32.totalorder %s33, 1
      %p324 = por %p322, %p323
      %p325 = scmp.ne.s32.totalorder %s316, %s317
      %p326 = scmp.eq.s32.totalorder %s33, 0
      %p327 = por %p325, %p326
      %p328 = scmp.ne.s32.totalorder %s316, %s317
      %p329 = scmp.eq.s32.totalorder %s34, 1
      %p330 = por %p328, %p329
      %p332 = scmp.ne.s32.totalorder %s317, %s331
      %p333 = scmp.eq.s32.totalorder %s34, 0
      %p334 = por %p332, %p333
      %s336 = sadd.s32 %s335, 1
      %p339 = scmp.eq.s32.totalorder %s28, 1
      %p340 = scmp.ne.s32.totalorder %s335, %s337
      %p341 = scmp.eq.s32.totalorder %s28, 0
      %p342 = por %p340, %p341
      %p343 = scmp.ne.s32.totalorder %s335, %s337
      %p344 = scmp.eq.s32.totalorder %s33, 1
      %p345 = por %p343, %p344
      %p346 = scmp.ne.s32.totalorder %s337, %s338
      %p347 = scmp.eq.s32.totalorder %s33, 0
      %p348 = por %p346, %p347
      %p349 = scmp.ne.s32.totalorder %s337, %s338
      %p350 = scmp.eq.s32.totalorder %s34, 1
      %p351 = por %p349, %p350
      %p353 = scmp.ne.s32.totalorder %s338, %s352
      %p354 = scmp.eq.s32.totalorder %s34, 0
      %p355 = por %p353, %p354
      %s357 = sadd.s32 %s356, 1
      %p360 = scmp.eq.s32.totalorder %s28, 1
      %p361 = scmp.ne.s32.totalorder %s356, %s358
      %p362 = scmp.eq.s32.totalorder %s28, 0
      %p363 = por %p361, %p362
      %p364 = scmp.ne.s32.totalorder %s356, %s358
      %p365 = scmp.eq.s32.totalorder %s33, 1
      %p366 = por %p364, %p365
      %p367 = scmp.ne.s32.totalorder %s358, %s359
      %p368 = scmp.eq.s32.totalorder %s33, 0
      %p369 = por %p367, %p368
      %p370 = scmp.ne.s32.totalorder %s358, %s359
      %p371 = scmp.eq.s32.totalorder %s34, 1
      %p372 = por %p370, %p371
      %p374 = scmp.ne.s32.totalorder %s359, %s373
      %p375 = scmp.eq.s32.totalorder %s34, 0
      %p376 = por %p374, %p375
      %s378 = sadd.s32 %s377, 1
      %p381 = scmp.eq.s32.totalorder %s28, 1
      %p382 = scmp.ne.s32.totalorder %s377, %s379
      %p383 = scmp.eq.s32.totalorder %s28, 0
      %p384 = por %p382, %p383
      %p385 = scmp.ne.s32.totalorder %s377, %s379
      %p386 = scmp.eq.s32.totalorder %s33, 1
      %p387 = por %p385, %p386
      %p388 = scmp.ne.s32.totalorder %s379, %s380
      %p389 = scmp.eq.s32.totalorder %s33, 0
      %p390 = por %p388, %p389
      %p391 = scmp.ne.s32.totalorder %s379, %s380
      %p392 = scmp.eq.s32.totalorder %s34, 1
      %p393 = por %p391, %p392
      %p395 = scmp.ne.s32.totalorder %s380, %s394
      %p396 = scmp.eq.s32.totalorder %s34, 0
      %p397 = por %p395, %p396
      %s399 = sadd.s32 %s398, 1
      %p402 = scmp.eq.s32.totalorder %s28, 1
      %p403 = scmp.ne.s32.totalorder %s398, %s400
      %p404 = scmp.eq.s32.totalorder %s28, 0
      %p405 = por %p403, %p404
      %p406 = scmp.ne.s32.totalorder %s398, %s400
      %p407 = scmp.eq.s32.totalorder %s33, 1
      %p408 = por %p406, %p407
      %p409 = scmp.ne.s32.totalorder %s400, %s401
      %p410 = scmp.eq.s32.totalorder %s33, 0
      %p411 = por %p409, %p410
      %p412 = scmp.ne.s32.totalorder %s400, %s401
      %p413 = scmp.eq.s32.totalorder %s34, 1
      %p414 = por %p412, %p413
      %p416 = scmp.ne.s32.totalorder %s401, %s415
      %p417 = scmp.eq.s32.totalorder %s34, 0
      %p418 = por %p416, %p417
      %s420 = sadd.s32 %s419, 1
      %p423 = scmp.eq.s32.totalorder %s28, 1
      %p424 = scmp.ne.s32.totalorder %s419, %s421
      %p425 = scmp.eq.s32.totalorder %s28, 0
      %p426 = por %p424, %p425
      %p427 = scmp.ne.s32.totalorder %s419, %s421
      %p428 = scmp.eq.s32.totalorder %s33, 1
      %p429 = por %p427, %p428
      %p430 = scmp.ne.s32.totalorder %s421, %s422
      %p431 = scmp.eq.s32.totalorder %s33, 0
      %p432 = por %p430, %p431
      %p433 = scmp.ne.s32.totalorder %s421, %s422
      %p434 = scmp.eq.s32.totalorder %s34, 1
      %p435 = por %p433, %p434
      %p437 = scmp.ne.s32.totalorder %s422, %s436
      %p438 = scmp.eq.s32.totalorder %s34, 0
      %p439 = por %p437, %p438
      %s440 = ssub.s32 %s28, %s35
      %p441 = scmp.eq.s32.totalorder %s440, 0
      %s443 = sadd.s32 %s442, 1
      %s444 = scalar_select %p441, %s442, %s443
      %p447 = pneg %p441
      %p448 = scmp.eq.s32.totalorder %s28, 1
      %p449 = por %p447, %p448
      %p450 = scmp.ne.s32.totalorder %s442, %s445
      %p451 = scmp.eq.s32.totalorder %s28, 0
      %p452 = por %p450, %p451
      %p453 = scmp.ne.s32.totalorder %s442, %s445
      %p454 = scmp.eq.s32.totalorder %s33, 1
      %p455 = por %p453, %p454
      %p456 = scmp.ne.s32.totalorder %s445, %s446
      %p457 = scmp.eq.s32.totalorder %s33, 0
      %p458 = por %p456, %p457
      %p459 = scmp.ne.s32.totalorder %s445, %s446
      %p460 = scmp.eq.s32.totalorder %s34, 1
      %p461 = por %p459, %p460
      %p463 = scmp.ne.s32.totalorder %s446, %s462
      %p464 = scmp.eq.s32.totalorder %s34, 0
      %p465 = por %p463, %p464
      %p466 = scmp.le.s32.totalorder 1, %s28
      %p467 = scmp.lt.s32.totalorder %s28, 3
      %p468 = pnand %p466, %p467
      %p469 = pneg %p468
      // Predicated region
      $region9: #{vit_forward.1} parent=5 // pred_check
        _
      $region10: #{vit_forward.1} parent=5 // pred_check_branch
        %471 = sbr.rel (%p468) target = $region12
      $region11: #{vit_forward.1} parent=5 // pred_region
        %s472 = ssub.s32 %s28, 1
        // Predicated region
        $region13: #{vit_forward.1} parent=11 // pred_check
          %p473 = pneg %p75
        $region14: #{vit_forward.1} parent=11 // pred_check_branch
          %475 = sbr.rel (%p473) target = $region16
        $region15: #{vit_forward.1} parent=11 // pred_region
          _
        $region16: #{vit_forward.1} parent=11 // pred_fallthru
          _
        // Predicated region
        $region17: #{vit_forward.1} parent=11 // pred_check
          %p476 = pneg %p96
        $region18: #{vit_forward.1} parent=11 // pred_check_branch
          %478 = sbr.rel (%p476) target = $region20
        $region19: #{vit_forward.1} parent=11 // pred_region
          _
        $region20: #{vit_forward.1} parent=11 // pred_fallthru
          _
        // Predicated region
        $region21: #{vit_forward.1} parent=11 // pred_check
          %p479 = pneg %p117
        $region22: #{vit_forward.1} parent=11 // pred_check_branch
          %481 = sbr.rel (%p479) target = $region24
        $region23: #{vit_forward.1} parent=11 // pred_region
          _
        $region24: #{vit_forward.1} parent=11 // pred_fallthru
          _
        // Predicated region
        $region25: #{vit_forward.1} parent=11 // pred_check
          %p482 = pneg %p138
        $region26: #{vit_forward.1} parent=11 // pred_check_branch
          %484 = sbr.rel (%p482) target = $region28
        $region27: #{vit_forward.1} parent=11 // pred_region
          _
        $region28: #{vit_forward.1} parent=11 // pred_fallthru
          _
        // Predicated region
        $region29: #{vit_forward.1} parent=11 // pred_check
          %p485 = pneg %p159
        $region30: #{vit_forward.1} parent=11 // pred_check_branch
          %487 = sbr.rel (%p485) target = $region32
        $region31: #{vit_forward.1} parent=11 // pred_region
          _
        $region32: #{vit_forward.1} parent=11 // pred_fallthru
          _
        // Predicated region
        $region33: #{vit_forward.1} parent=11 // pred_check
          %p488 = pneg %p180
        $region34: #{vit_forward.1} parent=11 // pred_check_branch
          %490 = sbr.rel (%p488) target = $region36
        $region35: #{vit_forward.1} parent=11 // pred_region
          _
        $region36: #{vit_forward.1} parent=11 // pred_fallthru
          _
        // Predicated region
        $region37: #{vit_forward.1} parent=11 // pred_check
          %p491 = pneg %p201
        $region38: #{vit_forward.1} parent=11 // pred_check_branch
          %493 = sbr.rel (%p491) target = $region40
        $region39: #{vit_forward.1} parent=11 // pred_region
          _
        $region40: #{vit_forward.1} parent=11 // pred_fallthru
          _
        // Predicated region
        $region41: #{vit_forward.1} parent=11 // pred_check
          %p494 = pneg %p222
        $region42: #{vit_forward.1} parent=11 // pred_check_branch
          %496 = sbr.rel (%p494) target = $region44
        $region43: #{vit_forward.1} parent=11 // pred_region
          _
        $region44: #{vit_forward.1} parent=11 // pred_fallthru
          _
        // Predicated region
        $region45: #{vit_forward.1} parent=11 // pred_check
          %p497 = pneg %p243
        $region46: #{vit_forward.1} parent=11 // pred_check_branch
          %499 = sbr.rel (%p497) target = $region48
        $region47: #{vit_forward.1} parent=11 // pred_region
          _
        $region48: #{vit_forward.1} parent=11 // pred_fallthru
          _
        // Predicated region
        $region49: #{vit_forward.1} parent=11 // pred_check
          %p500 = pneg %p264
        $region50: #{vit_forward.1} parent=11 // pred_check_branch
          %502 = sbr.rel (%p500) target = $region52
        $region51: #{vit_forward.1} parent=11 // pred_region
          _
        $region52: #{vit_forward.1} parent=11 // pred_fallthru
          _
        // Predicated region
        $region53: #{vit_forward.1} parent=11 // pred_check
          %p503 = pneg %p285
        $region54: #{vit_forward.1} parent=11 // pred_check_branch
          %505 = sbr.rel (%p503) target = $region56
        $region55: #{vit_forward.1} parent=11 // pred_region
          _
        $region56: #{vit_forward.1} parent=11 // pred_fallthru
          _
        // Predicated region
        $region57: #{vit_forward.1} parent=11 // pred_check
          %p506 = pneg %p306
        $region58: #{vit_forward.1} parent=11 // pred_check_branch
          %508 = sbr.rel (%p506) target = $region60
        $region59: #{vit_forward.1} parent=11 // pred_region
          _
        $region60: #{vit_forward.1} parent=11 // pred_fallthru
          _
        // Predicated region
        $region61: #{vit_forward.1} parent=11 // pred_check
          %p509 = pneg %p327
        $region62: #{vit_forward.1} parent=11 // pred_check_branch
          %511 = sbr.rel (%p509) target = $region64
        $region63: #{vit_forward.1} parent=11 // pred_region
          _
        $region64: #{vit_forward.1} parent=11 // pred_fallthru
          _
        // Predicated region
        $region65: #{vit_forward.1} parent=11 // pred_check
          %p512 = pneg %p348
        $region66: #{vit_forward.1} parent=11 // pred_check_branch
          %514 = sbr.rel (%p512) target = $region68
        $region67: #{vit_forward.1} parent=11 // pred_region
          _
        $region68: #{vit_forward.1} parent=11 // pred_fallthru
          _
        // Predicated region
        $region69: #{vit_forward.1} parent=11 // pred_check
          %p515 = pneg %p369
        $region70: #{vit_forward.1} parent=11 // pred_check_branch
          %517 = sbr.rel (%p515) target = $region72
        $region71: #{vit_forward.1} parent=11 // pred_region
          _
        $region72: #{vit_forward.1} parent=11 // pred_fallthru
          _
        // Predicated region
        $region73: #{vit_forward.1} parent=11 // pred_check
          %p518 = pneg %p390
        $region74: #{vit_forward.1} parent=11 // pred_check_branch
          %520 = sbr.rel (%p518) target = $region76
        $region75: #{vit_forward.1} parent=11 // pred_region
          _
        $region76: #{vit_forward.1} parent=11 // pred_fallthru
          _
        // Predicated region
        $region77: #{vit_forward.1} parent=11 // pred_check
          %p521 = pneg %p411
        $region78: #{vit_forward.1} parent=11 // pred_check_branch
          %523 = sbr.rel (%p521) target = $region80
        $region79: #{vit_forward.1} parent=11 // pred_region
          _
        $region80: #{vit_forward.1} parent=11 // pred_fallthru
          _
        // Predicated region
        $region81: #{vit_forward.1} parent=11 // pred_check
          %p524 = pneg %p432
        $region82: #{vit_forward.1} parent=11 // pred_check_branch
          %526 = sbr.rel (%p524) target = $region84
        $region83: #{vit_forward.1} parent=11 // pred_region
          _
        $region84: #{vit_forward.1} parent=11 // pred_fallthru
          _
      $region12: #{vit_forward.1} parent=5 // pred_fallthru
        _
      %p527 = scmp.lt.s32.totalorder %s28, 2
      // Predicated region
      $region85: #{vit_forward.1} parent=5 // pred_check
        %p528 = pneg %p527
      $region86: #{vit_forward.1} parent=5 // pred_check_branch
        %530 = sbr.rel (%p528) target = $region88
      $region87: #{vit_forward.1} parent=5 // pred_region
        // Predicated region
        $region89: #{vit_forward.1} parent=87 // pred_check
          %p531 = pneg %p48
        $region90: #{vit_forward.1} parent=87 // pred_check_branch
          %533 = sbr.rel (%p531) target = $region92
        $region91: #{vit_forward.1} parent=87 // pred_region
          %s534 = smul.u32 7, %s28
          %p535 = scmp.lt.s32.totalorder %s534, 13
          %s536 = scalar_select %p535, %s534, 13
          %s537 = smul.addr %s536, 4
          %s538 = scalar_lea.vmem %s0, %s537
          %s539 = smul.u32 7, %s28
        $region92: #{vit_forward.1} parent=87 // pred_fallthru
          _
      $region88: #{vit_forward.1} parent=5 // pred_fallthru
        _
      %p540 = scmp.le.s32.totalorder 1, %s28
      %p541 = scmp.lt.s32.totalorder %s28, 3
      %p542 = pnand %p540, %p541
      %p543 = pneg %p542
      // Predicated region
      $region93: #{vit_forward.1} parent=5 // pred_check
        _
      $region94: #{vit_forward.1} parent=5 // pred_check_branch
        %545 = sbr.rel (%p542) target = $region96
      $region95: #{vit_forward.1} parent=5 // pred_region
        %s546 = ssub.s32 %s28, 1
        %s547 = smul.u32 7, %s33
        %p548 = scmp.lt.s32.totalorder %s547, 13
        %s549 = scalar_select %p548, %s547, 13
        %s550 = smul.addr %s549, 4
        %s551 = scalar_lea.vmem %s0, %s550
        %p552 = pneg %p54
        %p553 = pneg %p51
        %p554 = pneg %p75
        %p555 = pneg %p72
        %p556 = pneg %p96
        %p557 = pneg %p93
        %p558 = pneg %p117
        %p559 = pneg %p114
        %p560 = pneg %p138
        %p561 = pneg %p135
        %p562 = pneg %p159
        %p563 = pneg %p156
        %p564 = pneg %p180
        %p565 = pneg %p177
        %p566 = pneg %p201
        %p567 = pneg %p198
        %p568 = pneg %p222
        %p569 = pneg %p219
        %p570 = pneg %p243
        %p571 = pneg %p240
        %p572 = pneg %p264
        %p573 = pneg %p261
        %p574 = pneg %p285
        %p575 = pneg %p282
        %p576 = pneg %p306
        %p577 = pneg %p303
        %p578 = pneg %p327
        %p579 = pneg %p324
        %p580 = pneg %p348
        %p581 = pneg %p345
        %p582 = pneg %p369
        %p583 = pneg %p366
        %p584 = pneg %p390
        %p585 = pneg %p387
        %p586 = pneg %p411
        %p587 = pneg %p408
        %p588 = pneg %p432
        %p589 = pneg %p429
        %p590 = pneg %p458
        %p591 = pneg %p455
        %s592 = sand.u32 %s445, 1
        %s593 = scalar_lea.sflag [#allocation4], %s592
        %s594 = sand.u32 %s445, 1
        %s595 = scalar_lea.vmem [#allocation3], %s594
        %s596 = smul.u32 7, %s33
        %p597 = scmp.lt.s32.totalorder %s596, 13
        %s598 = scalar_select %p597, %s596, 13
        %s599 = smul.addr %s598, 4
        %s600 = scalar_lea.vmem %s0, %s599
        %s601 = smul.u32 7, %s33
        %v603 = vld [vmem:[%s600] sm:$0xf]
        %v604 = vld [vmem:[%s600 + $0x4] sm:$0xf]
        %v605 = vld [vmem:[%s600 + $0x8] sm:$0xf]
        %v606 = vld [vmem:[%s600 + $0xc] sm:$0xf]
        %v607 = vld [vmem:[%s600 + $0x10] sm:$0xf]
        %v608 = vld [vmem:[%s600 + $0x14] sm:$0xf]
        %v609 = vld [vmem:[%s600 + $0x18] sm:$0xf]
        %v610 = vld [vmem:[%s1] sm:$0xf]
        %v611 = vld [vmem:[%s1 + $0x4] sm:$0xf]
        %v619 = vunpack.c.l.b16 %v603
        %v620 = vunpack.c.l.b16 %v604
        %v621 = vunpack.c.l.b16 %v605
        %v622 = vunpack.c.l.b16 %v606
        %v623 = vunpack.c.l.b16 %v607
        %v624 = vunpack.c.l.b16 %v608
        %v625 = vunpack.c.l.b16 %v609
        %v626 = vpack.c.b16 %v620, %v619
        %v627 = vpack.c.b16 %v622, %v621
        %v628 = vpack.c.b16 %v624, %v623
        %v629 = vpack.c.b16 %v625, %v625
        %v632 = vunpack.c.l.b16 %v610
        %v633 = vunpack.c.l.b16 %v611
        %v634 = vpack.c.b16 %v633, %v632
        %vm636 = vcmask 130048
        %v638 = vsel %vm636, %v626, 0
        %v641 = vsel %vm636, %v627, 0
        %v644 = vsel %vm636, %v628, 0
        %v647 = vsel %vm636, %v629, 0
        %649 = vmatpush.bf16.msra.mxu0 0
        %650 = vmatpush.bf16.msra.mxu0 0
        %651 = vmatpush.bf16.msra.mxu0 0
        %652 = vmatpush.bf16.msra.mxu0 0
        %653 = vmatpush.bf16.msra.mxu0 0
        %654 = vmatpush.bf16.msra.mxu0 0
        %655 = vmatpush.bf16.msra.mxu0 0
        %656 = vmatpush.bf16.msra.mxu0 %v634
        %657 = vmatmul.bf16.gmra.mxu0 %v638
        %v658 = vpop.f32.mrf.mxu0
        %v659 = vadd.f32 0.0, %v658
        %v660 = vpop.f32.mrf.mxu0
        %v661 = vadd.f32 0.0, %v660
        %662 = vmatmul.bf16.gmra.mxu0 %v641
        %v663 = vpop.f32.mrf.mxu0
        %v664 = vadd.f32 0.0, %v663
        %v665 = vpop.f32.mrf.mxu0
        %v666 = vadd.f32 0.0, %v665
        %667 = vmatmul.bf16.gmra.mxu0 %v644
        %v668 = vpop.f32.mrf.mxu0
        %v669 = vadd.f32 0.0, %v668
        %v670 = vpop.f32.mrf.mxu0
        %v671 = vadd.f32 0.0, %v670
        %672 = vmatmul.bf16.gmra.mxu0 %v647
        %v673 = vpop.f32.mrf.mxu0
        %v674 = vadd.f32 0.0, %v673
        %v675 = vpop.f32.mrf.mxu0
        %676 = vdwg.mxu0
        %v677 = vld [vmem:[%s2] sm:$0xff]
        %v678 = vld [vmem:[%s2 + $0x8] sm:$0xff]
        %v679 = vld [vmem:[%s2 + $0x10] sm:$0xff]
        %v680 = vld [vmem:[%s2 + $0x18] sm:$0xff]
        %v681 = vld [vmem:[%s2 + $0x20] sm:$0xff]
        %v682 = vld [vmem:[%s2 + $0x28] sm:$0xff]
        %v683 = vld [vmem:[%s2 + $0x30] sm:$0xff]
        %v684 = vadd.f32 %v659, %v677
        %v685 = vadd.f32 %v661, %v678
        %v686 = vadd.f32 %v664, %v679
        %v687 = vadd.f32 %v666, %v680
        %v688 = vadd.f32 %v669, %v681
        %v689 = vadd.f32 %v671, %v682
        %v690 = vadd.f32 %v674, %v683
        %v691 = vlaneseq
        %v692 = vand.u32 %v691, 127
        %vm693 = vcmp.lt.s32.totalorder %v692, 50
        %v694 = vsel %vm693, 0.0, -1e+30
        %v695 = vld [vmem:[%s3] sm:$0x1]
        %v696 = vld [vmem:[%s4] sm:$0x1]
        %vm697 = vcmask 523264
        %v698 = vsel %vm697, %v684, 0.0
        %699 = vadd.xlane.f32.xlu0 %v698
        %v700 = vpop.xlane.xlu0 %699
        %v701 = vsel %vm697, %v685, 0.0
        %702 = vadd.xlane.f32.xlu0 %v701
        %v703 = vpop.xlane.xlu0 %702
        %v704 = vsel %vm697, %v686, 0.0
        %705 = vadd.xlane.f32.xlu0 %v704
        %v706 = vpop.xlane.xlu0 %705
        %v707 = vsel %vm697, %v687, 0.0
        %708 = vadd.xlane.f32.xlu0 %v707
        %v709 = vpop.xlane.xlu0 %708
        %v710 = vsel %vm697, %v688, 0.0
        %711 = vadd.xlane.f32.xlu0 %v710
        %v712 = vpop.xlane.xlu0 %711
        %v713 = vsel %vm697, %v689, 0.0
        %714 = vadd.xlane.f32.xlu0 %v713
        %v715 = vpop.xlane.xlu0 %714
        %v716 = vsel %vm697, %v690, 0.0
        %717 = vadd.xlane.f32.xlu0 %v716
        %v718 = vpop.xlane.xlu0 %717
        %v719 = vrcp.pop 64.0
        %v720 = vmul.f32 64.0, %v719
        %v721 = vsub.f32 1.0, %v720
        %v722 = vmul.f32 %v719, %v721
        %v723 = vadd.f32 %v719, %v722
        %vm724 = vweird.f32 %v719
        %v725 = vsel %vm724, %v719, %v723
        %v726 = vmul.f32 %v700, %v725
        %v727 = vmul.f32 %v703, %v725
        %v728 = vmul.f32 %v706, %v725
        %v729 = vmul.f32 %v709, %v725
        %v730 = vmul.f32 %v712, %v725
        %v731 = vmul.f32 %v715, %v725
        %v732 = vmul.f32 %v718, %v725
        %v733 = vsub.f32 %v684, %v726
        %v734 = vsub.f32 %v685, %v727
        %v735 = vsub.f32 %v686, %v728
        %v736 = vsub.f32 %v687, %v729
        %v737 = vsub.f32 %v688, %v730
        %v738 = vsub.f32 %v689, %v731
        %v739 = vsub.f32 %v690, %v732
        %v740 = vmul.f32 %v733, %v733
        %v741 = vmul.f32 %v734, %v734
        %v742 = vmul.f32 %v735, %v735
        %v743 = vmul.f32 %v736, %v736
        %v744 = vmul.f32 %v737, %v737
        %v745 = vmul.f32 %v738, %v738
        %v746 = vmul.f32 %v739, %v739
        %v747 = vsel %vm697, %v740, 0.0
        %748 = vadd.xlane.f32.xlu0 %v747
        %v749 = vpop.xlane.xlu0 %748
        %v750 = vsel %vm697, %v741, 0.0
        %751 = vadd.xlane.f32.xlu0 %v750
        %v752 = vpop.xlane.xlu0 %751
        %v753 = vsel %vm697, %v742, 0.0
        %754 = vadd.xlane.f32.xlu0 %v753
        %v755 = vpop.xlane.xlu0 %754
        %v756 = vsel %vm697, %v743, 0.0
        %757 = vadd.xlane.f32.xlu0 %v756
        %v758 = vpop.xlane.xlu0 %757
        %v759 = vsel %vm697, %v744, 0.0
        %760 = vadd.xlane.f32.xlu0 %v759
        %v761 = vpop.xlane.xlu0 %760
        %v762 = vsel %vm697, %v745, 0.0
        %763 = vadd.xlane.f32.xlu0 %v762
        %v764 = vpop.xlane.xlu0 %763
        %v765 = vsel %vm697, %v746, 0.0
        %766 = vadd.xlane.f32.xlu0 %v765
        %v767 = vpop.xlane.xlu0 %766
        %v768 = vmul.f32 %v749, %v725
        %v769 = vmul.f32 %v752, %v725
        %v770 = vmul.f32 %v755, %v725
        %v771 = vmul.f32 %v758, %v725
        %v772 = vmul.f32 %v761, %v725
        %v773 = vmul.f32 %v764, %v725
        %v774 = vmul.f32 %v767, %v725
        %v775 = vadd.f32 %v768, 1e-05
        %v776 = vadd.f32 %v769, 1e-05
        %v777 = vadd.f32 %v770, 1e-05
        %v778 = vadd.f32 %v771, 1e-05
        %v779 = vadd.f32 %v772, 1e-05
        %v780 = vadd.f32 %v773, 1e-05
        %v781 = vadd.f32 %v774, 1e-05
        %v782 = vrsqrt.pop %v775
        %v783 = vmul.f32 %v782, %v775
        %v784 = vmul.f32 %v783, %v782
        %v785 = vmul.f32 0.5, %v784
        %v786 = vsub.f32 1.5, %v785
        %v787 = vmul.f32 %v782, %v786
        %vm788 = vweird.f32 %v775
        %vm789 = vweird.f32 %v782
        %vm790 = vmor %vm788, %vm789
        %v791 = vsel %vm790, %v782, %v787
        %v792 = vrsqrt.pop %v776
        %v793 = vmul.f32 %v792, %v776
        %v794 = vmul.f32 %v793, %v792
        %v795 = vmul.f32 0.5, %v794
        %v796 = vsub.f32 1.5, %v795
        %v797 = vmul.f32 %v792, %v796
        %vm798 = vweird.f32 %v776
        %vm799 = vweird.f32 %v792
        %vm800 = vmor %vm798, %vm799
        %v801 = vsel %vm800, %v792, %v797
        %v802 = vrsqrt.pop %v777
        %v803 = vmul.f32 %v802, %v777
        %v804 = vmul.f32 %v803, %v802
        %v805 = vmul.f32 0.5, %v804
        %v806 = vsub.f32 1.5, %v805
        %v807 = vmul.f32 %v802, %v806
        %vm808 = vweird.f32 %v777
        %vm809 = vweird.f32 %v802
        %vm810 = vmor %vm808, %vm809
        %v811 = vsel %vm810, %v802, %v807
        %v812 = vrsqrt.pop %v778
        %v813 = vmul.f32 %v812, %v778
        %v814 = vmul.f32 %v813, %v812
        %v815 = vmul.f32 0.5, %v814
        %v816 = vsub.f32 1.5, %v815
        %v817 = vmul.f32 %v812, %v816
        %vm818 = vweird.f32 %v778
        %vm819 = vweird.f32 %v812
        %vm820 = vmor %vm818, %vm819
        %v821 = vsel %vm820, %v812, %v817
        %v822 = vrsqrt.pop %v779
        %v823 = vmul.f32 %v822, %v779
        %v824 = vmul.f32 %v823, %v822
        %v825 = vmul.f32 0.5, %v824
        %v826 = vsub.f32 1.5, %v825
        %v827 = vmul.f32 %v822, %v826
        %vm828 = vweird.f32 %v779
        %vm829 = vweird.f32 %v822
        %vm830 = vmor %vm828, %vm829
        %v831 = vsel %vm830, %v822, %v827
        %v832 = vrsqrt.pop %v780
        %v833 = vmul.f32 %v832, %v780
        %v834 = vmul.f32 %v833, %v832
        %v835 = vmul.f32 0.5, %v834
        %v836 = vsub.f32 1.5, %v835
        %v837 = vmul.f32 %v832, %v836
        %vm838 = vweird.f32 %v780
        %vm839 = vweird.f32 %v832
        %vm840 = vmor %vm838, %vm839
        %v841 = vsel %vm840, %v832, %v837
        %v842 = vrsqrt.pop %v781
        %v843 = vmul.f32 %v842, %v781
        %v844 = vmul.f32 %v843, %v842
        %v845 = vmul.f32 0.5, %v844
        %v846 = vsub.f32 1.5, %v845
        %v847 = vmul.f32 %v842, %v846
        %vm848 = vweird.f32 %v781
        %vm849 = vweird.f32 %v842
        %vm850 = vmor %vm848, %vm849
        %v851 = vsel %vm850, %v842, %v847
        %v852 = vmul.f32 %v733, %v791
        %v853 = vmul.f32 %v734, %v801
        %v854 = vmul.f32 %v735, %v811
        %v855 = vmul.f32 %v736, %v821
        %v856 = vmul.f32 %v737, %v831
        %v857 = vmul.f32 %v738, %v841
        %v858 = vmul.f32 %v739, %v851
        %v860 = vperm.slane %v695, 0
        %v862 = vmul.f32 %v852, %v860
        %v863 = vmul.f32 %v853, %v860
        %v864 = vmul.f32 %v854, %v860
        %v865 = vmul.f32 %v855, %v860
        %v866 = vmul.f32 %v856, %v860
        %v867 = vmul.f32 %v857, %v860
        %v868 = vmul.f32 %v858, %v860
        %v870 = vperm.slane %v696, 0
        %v872 = vadd.f32 %v862, %v870
        %v873 = vadd.f32 %v863, %v870
        %v874 = vadd.f32 %v864, %v870
        %v875 = vadd.f32 %v865, %v870
        %v876 = vadd.f32 %v866, %v870
        %v877 = vadd.f32 %v867, %v870
        %v878 = vadd.f32 %v868, %v870
        %v879 = vpack.c.bf16 %v873, %v872
        %v880 = vpack.c.bf16 %v875, %v874
        %v881 = vpack.c.bf16 %v877, %v876
        %v882 = vpack.c.bf16 %v878, %v878
        %v883 = vld [vmem:[%s5] sm:$0xff]
        %v884 = vld [vmem:[%s5 + $0x8] sm:$0xff]
        %v885 = vld [vmem:[%s5 + $0x10] sm:$0xff]
        %v886 = vld [vmem:[%s5 + $0x18] sm:$0xff]
        %v887 = vld [vmem:[%s5 + $0x20] sm:$0xff]
        %v888 = vld [vmem:[%s5 + $0x28] sm:$0xff]
        %v889 = vld [vmem:[%s5 + $0x30] sm:$0xff]
        %v890 = vld [vmem:[%s5 + $0x38] sm:$0xff]
        %v891 = vld [vmem:[%s6] sm:$0x3]
        %v893 = vperm.slane %v891, 0
        %v894 = vperm.slane %v891, 1
        %v905 = vunpack.c.l.b16 %v883
        %v906 = vunpack.c.h.b16 %v883
        %v907 = vunpack.c.l.b16 %v884
        %v908 = vunpack.c.h.b16 %v884
        %v909 = vunpack.c.l.b16 %v885
        %v910 = vunpack.c.h.b16 %v885
        %v911 = vunpack.c.l.b16 %v886
        %v912 = vunpack.c.h.b16 %v886
        %v913 = vunpack.c.l.b16 %v887
        %v914 = vunpack.c.h.b16 %v887
        %v915 = vunpack.c.l.b16 %v888
        %v916 = vunpack.c.h.b16 %v888
        %v917 = vunpack.c.l.b16 %v889
        %v918 = vunpack.c.h.b16 %v889
        %v919 = vunpack.c.l.b16 %v890
        %v920 = vunpack.c.h.b16 %v890
        %v921 = vpack.c.b16 %v907, %v905
        %v922 = vpack.c.b16 %v908, %v906
        %v923 = vpack.c.b16 %v911, %v909
        %v924 = vpack.c.b16 %v912, %v910
        %v925 = vpack.c.b16 %v915, %v913
        %v926 = vpack.c.b16 %v916, %v914
        %v927 = vpack.c.b16 %v919, %v917
        %v928 = vpack.c.b16 %v920, %v918
        %v938 = vsel %vm697, %v879, 0
        %v941 = vsel %vm697, %v880, 0
        %v944 = vsel %vm697, %v881, 0
        %v947 = vsel %vm697, %v882, 0
        %949 = vmatpush.bf16.msra.mxu0 0
        %950 = vmatpush.bf16.msra.mxu0 0
        %951 = vmatpush.bf16.msra.mxu0 0
        %952 = vmatpush.bf16.msra.mxu0 0
        %953 = vmatpush.bf16.msra.mxu0 %v927
        %954 = vmatpush.bf16.msra.mxu0 %v925
        %955 = vmatpush.bf16.msra.mxu0 %v923
        %956 = vmatpush.bf16.msra.mxu0 %v921
        %957 = vmatmul.bf16.gmra.mxu0 %v938
        %v958 = vpop.f32.mrf.mxu0
        %v959 = vadd.f32 %v893, %v958
        %v960 = vpop.f32.mrf.mxu0
        %v961 = vadd.f32 %v893, %v960
        %962 = vmatmul.bf16.gmra.mxu0 %v941
        %v963 = vpop.f32.mrf.mxu0
        %v964 = vadd.f32 %v893, %v963
        %v965 = vpop.f32.mrf.mxu0
        %v966 = vadd.f32 %v893, %v965
        %967 = vmatmul.bf16.gmra.mxu0 %v944
        %v968 = vpop.f32.mrf.mxu0
        %v969 = vadd.f32 %v893, %v968
        %v970 = vpop.f32.mrf.mxu0
        %v971 = vadd.f32 %v893, %v970
        %972 = vmatmul.bf16.gmra.mxu0 %v947
        %v973 = vpop.f32.mrf.mxu0
        %v974 = vadd.f32 %v893, %v973
        %v975 = vpop.f32.mrf.mxu0
        %976 = vdwg.mxu0
        %977 = vmatpush.bf16.msra.mxu0 0
        %978 = vmatpush.bf16.msra.mxu0 0
        %979 = vmatpush.bf16.msra.mxu0 0
        %980 = vmatpush.bf16.msra.mxu0 0
        %981 = vmatpush.bf16.msra.mxu0 %v928
        %982 = vmatpush.bf16.msra.mxu0 %v926
        %983 = vmatpush.bf16.msra.mxu0 %v924
        %984 = vmatpush.bf16.msra.mxu0 %v922
        %985 = vmatmul.bf16.gmra.mxu0 %v938
        %v986 = vpop.f32.mrf.mxu0
        %v987 = vadd.f32 %v894, %v986
        %v988 = vpop.f32.mrf.mxu0
        %v989 = vadd.f32 %v894, %v988
        %990 = vmatmul.bf16.gmra.mxu0 %v941
        %v991 = vpop.f32.mrf.mxu0
        %v992 = vadd.f32 %v894, %v991
        %v993 = vpop.f32.mrf.mxu0
        %v994 = vadd.f32 %v894, %v993
        %995 = vmatmul.bf16.gmra.mxu0 %v944
        %v996 = vpop.f32.mrf.mxu0
        %v997 = vadd.f32 %v894, %v996
        %v998 = vpop.f32.mrf.mxu0
        %v999 = vadd.f32 %v894, %v998
        %1000 = vmatmul.bf16.gmra.mxu0 %v947
        %v1001 = vpop.f32.mrf.mxu0
        %v1002 = vadd.f32 %v894, %v1001
        %v1003 = vpop.f32.mrf.mxu0
        %1004 = vdwg.mxu0
        %v1005 = vpack.c.bf16 %v959, %v959
        %v1006 = vpack.c.bf16 %v961, %v961
        %v1007 = vpack.c.bf16 %v964, %v964
        %v1008 = vpack.c.bf16 %v966, %v966
        %v1009 = vpack.c.bf16 %v969, %v969
        %v1010 = vpack.c.bf16 %v971, %v971
        %v1011 = vpack.c.bf16 %v974, %v974
        %v1012 = vpack.c.bf16 %v987, %v987
        %v1013 = vpack.c.bf16 %v989, %v989
        %v1014 = vpack.c.bf16 %v992, %v992
        %v1015 = vpack.c.bf16 %v994, %v994
        %v1016 = vpack.c.bf16 %v997, %v997
        %v1017 = vpack.c.bf16 %v999, %v999
        %v1018 = vpack.c.bf16 %v1002, %v1002
        %v1026 = vunpack.c.l.b16 %v1005
        %v1027 = vunpack.c.l.b16 %v1006
        %v1028 = vunpack.c.l.b16 %v1007
        %v1029 = vunpack.c.l.b16 %v1008
        %v1030 = vunpack.c.l.b16 %v1009
        %v1031 = vunpack.c.l.b16 %v1010
        %v1032 = vunpack.c.l.b16 %v1011
        %v1033 = vpack.c.b16 %v1027, %v1026
        %v1034 = vpack.c.b16 %v1029, %v1028
        %v1035 = vpack.c.b16 %v1031, %v1030
        %v1036 = vpack.c.b16 %v1032, %v1032
        %1037 = vrot.lane.b32.xlu0 %v1033, 64
        %v1038 = vpop.permute.xlu0 %1037
        %1039 = vrot.lane.b32.xlu0 %v1034, 64
        %v1040 = vpop.permute.xlu0 %1039
        %1041 = vrot.lane.b32.xlu0 %v1035, 64
        %v1042 = vpop.permute.xlu0 %1041
        %1043 = vrot.lane.b32.xlu0 %v1036, 64
        %v1044 = vpop.permute.xlu0 %1043
        %v1046 = vsel %vm636, %v1033, 0
        %v1049 = vsel %vm636, %v1034, 0
        %v1052 = vsel %vm636, %v1035, 0
        %v1055 = vsel %vm636, %v1036, 0
        %v1058 = vsel %vm636, %v1038, 0
        %v1061 = vsel %vm636, %v1040, 0
        %v1064 = vsel %vm636, %v1042, 0
        %v1067 = vsel %vm636, %v1044, 0
        %1069 = vmatpush.bf16.xpose.msra.mxu0 0
        %1070 = vmatpush.bf16.xpose.msra.mxu0 0
        %1071 = vmatpush.bf16.xpose.msra.mxu0 0
        %1072 = vmatpush.bf16.xpose.msra.mxu0 0
        %1073 = vmatpush.bf16.xpose.msra.mxu0 %v1067
        %1074 = vmatpush.bf16.xpose.msra.mxu0 %v1064
        %1075 = vmatpush.bf16.xpose.msra.mxu0 %v1061
        %1076 = vmatpush.bf16.xpose.msra.mxu0 %v1058
        %1077 = vmatmul.bf16.gmra.mxu0 %v1046
        %v1078 = vpop.f32.mrf.mxu0
        %v1079 = vadd.f32 %v694, %v1078
        %v1080 = vpop.f32.mrf.mxu0
        %v1081 = vadd.f32 %v694, %v1080
        %1082 = vmatmul.bf16.gmra.mxu0 %v1049
        %v1083 = vpop.f32.mrf.mxu0
        %v1084 = vadd.f32 %v694, %v1083
        %v1085 = vpop.f32.mrf.mxu0
        %v1086 = vadd.f32 %v694, %v1085
        %1087 = vmatmul.bf16.gmra.mxu0 %v1052
        %v1088 = vpop.f32.mrf.mxu0
        %v1089 = vadd.f32 %v694, %v1088
        %v1090 = vpop.f32.mrf.mxu0
        %v1091 = vadd.f32 %v694, %v1090
        %1092 = vmatmul.bf16.gmra.mxu0 %v1055
        %v1093 = vpop.f32.mrf.mxu0
        %v1094 = vadd.f32 %v694, %v1093
        %v1095 = vpop.f32.mrf.mxu0
        %1096 = vdwg.mxu0
        %vm1097 = vcmask 457728
        %v1098 = vsel %vm1097, %v1079, -inf
        %1099 = vmax.xlane.f32.xlu0 %v1098
        %v1100 = vpop.xlane.xlu0 %1099
        %v1101 = vsel %vm1097, %v1081, -inf
        %1102 = vmax.xlane.f32.xlu0 %v1101
        %v1103 = vpop.xlane.xlu0 %1102
        %v1104 = vsel %vm1097, %v1084, -inf
        %1105 = vmax.xlane.f32.xlu0 %v1104
        %v1106 = vpop.xlane.xlu0 %1105
        %v1107 = vsel %vm1097, %v1086, -inf
        %1108 = vmax.xlane.f32.xlu0 %v1107
        %v1109 = vpop.xlane.xlu0 %1108
        %v1110 = vsel %vm1097, %v1089, -inf
        %1111 = vmax.xlane.f32.xlu0 %v1110
        %v1112 = vpop.xlane.xlu0 %1111
        %v1113 = vsel %vm1097, %v1091, -inf
        %1114 = vmax.xlane.f32.xlu0 %v1113
        %v1115 = vpop.xlane.xlu0 %1114
        %v1116 = vsel %vm1097, %v1094, -inf
        %1117 = vmax.xlane.f32.xlu0 %v1116
        %v1118 = vpop.xlane.xlu0 %1117
        %v1119 = vsub.f32 %v1079, %v1100
        %v1120 = vsub.f32 %v1081, %v1103
        %v1121 = vsub.f32 %v1084, %v1106
        %v1122 = vsub.f32 %v1086, %v1109
        %v1123 = vsub.f32 %v1089, %v1112
        %v1124 = vsub.f32 %v1091, %v1115
        %v1125 = vsub.f32 %v1094, %v1118
        %v1126 = vmul.f32 %v1119, 1.442695
        %v1127 = vpow.pop %v1126
        %v1128 = vmul.f32 %v1120, 1.442695
        %v1129 = vpow.pop %v1128
        %v1130 = vmul.f32 %v1121, 1.442695
        %v1131 = vpow.pop %v1130
        %v1132 = vmul.f32 %v1122, 1.442695
        %v1133 = vpow.pop %v1132
        %v1134 = vmul.f32 %v1123, 1.442695
        %v1135 = vpow.pop %v1134
        %v1136 = vmul.f32 %v1124, 1.442695
        %v1137 = vpow.pop %v1136
        %v1138 = vmul.f32 %v1125, 1.442695
        %v1139 = vpow.pop %v1138
        %v1140 = vsel %vm1097, %v1127, 0.0
        %1141 = vadd.xlane.f32.xlu0 %v1140
        %v1142 = vpop.xlane.xlu0 %1141
        %v1143 = vsel %vm1097, %v1129, 0.0
        %1144 = vadd.xlane.f32.xlu0 %v1143
        %v1145 = vpop.xlane.xlu0 %1144
        %v1146 = vsel %vm1097, %v1131, 0.0
        %1147 = vadd.xlane.f32.xlu0 %v1146
        %v1148 = vpop.xlane.xlu0 %1147
        %v1149 = vsel %vm1097, %v1133, 0.0
        %1150 = vadd.xlane.f32.xlu0 %v1149
        %v1151 = vpop.xlane.xlu0 %1150
        %v1152 = vsel %vm1097, %v1135, 0.0
        %1153 = vadd.xlane.f32.xlu0 %v1152
        %v1154 = vpop.xlane.xlu0 %1153
        %v1155 = vsel %vm1097, %v1137, 0.0
        %1156 = vadd.xlane.f32.xlu0 %v1155
        %v1157 = vpop.xlane.xlu0 %1156
        %v1158 = vsel %vm1097, %v1139, 0.0
        %1159 = vadd.xlane.f32.xlu0 %v1158
        %v1160 = vpop.xlane.xlu0 %1159
        %v1161 = vrcp.pop %v1142
        %v1162 = vrcp.pop %v1145
        %v1163 = vrcp.pop %v1148
        %v1164 = vrcp.pop %v1151
        %v1165 = vrcp.pop %v1154
        %v1166 = vrcp.pop %v1157
        %v1167 = vrcp.pop %v1160
        %v1168 = vmul.f32 %v1127, %v1161
        %v1169 = vmul.f32 %v1129, %v1162
        %v1170 = vmul.f32 %v1131, %v1163
        %v1171 = vmul.f32 %v1133, %v1164
        %v1172 = vmul.f32 %v1135, %v1165
        %v1173 = vmul.f32 %v1137, %v1166
        %v1174 = vmul.f32 %v1139, %v1167
        %v1175 = vpack.c.bf16 %v1168, %v1168
        %v1176 = vpack.c.bf16 %v1169, %v1169
        %v1177 = vpack.c.bf16 %v1170, %v1170
        %v1178 = vpack.c.bf16 %v1171, %v1171
        %v1179 = vpack.c.bf16 %v1172, %v1172
        %v1180 = vpack.c.bf16 %v1173, %v1173
        %v1181 = vpack.c.bf16 %v1174, %v1174
        %v1189 = vunpack.c.l.b16 %v1175
        %v1190 = vunpack.c.l.b16 %v1176
        %v1191 = vunpack.c.l.b16 %v1177
        %v1192 = vunpack.c.l.b16 %v1178
        %v1193 = vunpack.c.l.b16 %v1179
        %v1194 = vunpack.c.l.b16 %v1180
        %v1195 = vunpack.c.l.b16 %v1181
        %v1196 = vpack.c.b16 %v1190, %v1189
        %v1197 = vpack.c.b16 %v1192, %v1191
        %v1198 = vpack.c.b16 %v1194, %v1193
        %v1199 = vpack.c.b16 %v1195, %v1195
        %v1207 = vunpack.c.l.b16 %v1012
        %v1208 = vunpack.c.l.b16 %v1013
        %v1209 = vunpack.c.l.b16 %v1014
        %v1210 = vunpack.c.l.b16 %v1015
        %v1211 = vunpack.c.l.b16 %v1016
        %v1212 = vunpack.c.l.b16 %v1017
        %v1213 = vunpack.c.l.b16 %v1018
        %v1214 = vpack.c.b16 %v1208, %v1207
        %v1215 = vpack.c.b16 %v1210, %v1209
        %v1216 = vpack.c.b16 %v1212, %v1211
        %v1217 = vpack.c.b16 %v1213, %v1213
        %v1222 = vsel %vm1097, %v1196, 0
        %v1225 = vsel %vm1097, %v1197, 0
        %v1228 = vsel %vm1097, %v1198, 0
        %v1231 = vsel %vm1097, %v1199, 0
        %vm1233 = vcmask 1043456
        %v1235 = vsel %vm1233, %v1217, 0
        %1237 = vmatpush.bf16.msra.mxu0 0
        %1238 = vmatpush.bf16.msra.mxu0 0
        %1239 = vmatpush.bf16.msra.mxu0 0
        %1240 = vmatpush.bf16.msra.mxu0 0
        %1241 = vmatpush.bf16.msra.mxu0 %v1235
        %1242 = vmatpush.bf16.msra.mxu0 %v1216
        %1243 = vmatpush.bf16.msra.mxu0 %v1215
        %1244 = vmatpush.bf16.msra.mxu0 %v1214
        %1245 = vmatmul.bf16.gmra.mxu0 %v1222
        %v1246 = vpop.f32.mrf.mxu0
        %v1247 = vadd.f32 0.0, %v1246
        %v1248 = vpop.f32.mrf.mxu0
        %v1249 = vadd.f32 0.0, %v1248
        %1250 = vmatmul.bf16.gmra.mxu0 %v1225
        %v1251 = vpop.f32.mrf.mxu0
        %v1252 = vadd.f32 0.0, %v1251
        %v1253 = vpop.f32.mrf.mxu0
        %v1254 = vadd.f32 0.0, %v1253
        %1255 = vmatmul.bf16.gmra.mxu0 %v1228
        %v1256 = vpop.f32.mrf.mxu0
        %v1257 = vadd.f32 0.0, %v1256
        %v1258 = vpop.f32.mrf.mxu0
        %v1259 = vadd.f32 0.0, %v1258
        %1260 = vmatmul.bf16.gmra.mxu0 %v1231
        %v1261 = vpop.f32.mrf.mxu0
        %v1262 = vadd.f32 0.0, %v1261
        %v1263 = vpop.f32.mrf.mxu0
        %1264 = vdwg.mxu0
        %1265 = vst.msk [vmem:[#allocation2] sm:$0xff] %vm636, %v1247
        %1266 = vst.msk [vmem:[#allocation2 + $0x8] sm:$0xff] %vm636, %v1249
        %1267 = vst.msk [vmem:[#allocation2 + $0x10] sm:$0xff] %vm636, %v1252
        %1268 = vst.msk [vmem:[#allocation2 + $0x18] sm:$0xff] %vm636, %v1254
        %1269 = vst.msk [vmem:[#allocation2 + $0x20] sm:$0xff] %vm636, %v1257
        %1270 = vst.msk [vmem:[#allocation2 + $0x28] sm:$0xff] %vm636, %v1259
        %1271 = vst.msk [vmem:[#allocation2 + $0x30] sm:$0xff] %vm636, %v1262
        %1272 = vrot.lane.b32.xlu0 %v1033, 112
        %v1273 = vpop.permute.xlu0 %1272
        %1274 = vrot.lane.b32.xlu0 %v1034, 112
        %v1275 = vpop.permute.xlu0 %1274
        %1276 = vrot.lane.b32.xlu0 %v1035, 112
        %v1277 = vpop.permute.xlu0 %1276
        %1278 = vrot.lane.b32.xlu0 %v1036, 112
        %v1279 = vpop.permute.xlu0 %1278
        %1280 = vrot.lane.b32.xlu0 %v1033, 48
        %v1281 = vpop.permute.xlu0 %1280
        %1282 = vrot.lane.b32.xlu0 %v1034, 48
        %v1283 = vpop.permute.xlu0 %1282
        %1284 = vrot.lane.b32.xlu0 %v1035, 48
        %v1285 = vpop.permute.xlu0 %1284
        %1286 = vrot.lane.b32.xlu0 %v1036, 48
        %v1287 = vpop.permute.xlu0 %1286
        %v1289 = vsel %vm636, %v1273, 0
        %v1292 = vsel %vm636, %v1275, 0
        %v1295 = vsel %vm636, %v1277, 0
        %v1298 = vsel %vm636, %v1279, 0
        %v1301 = vsel %vm636, %v1281, 0
        %v1304 = vsel %vm636, %v1283, 0
        %v1307 = vsel %vm636, %v1285, 0
        %v1310 = vsel %vm636, %v1287, 0
        %1312 = vmatpush.bf16.xpose.msra.mxu0 0
        %1313 = vmatpush.bf16.xpose.msra.mxu0 0
        %1314 = vmatpush.bf16.xpose.msra.mxu0 0
        %1315 = vmatpush.bf16.xpose.msra.mxu0 0
        %1316 = vmatpush.bf16.xpose.msra.mxu0 %v1310
        %1317 = vmatpush.bf16.xpose.msra.mxu0 %v1307
        %1318 = vmatpush.bf16.xpose.msra.mxu0 %v1304
        %1319 = vmatpush.bf16.xpose.msra.mxu0 %v1301
        %1320 = vmatmul.bf16.gmra.mxu0 %v1289
        %v1321 = vpop.f32.mrf.mxu0
        %v1322 = vadd.f32 %v694, %v1321
        %v1323 = vpop.f32.mrf.mxu0
        %v1324 = vadd.f32 %v694, %v1323
        %1325 = vmatmul.bf16.gmra.mxu0 %v1292
        %v1326 = vpop.f32.mrf.mxu0
        %v1327 = vadd.f32 %v694, %v1326
        %v1328 = vpop.f32.mrf.mxu0
        %v1329 = vadd.f32 %v694, %v1328
        %1330 = vmatmul.bf16.gmra.mxu0 %v1295
        %v1331 = vpop.f32.mrf.mxu0
        %v1332 = vadd.f32 %v694, %v1331
        %v1333 = vpop.f32.mrf.mxu0
        %v1334 = vadd.f32 %v694, %v1333
        %1335 = vmatmul.bf16.gmra.mxu0 %v1298
        %v1336 = vpop.f32.mrf.mxu0
        %v1337 = vadd.f32 %v694, %v1336
        %v1338 = vpop.f32.mrf.mxu0
        %1339 = vdwg.mxu0
        %v1340 = vsel %vm1097, %v1322, -inf
        %1341 = vmax.xlane.f32.xlu0 %v1340
        %v1342 = vpop.xlane.xlu0 %1341
        %v1343 = vsel %vm1097, %v1324, -inf
        %1344 = vmax.xlane.f32.xlu0 %v1343
        %v1345 = vpop.xlane.xlu0 %1344
        %v1346 = vsel %vm1097, %v1327, -inf
        %1347 = vmax.xlane.f32.xlu0 %v1346
        %v1348 = vpop.xlane.xlu0 %1347
        %v1349 = vsel %vm1097, %v1329, -inf
        %1350 = vmax.xlane.f32.xlu0 %v1349
        %v1351 = vpop.xlane.xlu0 %1350
        %v1352 = vsel %vm1097, %v1332, -inf
        %1353 = vmax.xlane.f32.xlu0 %v1352
        %v1354 = vpop.xlane.xlu0 %1353
        %v1355 = vsel %vm1097, %v1334, -inf
        %1356 = vmax.xlane.f32.xlu0 %v1355
        %v1357 = vpop.xlane.xlu0 %1356
        %v1358 = vsel %vm1097, %v1337, -inf
        %1359 = vmax.xlane.f32.xlu0 %v1358
        %v1360 = vpop.xlane.xlu0 %1359
        %v1361 = vsub.f32 %v1322, %v1342
        %v1362 = vsub.f32 %v1324, %v1345
        %v1363 = vsub.f32 %v1327, %v1348
        %v1364 = vsub.f32 %v1329, %v1351
        %v1365 = vsub.f32 %v1332, %v1354
        %v1366 = vsub.f32 %v1334, %v1357
        %v1367 = vsub.f32 %v1337, %v1360
        %v1368 = vmul.f32 %v1361, 1.442695
        %v1369 = vpow.pop %v1368
        %v1370 = vmul.f32 %v1362, 1.442695
        %v1371 = vpow.pop %v1370
        %v1372 = vmul.f32 %v1363, 1.442695
        %v1373 = vpow.pop %v1372
        %v1374 = vmul.f32 %v1364, 1.442695
        %v1375 = vpow.pop %v1374
        %v1376 = vmul.f32 %v1365, 1.442695
        %v1377 = vpow.pop %v1376
        %v1378 = vmul.f32 %v1366, 1.442695
        %v1379 = vpow.pop %v1378
        %v1380 = vmul.f32 %v1367, 1.442695
        %v1381 = vpow.pop %v1380
        %v1382 = vsel %vm1097, %v1369, 0.0
        %1383 = vadd.xlane.f32.xlu0 %v1382
        %v1384 = vpop.xlane.xlu0 %1383
        %v1385 = vsel %vm1097, %v1371, 0.0
        %1386 = vadd.xlane.f32.xlu0 %v1385
        %v1387 = vpop.xlane.xlu0 %1386
        %v1388 = vsel %vm1097, %v1373, 0.0
        %1389 = vadd.xlane.f32.xlu0 %v1388
        %v1390 = vpop.xlane.xlu0 %1389
        %v1391 = vsel %vm1097, %v1375, 0.0
        %1392 = vadd.xlane.f32.xlu0 %v1391
        %v1393 = vpop.xlane.xlu0 %1392
        %v1394 = vsel %vm1097, %v1377, 0.0
        %1395 = vadd.xlane.f32.xlu0 %v1394
        %v1396 = vpop.xlane.xlu0 %1395
        %v1397 = vsel %vm1097, %v1379, 0.0
        %1398 = vadd.xlane.f32.xlu0 %v1397
        %v1399 = vpop.xlane.xlu0 %1398
        %v1400 = vsel %vm1097, %v1381, 0.0
        %1401 = vadd.xlane.f32.xlu0 %v1400
        %v1402 = vpop.xlane.xlu0 %1401
        %v1403 = vrcp.pop %v1384
        %v1404 = vrcp.pop %v1387
        %v1405 = vrcp.pop %v1390
        %v1406 = vrcp.pop %v1393
        %v1407 = vrcp.pop %v1396
        %v1408 = vrcp.pop %v1399
        %v1409 = vrcp.pop %v1402
        %v1410 = vmul.f32 %v1369, %v1403
        %v1411 = vmul.f32 %v1371, %v1404
        %v1412 = vmul.f32 %v1373, %v1405
        %v1413 = vmul.f32 %v1375, %v1406
        %v1414 = vmul.f32 %v1377, %v1407
        %v1415 = vmul.f32 %v1379, %v1408
        %v1416 = vmul.f32 %v1381, %v1409
        %v1417 = vpack.c.bf16 %v1410, %v1410
        %v1418 = vpack.c.bf16 %v1411, %v1411
        %v1419 = vpack.c.bf16 %v1412, %v1412
        %v1420 = vpack.c.bf16 %v1413, %v1413
        %v1421 = vpack.c.bf16 %v1414, %v1414
        %v1422 = vpack.c.bf16 %v1415, %v1415
        %v1423 = vpack.c.bf16 %v1416, %v1416
        %v1431 = vunpack.c.l.b16 %v1417
        %v1432 = vunpack.c.l.b16 %v1418
        %v1433 = vunpack.c.l.b16 %v1419
        %v1434 = vunpack.c.l.b16 %v1420
        %v1435 = vunpack.c.l.b16 %v1421
        %v1436 = vunpack.c.l.b16 %v1422
        %v1437 = vunpack.c.l.b16 %v1423
        %v1438 = vpack.c.b16 %v1432, %v1431
        %v1439 = vpack.c.b16 %v1434, %v1433
        %v1440 = vpack.c.b16 %v1436, %v1435
        %v1441 = vpack.c.b16 %v1437, %v1437
        %1442 = vrot.lane.b32.xlu0 %v1214, 112
        %v1443 = vpop.permute.xlu0 %1442
        %1444 = vrot.lane.b32.xlu0 %v1215, 112
        %v1445 = vpop.permute.xlu0 %1444
        %1446 = vrot.lane.b32.xlu0 %v1216, 112
        %v1447 = vpop.permute.xlu0 %1446
        %1448 = vrot.lane.b32.xlu0 %v1217, 112
        %v1449 = vpop.permute.xlu0 %1448
        %v1454 = vsel %vm1097, %v1438, 0
        %v1457 = vsel %vm1097, %v1439, 0
        %v1460 = vsel %vm1097, %v1440, 0
        %v1463 = vsel %vm1097, %v1441, 0
        %v1466 = vsel %vm1233, %v1449, 0
        %1468 = vmatpush.bf16.msra.mxu0 0
        %1469 = vmatpush.bf16.msra.mxu0 0
        %1470 = vmatpush.bf16.msra.mxu0 0
        %1471 = vmatpush.bf16.msra.mxu0 0
        %1472 = vmatpush.bf16.msra.mxu0 %v1466
        %1473 = vmatpush.bf16.msra.mxu0 %v1447
        %1474 = vmatpush.bf16.msra.mxu0 %v1445
        %1475 = vmatpush.bf16.msra.mxu0 %v1443
        %1476 = vmatmul.bf16.gmra.mxu0 %v1454
        %v1477 = vpop.f32.mrf.mxu0
        %v1478 = vadd.f32 0.0, %v1477
        %v1479 = vpop.f32.mrf.mxu0
        %v1480 = vadd.f32 0.0, %v1479
        %1481 = vmatmul.bf16.gmra.mxu0 %v1457
        %v1482 = vpop.f32.mrf.mxu0
        %v1483 = vadd.f32 0.0, %v1482
        %v1484 = vpop.f32.mrf.mxu0
        %v1485 = vadd.f32 0.0, %v1484
        %1486 = vmatmul.bf16.gmra.mxu0 %v1460
        %v1487 = vpop.f32.mrf.mxu0
        %v1488 = vadd.f32 0.0, %v1487
        %v1489 = vpop.f32.mrf.mxu0
        %v1490 = vadd.f32 0.0, %v1489
        %1491 = vmatmul.bf16.gmra.mxu0 %v1463
        %v1492 = vpop.f32.mrf.mxu0
        %v1493 = vadd.f32 0.0, %v1492
        %v1494 = vpop.f32.mrf.mxu0
        %1495 = vdwg.mxu0
        %1503 = vrot.lane.b32.xlu0 %v1478, 16
        %v1504 = vpop.permute.xlu0 %1503
        %1505 = vrot.lane.b32.xlu0 %v1480, 16
        %v1506 = vpop.permute.xlu0 %1505
        %1507 = vrot.lane.b32.xlu0 %v1483, 16
        %v1508 = vpop.permute.xlu0 %1507
        %1509 = vrot.lane.b32.xlu0 %v1485, 16
        %v1510 = vpop.permute.xlu0 %1509
        %1511 = vrot.lane.b32.xlu0 %v1488, 16
        %v1512 = vpop.permute.xlu0 %1511
        %1513 = vrot.lane.b32.xlu0 %v1490, 16
        %v1514 = vpop.permute.xlu0 %1513
        %1515 = vrot.lane.b32.xlu0 %v1493, 16
        %v1516 = vpop.permute.xlu0 %1515
        %vm1524 = vcmask 261248
        %1525 = vst.msk [vmem:[#allocation2] sm:$0xff] %vm1524, %v1504
        %1526 = vst.msk [vmem:[#allocation2 + $0x8] sm:$0xff] %vm1524, %v1506
        %1527 = vst.msk [vmem:[#allocation2 + $0x10] sm:$0xff] %vm1524, %v1508
        %1528 = vst.msk [vmem:[#allocation2 + $0x18] sm:$0xff] %vm1524, %v1510
        %1529 = vst.msk [vmem:[#allocation2 + $0x20] sm:$0xff] %vm1524, %v1512
        %1530 = vst.msk [vmem:[#allocation2 + $0x28] sm:$0xff] %vm1524, %v1514
        %1531 = vst.msk [vmem:[#allocation2 + $0x30] sm:$0xff] %vm1524, %v1516
        %1532 = vrot.lane.b32.xlu0 %v1033, 96
        %v1533 = vpop.permute.xlu0 %1532
        %1534 = vrot.lane.b32.xlu0 %v1034, 96
        %v1535 = vpop.permute.xlu0 %1534
        %1536 = vrot.lane.b32.xlu0 %v1035, 96
        %v1537 = vpop.permute.xlu0 %1536
        %1538 = vrot.lane.b32.xlu0 %v1036, 96
        %v1539 = vpop.permute.xlu0 %1538
        %1540 = vrot.lane.b32.xlu0 %v1033, 32
        %v1541 = vpop.permute.xlu0 %1540
        %1542 = vrot.lane.b32.xlu0 %v1034, 32
        %v1543 = vpop.permute.xlu0 %1542
        %1544 = vrot.lane.b32.xlu0 %v1035, 32
        %v1545 = vpop.permute.xlu0 %1544
        %1546 = vrot.lane.b32.xlu0 %v1036, 32
        %v1547 = vpop.permute.xlu0 %1546
        %v1549 = vsel %vm636, %v1533, 0
        %v1552 = vsel %vm636, %v1535, 0
        %v1555 = vsel %vm636, %v1537, 0
        %v1558 = vsel %vm636, %v1539, 0
        %v1561 = vsel %vm636, %v1541, 0
        %v1564 = vsel %vm636, %v1543, 0
        %v1567 = vsel %vm636, %v1545, 0
        %v1570 = vsel %vm636, %v1547, 0
        %1572 = vmatpush.bf16.xpose.msra.mxu0 0
        %1573 = vmatpush.bf16.xpose.msra.mxu0 0
        %1574 = vmatpush.bf16.xpose.msra.mxu0 0
        %1575 = vmatpush.bf16.xpose.msra.mxu0 0
        %1576 = vmatpush.bf16.xpose.msra.mxu0 %v1570
        %1577 = vmatpush.bf16.xpose.msra.mxu0 %v1567
        %1578 = vmatpush.bf16.xpose.msra.mxu0 %v1564
        %1579 = vmatpush.bf16.xpose.msra.mxu0 %v1561
        %1580 = vmatmul.bf16.gmra.mxu0 %v1549
        %v1581 = vpop.f32.mrf.mxu0
        %v1582 = vadd.f32 %v694, %v1581
        %v1583 = vpop.f32.mrf.mxu0
        %v1584 = vadd.f32 %v694, %v1583
        %1585 = vmatmul.bf16.gmra.mxu0 %v1552
        %v1586 = vpop.f32.mrf.mxu0
        %v1587 = vadd.f32 %v694, %v1586
        %v1588 = vpop.f32.mrf.mxu0
        %v1589 = vadd.f32 %v694, %v1588
        %1590 = vmatmul.bf16.gmra.mxu0 %v1555
        %v1591 = vpop.f32.mrf.mxu0
        %v1592 = vadd.f32 %v694, %v1591
        %v1593 = vpop.f32.mrf.mxu0
        %v1594 = vadd.f32 %v694, %v1593
        %1595 = vmatmul.bf16.gmra.mxu0 %v1558
        %v1596 = vpop.f32.mrf.mxu0
        %v1597 = vadd.f32 %v694, %v1596
        %v1598 = vpop.f32.mrf.mxu0
        %1599 = vdwg.mxu0
        %v1600 = vsel %vm1097, %v1582, -inf
        %1601 = vmax.xlane.f32.xlu0 %v1600
        %v1602 = vpop.xlane.xlu0 %1601
        %v1603 = vsel %vm1097, %v1584, -inf
        %1604 = vmax.xlane.f32.xlu0 %v1603
        %v1605 = vpop.xlane.xlu0 %1604
        %v1606 = vsel %vm1097, %v1587, -inf
        %1607 = vmax.xlane.f32.xlu0 %v1606
        %v1608 = vpop.xlane.xlu0 %1607
        %v1609 = vsel %vm1097, %v1589, -inf
        %1610 = vmax.xlane.f32.xlu0 %v1609
        %v1611 = vpop.xlane.xlu0 %1610
        %v1612 = vsel %vm1097, %v1592, -inf
        %1613 = vmax.xlane.f32.xlu0 %v1612
        %v1614 = vpop.xlane.xlu0 %1613
        %v1615 = vsel %vm1097, %v1594, -inf
        %1616 = vmax.xlane.f32.xlu0 %v1615
        %v1617 = vpop.xlane.xlu0 %1616
        %v1618 = vsel %vm1097, %v1597, -inf
        %1619 = vmax.xlane.f32.xlu0 %v1618
        %v1620 = vpop.xlane.xlu0 %1619
        %v1621 = vsub.f32 %v1582, %v1602
        %v1622 = vsub.f32 %v1584, %v1605
        %v1623 = vsub.f32 %v1587, %v1608
        %v1624 = vsub.f32 %v1589, %v1611
        %v1625 = vsub.f32 %v1592, %v1614
        %v1626 = vsub.f32 %v1594, %v1617
        %v1627 = vsub.f32 %v1597, %v1620
        %v1628 = vmul.f32 %v1621, 1.442695
        %v1629 = vpow.pop %v1628
        %v1630 = vmul.f32 %v1622, 1.442695
        %v1631 = vpow.pop %v1630
        %v1632 = vmul.f32 %v1623, 1.442695
        %v1633 = vpow.pop %v1632
        %v1634 = vmul.f32 %v1624, 1.442695
        %v1635 = vpow.pop %v1634
        %v1636 = vmul.f32 %v1625, 1.442695
        %v1637 = vpow.pop %v1636
        %v1638 = vmul.f32 %v1626, 1.442695
        %v1639 = vpow.pop %v1638
        %v1640 = vmul.f32 %v1627, 1.442695
        %v1641 = vpow.pop %v1640
        %v1642 = vsel %vm1097, %v1629, 0.0
        %1643 = vadd.xlane.f32.xlu0 %v1642
        %v1644 = vpop.xlane.xlu0 %1643
        %v1645 = vsel %vm1097, %v1631, 0.0
        %1646 = vadd.xlane.f32.xlu0 %v1645
        %v1647 = vpop.xlane.xlu0 %1646
        %v1648 = vsel %vm1097, %v1633, 0.0
        %1649 = vadd.xlane.f32.xlu0 %v1648
        %v1650 = vpop.xlane.xlu0 %1649
        %v1651 = vsel %vm1097, %v1635, 0.0
        %1652 = vadd.xlane.f32.xlu0 %v1651
        %v1653 = vpop.xlane.xlu0 %1652
        %v1654 = vsel %vm1097, %v1637, 0.0
        %1655 = vadd.xlane.f32.xlu0 %v1654
        %v1656 = vpop.xlane.xlu0 %1655
        %v1657 = vsel %vm1097, %v1639, 0.0
        %1658 = vadd.xlane.f32.xlu0 %v1657
        %v1659 = vpop.xlane.xlu0 %1658
        %v1660 = vsel %vm1097, %v1641, 0.0
        %1661 = vadd.xlane.f32.xlu0 %v1660
        %v1662 = vpop.xlane.xlu0 %1661
        %v1663 = vrcp.pop %v1644
        %v1664 = vrcp.pop %v1647
        %v1665 = vrcp.pop %v1650
        %v1666 = vrcp.pop %v1653
        %v1667 = vrcp.pop %v1656
        %v1668 = vrcp.pop %v1659
        %v1669 = vrcp.pop %v1662
        %v1670 = vmul.f32 %v1629, %v1663
        %v1671 = vmul.f32 %v1631, %v1664
        %v1672 = vmul.f32 %v1633, %v1665
        %v1673 = vmul.f32 %v1635, %v1666
        %v1674 = vmul.f32 %v1637, %v1667
        %v1675 = vmul.f32 %v1639, %v1668
        %v1676 = vmul.f32 %v1641, %v1669
        %v1677 = vpack.c.bf16 %v1670, %v1670
        %v1678 = vpack.c.bf16 %v1671, %v1671
        %v1679 = vpack.c.bf16 %v1672, %v1672
        %v1680 = vpack.c.bf16 %v1673, %v1673
        %v1681 = vpack.c.bf16 %v1674, %v1674
        %v1682 = vpack.c.bf16 %v1675, %v1675
        %v1683 = vpack.c.bf16 %v1676, %v1676
        %v1691 = vunpack.c.l.b16 %v1677
        %v1692 = vunpack.c.l.b16 %v1678
        %v1693 = vunpack.c.l.b16 %v1679
        %v1694 = vunpack.c.l.b16 %v1680
        %v1695 = vunpack.c.l.b16 %v1681
        %v1696 = vunpack.c.l.b16 %v1682
        %v1697 = vunpack.c.l.b16 %v1683
        %v1698 = vpack.c.b16 %v1692, %v1691
        %v1699 = vpack.c.b16 %v1694, %v1693
        %v1700 = vpack.c.b16 %v1696, %v1695
        %v1701 = vpack.c.b16 %v1697, %v1697
        %1702 = vrot.lane.b32.xlu0 %v1214, 96
        %v1703 = vpop.permute.xlu0 %1702
        %1704 = vrot.lane.b32.xlu0 %v1215, 96
        %v1705 = vpop.permute.xlu0 %1704
        %1706 = vrot.lane.b32.xlu0 %v1216, 96
        %v1707 = vpop.permute.xlu0 %1706
        %1708 = vrot.lane.b32.xlu0 %v1217, 96
        %v1709 = vpop.permute.xlu0 %1708
        %v1714 = vsel %vm1097, %v1698, 0
        %v1717 = vsel %vm1097, %v1699, 0
        %v1720 = vsel %vm1097, %v1700, 0
        %v1723 = vsel %vm1097, %v1701, 0
        %v1726 = vsel %vm1233, %v1709, 0
        %1728 = vmatpush.bf16.msra.mxu0 0
        %1729 = vmatpush.bf16.msra.mxu0 0
        %1730 = vmatpush.bf16.msra.mxu0 0
        %1731 = vmatpush.bf16.msra.mxu0 0
        %1732 = vmatpush.bf16.msra.mxu0 %v1726
        %1733 = vmatpush.bf16.msra.mxu0 %v1707
        %1734 = vmatpush.bf16.msra.mxu0 %v1705
        %1735 = vmatpush.bf16.msra.mxu0 %v1703
        %1736 = vmatmul.bf16.gmra.mxu0 %v1714
        %v1737 = vpop.f32.mrf.mxu0
        %v1738 = vadd.f32 0.0, %v1737
        %v1739 = vpop.f32.mrf.mxu0
        %v1740 = vadd.f32 0.0, %v1739
        %1741 = vmatmul.bf16.gmra.mxu0 %v1717
        %v1742 = vpop.f32.mrf.mxu0
        %v1743 = vadd.f32 0.0, %v1742
        %v1744 = vpop.f32.mrf.mxu0
        %v1745 = vadd.f32 0.0, %v1744
        %1746 = vmatmul.bf16.gmra.mxu0 %v1720
        %v1747 = vpop.f32.mrf.mxu0
        %v1748 = vadd.f32 0.0, %v1747
        %v1749 = vpop.f32.mrf.mxu0
        %v1750 = vadd.f32 0.0, %v1749
        %1751 = vmatmul.bf16.gmra.mxu0 %v1723
        %v1752 = vpop.f32.mrf.mxu0
        %v1753 = vadd.f32 0.0, %v1752
        %v1754 = vpop.f32.mrf.mxu0
        %1755 = vdwg.mxu0
        %1763 = vrot.lane.b32.xlu0 %v1738, 32
        %v1764 = vpop.permute.xlu0 %1763
        %1765 = vrot.lane.b32.xlu0 %v1740, 32
        %v1766 = vpop.permute.xlu0 %1765
        %1767 = vrot.lane.b32.xlu0 %v1743, 32
        %v1768 = vpop.permute.xlu0 %1767
        %1769 = vrot.lane.b32.xlu0 %v1745, 32
        %v1770 = vpop.permute.xlu0 %1769
        %1771 = vrot.lane.b32.xlu0 %v1748, 32
        %v1772 = vpop.permute.xlu0 %1771
        %1773 = vrot.lane.b32.xlu0 %v1750, 32
        %v1774 = vpop.permute.xlu0 %1773
        %1775 = vrot.lane.b32.xlu0 %v1753, 32
        %v1776 = vpop.permute.xlu0 %1775
        %vm1784 = vcmask 392448
        %1785 = vst.msk [vmem:[#allocation2] sm:$0xff] %vm1784, %v1764
        %1786 = vst.msk [vmem:[#allocation2 + $0x8] sm:$0xff] %vm1784, %v1766
        %1787 = vst.msk [vmem:[#allocation2 + $0x10] sm:$0xff] %vm1784, %v1768
        %1788 = vst.msk [vmem:[#allocation2 + $0x18] sm:$0xff] %vm1784, %v1770
        %1789 = vst.msk [vmem:[#allocation2 + $0x20] sm:$0xff] %vm1784, %v1772
        %1790 = vst.msk [vmem:[#allocation2 + $0x28] sm:$0xff] %vm1784, %v1774
        %1791 = vst.msk [vmem:[#allocation2 + $0x30] sm:$0xff] %vm1784, %v1776
        %1792 = vrot.lane.b32.xlu0 %v1033, 80
        %v1793 = vpop.permute.xlu0 %1792
        %1794 = vrot.lane.b32.xlu0 %v1034, 80
        %v1795 = vpop.permute.xlu0 %1794
        %1796 = vrot.lane.b32.xlu0 %v1035, 80
        %v1797 = vpop.permute.xlu0 %1796
        %1798 = vrot.lane.b32.xlu0 %v1036, 80
        %v1799 = vpop.permute.xlu0 %1798
        %1800 = vrot.lane.b32.xlu0 %v1033, 16
        %v1801 = vpop.permute.xlu0 %1800
        %1802 = vrot.lane.b32.xlu0 %v1034, 16
        %v1803 = vpop.permute.xlu0 %1802
        %1804 = vrot.lane.b32.xlu0 %v1035, 16
        %v1805 = vpop.permute.xlu0 %1804
        %1806 = vrot.lane.b32.xlu0 %v1036, 16
        %v1807 = vpop.permute.xlu0 %1806
        %v1809 = vsel %vm636, %v1793, 0
        %v1812 = vsel %vm636, %v1795, 0
        %v1815 = vsel %vm636, %v1797, 0
        %v1818 = vsel %vm636, %v1799, 0
        %v1821 = vsel %vm636, %v1801, 0
        %v1824 = vsel %vm636, %v1803, 0
        %v1827 = vsel %vm636, %v1805, 0
        %v1830 = vsel %vm636, %v1807, 0
        %1832 = vmatpush.bf16.xpose.msra.mxu0 0
        %1833 = vmatpush.bf16.xpose.msra.mxu0 0
        %1834 = vmatpush.bf16.xpose.msra.mxu0 0
        %1835 = vmatpush.bf16.xpose.msra.mxu0 0
        %1836 = vmatpush.bf16.xpose.msra.mxu0 %v1830
        %1837 = vmatpush.bf16.xpose.msra.mxu0 %v1827
        %1838 = vmatpush.bf16.xpose.msra.mxu0 %v1824
        %1839 = vmatpush.bf16.xpose.msra.mxu0 %v1821
        %1840 = vmatmul.bf16.gmra.mxu0 %v1809
        %v1841 = vpop.f32.mrf.mxu0
        %v1842 = vadd.f32 %v694, %v1841
        %v1843 = vpop.f32.mrf.mxu0
        %v1844 = vadd.f32 %v694, %v1843
        %1845 = vmatmul.bf16.gmra.mxu0 %v1812
        %v1846 = vpop.f32.mrf.mxu0
        %v1847 = vadd.f32 %v694, %v1846
        %v1848 = vpop.f32.mrf.mxu0
        %v1849 = vadd.f32 %v694, %v1848
        %1850 = vmatmul.bf16.gmra.mxu0 %v1815
        %v1851 = vpop.f32.mrf.mxu0
        %v1852 = vadd.f32 %v694, %v1851
        %v1853 = vpop.f32.mrf.mxu0
        %v1854 = vadd.f32 %v694, %v1853
        %1855 = vmatmul.bf16.gmra.mxu0 %v1818
        %v1856 = vpop.f32.mrf.mxu0
        %v1857 = vadd.f32 %v694, %v1856
        %v1858 = vpop.f32.mrf.mxu0
        %1859 = vdwg.mxu0
        %v1860 = vsel %vm1097, %v1842, -inf
        %1861 = vmax.xlane.f32.xlu0 %v1860
        %v1862 = vpop.xlane.xlu0 %1861
        %v1863 = vsel %vm1097, %v1844, -inf
        %1864 = vmax.xlane.f32.xlu0 %v1863
        %v1865 = vpop.xlane.xlu0 %1864
        %v1866 = vsel %vm1097, %v1847, -inf
        %1867 = vmax.xlane.f32.xlu0 %v1866
        %v1868 = vpop.xlane.xlu0 %1867
        %v1869 = vsel %vm1097, %v1849, -inf
        %1870 = vmax.xlane.f32.xlu0 %v1869
        %v1871 = vpop.xlane.xlu0 %1870
        %v1872 = vsel %vm1097, %v1852, -inf
        %1873 = vmax.xlane.f32.xlu0 %v1872
        %v1874 = vpop.xlane.xlu0 %1873
        %v1875 = vsel %vm1097, %v1854, -inf
        %1876 = vmax.xlane.f32.xlu0 %v1875
        %v1877 = vpop.xlane.xlu0 %1876
        %v1878 = vsel %vm1097, %v1857, -inf
        %1879 = vmax.xlane.f32.xlu0 %v1878
        %v1880 = vpop.xlane.xlu0 %1879
        %v1881 = vsub.f32 %v1842, %v1862
        %v1882 = vsub.f32 %v1844, %v1865
        %v1883 = vsub.f32 %v1847, %v1868
        %v1884 = vsub.f32 %v1849, %v1871
        %v1885 = vsub.f32 %v1852, %v1874
        %v1886 = vsub.f32 %v1854, %v1877
        %v1887 = vsub.f32 %v1857, %v1880
        %v1888 = vmul.f32 %v1881, 1.442695
        %v1889 = vpow.pop %v1888
        %v1890 = vmul.f32 %v1882, 1.442695
        %v1891 = vpow.pop %v1890
        %v1892 = vmul.f32 %v1883, 1.442695
        %v1893 = vpow.pop %v1892
        %v1894 = vmul.f32 %v1884, 1.442695
        %v1895 = vpow.pop %v1894
        %v1896 = vmul.f32 %v1885, 1.442695
        %v1897 = vpow.pop %v1896
        %v1898 = vmul.f32 %v1886, 1.442695
        %v1899 = vpow.pop %v1898
        %v1900 = vmul.f32 %v1887, 1.442695
        %v1901 = vpow.pop %v1900
        %v1902 = vsel %vm1097, %v1889, 0.0
        %1903 = vadd.xlane.f32.xlu0 %v1902
        %v1904 = vpop.xlane.xlu0 %1903
        %v1905 = vsel %vm1097, %v1891, 0.0
        %1906 = vadd.xlane.f32.xlu0 %v1905
        %v1907 = vpop.xlane.xlu0 %1906
        %v1908 = vsel %vm1097, %v1893, 0.0
        %1909 = vadd.xlane.f32.xlu0 %v1908
        %v1910 = vpop.xlane.xlu0 %1909
        %v1911 = vsel %vm1097, %v1895, 0.0
        %1912 = vadd.xlane.f32.xlu0 %v1911
        %v1913 = vpop.xlane.xlu0 %1912
        %v1914 = vsel %vm1097, %v1897, 0.0
        %1915 = vadd.xlane.f32.xlu0 %v1914
        %v1916 = vpop.xlane.xlu0 %1915
        %v1917 = vsel %vm1097, %v1899, 0.0
        %1918 = vadd.xlane.f32.xlu0 %v1917
        %v1919 = vpop.xlane.xlu0 %1918
        %v1920 = vsel %vm1097, %v1901, 0.0
        %1921 = vadd.xlane.f32.xlu0 %v1920
        %v1922 = vpop.xlane.xlu0 %1921
        %v1923 = vrcp.pop %v1904
        %v1924 = vrcp.pop %v1907
        %v1925 = vrcp.pop %v1910
        %v1926 = vrcp.pop %v1913
        %v1927 = vrcp.pop %v1916
        %v1928 = vrcp.pop %v1919
        %v1929 = vrcp.pop %v1922
        %v1930 = vmul.f32 %v1889, %v1923
        %v1931 = vmul.f32 %v1891, %v1924
        %v1932 = vmul.f32 %v1893, %v1925
        %v1933 = vmul.f32 %v1895, %v1926
        %v1934 = vmul.f32 %v1897, %v1927
        %v1935 = vmul.f32 %v1899, %v1928
        %v1936 = vmul.f32 %v1901, %v1929
        %v1937 = vpack.c.bf16 %v1930, %v1930
        %v1938 = vpack.c.bf16 %v1931, %v1931
        %v1939 = vpack.c.bf16 %v1932, %v1932
        %v1940 = vpack.c.bf16 %v1933, %v1933
        %v1941 = vpack.c.bf16 %v1934, %v1934
        %v1942 = vpack.c.bf16 %v1935, %v1935
        %v1943 = vpack.c.bf16 %v1936, %v1936
        %v1951 = vunpack.c.l.b16 %v1937
        %v1952 = vunpack.c.l.b16 %v1938
        %v1953 = vunpack.c.l.b16 %v1939
        %v1954 = vunpack.c.l.b16 %v1940
        %v1955 = vunpack.c.l.b16 %v1941
        %v1956 = vunpack.c.l.b16 %v1942
        %v1957 = vunpack.c.l.b16 %v1943
        %v1958 = vpack.c.b16 %v1952, %v1951
        %v1959 = vpack.c.b16 %v1954, %v1953
        %v1960 = vpack.c.b16 %v1956, %v1955
        %v1961 = vpack.c.b16 %v1957, %v1957
        %1962 = vrot.lane.b32.xlu0 %v1214, 80
        %v1963 = vpop.permute.xlu0 %1962
        %1964 = vrot.lane.b32.xlu0 %v1215, 80
        %v1965 = vpop.permute.xlu0 %1964
        %1966 = vrot.lane.b32.xlu0 %v1216, 80
        %v1967 = vpop.permute.xlu0 %1966
        %1968 = vrot.lane.b32.xlu0 %v1217, 80
        %v1969 = vpop.permute.xlu0 %1968
        %v1974 = vsel %vm1097, %v1958, 0
        %v1977 = vsel %vm1097, %v1959, 0
        %v1980 = vsel %vm1097, %v1960, 0
        %v1983 = vsel %vm1097, %v1961, 0
        %v1986 = vsel %vm1233, %v1969, 0
        %1988 = vmatpush.bf16.msra.mxu0 0
        %1989 = vmatpush.bf16.msra.mxu0 0
        %1990 = vmatpush.bf16.msra.mxu0 0
        %1991 = vmatpush.bf16.msra.mxu0 0
        %1992 = vmatpush.bf16.msra.mxu0 %v1986
        %1993 = vmatpush.bf16.msra.mxu0 %v1967
        %1994 = vmatpush.bf16.msra.mxu0 %v1965
        %1995 = vmatpush.bf16.msra.mxu0 %v1963
        %1996 = vmatmul.bf16.gmra.mxu0 %v1974
        %v1997 = vpop.f32.mrf.mxu0
        %v1998 = vadd.f32 0.0, %v1997
        %v1999 = vpop.f32.mrf.mxu0
        %v2000 = vadd.f32 0.0, %v1999
        %2001 = vmatmul.bf16.gmra.mxu0 %v1977
        %v2002 = vpop.f32.mrf.mxu0
        %v2003 = vadd.f32 0.0, %v2002
        %v2004 = vpop.f32.mrf.mxu0
        %v2005 = vadd.f32 0.0, %v2004
        %2006 = vmatmul.bf16.gmra.mxu0 %v1980
        %v2007 = vpop.f32.mrf.mxu0
        %v2008 = vadd.f32 0.0, %v2007
        %v2009 = vpop.f32.mrf.mxu0
        %v2010 = vadd.f32 0.0, %v2009
        %2011 = vmatmul.bf16.gmra.mxu0 %v1983
        %v2012 = vpop.f32.mrf.mxu0
        %v2013 = vadd.f32 0.0, %v2012
        %v2014 = vpop.f32.mrf.mxu0
        %2015 = vdwg.mxu0
        %2023 = vrot.lane.b32.xlu0 %v1998, 48
        %v2024 = vpop.permute.xlu0 %2023
        %2025 = vrot.lane.b32.xlu0 %v2000, 48
        %v2026 = vpop.permute.xlu0 %2025
        %2027 = vrot.lane.b32.xlu0 %v2003, 48
        %v2028 = vpop.permute.xlu0 %2027
        %2029 = vrot.lane.b32.xlu0 %v2005, 48
        %v2030 = vpop.permute.xlu0 %2029
        %2031 = vrot.lane.b32.xlu0 %v2008, 48
        %v2032 = vpop.permute.xlu0 %2031
        %2033 = vrot.lane.b32.xlu0 %v2010, 48
        %v2034 = vpop.permute.xlu0 %2033
        %2035 = vrot.lane.b32.xlu0 %v2013, 48
        %v2036 = vpop.permute.xlu0 %2035
        %vm2044 = vcmask 523648
        %2045 = vst.msk [vmem:[#allocation2] sm:$0xff] %vm2044, %v2024
        %2046 = vst.msk [vmem:[#allocation2 + $0x8] sm:$0xff] %vm2044, %v2026
        %2047 = vst.msk [vmem:[#allocation2 + $0x10] sm:$0xff] %vm2044, %v2028
        %2048 = vst.msk [vmem:[#allocation2 + $0x18] sm:$0xff] %vm2044, %v2030
        %2049 = vst.msk [vmem:[#allocation2 + $0x20] sm:$0xff] %vm2044, %v2032
        %2050 = vst.msk [vmem:[#allocation2 + $0x28] sm:$0xff] %vm2044, %v2034
        %2051 = vst.msk [vmem:[#allocation2 + $0x30] sm:$0xff] %vm2044, %v2036
        %v2052 = vld [vmem:[#allocation2] sm:$0xff]
        %v2053 = vld [vmem:[#allocation2 + $0x8] sm:$0xff]
        %v2054 = vld [vmem:[#allocation2 + $0x10] sm:$0xff]
        %v2055 = vld [vmem:[#allocation2 + $0x18] sm:$0xff]
        %v2056 = vld [vmem:[#allocation2 + $0x20] sm:$0xff]
        %v2057 = vld [vmem:[#allocation2 + $0x28] sm:$0xff]
        %v2058 = vld [vmem:[#allocation2 + $0x30] sm:$0xff]
        %v2059 = vpack.c.bf16 %v2053, %v2052
        %v2060 = vpack.c.bf16 %v2055, %v2054
        %v2061 = vpack.c.bf16 %v2057, %v2056
        %v2062 = vpack.c.bf16 %v2058, %v2058
        %v2063 = vld [vmem:[%s7] sm:$0xf]
        %v2064 = vld [vmem:[%s7 + $0x4] sm:$0xf]
        %v2065 = vld [vmem:[%s7 + $0x8] sm:$0xf]
        %v2066 = vld [vmem:[%s7 + $0xc] sm:$0xf]
        %v2067 = vld [vmem:[%s7 + $0x10] sm:$0xf]
        %v2068 = vld [vmem:[%s7 + $0x14] sm:$0xf]
        %v2069 = vld [vmem:[%s7 + $0x18] sm:$0xf]
        %v2070 = vld [vmem:[%s7 + $0x1c] sm:$0xf]
        %v2071 = vld [vmem:[%s8] sm:$0x1]
        %v2073 = vperm.slane %v2071, 0
        %v2083 = vunpack.c.l.b16 %v2063
        %v2084 = vunpack.c.l.b16 %v2064
        %v2085 = vunpack.c.l.b16 %v2065
        %v2086 = vunpack.c.l.b16 %v2066
        %v2087 = vunpack.c.l.b16 %v2067
        %v2088 = vunpack.c.l.b16 %v2068
        %v2089 = vunpack.c.l.b16 %v2069
        %v2090 = vunpack.c.l.b16 %v2070
        %v2091 = vpack.c.b16 %v2084, %v2083
        %v2092 = vpack.c.b16 %v2086, %v2085
        %v2093 = vpack.c.b16 %v2088, %v2087
        %v2094 = vpack.c.b16 %v2090, %v2089
        %v2100 = vsel %vm697, %v2059, 0
        %v2103 = vsel %vm697, %v2060, 0
        %v2106 = vsel %vm697, %v2061, 0
        %v2109 = vsel %vm697, %v2062, 0
        %2111 = vmatpush.bf16.msra.mxu0 0
        %2112 = vmatpush.bf16.msra.mxu0 0
        %2113 = vmatpush.bf16.msra.mxu0 0
        %2114 = vmatpush.bf16.msra.mxu0 0
        %2115 = vmatpush.bf16.msra.mxu0 %v2094
        %2116 = vmatpush.bf16.msra.mxu0 %v2093
        %2117 = vmatpush.bf16.msra.mxu0 %v2092
        %2118 = vmatpush.bf16.msra.mxu0 %v2091
        %2119 = vmatmul.bf16.gmra.mxu0 %v2100
        %v2120 = vpop.f32.mrf.mxu0
        %v2121 = vadd.f32 %v2073, %v2120
        %v2122 = vpop.f32.mrf.mxu0
        %v2123 = vadd.f32 %v2073, %v2122
        %2124 = vmatmul.bf16.gmra.mxu0 %v2103
        %v2125 = vpop.f32.mrf.mxu0
        %v2126 = vadd.f32 %v2073, %v2125
        %v2127 = vpop.f32.mrf.mxu0
        %v2128 = vadd.f32 %v2073, %v2127
        %2129 = vmatmul.bf16.gmra.mxu0 %v2106
        %v2130 = vpop.f32.mrf.mxu0
        %v2131 = vadd.f32 %v2073, %v2130
        %v2132 = vpop.f32.mrf.mxu0
        %v2133 = vadd.f32 %v2073, %v2132
        %2134 = vmatmul.bf16.gmra.mxu0 %v2109
        %v2135 = vpop.f32.mrf.mxu0
        %v2136 = vadd.f32 %v2073, %v2135
        %v2137 = vpop.f32.mrf.mxu0
        %2138 = vdwg.mxu0
        %v2139 = vadd.f32 %v684, %v2121
        %v2140 = vadd.f32 %v685, %v2123
        %v2141 = vadd.f32 %v686, %v2126
        %v2142 = vadd.f32 %v687, %v2128
        %v2143 = vadd.f32 %v688, %v2131
        %v2144 = vadd.f32 %v689, %v2133
        %v2145 = vadd.f32 %v690, %v2136
        %v2146 = vld [vmem:[%s9] sm:$0x1]
        %v2147 = vld [vmem:[%s10] sm:$0x1]
        %v2148 = vsel %vm697, %v2139, 0.0
        %2149 = vadd.xlane.f32.xlu0 %v2148
        %v2150 = vpop.xlane.xlu0 %2149
        %v2151 = vsel %vm697, %v2140, 0.0
        %2152 = vadd.xlane.f32.xlu0 %v2151
        %v2153 = vpop.xlane.xlu0 %2152
        %v2154 = vsel %vm697, %v2141, 0.0
        %2155 = vadd.xlane.f32.xlu0 %v2154
        %v2156 = vpop.xlane.xlu0 %2155
        %v2157 = vsel %vm697, %v2142, 0.0
        %2158 = vadd.xlane.f32.xlu0 %v2157
        %v2159 = vpop.xlane.xlu0 %2158
        %v2160 = vsel %vm697, %v2143, 0.0
        %2161 = vadd.xlane.f32.xlu0 %v2160
        %v2162 = vpop.xlane.xlu0 %2161
        %v2163 = vsel %vm697, %v2144, 0.0
        %2164 = vadd.xlane.f32.xlu0 %v2163
        %v2165 = vpop.xlane.xlu0 %2164
        %v2166 = vsel %vm697, %v2145, 0.0
        %2167 = vadd.xlane.f32.xlu0 %v2166
        %v2168 = vpop.xlane.xlu0 %2167
        %v2169 = vmul.f32 %v2150, %v725
        %v2170 = vmul.f32 %v2153, %v725
        %v2171 = vmul.f32 %v2156, %v725
        %v2172 = vmul.f32 %v2159, %v725
        %v2173 = vmul.f32 %v2162, %v725
        %v2174 = vmul.f32 %v2165, %v725
        %v2175 = vmul.f32 %v2168, %v725
        %v2176 = vsub.f32 %v2139, %v2169
        %v2177 = vsub.f32 %v2140, %v2170
        %v2178 = vsub.f32 %v2141, %v2171
        %v2179 = vsub.f32 %v2142, %v2172
        %v2180 = vsub.f32 %v2143, %v2173
        %v2181 = vsub.f32 %v2144, %v2174
        %v2182 = vsub.f32 %v2145, %v2175
        %v2183 = vmul.f32 %v2176, %v2176
        %v2184 = vmul.f32 %v2177, %v2177
        %v2185 = vmul.f32 %v2178, %v2178
        %v2186 = vmul.f32 %v2179, %v2179
        %v2187 = vmul.f32 %v2180, %v2180
        %v2188 = vmul.f32 %v2181, %v2181
        %v2189 = vmul.f32 %v2182, %v2182
        %v2190 = vsel %vm697, %v2183, 0.0
        %2191 = vadd.xlane.f32.xlu0 %v2190
        %v2192 = vpop.xlane.xlu0 %2191
        %v2193 = vsel %vm697, %v2184, 0.0
        %2194 = vadd.xlane.f32.xlu0 %v2193
        %v2195 = vpop.xlane.xlu0 %2194
        %v2196 = vsel %vm697, %v2185, 0.0
        %2197 = vadd.xlane.f32.xlu0 %v2196
        %v2198 = vpop.xlane.xlu0 %2197
        %v2199 = vsel %vm697, %v2186, 0.0
        %2200 = vadd.xlane.f32.xlu0 %v2199
        %v2201 = vpop.xlane.xlu0 %2200
        %v2202 = vsel %vm697, %v2187, 0.0
        %2203 = vadd.xlane.f32.xlu0 %v2202
        %v2204 = vpop.xlane.xlu0 %2203
        %v2205 = vsel %vm697, %v2188, 0.0
        %2206 = vadd.xlane.f32.xlu0 %v2205
        %v2207 = vpop.xlane.xlu0 %2206
        %v2208 = vsel %vm697, %v2189, 0.0
        %2209 = vadd.xlane.f32.xlu0 %v2208
        %v2210 = vpop.xlane.xlu0 %2209
        %v2211 = vmul.f32 %v2192, %v725
        %v2212 = vmul.f32 %v2195, %v725
        %v2213 = vmul.f32 %v2198, %v725
        %v2214 = vmul.f32 %v2201, %v725
        %v2215 = vmul.f32 %v2204, %v725
        %v2216 = vmul.f32 %v2207, %v725
        %v2217 = vmul.f32 %v2210, %v725
        %v2218 = vadd.f32 %v2211, 1e-05
        %v2219 = vadd.f32 %v2212, 1e-05
        %v2220 = vadd.f32 %v2213, 1e-05
        %v2221 = vadd.f32 %v2214, 1e-05
        %v2222 = vadd.f32 %v2215, 1e-05
        %v2223 = vadd.f32 %v2216, 1e-05
        %v2224 = vadd.f32 %v2217, 1e-05
        %v2225 = vrsqrt.pop %v2218
        %v2226 = vmul.f32 %v2225, %v2218
        %v2227 = vmul.f32 %v2226, %v2225
        %v2228 = vmul.f32 0.5, %v2227
        %v2229 = vsub.f32 1.5, %v2228
        %v2230 = vmul.f32 %v2225, %v2229
        %vm2231 = vweird.f32 %v2218
        %vm2232 = vweird.f32 %v2225
        %vm2233 = vmor %vm2231, %vm2232
        %v2234 = vsel %vm2233, %v2225, %v2230
        %v2235 = vrsqrt.pop %v2219
        %v2236 = vmul.f32 %v2235, %v2219
        %v2237 = vmul.f32 %v2236, %v2235
        %v2238 = vmul.f32 0.5, %v2237
        %v2239 = vsub.f32 1.5, %v2238
        %v2240 = vmul.f32 %v2235, %v2239
        %vm2241 = vweird.f32 %v2219
        %vm2242 = vweird.f32 %v2235
        %vm2243 = vmor %vm2241, %vm2242
        %v2244 = vsel %vm2243, %v2235, %v2240
        %v2245 = vrsqrt.pop %v2220
        %v2246 = vmul.f32 %v2245, %v2220
        %v2247 = vmul.f32 %v2246, %v2245
        %v2248 = vmul.f32 0.5, %v2247
        %v2249 = vsub.f32 1.5, %v2248
        %v2250 = vmul.f32 %v2245, %v2249
        %vm2251 = vweird.f32 %v2220
        %vm2252 = vweird.f32 %v2245
        %vm2253 = vmor %vm2251, %vm2252
        %v2254 = vsel %vm2253, %v2245, %v2250
        %v2255 = vrsqrt.pop %v2221
        %v2256 = vmul.f32 %v2255, %v2221
        %v2257 = vmul.f32 %v2256, %v2255
        %v2258 = vmul.f32 0.5, %v2257
        %v2259 = vsub.f32 1.5, %v2258
        %v2260 = vmul.f32 %v2255, %v2259
        %vm2261 = vweird.f32 %v2221
        %vm2262 = vweird.f32 %v2255
        %vm2263 = vmor %vm2261, %vm2262
        %v2264 = vsel %vm2263, %v2255, %v2260
        %v2265 = vrsqrt.pop %v2222
        %v2266 = vmul.f32 %v2265, %v2222
        %v2267 = vmul.f32 %v2266, %v2265
        %v2268 = vmul.f32 0.5, %v2267
        %v2269 = vsub.f32 1.5, %v2268
        %v2270 = vmul.f32 %v2265, %v2269
        %vm2271 = vweird.f32 %v2222
        %vm2272 = vweird.f32 %v2265
        %vm2273 = vmor %vm2271, %vm2272
        %v2274 = vsel %vm2273, %v2265, %v2270
        %v2275 = vrsqrt.pop %v2223
        %v2276 = vmul.f32 %v2275, %v2223
        %v2277 = vmul.f32 %v2276, %v2275
        %v2278 = vmul.f32 0.5, %v2277
        %v2279 = vsub.f32 1.5, %v2278
        %v2280 = vmul.f32 %v2275, %v2279
        %vm2281 = vweird.f32 %v2223
        %vm2282 = vweird.f32 %v2275
        %vm2283 = vmor %vm2281, %vm2282
        %v2284 = vsel %vm2283, %v2275, %v2280
        %v2285 = vrsqrt.pop %v2224
        %v2286 = vmul.f32 %v2285, %v2224
        %v2287 = vmul.f32 %v2286, %v2285
        %v2288 = vmul.f32 0.5, %v2287
        %v2289 = vsub.f32 1.5, %v2288
        %v2290 = vmul.f32 %v2285, %v2289
        %vm2291 = vweird.f32 %v2224
        %vm2292 = vweird.f32 %v2285
        %vm2293 = vmor %vm2291, %vm2292
        %v2294 = vsel %vm2293, %v2285, %v2290
        %v2295 = vmul.f32 %v2176, %v2234
        %v2296 = vmul.f32 %v2177, %v2244
        %v2297 = vmul.f32 %v2178, %v2254
        %v2298 = vmul.f32 %v2179, %v2264
        %v2299 = vmul.f32 %v2180, %v2274
        %v2300 = vmul.f32 %v2181, %v2284
        %v2301 = vmul.f32 %v2182, %v2294
        %v2303 = vperm.slane %v2146, 0
        %v2305 = vmul.f32 %v2295, %v2303
        %v2306 = vmul.f32 %v2296, %v2303
        %v2307 = vmul.f32 %v2297, %v2303
        %v2308 = vmul.f32 %v2298, %v2303
        %v2309 = vmul.f32 %v2299, %v2303
        %v2310 = vmul.f32 %v2300, %v2303
        %v2311 = vmul.f32 %v2301, %v2303
        %v2313 = vperm.slane %v2147, 0
        %v2315 = vadd.f32 %v2305, %v2313
        %v2316 = vadd.f32 %v2306, %v2313
        %v2317 = vadd.f32 %v2307, %v2313
        %v2318 = vadd.f32 %v2308, %v2313
        %v2319 = vadd.f32 %v2309, %v2313
        %v2320 = vadd.f32 %v2310, %v2313
        %v2321 = vadd.f32 %v2311, %v2313
        %v2322 = vpack.c.bf16 %v2316, %v2315
        %v2323 = vpack.c.bf16 %v2318, %v2317
        %v2324 = vpack.c.bf16 %v2320, %v2319
        %v2325 = vpack.c.bf16 %v2321, %v2321
        %v2326 = vld [vmem:[%s11] sm:$0xff]
        %v2327 = vld [vmem:[%s11 + $0x8] sm:$0xff]
        %v2328 = vld [vmem:[%s11 + $0x10] sm:$0xff]
        %v2329 = vld [vmem:[%s11 + $0x18] sm:$0xff]
        %v2330 = vld [vmem:[%s11 + $0x20] sm:$0xff]
        %v2331 = vld [vmem:[%s11 + $0x28] sm:$0xff]
        %v2332 = vld [vmem:[%s11 + $0x30] sm:$0xff]
        %v2333 = vld [vmem:[%s11 + $0x38] sm:$0xff]
        %v2334 = vld [vmem:[%s12] sm:$0x3]
        %v2336 = vperm.slane %v2334, 0
        %v2337 = vperm.slane %v2334, 1
        %v2348 = vunpack.c.l.b16 %v2326
        %v2349 = vunpack.c.h.b16 %v2326
        %v2350 = vunpack.c.l.b16 %v2327
        %v2351 = vunpack.c.h.b16 %v2327
        %v2352 = vunpack.c.l.b16 %v2328
        %v2353 = vunpack.c.h.b16 %v2328
        %v2354 = vunpack.c.l.b16 %v2329
        %v2355 = vunpack.c.h.b16 %v2329
        %v2356 = vunpack.c.l.b16 %v2330
        %v2357 = vunpack.c.h.b16 %v2330
        %v2358 = vunpack.c.l.b16 %v2331
        %v2359 = vunpack.c.h.b16 %v2331
        %v2360 = vunpack.c.l.b16 %v2332
        %v2361 = vunpack.c.h.b16 %v2332
        %v2362 = vunpack.c.l.b16 %v2333
        %v2363 = vunpack.c.h.b16 %v2333
        %v2364 = vpack.c.b16 %v2350, %v2348
        %v2365 = vpack.c.b16 %v2351, %v2349
        %v2366 = vpack.c.b16 %v2354, %v2352
        %v2367 = vpack.c.b16 %v2355, %v2353
        %v2368 = vpack.c.b16 %v2358, %v2356
        %v2369 = vpack.c.b16 %v2359, %v2357
        %v2370 = vpack.c.b16 %v2362, %v2360
        %v2371 = vpack.c.b16 %v2363, %v2361
        %v2381 = vsel %vm697, %v2322, 0
        %v2384 = vsel %vm697, %v2323, 0
        %v2387 = vsel %vm697, %v2324, 0
        %v2390 = vsel %vm697, %v2325, 0
        %2392 = vmatpush.bf16.msra.mxu0 0
        %2393 = vmatpush.bf16.msra.mxu0 0
        %2394 = vmatpush.bf16.msra.mxu0 0
        %2395 = vmatpush.bf16.msra.mxu0 0
        %2396 = vmatpush.bf16.msra.mxu0 %v2370
        %2397 = vmatpush.bf16.msra.mxu0 %v2368
        %2398 = vmatpush.bf16.msra.mxu0 %v2366
        %2399 = vmatpush.bf16.msra.mxu0 %v2364
        %2400 = vmatmul.bf16.gmra.mxu0 %v2381
        %v2401 = vpop.f32.mrf.mxu0
        %v2402 = vadd.f32 %v2336, %v2401
        %v2403 = vpop.f32.mrf.mxu0
        %v2404 = vadd.f32 %v2336, %v2403
        %2405 = vmatmul.bf16.gmra.mxu0 %v2384
        %v2406 = vpop.f32.mrf.mxu0
        %v2407 = vadd.f32 %v2336, %v2406
        %v2408 = vpop.f32.mrf.mxu0
        %v2409 = vadd.f32 %v2336, %v2408
        %2410 = vmatmul.bf16.gmra.mxu0 %v2387
        %v2411 = vpop.f32.mrf.mxu0
        %v2412 = vadd.f32 %v2336, %v2411
        %v2413 = vpop.f32.mrf.mxu0
        %v2414 = vadd.f32 %v2336, %v2413
        %2415 = vmatmul.bf16.gmra.mxu0 %v2390
        %v2416 = vpop.f32.mrf.mxu0
        %v2417 = vadd.f32 %v2336, %v2416
        %v2418 = vpop.f32.mrf.mxu0
        %2419 = vdwg.mxu0
        %2420 = vmatpush.bf16.msra.mxu0 0
        %2421 = vmatpush.bf16.msra.mxu0 0
        %2422 = vmatpush.bf16.msra.mxu0 0
        %2423 = vmatpush.bf16.msra.mxu0 0
        %2424 = vmatpush.bf16.msra.mxu0 %v2371
        %2425 = vmatpush.bf16.msra.mxu0 %v2369
        %2426 = vmatpush.bf16.msra.mxu0 %v2367
        %2427 = vmatpush.bf16.msra.mxu0 %v2365
        %2428 = vmatmul.bf16.gmra.mxu0 %v2381
        %v2429 = vpop.f32.mrf.mxu0
        %v2430 = vadd.f32 %v2337, %v2429
        %v2431 = vpop.f32.mrf.mxu0
        %v2432 = vadd.f32 %v2337, %v2431
        %2433 = vmatmul.bf16.gmra.mxu0 %v2384
        %v2434 = vpop.f32.mrf.mxu0
        %v2435 = vadd.f32 %v2337, %v2434
        %v2436 = vpop.f32.mrf.mxu0
        %v2437 = vadd.f32 %v2337, %v2436
        %2438 = vmatmul.bf16.gmra.mxu0 %v2387
        %v2439 = vpop.f32.mrf.mxu0
        %v2440 = vadd.f32 %v2337, %v2439
        %v2441 = vpop.f32.mrf.mxu0
        %v2442 = vadd.f32 %v2337, %v2441
        %2443 = vmatmul.bf16.gmra.mxu0 %v2390
        %v2444 = vpop.f32.mrf.mxu0
        %v2445 = vadd.f32 %v2337, %v2444
        %v2446 = vpop.f32.mrf.mxu0
        %2447 = vdwg.mxu0
        %v2448 = vmul.f32 %v2402, 0.5
        %v2449 = vmul.f32 %v2430, 0.5
        %v2450 = vmul.f32 %v2404, 0.5
        %v2451 = vmul.f32 %v2432, 0.5
        %v2452 = vmul.f32 %v2407, 0.5
        %v2453 = vmul.f32 %v2435, 0.5
        %v2454 = vmul.f32 %v2409, 0.5
        %v2455 = vmul.f32 %v2437, 0.5
        %v2456 = vmul.f32 %v2412, 0.5
        %v2457 = vmul.f32 %v2440, 0.5
        %v2458 = vmul.f32 %v2414, 0.5
        %v2459 = vmul.f32 %v2442, 0.5
        %v2460 = vmul.f32 %v2417, 0.5
        %v2461 = vmul.f32 %v2445, 0.5
        %v2462 = vmul.f32 %v2402, 0.70710677
        %v2463 = vmul.f32 %v2430, 0.70710677
        %v2464 = vmul.f32 %v2404, 0.70710677
        %v2465 = vmul.f32 %v2432, 0.70710677
        %v2466 = vmul.f32 %v2407, 0.70710677
        %v2467 = vmul.f32 %v2435, 0.70710677
        %v2468 = vmul.f32 %v2409, 0.70710677
        %v2469 = vmul.f32 %v2437, 0.70710677
        %v2470 = vmul.f32 %v2412, 0.70710677
        %v2471 = vmul.f32 %v2440, 0.70710677
        %v2472 = vmul.f32 %v2414, 0.70710677
        %v2473 = vmul.f32 %v2442, 0.70710677
        %v2474 = vmul.f32 %v2417, 0.70710677
        %v2475 = vmul.f32 %v2445, 0.70710677
        %v2476 = vand.u32 2147483647, %v2462
        %v2477 = vand.u32 2147483647, %v2463
        %v2478 = vand.u32 2147483647, %v2464
        %v2479 = vand.u32 2147483647, %v2465
        %v2480 = vand.u32 2147483647, %v2466
        %v2481 = vand.u32 2147483647, %v2467
        %v2482 = vand.u32 2147483647, %v2468
        %v2483 = vand.u32 2147483647, %v2469
        %v2484 = vand.u32 2147483647, %v2470
        %v2485 = vand.u32 2147483647, %v2471
        %v2486 = vand.u32 2147483647, %v2472
        %v2487 = vand.u32 2147483647, %v2473
        %v2488 = vand.u32 2147483647, %v2474
        %v2489 = vand.u32 2147483647, %v2475
        %v2490 = vmul.f32 %v2476, 0.3275911
        %v2491 = vmul.f32 %v2477, 0.3275911
        %v2492 = vmul.f32 %v2478, 0.3275911
        %v2493 = vmul.f32 %v2479, 0.3275911
        %v2494 = vmul.f32 %v2480, 0.3275911
        %v2495 = vmul.f32 %v2481, 0.3275911
        %v2496 = vmul.f32 %v2482, 0.3275911
        %v2497 = vmul.f32 %v2483, 0.3275911
        %v2498 = vmul.f32 %v2484, 0.3275911
        %v2499 = vmul.f32 %v2485, 0.3275911
        %v2500 = vmul.f32 %v2486, 0.3275911
        %v2501 = vmul.f32 %v2487, 0.3275911
        %v2502 = vmul.f32 %v2488, 0.3275911
        %v2503 = vmul.f32 %v2489, 0.3275911
        %v2504 = vadd.f32 %v2490, 1.0
        %v2505 = vadd.f32 %v2491, 1.0
        %v2506 = vadd.f32 %v2492, 1.0
        %v2507 = vadd.f32 %v2493, 1.0
        %v2508 = vadd.f32 %v2494, 1.0
        %v2509 = vadd.f32 %v2495, 1.0
        %v2510 = vadd.f32 %v2496, 1.0
        %v2511 = vadd.f32 %v2497, 1.0
        %v2512 = vadd.f32 %v2498, 1.0
        %v2513 = vadd.f32 %v2499, 1.0
        %v2514 = vadd.f32 %v2500, 1.0
        %v2515 = vadd.f32 %v2501, 1.0
        %v2516 = vadd.f32 %v2502, 1.0
        %v2517 = vadd.f32 %v2503, 1.0
        %v2518 = vrcp.pop %v2504
        %v2519 = vmul.f32 %v2504, %v2518
        %v2520 = vsub.f32 1.0, %v2519
        %v2521 = vmul.f32 %v2518, %v2520
        %v2522 = vadd.f32 %v2518, %v2521
        %vm2523 = vweird.f32 %v2504
        %vm2524 = vweird.f32 %v2518
        %vm2525 = vmor %vm2523, %vm2524
        %v2526 = vsel %vm2525, %v2518, %v2522
        %v2527 = vand.u32 2147483647, %v2504
        %vm2528 = vcmp.eq.f32.partialorder %v2527, 8.507059e+37
        %v2529 = vand.u32 %v2504, 2147483648
        %v2530 = vor.u32 1.1754944e-38, %v2529
        %v2531 = vsel %vm2528, %v2530, %v2526
        %v2532 = vmul.f32 1.0, %v2531
        %v2533 = vrcp.pop %v2505
        %v2534 = vmul.f32 %v2505, %v2533
        %v2535 = vsub.f32 1.0, %v2534
        %v2536 = vmul.f32 %v2533, %v2535
        %v2537 = vadd.f32 %v2533, %v2536
        %vm2538 = vweird.f32 %v2505
        %vm2539 = vweird.f32 %v2533
        %vm2540 = vmor %vm2538, %vm2539
        %v2541 = vsel %vm2540, %v2533, %v2537
        %v2542 = vand.u32 2147483647, %v2505
        %vm2543 = vcmp.eq.f32.partialorder %v2542, 8.507059e+37
        %v2544 = vand.u32 %v2505, 2147483648
        %v2545 = vor.u32 1.1754944e-38, %v2544
        %v2546 = vsel %vm2543, %v2545, %v2541
        %v2547 = vmul.f32 1.0, %v2546
        %v2548 = vrcp.pop %v2506
        %v2549 = vmul.f32 %v2506, %v2548
        %v2550 = vsub.f32 1.0, %v2549
        %v2551 = vmul.f32 %v2548, %v2550
        %v2552 = vadd.f32 %v2548, %v2551
        %vm2553 = vweird.f32 %v2506
        %vm2554 = vweird.f32 %v2548
        %vm2555 = vmor %vm2553, %vm2554
        %v2556 = vsel %vm2555, %v2548, %v2552
        %v2557 = vand.u32 2147483647, %v2506
        %vm2558 = vcmp.eq.f32.partialorder %v2557, 8.507059e+37
        %v2559 = vand.u32 %v2506, 2147483648
        %v2560 = vor.u32 1.1754944e-38, %v2559
        %v2561 = vsel %vm2558, %v2560, %v2556
        %v2562 = vmul.f32 1.0, %v2561
        %v2563 = vrcp.pop %v2507
        %v2564 = vmul.f32 %v2507, %v2563
        %v2565 = vsub.f32 1.0, %v2564
        %v2566 = vmul.f32 %v2563, %v2565
        %v2567 = vadd.f32 %v2563, %v2566
        %vm2568 = vweird.f32 %v2507
        %vm2569 = vweird.f32 %v2563
        %vm2570 = vmor %vm2568, %vm2569
        %v2571 = vsel %vm2570, %v2563, %v2567
        %v2572 = vand.u32 2147483647, %v2507
        %vm2573 = vcmp.eq.f32.partialorder %v2572, 8.507059e+37
        %v2574 = vand.u32 %v2507, 2147483648
        %v2575 = vor.u32 1.1754944e-38, %v2574
        %v2576 = vsel %vm2573, %v2575, %v2571
        %v2577 = vmul.f32 1.0, %v2576
        %v2578 = vrcp.pop %v2508
        %v2579 = vmul.f32 %v2508, %v2578
        %v2580 = vsub.f32 1.0, %v2579
        %v2581 = vmul.f32 %v2578, %v2580
        %v2582 = vadd.f32 %v2578, %v2581
        %vm2583 = vweird.f32 %v2508
        %vm2584 = vweird.f32 %v2578
        %vm2585 = vmor %vm2583, %vm2584
        %v2586 = vsel %vm2585, %v2578, %v2582
        %v2587 = vand.u32 2147483647, %v2508
        %vm2588 = vcmp.eq.f32.partialorder %v2587, 8.507059e+37
        %v2589 = vand.u32 %v2508, 2147483648
        %v2590 = vor.u32 1.1754944e-38, %v2589
        %v2591 = vsel %vm2588, %v2590, %v2586
        %v2592 = vmul.f32 1.0, %v2591
        %v2593 = vrcp.pop %v2509
        %v2594 = vmul.f32 %v2509, %v2593
        %v2595 = vsub.f32 1.0, %v2594
        %v2596 = vmul.f32 %v2593, %v2595
        %v2597 = vadd.f32 %v2593, %v2596
        %vm2598 = vweird.f32 %v2509
        %vm2599 = vweird.f32 %v2593
        %vm2600 = vmor %vm2598, %vm2599
        %v2601 = vsel %vm2600, %v2593, %v2597
        %v2602 = vand.u32 2147483647, %v2509
        %vm2603 = vcmp.eq.f32.partialorder %v2602, 8.507059e+37
        %v2604 = vand.u32 %v2509, 2147483648
        %v2605 = vor.u32 1.1754944e-38, %v2604
        %v2606 = vsel %vm2603, %v2605, %v2601
        %v2607 = vmul.f32 1.0, %v2606
        %v2608 = vrcp.pop %v2510
        %v2609 = vmul.f32 %v2510, %v2608
        %v2610 = vsub.f32 1.0, %v2609
        %v2611 = vmul.f32 %v2608, %v2610
        %v2612 = vadd.f32 %v2608, %v2611
        %vm2613 = vweird.f32 %v2510
        %vm2614 = vweird.f32 %v2608
        %vm2615 = vmor %vm2613, %vm2614
        %v2616 = vsel %vm2615, %v2608, %v2612
        %v2617 = vand.u32 2147483647, %v2510
        %vm2618 = vcmp.eq.f32.partialorder %v2617, 8.507059e+37
        %v2619 = vand.u32 %v2510, 2147483648
        %v2620 = vor.u32 1.1754944e-38, %v2619
        %v2621 = vsel %vm2618, %v2620, %v2616
        %v2622 = vmul.f32 1.0, %v2621
        %v2623 = vrcp.pop %v2511
        %v2624 = vmul.f32 %v2511, %v2623
        %v2625 = vsub.f32 1.0, %v2624
        %v2626 = vmul.f32 %v2623, %v2625
        %v2627 = vadd.f32 %v2623, %v2626
        %vm2628 = vweird.f32 %v2511
        %vm2629 = vweird.f32 %v2623
        %vm2630 = vmor %vm2628, %vm2629
        %v2631 = vsel %vm2630, %v2623, %v2627
        %v2632 = vand.u32 2147483647, %v2511
        %vm2633 = vcmp.eq.f32.partialorder %v2632, 8.507059e+37
        %v2634 = vand.u32 %v2511, 2147483648
        %v2635 = vor.u32 1.1754944e-38, %v2634
        %v2636 = vsel %vm2633, %v2635, %v2631
        %v2637 = vmul.f32 1.0, %v2636
        %v2638 = vrcp.pop %v2512
        %v2639 = vmul.f32 %v2512, %v2638
        %v2640 = vsub.f32 1.0, %v2639
        %v2641 = vmul.f32 %v2638, %v2640
        %v2642 = vadd.f32 %v2638, %v2641
        %vm2643 = vweird.f32 %v2512
        %vm2644 = vweird.f32 %v2638
        %vm2645 = vmor %vm2643, %vm2644
        %v2646 = vsel %vm2645, %v2638, %v2642
        %v2647 = vand.u32 2147483647, %v2512
        %vm2648 = vcmp.eq.f32.partialorder %v2647, 8.507059e+37
        %v2649 = vand.u32 %v2512, 2147483648
        %v2650 = vor.u32 1.1754944e-38, %v2649
        %v2651 = vsel %vm2648, %v2650, %v2646
        %v2652 = vmul.f32 1.0, %v2651
        %v2653 = vrcp.pop %v2513
        %v2654 = vmul.f32 %v2513, %v2653
        %v2655 = vsub.f32 1.0, %v2654
        %v2656 = vmul.f32 %v2653, %v2655
        %v2657 = vadd.f32 %v2653, %v2656
        %vm2658 = vweird.f32 %v2513
        %vm2659 = vweird.f32 %v2653
        %vm2660 = vmor %vm2658, %vm2659
        %v2661 = vsel %vm2660, %v2653, %v2657
        %v2662 = vand.u32 2147483647, %v2513
        %vm2663 = vcmp.eq.f32.partialorder %v2662, 8.507059e+37
        %v2664 = vand.u32 %v2513, 2147483648
        %v2665 = vor.u32 1.1754944e-38, %v2664
        %v2666 = vsel %vm2663, %v2665, %v2661
        %v2667 = vmul.f32 1.0, %v2666
        %v2668 = vrcp.pop %v2514
        %v2669 = vmul.f32 %v2514, %v2668
        %v2670 = vsub.f32 1.0, %v2669
        %v2671 = vmul.f32 %v2668, %v2670
        %v2672 = vadd.f32 %v2668, %v2671
        %vm2673 = vweird.f32 %v2514
        %vm2674 = vweird.f32 %v2668
        %vm2675 = vmor %vm2673, %vm2674
        %v2676 = vsel %vm2675, %v2668, %v2672
        %v2677 = vand.u32 2147483647, %v2514
        %vm2678 = vcmp.eq.f32.partialorder %v2677, 8.507059e+37
        %v2679 = vand.u32 %v2514, 2147483648
        %v2680 = vor.u32 1.1754944e-38, %v2679
        %v2681 = vsel %vm2678, %v2680, %v2676
        %v2682 = vmul.f32 1.0, %v2681
        %v2683 = vrcp.pop %v2515
        %v2684 = vmul.f32 %v2515, %v2683
        %v2685 = vsub.f32 1.0, %v2684
        %v2686 = vmul.f32 %v2683, %v2685
        %v2687 = vadd.f32 %v2683, %v2686
        %vm2688 = vweird.f32 %v2515
        %vm2689 = vweird.f32 %v2683
        %vm2690 = vmor %vm2688, %vm2689
        %v2691 = vsel %vm2690, %v2683, %v2687
        %v2692 = vand.u32 2147483647, %v2515
        %vm2693 = vcmp.eq.f32.partialorder %v2692, 8.507059e+37
        %v2694 = vand.u32 %v2515, 2147483648
        %v2695 = vor.u32 1.1754944e-38, %v2694
        %v2696 = vsel %vm2693, %v2695, %v2691
        %v2697 = vmul.f32 1.0, %v2696
        %v2698 = vrcp.pop %v2516
        %v2699 = vmul.f32 %v2516, %v2698
        %v2700 = vsub.f32 1.0, %v2699
        %v2701 = vmul.f32 %v2698, %v2700
        %v2702 = vadd.f32 %v2698, %v2701
        %vm2703 = vweird.f32 %v2516
        %vm2704 = vweird.f32 %v2698
        %vm2705 = vmor %vm2703, %vm2704
        %v2706 = vsel %vm2705, %v2698, %v2702
        %v2707 = vand.u32 2147483647, %v2516
        %vm2708 = vcmp.eq.f32.partialorder %v2707, 8.507059e+37
        %v2709 = vand.u32 %v2516, 2147483648
        %v2710 = vor.u32 1.1754944e-38, %v2709
        %v2711 = vsel %vm2708, %v2710, %v2706
        %v2712 = vmul.f32 1.0, %v2711
        %v2713 = vrcp.pop %v2517
        %v2714 = vmul.f32 %v2517, %v2713
        %v2715 = vsub.f32 1.0, %v2714
        %v2716 = vmul.f32 %v2713, %v2715
        %v2717 = vadd.f32 %v2713, %v2716
        %vm2718 = vweird.f32 %v2517
        %vm2719 = vweird.f32 %v2713
        %vm2720 = vmor %vm2718, %vm2719
        %v2721 = vsel %vm2720, %v2713, %v2717
        %v2722 = vand.u32 2147483647, %v2517
        %vm2723 = vcmp.eq.f32.partialorder %v2722, 8.507059e+37
        %v2724 = vand.u32 %v2517, 2147483648
        %v2725 = vor.u32 1.1754944e-38, %v2724
        %v2726 = vsel %vm2723, %v2725, %v2721
        %v2727 = vmul.f32 1.0, %v2726
        %v2728 = vmul.f32 %v2532, 1.0614054
        %v2729 = vmul.f32 %v2547, 1.0614054
        %v2730 = vmul.f32 %v2562, 1.0614054
        %v2731 = vmul.f32 %v2577, 1.0614054
        %v2732 = vmul.f32 %v2592, 1.0614054
        %v2733 = vmul.f32 %v2607, 1.0614054
        %v2734 = vmul.f32 %v2622, 1.0614054
        %v2735 = vmul.f32 %v2637, 1.0614054
        %v2736 = vmul.f32 %v2652, 1.0614054
        %v2737 = vmul.f32 %v2667, 1.0614054
        %v2738 = vmul.f32 %v2682, 1.0614054
        %v2739 = vmul.f32 %v2697, 1.0614054
        %v2740 = vmul.f32 %v2712, 1.0614054
        %v2741 = vmul.f32 %v2727, 1.0614054
        %v2742 = vadd.f32 %v2728, -1.4531521
        %v2743 = vadd.f32 %v2729, -1.4531521
        %v2744 = vadd.f32 %v2730, -1.4531521
        %v2745 = vadd.f32 %v2731, -1.4531521
        %v2746 = vadd.f32 %v2732, -1.4531521
        %v2747 = vadd.f32 %v2733, -1.4531521
        %v2748 = vadd.f32 %v2734, -1.4531521
        %v2749 = vadd.f32 %v2735, -1.4531521
        %v2750 = vadd.f32 %v2736, -1.4531521
        %v2751 = vadd.f32 %v2737, -1.4531521
        %v2752 = vadd.f32 %v2738, -1.4531521
        %v2753 = vadd.f32 %v2739, -1.4531521
        %v2754 = vadd.f32 %v2740, -1.4531521
        %v2755 = vadd.f32 %v2741, -1.4531521
        %v2756 = vmul.f32 %v2742, %v2532
        %v2757 = vmul.f32 %v2743, %v2547
        %v2758 = vmul.f32 %v2744, %v2562
        %v2759 = vmul.f32 %v2745, %v2577
        %v2760 = vmul.f32 %v2746, %v2592
        %v2761 = vmul.f32 %v2747, %v2607
        %v2762 = vmul.f32 %v2748, %v2622
        %v2763 = vmul.f32 %v2749, %v2637
        %v2764 = vmul.f32 %v2750, %v2652
        %v2765 = vmul.f32 %v2751, %v2667
        %v2766 = vmul.f32 %v2752, %v2682
        %v2767 = vmul.f32 %v2753, %v2697
        %v2768 = vmul.f32 %v2754, %v2712
        %v2769 = vmul.f32 %v2755, %v2727
        %v2770 = vadd.f32 %v2756, 1.4214138
        %v2771 = vadd.f32 %v2757, 1.4214138
        %v2772 = vadd.f32 %v2758, 1.4214138
        %v2773 = vadd.f32 %v2759, 1.4214138
        %v2774 = vadd.f32 %v2760, 1.4214138
        %v2775 = vadd.f32 %v2761, 1.4214138
        %v2776 = vadd.f32 %v2762, 1.4214138
        %v2777 = vadd.f32 %v2763, 1.4214138
        %v2778 = vadd.f32 %v2764, 1.4214138
        %v2779 = vadd.f32 %v2765, 1.4214138
        %v2780 = vadd.f32 %v2766, 1.4214138
        %v2781 = vadd.f32 %v2767, 1.4214138
        %v2782 = vadd.f32 %v2768, 1.4214138
        %v2783 = vadd.f32 %v2769, 1.4214138
        %v2784 = vmul.f32 %v2770, %v2532
        %v2785 = vmul.f32 %v2771, %v2547
        %v2786 = vmul.f32 %v2772, %v2562
        %v2787 = vmul.f32 %v2773, %v2577
        %v2788 = vmul.f32 %v2774, %v2592
        %v2789 = vmul.f32 %v2775, %v2607
        %v2790 = vmul.f32 %v2776, %v2622
        %v2791 = vmul.f32 %v2777, %v2637
        %v2792 = vmul.f32 %v2778, %v2652
        %v2793 = vmul.f32 %v2779, %v2667
        %v2794 = vmul.f32 %v2780, %v2682
        %v2795 = vmul.f32 %v2781, %v2697
        %v2796 = vmul.f32 %v2782, %v2712
        %v2797 = vmul.f32 %v2783, %v2727
        %v2798 = vadd.f32 %v2784, -0.28449672
        %v2799 = vadd.f32 %v2785, -0.28449672
        %v2800 = vadd.f32 %v2786, -0.28449672
        %v2801 = vadd.f32 %v2787, -0.28449672
        %v2802 = vadd.f32 %v2788, -0.28449672
        %v2803 = vadd.f32 %v2789, -0.28449672
        %v2804 = vadd.f32 %v2790, -0.28449672
        %v2805 = vadd.f32 %v2791, -0.28449672
        %v2806 = vadd.f32 %v2792, -0.28449672
        %v2807 = vadd.f32 %v2793, -0.28449672
        %v2808 = vadd.f32 %v2794, -0.28449672
        %v2809 = vadd.f32 %v2795, -0.28449672
        %v2810 = vadd.f32 %v2796, -0.28449672
        %v2811 = vadd.f32 %v2797, -0.28449672
        %v2812 = vmul.f32 %v2798, %v2532
        %v2813 = vmul.f32 %v2799, %v2547
        %v2814 = vmul.f32 %v2800, %v2562
        %v2815 = vmul.f32 %v2801, %v2577
        %v2816 = vmul.f32 %v2802, %v2592
        %v2817 = vmul.f32 %v2803, %v2607
        %v2818 = vmul.f32 %v2804, %v2622
        %v2819 = vmul.f32 %v2805, %v2637
        %v2820 = vmul.f32 %v2806, %v2652
        %v2821 = vmul.f32 %v2807, %v2667
        %v2822 = vmul.f32 %v2808, %v2682
        %v2823 = vmul.f32 %v2809, %v2697
        %v2824 = vmul.f32 %v2810, %v2712
        %v2825 = vmul.f32 %v2811, %v2727
        %v2826 = vadd.f32 %v2812, 0.2548296
        %v2827 = vadd.f32 %v2813, 0.2548296
        %v2828 = vadd.f32 %v2814, 0.2548296
        %v2829 = vadd.f32 %v2815, 0.2548296
        %v2830 = vadd.f32 %v2816, 0.2548296
        %v2831 = vadd.f32 %v2817, 0.2548296
        %v2832 = vadd.f32 %v2818, 0.2548296
        %v2833 = vadd.f32 %v2819, 0.2548296
        %v2834 = vadd.f32 %v2820, 0.2548296
        %v2835 = vadd.f32 %v2821, 0.2548296
        %v2836 = vadd.f32 %v2822, 0.2548296
        %v2837 = vadd.f32 %v2823, 0.2548296
        %v2838 = vadd.f32 %v2824, 0.2548296
        %v2839 = vadd.f32 %v2825, 0.2548296
        %v2840 = vmul.f32 %v2826, %v2532
        %v2841 = vmul.f32 %v2827, %v2547
        %v2842 = vmul.f32 %v2828, %v2562
        %v2843 = vmul.f32 %v2829, %v2577
        %v2844 = vmul.f32 %v2830, %v2592
        %v2845 = vmul.f32 %v2831, %v2607
        %v2846 = vmul.f32 %v2832, %v2622
        %v2847 = vmul.f32 %v2833, %v2637
        %v2848 = vmul.f32 %v2834, %v2652
        %v2849 = vmul.f32 %v2835, %v2667
        %v2850 = vmul.f32 %v2836, %v2682
        %v2851 = vmul.f32 %v2837, %v2697
        %v2852 = vmul.f32 %v2838, %v2712
        %v2853 = vmul.f32 %v2839, %v2727
        %v2854 = vsub.f32 0.0, %v2476
        %v2855 = vsub.f32 0.0, %v2477
        %v2856 = vsub.f32 0.0, %v2478
        %v2857 = vsub.f32 0.0, %v2479
        %v2858 = vsub.f32 0.0, %v2480
        %v2859 = vsub.f32 0.0, %v2481
        %v2860 = vsub.f32 0.0, %v2482
        %v2861 = vsub.f32 0.0, %v2483
        %v2862 = vsub.f32 0.0, %v2484
        %v2863 = vsub.f32 0.0, %v2485
        %v2864 = vsub.f32 0.0, %v2486
        %v2865 = vsub.f32 0.0, %v2487
        %v2866 = vsub.f32 0.0, %v2488
        %v2867 = vsub.f32 0.0, %v2489
        %v2868 = vmul.f32 %v2854, %v2476
        %v2869 = vmul.f32 %v2855, %v2477
        %v2870 = vmul.f32 %v2856, %v2478
        %v2871 = vmul.f32 %v2857, %v2479
        %v2872 = vmul.f32 %v2858, %v2480
        %v2873 = vmul.f32 %v2859, %v2481
        %v2874 = vmul.f32 %v2860, %v2482
        %v2875 = vmul.f32 %v2861, %v2483
        %v2876 = vmul.f32 %v2862, %v2484
        %v2877 = vmul.f32 %v2863, %v2485
        %v2878 = vmul.f32 %v2864, %v2486
        %v2879 = vmul.f32 %v2865, %v2487
        %v2880 = vmul.f32 %v2866, %v2488
        %v2881 = vmul.f32 %v2867, %v2489
        %v2882 = vmul.f32 %v2868, 1.442695
        %v2883 = vpow.pop %v2882
        %v2884 = vmul.f32 %v2869, 1.442695
        %v2885 = vpow.pop %v2884
        %v2886 = vmul.f32 %v2870, 1.442695
        %v2887 = vpow.pop %v2886
        %v2888 = vmul.f32 %v2871, 1.442695
        %v2889 = vpow.pop %v2888
        %v2890 = vmul.f32 %v2872, 1.442695
        %v2891 = vpow.pop %v2890
        %v2892 = vmul.f32 %v2873, 1.442695
        %v2893 = vpow.pop %v2892
        %v2894 = vmul.f32 %v2874, 1.442695
        %v2895 = vpow.pop %v2894
        %v2896 = vmul.f32 %v2875, 1.442695
        %v2897 = vpow.pop %v2896
        %v2898 = vmul.f32 %v2876, 1.442695
        %v2899 = vpow.pop %v2898
        %v2900 = vmul.f32 %v2877, 1.442695
        %v2901 = vpow.pop %v2900
        %v2902 = vmul.f32 %v2878, 1.442695
        %v2903 = vpow.pop %v2902
        %v2904 = vmul.f32 %v2879, 1.442695
        %v2905 = vpow.pop %v2904
        %v2906 = vmul.f32 %v2880, 1.442695
        %v2907 = vpow.pop %v2906
        %v2908 = vmul.f32 %v2881, 1.442695
        %v2909 = vpow.pop %v2908
        %v2910 = vmul.f32 %v2840, %v2883
        %v2911 = vmul.f32 %v2841, %v2885
        %v2912 = vmul.f32 %v2842, %v2887
        %v2913 = vmul.f32 %v2843, %v2889
        %v2914 = vmul.f32 %v2844, %v2891
        %v2915 = vmul.f32 %v2845, %v2893
        %v2916 = vmul.f32 %v2846, %v2895
        %v2917 = vmul.f32 %v2847, %v2897
        %v2918 = vmul.f32 %v2848, %v2899
        %v2919 = vmul.f32 %v2849, %v2901
        %v2920 = vmul.f32 %v2850, %v2903
        %v2921 = vmul.f32 %v2851, %v2905
        %v2922 = vmul.f32 %v2852, %v2907
        %v2923 = vmul.f32 %v2853, %v2909
        %v2924 = vsub.f32 1.0, %v2910
        %v2925 = vsub.f32 1.0, %v2911
        %v2926 = vsub.f32 1.0, %v2912
        %v2927 = vsub.f32 1.0, %v2913
        %v2928 = vsub.f32 1.0, %v2914
        %v2929 = vsub.f32 1.0, %v2915
        %v2930 = vsub.f32 1.0, %v2916
        %v2931 = vsub.f32 1.0, %v2917
        %v2932 = vsub.f32 1.0, %v2918
        %v2933 = vsub.f32 1.0, %v2919
        %v2934 = vsub.f32 1.0, %v2920
        %v2935 = vsub.f32 1.0, %v2921
        %v2936 = vsub.f32 1.0, %v2922
        %v2937 = vsub.f32 1.0, %v2923
        %vm2938 = vcmp.ge.f32.partialorder %v2462, 0.0
        %vm2939 = vcmp.ge.f32.partialorder %v2463, 0.0
        %vm2940 = vcmp.ge.f32.partialorder %v2464, 0.0
        %vm2941 = vcmp.ge.f32.partialorder %v2465, 0.0
        %vm2942 = vcmp.ge.f32.partialorder %v2466, 0.0
        %vm2943 = vcmp.ge.f32.partialorder %v2467, 0.0
        %vm2944 = vcmp.ge.f32.partialorder %v2468, 0.0
        %vm2945 = vcmp.ge.f32.partialorder %v2469, 0.0
        %vm2946 = vcmp.ge.f32.partialorder %v2470, 0.0
        %vm2947 = vcmp.ge.f32.partialorder %v2471, 0.0
        %vm2948 = vcmp.ge.f32.partialorder %v2472, 0.0
        %vm2949 = vcmp.ge.f32.partialorder %v2473, 0.0
        %vm2950 = vcmp.ge.f32.partialorder %v2474, 0.0
        %vm2951 = vcmp.ge.f32.partialorder %v2475, 0.0
        %v2952 = vsub.f32 0.0, %v2924
        %v2953 = vsub.f32 0.0, %v2925
        %v2954 = vsub.f32 0.0, %v2926
        %v2955 = vsub.f32 0.0, %v2927
        %v2956 = vsub.f32 0.0, %v2928
        %v2957 = vsub.f32 0.0, %v2929
        %v2958 = vsub.f32 0.0, %v2930
        %v2959 = vsub.f32 0.0, %v2931
        %v2960 = vsub.f32 0.0, %v2932
        %v2961 = vsub.f32 0.0, %v2933
        %v2962 = vsub.f32 0.0, %v2934
        %v2963 = vsub.f32 0.0, %v2935
        %v2964 = vsub.f32 0.0, %v2936
        %v2965 = vsub.f32 0.0, %v2937
        %v2966 = vsel %vm2938, %v2924, %v2952
        %v2967 = vsel %vm2939, %v2925, %v2953
        %v2968 = vsel %vm2940, %v2926, %v2954
        %v2969 = vsel %vm2941, %v2927, %v2955
        %v2970 = vsel %vm2942, %v2928, %v2956
        %v2971 = vsel %vm2943, %v2929, %v2957
        %v2972 = vsel %vm2944, %v2930, %v2958
        %v2973 = vsel %vm2945, %v2931, %v2959
        %v2974 = vsel %vm2946, %v2932, %v2960
        %v2975 = vsel %vm2947, %v2933, %v2961
        %v2976 = vsel %vm2948, %v2934, %v2962
        %v2977 = vsel %vm2949, %v2935, %v2963
        %v2978 = vsel %vm2950, %v2936, %v2964
        %v2979 = vsel %vm2951, %v2937, %v2965
        %v2980 = vadd.f32 %v2966, 1.0
        %v2981 = vadd.f32 %v2967, 1.0
        %v2982 = vadd.f32 %v2968, 1.0
        %v2983 = vadd.f32 %v2969, 1.0
        %v2984 = vadd.f32 %v2970, 1.0
        %v2985 = vadd.f32 %v2971, 1.0
        %v2986 = vadd.f32 %v2972, 1.0
        %v2987 = vadd.f32 %v2973, 1.0
        %v2988 = vadd.f32 %v2974, 1.0
        %v2989 = vadd.f32 %v2975, 1.0
        %v2990 = vadd.f32 %v2976, 1.0
        %v2991 = vadd.f32 %v2977, 1.0
        %v2992 = vadd.f32 %v2978, 1.0
        %v2993 = vadd.f32 %v2979, 1.0
        %v2994 = vmul.f32 %v2448, %v2980
        %v2995 = vmul.f32 %v2449, %v2981
        %v2996 = vmul.f32 %v2450, %v2982
        %v2997 = vmul.f32 %v2451, %v2983
        %v2998 = vmul.f32 %v2452, %v2984
        %v2999 = vmul.f32 %v2453, %v2985
        %v3000 = vmul.f32 %v2454, %v2986
        %v3001 = vmul.f32 %v2455, %v2987
        %v3002 = vmul.f32 %v2456, %v2988
        %v3003 = vmul.f32 %v2457, %v2989
        %v3004 = vmul.f32 %v2458, %v2990
        %v3005 = vmul.f32 %v2459, %v2991
        %v3006 = vmul.f32 %v2460, %v2992
        %v3007 = vmul.f32 %v2461, %v2993
        %v3008 = vpack.c.bf16 %v2996, %v2994
        %v3009 = vpack.c.bf16 %v2997, %v2995
        %v3010 = vpack.c.bf16 %v3000, %v2998
        %v3011 = vpack.c.bf16 %v3001, %v2999
        %v3012 = vpack.c.bf16 %v3004, %v3002
        %v3013 = vpack.c.bf16 %v3005, %v3003
        %v3014 = vpack.c.bf16 %v3006, %v3006
        %v3015 = vpack.c.bf16 %v3007, %v3007
        %v3016 = vld [vmem:[%s13] sm:$0xf]
        %v3017 = vld [vmem:[%s13 + $0x4] sm:$0xf]
        %v3018 = vld [vmem:[%s13 + $0x8] sm:$0xf]
        %v3019 = vld [vmem:[%s13 + $0xc] sm:$0xf]
        %v3020 = vld [vmem:[%s13 + $0x10] sm:$0xf]
        %v3021 = vld [vmem:[%s13 + $0x14] sm:$0xf]
        %v3022 = vld [vmem:[%s13 + $0x18] sm:$0xf]
        %v3023 = vld [vmem:[%s13 + $0x1c] sm:$0xf]
        %v3024 = vld [vmem:[%s13 + $0x20] sm:$0xf]
        %v3025 = vld [vmem:[%s13 + $0x24] sm:$0xf]
        %v3026 = vld [vmem:[%s13 + $0x28] sm:$0xf]
        %v3027 = vld [vmem:[%s13 + $0x2c] sm:$0xf]
        %v3028 = vld [vmem:[%s13 + $0x30] sm:$0xf]
        %v3029 = vld [vmem:[%s13 + $0x34] sm:$0xf]
        %v3030 = vld [vmem:[%s13 + $0x38] sm:$0xf]
        %v3031 = vld [vmem:[%s13 + $0x3c] sm:$0xf]
        %v3032 = vld [vmem:[%s13 + $0x40] sm:$0xf]
        %v3033 = vld [vmem:[%s13 + $0x44] sm:$0xf]
        %v3034 = vld [vmem:[%s13 + $0x48] sm:$0xf]
        %v3035 = vld [vmem:[%s13 + $0x4c] sm:$0xf]
        %v3036 = vld [vmem:[%s13 + $0x50] sm:$0xf]
        %v3037 = vld [vmem:[%s13 + $0x54] sm:$0xf]
        %v3038 = vld [vmem:[%s13 + $0x58] sm:$0xf]
        %v3039 = vld [vmem:[%s13 + $0x5c] sm:$0xf]
        %v3040 = vld [vmem:[%s13 + $0x60] sm:$0xf]
        %v3041 = vld [vmem:[%s13 + $0x64] sm:$0xf]
        %v3042 = vld [vmem:[%s13 + $0x68] sm:$0xf]
        %v3043 = vld [vmem:[%s13 + $0x6c] sm:$0xf]
        %v3044 = vld [vmem:[%s13 + $0x70] sm:$0xf]
        %v3045 = vld [vmem:[%s13 + $0x74] sm:$0xf]
        %v3046 = vld [vmem:[%s13 + $0x78] sm:$0xf]
        %v3047 = vld [vmem:[%s13 + $0x7c] sm:$0xf]
        %v3048 = vld [vmem:[%s14] sm:$0x1]
        %v3050 = vperm.slane %v3048, 0
        %v3084 = vunpack.c.l.b16 %v3016
        %v3085 = vunpack.c.l.b16 %v3017
        %v3086 = vunpack.c.l.b16 %v3018
        %v3087 = vunpack.c.l.b16 %v3019
        %v3088 = vunpack.c.l.b16 %v3020
        %v3089 = vunpack.c.l.b16 %v3021
        %v3090 = vunpack.c.l.b16 %v3022
        %v3091 = vunpack.c.l.b16 %v3023
        %v3092 = vunpack.c.l.b16 %v3024
        %v3093 = vunpack.c.l.b16 %v3025
        %v3094 = vunpack.c.l.b16 %v3026
        %v3095 = vunpack.c.l.b16 %v3027
        %v3096 = vunpack.c.l.b16 %v3028
        %v3097 = vunpack.c.l.b16 %v3029
        %v3098 = vunpack.c.l.b16 %v3030
        %v3099 = vunpack.c.l.b16 %v3031
        %v3100 = vunpack.c.l.b16 %v3032
        %v3101 = vunpack.c.l.b16 %v3033
        %v3102 = vunpack.c.l.b16 %v3034
        %v3103 = vunpack.c.l.b16 %v3035
        %v3104 = vunpack.c.l.b16 %v3036
        %v3105 = vunpack.c.l.b16 %v3037
        %v3106 = vunpack.c.l.b16 %v3038
        %v3107 = vunpack.c.l.b16 %v3039
        %v3108 = vunpack.c.l.b16 %v3040
        %v3109 = vunpack.c.l.b16 %v3041
        %v3110 = vunpack.c.l.b16 %v3042
        %v3111 = vunpack.c.l.b16 %v3043
        %v3112 = vunpack.c.l.b16 %v3044
        %v3113 = vunpack.c.l.b16 %v3045
        %v3114 = vunpack.c.l.b16 %v3046
        %v3115 = vunpack.c.l.b16 %v3047
        %v3116 = vpack.c.b16 %v3085, %v3084
        %v3117 = vpack.c.b16 %v3087, %v3086
        %v3118 = vpack.c.b16 %v3089, %v3088
        %v3119 = vpack.c.b16 %v3091, %v3090
        %v3120 = vpack.c.b16 %v3093, %v3092
        %v3121 = vpack.c.b16 %v3095, %v3094
        %v3122 = vpack.c.b16 %v3097, %v3096
        %v3123 = vpack.c.b16 %v3099, %v3098
        %v3124 = vpack.c.b16 %v3101, %v3100
        %v3125 = vpack.c.b16 %v3103, %v3102
        %v3126 = vpack.c.b16 %v3105, %v3104
        %v3127 = vpack.c.b16 %v3107, %v3106
        %v3128 = vpack.c.b16 %v3109, %v3108
        %v3129 = vpack.c.b16 %v3111, %v3110
        %v3130 = vpack.c.b16 %v3113, %v3112
        %v3131 = vpack.c.b16 %v3115, %v3114
        %3148 = vmatpush.bf16.msra.mxu0 %v3123
        %3149 = vmatpush.bf16.msra.mxu0 %v3122
        %3150 = vmatpush.bf16.msra.mxu0 %v3121
        %3151 = vmatpush.bf16.msra.mxu0 %v3120
        %3152 = vmatpush.bf16.msra.mxu0 %v3119
        %3153 = vmatpush.bf16.msra.mxu0 %v3118
        %3154 = vmatpush.bf16.msra.mxu0 %v3117
        %3155 = vmatpush.bf16.msra.mxu0 %v3116
        %3156 = vmatmul.bf16.gmra.mxu0 %v3008
        %v3157 = vpop.f32.mrf.mxu0
        %v3158 = vadd.f32 %v3050, %v3157
        %v3159 = vpop.f32.mrf.mxu0
        %v3160 = vadd.f32 %v3050, %v3159
        %3161 = vmatmul.bf16.gmra.mxu0 %v3010
        %v3162 = vpop.f32.mrf.mxu0
        %v3163 = vadd.f32 %v3050, %v3162
        %v3164 = vpop.f32.mrf.mxu0
        %v3165 = vadd.f32 %v3050, %v3164
        %3166 = vmatmul.bf16.gmra.mxu0 %v3012
        %v3167 = vpop.f32.mrf.mxu0
        %v3168 = vadd.f32 %v3050, %v3167
        %v3169 = vpop.f32.mrf.mxu0
        %v3170 = vadd.f32 %v3050, %v3169
        %3171 = vmatmul.bf16.gmra.mxu0 %v3014
        %v3172 = vpop.f32.mrf.mxu0
        %v3173 = vadd.f32 %v3050, %v3172
        %v3174 = vpop.f32.mrf.mxu0
        %3175 = vdwg.mxu0
        %3176 = vmatpush.bf16.msra.mxu0 %v3131
        %3177 = vmatpush.bf16.msra.mxu0 %v3130
        %3178 = vmatpush.bf16.msra.mxu0 %v3129
        %3179 = vmatpush.bf16.msra.mxu0 %v3128
        %3180 = vmatpush.bf16.msra.mxu0 %v3127
        %3181 = vmatpush.bf16.msra.mxu0 %v3126
        %3182 = vmatpush.bf16.msra.mxu0 %v3125
        %3183 = vmatpush.bf16.msra.mxu0 %v3124
        %3184 = vmatmul.bf16.gmra.mxu0 %v3009
        %v3185 = vpop.f32.mrf.mxu0
        %v3186 = vadd.f32 %v3158, %v3185
        %v3187 = vpop.f32.mrf.mxu0
        %v3188 = vadd.f32 %v3160, %v3187
        %3189 = vmatmul.bf16.gmra.mxu0 %v3011
        %v3190 = vpop.f32.mrf.mxu0
        %v3191 = vadd.f32 %v3163, %v3190
        %v3192 = vpop.f32.mrf.mxu0
        %v3193 = vadd.f32 %v3165, %v3192
        %3194 = vmatmul.bf16.gmra.mxu0 %v3013
        %v3195 = vpop.f32.mrf.mxu0
        %v3196 = vadd.f32 %v3168, %v3195
        %v3197 = vpop.f32.mrf.mxu0
        %v3198 = vadd.f32 %v3170, %v3197
        %3199 = vmatmul.bf16.gmra.mxu0 %v3015
        %v3200 = vpop.f32.mrf.mxu0
        %v3201 = vadd.f32 %v3173, %v3200
        %v3202 = vpop.f32.mrf.mxu0
        %3203 = vdwg.mxu0
        %v3204 = vadd.f32 %v2139, %v3186
        %v3205 = vadd.f32 %v2140, %v3188
        %v3206 = vadd.f32 %v2141, %v3191
        %v3207 = vadd.f32 %v2142, %v3193
        %v3208 = vadd.f32 %v2143, %v3196
        %v3209 = vadd.f32 %v2144, %v3198
        %v3210 = vadd.f32 %v2145, %v3201
        %s3211 = scalar_lea.vmem %s3, 1
        %v3212 = vld [vmem:[%s3211] sm:$0x1]
        %s3213 = scalar_lea.vmem %s4, 1
        %v3214 = vld [vmem:[%s3213] sm:$0x1]
        %v3215 = vsel %vm697, %v3204, 0.0
        %3216 = vadd.xlane.f32.xlu0 %v3215
        %v3217 = vpop.xlane.xlu0 %3216
        %v3218 = vsel %vm697, %v3205, 0.0
        %3219 = vadd.xlane.f32.xlu0 %v3218
        %v3220 = vpop.xlane.xlu0 %3219
        %v3221 = vsel %vm697, %v3206, 0.0
        %3222 = vadd.xlane.f32.xlu0 %v3221
        %v3223 = vpop.xlane.xlu0 %3222
        %v3224 = vsel %vm697, %v3207, 0.0
        %3225 = vadd.xlane.f32.xlu0 %v3224
        %v3226 = vpop.xlane.xlu0 %3225
        %v3227 = vsel %vm697, %v3208, 0.0
        %3228 = vadd.xlane.f32.xlu0 %v3227
        %v3229 = vpop.xlane.xlu0 %3228
        %v3230 = vsel %vm697, %v3209, 0.0
        %3231 = vadd.xlane.f32.xlu0 %v3230
        %v3232 = vpop.xlane.xlu0 %3231
        %v3233 = vsel %vm697, %v3210, 0.0
        %3234 = vadd.xlane.f32.xlu0 %v3233
        %v3235 = vpop.xlane.xlu0 %3234
        %v3236 = vmul.f32 %v3217, %v725
        %v3237 = vmul.f32 %v3220, %v725
        %v3238 = vmul.f32 %v3223, %v725
        %v3239 = vmul.f32 %v3226, %v725
        %v3240 = vmul.f32 %v3229, %v725
        %v3241 = vmul.f32 %v3232, %v725
        %v3242 = vmul.f32 %v3235, %v725
        %v3243 = vsub.f32 %v3204, %v3236
        %v3244 = vsub.f32 %v3205, %v3237
        %v3245 = vsub.f32 %v3206, %v3238
        %v3246 = vsub.f32 %v3207, %v3239
        %v3247 = vsub.f32 %v3208, %v3240
        %v3248 = vsub.f32 %v3209, %v3241
        %v3249 = vsub.f32 %v3210, %v3242
        %v3250 = vmul.f32 %v3243, %v3243
        %v3251 = vmul.f32 %v3244, %v3244
        %v3252 = vmul.f32 %v3245, %v3245
        %v3253 = vmul.f32 %v3246, %v3246
        %v3254 = vmul.f32 %v3247, %v3247
        %v3255 = vmul.f32 %v3248, %v3248
        %v3256 = vmul.f32 %v3249, %v3249
        %v3257 = vsel %vm697, %v3250, 0.0
        %3258 = vadd.xlane.f32.xlu0 %v3257
        %v3259 = vpop.xlane.xlu0 %3258
        %v3260 = vsel %vm697, %v3251, 0.0
        %3261 = vadd.xlane.f32.xlu0 %v3260
        %v3262 = vpop.xlane.xlu0 %3261
        %v3263 = vsel %vm697, %v3252, 0.0
        %3264 = vadd.xlane.f32.xlu0 %v3263
        %v3265 = vpop.xlane.xlu0 %3264
        %v3266 = vsel %vm697, %v3253, 0.0
        %3267 = vadd.xlane.f32.xlu0 %v3266
        %v3268 = vpop.xlane.xlu0 %3267
        %v3269 = vsel %vm697, %v3254, 0.0
        %3270 = vadd.xlane.f32.xlu0 %v3269
        %v3271 = vpop.xlane.xlu0 %3270
        %v3272 = vsel %vm697, %v3255, 0.0
        %3273 = vadd.xlane.f32.xlu0 %v3272
        %v3274 = vpop.xlane.xlu0 %3273
        %v3275 = vsel %vm697, %v3256, 0.0
        %3276 = vadd.xlane.f32.xlu0 %v3275
        %v3277 = vpop.xlane.xlu0 %3276
        %v3278 = vmul.f32 %v3259, %v725
        %v3279 = vmul.f32 %v3262, %v725
        %v3280 = vmul.f32 %v3265, %v725
        %v3281 = vmul.f32 %v3268, %v725
        %v3282 = vmul.f32 %v3271, %v725
        %v3283 = vmul.f32 %v3274, %v725
        %v3284 = vmul.f32 %v3277, %v725
        %v3285 = vadd.f32 %v3278, 1e-05
        %v3286 = vadd.f32 %v3279, 1e-05
        %v3287 = vadd.f32 %v3280, 1e-05
        %v3288 = vadd.f32 %v3281, 1e-05
        %v3289 = vadd.f32 %v3282, 1e-05
        %v3290 = vadd.f32 %v3283, 1e-05
        %v3291 = vadd.f32 %v3284, 1e-05
        %v3292 = vrsqrt.pop %v3285
        %v3293 = vmul.f32 %v3292, %v3285
        %v3294 = vmul.f32 %v3293, %v3292
        %v3295 = vmul.f32 0.5, %v3294
        %v3296 = vsub.f32 1.5, %v3295
        %v3297 = vmul.f32 %v3292, %v3296
        %vm3298 = vweird.f32 %v3285
        %vm3299 = vweird.f32 %v3292
        %vm3300 = vmor %vm3298, %vm3299
        %v3301 = vsel %vm3300, %v3292, %v3297
        %v3302 = vrsqrt.pop %v3286
        %v3303 = vmul.f32 %v3302, %v3286
        %v3304 = vmul.f32 %v3303, %v3302
        %v3305 = vmul.f32 0.5, %v3304
        %v3306 = vsub.f32 1.5, %v3305
        %v3307 = vmul.f32 %v3302, %v3306
        %vm3308 = vweird.f32 %v3286
        %vm3309 = vweird.f32 %v3302
        %vm3310 = vmor %vm3308, %vm3309
        %v3311 = vsel %vm3310, %v3302, %v3307
        %v3312 = vrsqrt.pop %v3287
        %v3313 = vmul.f32 %v3312, %v3287
        %v3314 = vmul.f32 %v3313, %v3312
        %v3315 = vmul.f32 0.5, %v3314
        %v3316 = vsub.f32 1.5, %v3315
        %v3317 = vmul.f32 %v3312, %v3316
        %vm3318 = vweird.f32 %v3287
        %vm3319 = vweird.f32 %v3312
        %vm3320 = vmor %vm3318, %vm3319
        %v3321 = vsel %vm3320, %v3312, %v3317
        %v3322 = vrsqrt.pop %v3288
        %v3323 = vmul.f32 %v3322, %v3288
        %v3324 = vmul.f32 %v3323, %v3322
        %v3325 = vmul.f32 0.5, %v3324
        %v3326 = vsub.f32 1.5, %v3325
        %v3327 = vmul.f32 %v3322, %v3326
        %vm3328 = vweird.f32 %v3288
        %vm3329 = vweird.f32 %v3322
        %vm3330 = vmor %vm3328, %vm3329
        %v3331 = vsel %vm3330, %v3322, %v3327
        %v3332 = vrsqrt.pop %v3289
        %v3333 = vmul.f32 %v3332, %v3289
        %v3334 = vmul.f32 %v3333, %v3332
        %v3335 = vmul.f32 0.5, %v3334
        %v3336 = vsub.f32 1.5, %v3335
        %v3337 = vmul.f32 %v3332, %v3336
        %vm3338 = vweird.f32 %v3289
        %vm3339 = vweird.f32 %v3332
        %vm3340 = vmor %vm3338, %vm3339
        %v3341 = vsel %vm3340, %v3332, %v3337
        %v3342 = vrsqrt.pop %v3290
        %v3343 = vmul.f32 %v3342, %v3290
        %v3344 = vmul.f32 %v3343, %v3342
        %v3345 = vmul.f32 0.5, %v3344
        %v3346 = vsub.f32 1.5, %v3345
        %v3347 = vmul.f32 %v3342, %v3346
        %vm3348 = vweird.f32 %v3290
        %vm3349 = vweird.f32 %v3342
        %vm3350 = vmor %vm3348, %vm3349
        %v3351 = vsel %vm3350, %v3342, %v3347
        %v3352 = vrsqrt.pop %v3291
        %v3353 = vmul.f32 %v3352, %v3291
        %v3354 = vmul.f32 %v3353, %v3352
        %v3355 = vmul.f32 0.5, %v3354
        %v3356 = vsub.f32 1.5, %v3355
        %v3357 = vmul.f32 %v3352, %v3356
        %vm3358 = vweird.f32 %v3291
        %vm3359 = vweird.f32 %v3352
        %vm3360 = vmor %vm3358, %vm3359
        %v3361 = vsel %vm3360, %v3352, %v3357
        %v3362 = vmul.f32 %v3243, %v3301
        %v3363 = vmul.f32 %v3244, %v3311
        %v3364 = vmul.f32 %v3245, %v3321
        %v3365 = vmul.f32 %v3246, %v3331
        %v3366 = vmul.f32 %v3247, %v3341
        %v3367 = vmul.f32 %v3248, %v3351
        %v3368 = vmul.f32 %v3249, %v3361
        %v3370 = vperm.slane %v3212, 0
        %v3372 = vmul.f32 %v3362, %v3370
        %v3373 = vmul.f32 %v3363, %v3370
        %v3374 = vmul.f32 %v3364, %v3370
        %v3375 = vmul.f32 %v3365, %v3370
        %v3376 = vmul.f32 %v3366, %v3370
        %v3377 = vmul.f32 %v3367, %v3370
        %v3378 = vmul.f32 %v3368, %v3370
        %v3380 = vperm.slane %v3214, 0
        %v3382 = vadd.f32 %v3372, %v3380
        %v3383 = vadd.f32 %v3373, %v3380
        %v3384 = vadd.f32 %v3374, %v3380
        %v3385 = vadd.f32 %v3375, %v3380
        %v3386 = vadd.f32 %v3376, %v3380
        %v3387 = vadd.f32 %v3377, %v3380
        %v3388 = vadd.f32 %v3378, %v3380
        %v3389 = vpack.c.bf16 %v3383, %v3382
        %v3390 = vpack.c.bf16 %v3385, %v3384
        %v3391 = vpack.c.bf16 %v3387, %v3386
        %v3392 = vpack.c.bf16 %v3388, %v3388
        %s3393 = scalar_lea.vmem %s5, 64
        %v3394 = vld [vmem:[%s3393] sm:$0xff]
        %v3395 = vld [vmem:[%s3393 + $0x8] sm:$0xff]
        %v3396 = vld [vmem:[%s3393 + $0x10] sm:$0xff]
        %v3397 = vld [vmem:[%s3393 + $0x18] sm:$0xff]
        %v3398 = vld [vmem:[%s3393 + $0x20] sm:$0xff]
        %v3399 = vld [vmem:[%s3393 + $0x28] sm:$0xff]
        %v3400 = vld [vmem:[%s3393 + $0x30] sm:$0xff]
        %v3401 = vld [vmem:[%s3393 + $0x38] sm:$0xff]
        %s3402 = scalar_lea.vmem %s6, 2
        %v3403 = vld [vmem:[%s3402] sm:$0x3]
        %v3405 = vperm.slane %v3403, 0
        %v3406 = vperm.slane %v3403, 1
        %v3417 = vunpack.c.l.b16 %v3394
        %v3418 = vunpack.c.h.b16 %v3394
        %v3419 = vunpack.c.l.b16 %v3395
        %v3420 = vunpack.c.h.b16 %v3395
        %v3421 = vunpack.c.l.b16 %v3396
        %v3422 = vunpack.c.h.b16 %v3396
        %v3423 = vunpack.c.l.b16 %v3397
        %v3424 = vunpack.c.h.b16 %v3397
        %v3425 = vunpack.c.l.b16 %v3398
        %v3426 = vunpack.c.h.b16 %v3398
        %v3427 = vunpack.c.l.b16 %v3399
        %v3428 = vunpack.c.h.b16 %v3399
        %v3429 = vunpack.c.l.b16 %v3400
        %v3430 = vunpack.c.h.b16 %v3400
        %v3431 = vunpack.c.l.b16 %v3401
        %v3432 = vunpack.c.h.b16 %v3401
        %v3433 = vpack.c.b16 %v3419, %v3417
        %v3434 = vpack.c.b16 %v3420, %v3418
        %v3435 = vpack.c.b16 %v3423, %v3421
        %v3436 = vpack.c.b16 %v3424, %v3422
        %v3437 = vpack.c.b16 %v3427, %v3425
        %v3438 = vpack.c.b16 %v3428, %v3426
        %v3439 = vpack.c.b16 %v3431, %v3429
        %v3440 = vpack.c.b16 %v3432, %v3430
        %v3450 = vsel %vm697, %v3389, 0
        %v3453 = vsel %vm697, %v3390, 0
        %v3456 = vsel %vm697, %v3391, 0
        %v3459 = vsel %vm697, %v3392, 0
        %3461 = vmatpush.bf16.msra.mxu0 0
        %3462 = vmatpush.bf16.msra.mxu0 0
        %3463 = vmatpush.bf16.msra.mxu0 0
        %3464 = vmatpush.bf16.msra.mxu0 0
        %3465 = vmatpush.bf16.msra.mxu0 %v3439
        %3466 = vmatpush.bf16.msra.mxu0 %v3437
        %3467 = vmatpush.bf16.msra.mxu0 %v3435
        %3468 = vmatpush.bf16.msra.mxu0 %v3433
        %3469 = vmatmul.bf16.gmra.mxu0 %v3450
        %v3470 = vpop.f32.mrf.mxu0
        %v3471 = vadd.f32 %v3405, %v3470
        %v3472 = vpop.f32.mrf.mxu0
        %v3473 = vadd.f32 %v3405, %v3472
        %3474 = vmatmul.bf16.gmra.mxu0 %v3453
        %v3475 = vpop.f32.mrf.mxu0
        %v3476 = vadd.f32 %v3405, %v3475
        %v3477 = vpop.f32.mrf.mxu0
        %v3478 = vadd.f32 %v3405, %v3477
        %3479 = vmatmul.bf16.gmra.mxu0 %v3456
        %v3480 = vpop.f32.mrf.mxu0
        %v3481 = vadd.f32 %v3405, %v3480
        %v3482 = vpop.f32.mrf.mxu0
        %v3483 = vadd.f32 %v3405, %v3482
        %3484 = vmatmul.bf16.gmra.mxu0 %v3459
        %v3485 = vpop.f32.mrf.mxu0
        %v3486 = vadd.f32 %v3405, %v3485
        %v3487 = vpop.f32.mrf.mxu0
        %3488 = vdwg.mxu0
        %3489 = vmatpush.bf16.msra.mxu0 0
        %3490 = vmatpush.bf16.msra.mxu0 0
        %3491 = vmatpush.bf16.msra.mxu0 0
        %3492 = vmatpush.bf16.msra.mxu0 0
        %3493 = vmatpush.bf16.msra.mxu0 %v3440
        %3494 = vmatpush.bf16.msra.mxu0 %v3438
        %3495 = vmatpush.bf16.msra.mxu0 %v3436
        %3496 = vmatpush.bf16.msra.mxu0 %v3434
        %3497 = vmatmul.bf16.gmra.mxu0 %v3450
        %v3498 = vpop.f32.mrf.mxu0
        %v3499 = vadd.f32 %v3406, %v3498
        %v3500 = vpop.f32.mrf.mxu0
        %v3501 = vadd.f32 %v3406, %v3500
        %3502 = vmatmul.bf16.gmra.mxu0 %v3453
        %v3503 = vpop.f32.mrf.mxu0
        %v3504 = vadd.f32 %v3406, %v3503
        %v3505 = vpop.f32.mrf.mxu0
        %v3506 = vadd.f32 %v3406, %v3505
        %3507 = vmatmul.bf16.gmra.mxu0 %v3456
        %v3508 = vpop.f32.mrf.mxu0
        %v3509 = vadd.f32 %v3406, %v3508
        %v3510 = vpop.f32.mrf.mxu0
        %v3511 = vadd.f32 %v3406, %v3510
        %3512 = vmatmul.bf16.gmra.mxu0 %v3459
        %v3513 = vpop.f32.mrf.mxu0
        %v3514 = vadd.f32 %v3406, %v3513
        %v3515 = vpop.f32.mrf.mxu0
        %3516 = vdwg.mxu0
        %v3517 = vpack.c.bf16 %v3471, %v3471
        %v3518 = vpack.c.bf16 %v3473, %v3473
        %v3519 = vpack.c.bf16 %v3476, %v3476
        %v3520 = vpack.c.bf16 %v3478, %v3478
        %v3521 = vpack.c.bf16 %v3481, %v3481
        %v3522 = vpack.c.bf16 %v3483, %v3483
        %v3523 = vpack.c.bf16 %v3486, %v3486
        %v3524 = vpack.c.bf16 %v3499, %v3499
        %v3525 = vpack.c.bf16 %v3501, %v3501
        %v3526 = vpack.c.bf16 %v3504, %v3504
        %v3527 = vpack.c.bf16 %v3506, %v3506
        %v3528 = vpack.c.bf16 %v3509, %v3509
        %v3529 = vpack.c.bf16 %v3511, %v3511
        %v3530 = vpack.c.bf16 %v3514, %v3514
        %v3538 = vunpack.c.l.b16 %v3517
        %v3539 = vunpack.c.l.b16 %v3518
        %v3540 = vunpack.c.l.b16 %v3519
        %v3541 = vunpack.c.l.b16 %v3520
        %v3542 = vunpack.c.l.b16 %v3521
        %v3543 = vunpack.c.l.b16 %v3522
        %v3544 = vunpack.c.l.b16 %v3523
        %v3545 = vpack.c.b16 %v3539, %v3538
        %v3546 = vpack.c.b16 %v3541, %v3540
        %v3547 = vpack.c.b16 %v3543, %v3542
        %v3548 = vpack.c.b16 %v3544, %v3544
        %3549 = vrot.lane.b32.xlu0 %v3545, 64
        %v3550 = vpop.permute.xlu0 %3549
        %3551 = vrot.lane.b32.xlu0 %v3546, 64
        %v3552 = vpop.permute.xlu0 %3551
        %3553 = vrot.lane.b32.xlu0 %v3547, 64
        %v3554 = vpop.permute.xlu0 %3553
        %3555 = vrot.lane.b32.xlu0 %v3548, 64
        %v3556 = vpop.permute.xlu0 %3555
        %v3558 = vsel %vm636, %v3545, 0
        %v3561 = vsel %vm636, %v3546, 0
        %v3564 = vsel %vm636, %v3547, 0
        %v3567 = vsel %vm636, %v3548, 0
        %v3570 = vsel %vm636, %v3550, 0
        %v3573 = vsel %vm636, %v3552, 0
        %v3576 = vsel %vm636, %v3554, 0
        %v3579 = vsel %vm636, %v3556, 0
        %3581 = vmatpush.bf16.xpose.msra.mxu0 0
        %3582 = vmatpush.bf16.xpose.msra.mxu0 0
        %3583 = vmatpush.bf16.xpose.msra.mxu0 0
        %3584 = vmatpush.bf16.xpose.msra.mxu0 0
        %3585 = vmatpush.bf16.xpose.msra.mxu0 %v3579
        %3586 = vmatpush.bf16.xpose.msra.mxu0 %v3576
        %3587 = vmatpush.bf16.xpose.msra.mxu0 %v3573
        %3588 = vmatpush.bf16.xpose.msra.mxu0 %v3570
        %3589 = vmatmul.bf16.gmra.mxu0 %v3558
        %v3590 = vpop.f32.mrf.mxu0
        %v3591 = vadd.f32 %v694, %v3590
        %v3592 = vpop.f32.mrf.mxu0
        %v3593 = vadd.f32 %v694, %v3592
        %3594 = vmatmul.bf16.gmra.mxu0 %v3561
        %v3595 = vpop.f32.mrf.mxu0
        %v3596 = vadd.f32 %v694, %v3595
        %v3597 = vpop.f32.mrf.mxu0
        %v3598 = vadd.f32 %v694, %v3597
        %3599 = vmatmul.bf16.gmra.mxu0 %v3564
        %v3600 = vpop.f32.mrf.mxu0
        %v3601 = vadd.f32 %v694, %v3600
        %v3602 = vpop.f32.mrf.mxu0
        %v3603 = vadd.f32 %v694, %v3602
        %3604 = vmatmul.bf16.gmra.mxu0 %v3567
        %v3605 = vpop.f32.mrf.mxu0
        %v3606 = vadd.f32 %v694, %v3605
        %v3607 = vpop.f32.mrf.mxu0
        %3608 = vdwg.mxu0
        %v3609 = vsel %vm1097, %v3591, -inf
        %3610 = vmax.xlane.f32.xlu0 %v3609
        %v3611 = vpop.xlane.xlu0 %3610
        %v3612 = vsel %vm1097, %v3593, -inf
        %3613 = vmax.xlane.f32.xlu0 %v3612
        %v3614 = vpop.xlane.xlu0 %3613
        %v3615 = vsel %vm1097, %v3596, -inf
        %3616 = vmax.xlane.f32.xlu0 %v3615
        %v3617 = vpop.xlane.xlu0 %3616
        %v3618 = vsel %vm1097, %v3598, -inf
        %3619 = vmax.xlane.f32.xlu0 %v3618
        %v3620 = vpop.xlane.xlu0 %3619
        %v3621 = vsel %vm1097, %v3601, -inf
        %3622 = vmax.xlane.f32.xlu0 %v3621
        %v3623 = vpop.xlane.xlu0 %3622
        %v3624 = vsel %vm1097, %v3603, -inf
        %3625 = vmax.xlane.f32.xlu0 %v3624
        %v3626 = vpop.xlane.xlu0 %3625
        %v3627 = vsel %vm1097, %v3606, -inf
        %3628 = vmax.xlane.f32.xlu0 %v3627
        %v3629 = vpop.xlane.xlu0 %3628
        %v3630 = vsub.f32 %v3591, %v3611
        %v3631 = vsub.f32 %v3593, %v3614
        %v3632 = vsub.f32 %v3596, %v3617
        %v3633 = vsub.f32 %v3598, %v3620
        %v3634 = vsub.f32 %v3601, %v3623
        %v3635 = vsub.f32 %v3603, %v3626
        %v3636 = vsub.f32 %v3606, %v3629
        %v3637 = vmul.f32 %v3630, 1.442695
        %v3638 = vpow.pop %v3637
        %v3639 = vmul.f32 %v3631, 1.442695
        %v3640 = vpow.pop %v3639
        %v3641 = vmul.f32 %v3632, 1.442695
        %v3642 = vpow.pop %v3641
        %v3643 = vmul.f32 %v3633, 1.442695
        %v3644 = vpow.pop %v3643
        %v3645 = vmul.f32 %v3634, 1.442695
        %v3646 = vpow.pop %v3645
        %v3647 = vmul.f32 %v3635, 1.442695
        %v3648 = vpow.pop %v3647
        %v3649 = vmul.f32 %v3636, 1.442695
        %v3650 = vpow.pop %v3649
        %v3651 = vsel %vm1097, %v3638, 0.0
        %3652 = vadd.xlane.f32.xlu0 %v3651
        %v3653 = vpop.xlane.xlu0 %3652
        %v3654 = vsel %vm1097, %v3640, 0.0
        %3655 = vadd.xlane.f32.xlu0 %v3654
        %v3656 = vpop.xlane.xlu0 %3655
        %v3657 = vsel %vm1097, %v3642, 0.0
        %3658 = vadd.xlane.f32.xlu0 %v3657
        %v3659 = vpop.xlane.xlu0 %3658
        %v3660 = vsel %vm1097, %v3644, 0.0
        %3661 = vadd.xlane.f32.xlu0 %v3660
        %v3662 = vpop.xlane.xlu0 %3661
        %v3663 = vsel %vm1097, %v3646, 0.0
        %3664 = vadd.xlane.f32.xlu0 %v3663
        %v3665 = vpop.xlane.xlu0 %3664
        %v3666 = vsel %vm1097, %v3648, 0.0
        %3667 = vadd.xlane.f32.xlu0 %v3666
        %v3668 = vpop.xlane.xlu0 %3667
        %v3669 = vsel %vm1097, %v3650, 0.0
        %3670 = vadd.xlane.f32.xlu0 %v3669
        %v3671 = vpop.xlane.xlu0 %3670
        %v3672 = vrcp.pop %v3653
        %v3673 = vrcp.pop %v3656
        %v3674 = vrcp.pop %v3659
        %v3675 = vrcp.pop %v3662
        %v3676 = vrcp.pop %v3665
        %v3677 = vrcp.pop %v3668
        %v3678 = vrcp.pop %v3671
        %v3679 = vmul.f32 %v3638, %v3672
        %v3680 = vmul.f32 %v3640, %v3673
        %v3681 = vmul.f32 %v3642, %v3674
        %v3682 = vmul.f32 %v3644, %v3675
        %v3683 = vmul.f32 %v3646, %v3676
        %v3684 = vmul.f32 %v3648, %v3677
        %v3685 = vmul.f32 %v3650, %v3678
        %v3686 = vpack.c.bf16 %v3679, %v3679
        %v3687 = vpack.c.bf16 %v3680, %v3680
        %v3688 = vpack.c.bf16 %v3681, %v3681
        %v3689 = vpack.c.bf16 %v3682, %v3682
        %v3690 = vpack.c.bf16 %v3683, %v3683
        %v3691 = vpack.c.bf16 %v3684, %v3684
        %v3692 = vpack.c.bf16 %v3685, %v3685
        %v3700 = vunpack.c.l.b16 %v3686
        %v3701 = vunpack.c.l.b16 %v3687
        %v3702 = vunpack.c.l.b16 %v3688
        %v3703 = vunpack.c.l.b16 %v3689
        %v3704 = vunpack.c.l.b16 %v3690
        %v3705 = vunpack.c.l.b16 %v3691
        %v3706 = vunpack.c.l.b16 %v3692
        %v3707 = vpack.c.b16 %v3701, %v3700
        %v3708 = vpack.c.b16 %v3703, %v3702
        %v3709 = vpack.c.b16 %v3705, %v3704
        %v3710 = vpack.c.b16 %v3706, %v3706
        %v3718 = vunpack.c.l.b16 %v3524
        %v3719 = vunpack.c.l.b16 %v3525
        %v3720 = vunpack.c.l.b16 %v3526
        %v3721 = vunpack.c.l.b16 %v3527
        %v3722 = vunpack.c.l.b16 %v3528
        %v3723 = vunpack.c.l.b16 %v3529
        %v3724 = vunpack.c.l.b16 %v3530
        %v3725 = vpack.c.b16 %v3719, %v3718
        %v3726 = vpack.c.b16 %v3721, %v3720
        %v3727 = vpack.c.b16 %v3723, %v3722
        %v3728 = vpack.c.b16 %v3724, %v3724
        %v3733 = vsel %vm1097, %v3707, 0
        %v3736 = vsel %vm1097, %v3708, 0
        %v3739 = vsel %vm1097, %v3709, 0
        %v3742 = vsel %vm1097, %v3710, 0
        %v3745 = vsel %vm1233, %v3728, 0
        %3747 = vmatpush.bf16.msra.mxu0 0
        %3748 = vmatpush.bf16.msra.mxu0 0
        %3749 = vmatpush.bf16.msra.mxu0 0
        %3750 = vmatpush.bf16.msra.mxu0 0
        %3751 = vmatpush.bf16.msra.mxu0 %v3745
        %3752 = vmatpush.bf16.msra.mxu0 %v3727
        %3753 = vmatpush.bf16.msra.mxu0 %v3726
        %3754 = vmatpush.bf16.msra.mxu0 %v3725
        %3755 = vmatmul.bf16.gmra.mxu0 %v3733
        %v3756 = vpop.f32.mrf.mxu0
        %v3757 = vadd.f32 0.0, %v3756
        %v3758 = vpop.f32.mrf.mxu0
        %v3759 = vadd.f32 0.0, %v3758
        %3760 = vmatmul.bf16.gmra.mxu0 %v3736
        %v3761 = vpop.f32.mrf.mxu0
        %v3762 = vadd.f32 0.0, %v3761
        %v3763 = vpop.f32.mrf.mxu0
        %v3764 = vadd.f32 0.0, %v3763
        %3765 = vmatmul.bf16.gmra.mxu0 %v3739
        %v3766 = vpop.f32.mrf.mxu0
        %v3767 = vadd.f32 0.0, %v3766
        %v3768 = vpop.f32.mrf.mxu0
        %v3769 = vadd.f32 0.0, %v3768
        %3770 = vmatmul.bf16.gmra.mxu0 %v3742
        %v3771 = vpop.f32.mrf.mxu0
        %v3772 = vadd.f32 0.0, %v3771
        %v3773 = vpop.f32.mrf.mxu0
        %3774 = vdwg.mxu0
        %3775 = vst.msk [vmem:[#allocation2] sm:$0xff] %vm636, %v3757
        %3776 = vst.msk [vmem:[#allocation2 + $0x8] sm:$0xff] %vm636, %v3759
        %3777 = vst.msk [vmem:[#allocation2 + $0x10] sm:$0xff] %vm636, %v3762
        %3778 = vst.msk [vmem:[#allocation2 + $0x18] sm:$0xff] %vm636, %v3764
        %3779 = vst.msk [vmem:[#allocation2 + $0x20] sm:$0xff] %vm636, %v3767
        %3780 = vst.msk [vmem:[#allocation2 + $0x28] sm:$0xff] %vm636, %v3769
        %3781 = vst.msk [vmem:[#allocation2 + $0x30] sm:$0xff] %vm636, %v3772
        %3782 = vrot.lane.b32.xlu0 %v3545, 112
        %v3783 = vpop.permute.xlu0 %3782
        %3784 = vrot.lane.b32.xlu0 %v3546, 112
        %v3785 = vpop.permute.xlu0 %3784
        %3786 = vrot.lane.b32.xlu0 %v3547, 112
        %v3787 = vpop.permute.xlu0 %3786
        %3788 = vrot.lane.b32.xlu0 %v3548, 112
        %v3789 = vpop.permute.xlu0 %3788
        %3790 = vrot.lane.b32.xlu0 %v3545, 48
        %v3791 = vpop.permute.xlu0 %3790
        %3792 = vrot.lane.b32.xlu0 %v3546, 48
        %v3793 = vpop.permute.xlu0 %3792
        %3794 = vrot.lane.b32.xlu0 %v3547, 48
        %v3795 = vpop.permute.xlu0 %3794
        %3796 = vrot.lane.b32.xlu0 %v3548, 48
        %v3797 = vpop.permute.xlu0 %3796
        %v3799 = vsel %vm636, %v3783, 0
        %v3802 = vsel %vm636, %v3785, 0
        %v3805 = vsel %vm636, %v3787, 0
        %v3808 = vsel %vm636, %v3789, 0
        %v3811 = vsel %vm636, %v3791, 0
        %v3814 = vsel %vm636, %v3793, 0
        %v3817 = vsel %vm636, %v3795, 0
        %v3820 = vsel %vm636, %v3797, 0
        %3822 = vmatpush.bf16.xpose.msra.mxu0 0
        %3823 = vmatpush.bf16.xpose.msra.mxu0 0
        %3824 = vmatpush.bf16.xpose.msra.mxu0 0
        %3825 = vmatpush.bf16.xpose.msra.mxu0 0
        %3826 = vmatpush.bf16.xpose.msra.mxu0 %v3820
        %3827 = vmatpush.bf16.xpose.msra.mxu0 %v3817
        %3828 = vmatpush.bf16.xpose.msra.mxu0 %v3814
        %3829 = vmatpush.bf16.xpose.msra.mxu0 %v3811
        %3830 = vmatmul.bf16.gmra.mxu0 %v3799
        %v3831 = vpop.f32.mrf.mxu0
        %v3832 = vadd.f32 %v694, %v3831
        %v3833 = vpop.f32.mrf.mxu0
        %v3834 = vadd.f32 %v694, %v3833
        %3835 = vmatmul.bf16.gmra.mxu0 %v3802
        %v3836 = vpop.f32.mrf.mxu0
        %v3837 = vadd.f32 %v694, %v3836
        %v3838 = vpop.f32.mrf.mxu0
        %v3839 = vadd.f32 %v694, %v3838
        %3840 = vmatmul.bf16.gmra.mxu0 %v3805
        %v3841 = vpop.f32.mrf.mxu0
        %v3842 = vadd.f32 %v694, %v3841
        %v3843 = vpop.f32.mrf.mxu0
        %v3844 = vadd.f32 %v694, %v3843
        %3845 = vmatmul.bf16.gmra.mxu0 %v3808
        %v3846 = vpop.f32.mrf.mxu0
        %v3847 = vadd.f32 %v694, %v3846
        %v3848 = vpop.f32.mrf.mxu0
        %3849 = vdwg.mxu0
        %v3850 = vsel %vm1097, %v3832, -inf
        %3851 = vmax.xlane.f32.xlu0 %v3850
        %v3852 = vpop.xlane.xlu0 %3851
        %v3853 = vsel %vm1097, %v3834, -inf
        %3854 = vmax.xlane.f32.xlu0 %v3853
        %v3855 = vpop.xlane.xlu0 %3854
        %v3856 = vsel %vm1097, %v3837, -inf
        %3857 = vmax.xlane.f32.xlu0 %v3856
        %v3858 = vpop.xlane.xlu0 %3857
        %v3859 = vsel %vm1097, %v3839, -inf
        %3860 = vmax.xlane.f32.xlu0 %v3859
        %v3861 = vpop.xlane.xlu0 %3860
        %v3862 = vsel %vm1097, %v3842, -inf
        %3863 = vmax.xlane.f32.xlu0 %v3862
        %v3864 = vpop.xlane.xlu0 %3863
        %v3865 = vsel %vm1097, %v3844, -inf
        %3866 = vmax.xlane.f32.xlu0 %v3865
        %v3867 = vpop.xlane.xlu0 %3866
        %v3868 = vsel %vm1097, %v3847, -inf
        %3869 = vmax.xlane.f32.xlu0 %v3868
        %v3870 = vpop.xlane.xlu0 %3869
        %v3871 = vsub.f32 %v3832, %v3852
        %v3872 = vsub.f32 %v3834, %v3855
        %v3873 = vsub.f32 %v3837, %v3858
        %v3874 = vsub.f32 %v3839, %v3861
        %v3875 = vsub.f32 %v3842, %v3864
        %v3876 = vsub.f32 %v3844, %v3867
        %v3877 = vsub.f32 %v3847, %v3870
        %v3878 = vmul.f32 %v3871, 1.442695
        %v3879 = vpow.pop %v3878
        %v3880 = vmul.f32 %v3872, 1.442695
        %v3881 = vpow.pop %v3880
        %v3882 = vmul.f32 %v3873, 1.442695
        %v3883 = vpow.pop %v3882
        %v3884 = vmul.f32 %v3874, 1.442695
        %v3885 = vpow.pop %v3884
        %v3886 = vmul.f32 %v3875, 1.442695
        %v3887 = vpow.pop %v3886
        %v3888 = vmul.f32 %v3876, 1.442695
        %v3889 = vpow.pop %v3888
        %v3890 = vmul.f32 %v3877, 1.442695
        %v3891 = vpow.pop %v3890
        %v3892 = vsel %vm1097, %v3879, 0.0
        %3893 = vadd.xlane.f32.xlu0 %v3892
        %v3894 = vpop.xlane.xlu0 %3893
        %v3895 = vsel %vm1097, %v3881, 0.0
        %3896 = vadd.xlane.f32.xlu0 %v3895
        %v3897 = vpop.xlane.xlu0 %3896
        %v3898 = vsel %vm1097, %v3883, 0.0
        %3899 = vadd.xlane.f32.xlu0 %v3898
        %v3900 = vpop.xlane.xlu0 %3899
        %v3901 = vsel %vm1097, %v3885, 0.0
        %3902 = vadd.xlane.f32.xlu0 %v3901
        %v3903 = vpop.xlane.xlu0 %3902
        %v3904 = vsel %vm1097, %v3887, 0.0
        %3905 = vadd.xlane.f32.xlu0 %v3904
        %v3906 = vpop.xlane.xlu0 %3905
        %v3907 = vsel %vm1097, %v3889, 0.0
        %3908 = vadd.xlane.f32.xlu0 %v3907
        %v3909 = vpop.xlane.xlu0 %3908
        %v3910 = vsel %vm1097, %v3891, 0.0
        %3911 = vadd.xlane.f32.xlu0 %v3910
        %v3912 = vpop.xlane.xlu0 %3911
        %v3913 = vrcp.pop %v3894
        %v3914 = vrcp.pop %v3897
        %v3915 = vrcp.pop %v3900
        %v3916 = vrcp.pop %v3903
        %v3917 = vrcp.pop %v3906
        %v3918 = vrcp.pop %v3909
        %v3919 = vrcp.pop %v3912
        %v3920 = vmul.f32 %v3879, %v3913
        %v3921 = vmul.f32 %v3881, %v3914
        %v3922 = vmul.f32 %v3883, %v3915
        %v3923 = vmul.f32 %v3885, %v3916
        %v3924 = vmul.f32 %v3887, %v3917
        %v3925 = vmul.f32 %v3889, %v3918
        %v3926 = vmul.f32 %v3891, %v3919
        %v3927 = vpack.c.bf16 %v3920, %v3920
        %v3928 = vpack.c.bf16 %v3921, %v3921
        %v3929 = vpack.c.bf16 %v3922, %v3922
        %v3930 = vpack.c.bf16 %v3923, %v3923
        %v3931 = vpack.c.bf16 %v3924, %v3924
        %v3932 = vpack.c.bf16 %v3925, %v3925
        %v3933 = vpack.c.bf16 %v3926, %v3926
        %v3941 = vunpack.c.l.b16 %v3927
        %v3942 = vunpack.c.l.b16 %v3928
        %v3943 = vunpack.c.l.b16 %v3929
        %v3944 = vunpack.c.l.b16 %v3930
        %v3945 = vunpack.c.l.b16 %v3931
        %v3946 = vunpack.c.l.b16 %v3932
        %v3947 = vunpack.c.l.b16 %v3933
        %v3948 = vpack.c.b16 %v3942, %v3941
        %v3949 = vpack.c.b16 %v3944, %v3943
        %v3950 = vpack.c.b16 %v3946, %v3945
        %v3951 = vpack.c.b16 %v3947, %v3947
        %3952 = vrot.lane.b32.xlu0 %v3725, 112
        %v3953 = vpop.permute.xlu0 %3952
        %3954 = vrot.lane.b32.xlu0 %v3726, 112
        %v3955 = vpop.permute.xlu0 %3954
        %3956 = vrot.lane.b32.xlu0 %v3727, 112
        %v3957 = vpop.permute.xlu0 %3956
        %3958 = vrot.lane.b32.xlu0 %v3728, 112
        %v3959 = vpop.permute.xlu0 %3958
        %v3964 = vsel %vm1097, %v3948, 0
        %v3967 = vsel %vm1097, %v3949, 0
        %v3970 = vsel %vm1097, %v3950, 0
        %v3973 = vsel %vm1097, %v3951, 0
        %v3976 = vsel %vm1233, %v3959, 0
        %3978 = vmatpush.bf16.msra.mxu0 0
        %3979 = vmatpush.bf16.msra.mxu0 0
        %3980 = vmatpush.bf16.msra.mxu0 0
        %3981 = vmatpush.bf16.msra.mxu0 0
        %3982 = vmatpush.bf16.msra.mxu0 %v3976
        %3983 = vmatpush.bf16.msra.mxu0 %v3957
        %3984 = vmatpush.bf16.msra.mxu0 %v3955
        %3985 = vmatpush.bf16.msra.mxu0 %v3953
        %3986 = vmatmul.bf16.gmra.mxu0 %v3964
        %v3987 = vpop.f32.mrf.mxu0
        %v3988 = vadd.f32 0.0, %v3987
        %v3989 = vpop.f32.mrf.mxu0
        %v3990 = vadd.f32 0.0, %v3989
        %3991 = vmatmul.bf16.gmra.mxu0 %v3967
        %v3992 = vpop.f32.mrf.mxu0
        %v3993 = vadd.f32 0.0, %v3992
        %v3994 = vpop.f32.mrf.mxu0
        %v3995 = vadd.f32 0.0, %v3994
        %3996 = vmatmul.bf16.gmra.mxu0 %v3970
        %v3997 = vpop.f32.mrf.mxu0
        %v3998 = vadd.f32 0.0, %v3997
        %v3999 = vpop.f32.mrf.mxu0
        %v4000 = vadd.f32 0.0, %v3999
        %4001 = vmatmul.bf16.gmra.mxu0 %v3973
        %v4002 = vpop.f32.mrf.mxu0
        %v4003 = vadd.f32 0.0, %v4002
        %v4004 = vpop.f32.mrf.mxu0
        %4005 = vdwg.mxu0
        %4013 = vrot.lane.b32.xlu0 %v3988, 16
        %v4014 = vpop.permute.xlu0 %4013
        %4015 = vrot.lane.b32.xlu0 %v3990, 16
        %v4016 = vpop.permute.xlu0 %4015
        %4017 = vrot.lane.b32.xlu0 %v3993, 16
        %v4018 = vpop.permute.xlu0 %4017
        %4019 = vrot.lane.b32.xlu0 %v3995, 16
        %v4020 = vpop.permute.xlu0 %4019
        %4021 = vrot.lane.b32.xlu0 %v3998, 16
        %v4022 = vpop.permute.xlu0 %4021
        %4023 = vrot.lane.b32.xlu0 %v4000, 16
        %v4024 = vpop.permute.xlu0 %4023
        %4025 = vrot.lane.b32.xlu0 %v4003, 16
        %v4026 = vpop.permute.xlu0 %4025
        %4034 = vst.msk [vmem:[#allocation2] sm:$0xff] %vm1524, %v4014
        %4035 = vst.msk [vmem:[#allocation2 + $0x8] sm:$0xff] %vm1524, %v4016
        %4036 = vst.msk [vmem:[#allocation2 + $0x10] sm:$0xff] %vm1524, %v4018
        %4037 = vst.msk [vmem:[#allocation2 + $0x18] sm:$0xff] %vm1524, %v4020
        %4038 = vst.msk [vmem:[#allocation2 + $0x20] sm:$0xff] %vm1524, %v4022
        %4039 = vst.msk [vmem:[#allocation2 + $0x28] sm:$0xff] %vm1524, %v4024
        %4040 = vst.msk [vmem:[#allocation2 + $0x30] sm:$0xff] %vm1524, %v4026
        %4041 = vrot.lane.b32.xlu0 %v3545, 96
        %v4042 = vpop.permute.xlu0 %4041
        %4043 = vrot.lane.b32.xlu0 %v3546, 96
        %v4044 = vpop.permute.xlu0 %4043
        %4045 = vrot.lane.b32.xlu0 %v3547, 96
        %v4046 = vpop.permute.xlu0 %4045
        %4047 = vrot.lane.b32.xlu0 %v3548, 96
        %v4048 = vpop.permute.xlu0 %4047
        %4049 = vrot.lane.b32.xlu0 %v3545, 32
        %v4050 = vpop.permute.xlu0 %4049
        %4051 = vrot.lane.b32.xlu0 %v3546, 32
        %v4052 = vpop.permute.xlu0 %4051
        %4053 = vrot.lane.b32.xlu0 %v3547, 32
        %v4054 = vpop.permute.xlu0 %4053
        %4055 = vrot.lane.b32.xlu0 %v3548, 32
        %v4056 = vpop.permute.xlu0 %4055
        %v4058 = vsel %vm636, %v4042, 0
        %v4061 = vsel %vm636, %v4044, 0
        %v4064 = vsel %vm636, %v4046, 0
        %v4067 = vsel %vm636, %v4048, 0
        %v4070 = vsel %vm636, %v4050, 0
        %v4073 = vsel %vm636, %v4052, 0
        %v4076 = vsel %vm636, %v4054, 0
        %v4079 = vsel %vm636, %v4056, 0
        %4081 = vmatpush.bf16.xpose.msra.mxu0 0
        %4082 = vmatpush.bf16.xpose.msra.mxu0 0
        %4083 = vmatpush.bf16.xpose.msra.mxu0 0
        %4084 = vmatpush.bf16.xpose.msra.mxu0 0
        %4085 = vmatpush.bf16.xpose.msra.mxu0 %v4079
        %4086 = vmatpush.bf16.xpose.msra.mxu0 %v4076
        %4087 = vmatpush.bf16.xpose.msra.mxu0 %v4073
        %4088 = vmatpush.bf16.xpose.msra.mxu0 %v4070
        %4089 = vmatmul.bf16.gmra.mxu0 %v4058
        %v4090 = vpop.f32.mrf.mxu0
        %v4091 = vadd.f32 %v694, %v4090
        %v4092 = vpop.f32.mrf.mxu0
        %v4093 = vadd.f32 %v694, %v4092
        %4094 = vmatmul.bf16.gmra.mxu0 %v4061
        %v4095 = vpop.f32.mrf.mxu0
        %v4096 = vadd.f32 %v694, %v4095
        %v4097 = vpop.f32.mrf.mxu0
        %v4098 = vadd.f32 %v694, %v4097
        %4099 = vmatmul.bf16.gmra.mxu0 %v4064
        %v4100 = vpop.f32.mrf.mxu0
        %v4101 = vadd.f32 %v694, %v4100
        %v4102 = vpop.f32.mrf.mxu0
        %v4103 = vadd.f32 %v694, %v4102
        %4104 = vmatmul.bf16.gmra.mxu0 %v4067
        %v4105 = vpop.f32.mrf.mxu0
        %v4106 = vadd.f32 %v694, %v4105
        %v4107 = vpop.f32.mrf.mxu0
        %4108 = vdwg.mxu0
        %v4109 = vsel %vm1097, %v4091, -inf
        %4110 = vmax.xlane.f32.xlu0 %v4109
        %v4111 = vpop.xlane.xlu0 %4110
        %v4112 = vsel %vm1097, %v4093, -inf
        %4113 = vmax.xlane.f32.xlu0 %v4112
        %v4114 = vpop.xlane.xlu0 %4113
        %v4115 = vsel %vm1097, %v4096, -inf
        %4116 = vmax.xlane.f32.xlu0 %v4115
        %v4117 = vpop.xlane.xlu0 %4116
        %v4118 = vsel %vm1097, %v4098, -inf
        %4119 = vmax.xlane.f32.xlu0 %v4118
        %v4120 = vpop.xlane.xlu0 %4119
        %v4121 = vsel %vm1097, %v4101, -inf
        %4122 = vmax.xlane.f32.xlu0 %v4121
        %v4123 = vpop.xlane.xlu0 %4122
        %v4124 = vsel %vm1097, %v4103, -inf
        %4125 = vmax.xlane.f32.xlu0 %v4124
        %v4126 = vpop.xlane.xlu0 %4125
        %v4127 = vsel %vm1097, %v4106, -inf
        %4128 = vmax.xlane.f32.xlu0 %v4127
        %v4129 = vpop.xlane.xlu0 %4128
        %v4130 = vsub.f32 %v4091, %v4111
        %v4131 = vsub.f32 %v4093, %v4114
        %v4132 = vsub.f32 %v4096, %v4117
        %v4133 = vsub.f32 %v4098, %v4120
        %v4134 = vsub.f32 %v4101, %v4123
        %v4135 = vsub.f32 %v4103, %v4126
        %v4136 = vsub.f32 %v4106, %v4129
        %v4137 = vmul.f32 %v4130, 1.442695
        %v4138 = vpow.pop %v4137
        %v4139 = vmul.f32 %v4131, 1.442695
        %v4140 = vpow.pop %v4139
        %v4141 = vmul.f32 %v4132, 1.442695
        %v4142 = vpow.pop %v4141
        %v4143 = vmul.f32 %v4133, 1.442695
        %v4144 = vpow.pop %v4143
        %v4145 = vmul.f32 %v4134, 1.442695
        %v4146 = vpow.pop %v4145
        %v4147 = vmul.f32 %v4135, 1.442695
        %v4148 = vpow.pop %v4147
        %v4149 = vmul.f32 %v4136, 1.442695
        %v4150 = vpow.pop %v4149
        %v4151 = vsel %vm1097, %v4138, 0.0
        %4152 = vadd.xlane.f32.xlu0 %v4151
        %v4153 = vpop.xlane.xlu0 %4152
        %v4154 = vsel %vm1097, %v4140, 0.0
        %4155 = vadd.xlane.f32.xlu0 %v4154
        %v4156 = vpop.xlane.xlu0 %4155
        %v4157 = vsel %vm1097, %v4142, 0.0
        %4158 = vadd.xlane.f32.xlu0 %v4157
        %v4159 = vpop.xlane.xlu0 %4158
        %v4160 = vsel %vm1097, %v4144, 0.0
        %4161 = vadd.xlane.f32.xlu0 %v4160
        %v4162 = vpop.xlane.xlu0 %4161
        %v4163 = vsel %vm1097, %v4146, 0.0
        %4164 = vadd.xlane.f32.xlu0 %v4163
        %v4165 = vpop.xlane.xlu0 %4164
        %v4166 = vsel %vm1097, %v4148, 0.0
        %4167 = vadd.xlane.f32.xlu0 %v4166
        %v4168 = vpop.xlane.xlu0 %4167
        %v4169 = vsel %vm1097, %v4150, 0.0
        %4170 = vadd.xlane.f32.xlu0 %v4169
        %v4171 = vpop.xlane.xlu0 %4170
        %v4172 = vrcp.pop %v4153
        %v4173 = vrcp.pop %v4156
        %v4174 = vrcp.pop %v4159
        %v4175 = vrcp.pop %v4162
        %v4176 = vrcp.pop %v4165
        %v4177 = vrcp.pop %v4168
        %v4178 = vrcp.pop %v4171
        %v4179 = vmul.f32 %v4138, %v4172
        %v4180 = vmul.f32 %v4140, %v4173
        %v4181 = vmul.f32 %v4142, %v4174
        %v4182 = vmul.f32 %v4144, %v4175
        %v4183 = vmul.f32 %v4146, %v4176
        %v4184 = vmul.f32 %v4148, %v4177
        %v4185 = vmul.f32 %v4150, %v4178
        %v4186 = vpack.c.bf16 %v4179, %v4179
        %v4187 = vpack.c.bf16 %v4180, %v4180
        %v4188 = vpack.c.bf16 %v4181, %v4181
        %v4189 = vpack.c.bf16 %v4182, %v4182
        %v4190 = vpack.c.bf16 %v4183, %v4183
        %v4191 = vpack.c.bf16 %v4184, %v4184
        %v4192 = vpack.c.bf16 %v4185, %v4185
        %v4200 = vunpack.c.l.b16 %v4186
        %v4201 = vunpack.c.l.b16 %v4187
        %v4202 = vunpack.c.l.b16 %v4188
        %v4203 = vunpack.c.l.b16 %v4189
        %v4204 = vunpack.c.l.b16 %v4190
        %v4205 = vunpack.c.l.b16 %v4191
        %v4206 = vunpack.c.l.b16 %v4192
        %v4207 = vpack.c.b16 %v4201, %v4200
        %v4208 = vpack.c.b16 %v4203, %v4202
        %v4209 = vpack.c.b16 %v4205, %v4204
        %v4210 = vpack.c.b16 %v4206, %v4206
        %4211 = vrot.lane.b32.xlu0 %v3725, 96
        %v4212 = vpop.permute.xlu0 %4211
        %4213 = vrot.lane.b32.xlu0 %v3726, 96
        %v4214 = vpop.permute.xlu0 %4213
        %4215 = vrot.lane.b32.xlu0 %v3727, 96
        %v4216 = vpop.permute.xlu0 %4215
        %4217 = vrot.lane.b32.xlu0 %v3728, 96
        %v4218 = vpop.permute.xlu0 %4217
        %v4223 = vsel %vm1097, %v4207, 0
        %v4226 = vsel %vm1097, %v4208, 0
        %v4229 = vsel %vm1097, %v4209, 0
        %v4232 = vsel %vm1097, %v4210, 0
        %v4235 = vsel %vm1233, %v4218, 0
        %4237 = vmatpush.bf16.msra.mxu0 0
        %4238 = vmatpush.bf16.msra.mxu0 0
        %4239 = vmatpush.bf16.msra.mxu0 0
        %4240 = vmatpush.bf16.msra.mxu0 0
        %4241 = vmatpush.bf16.msra.mxu0 %v4235
        %4242 = vmatpush.bf16.msra.mxu0 %v4216
        %4243 = vmatpush.bf16.msra.mxu0 %v4214
        %4244 = vmatpush.bf16.msra.mxu0 %v4212
        %4245 = vmatmul.bf16.gmra.mxu0 %v4223
        %v4246 = vpop.f32.mrf.mxu0
        %v4247 = vadd.f32 0.0, %v4246
        %v4248 = vpop.f32.mrf.mxu0
        %v4249 = vadd.f32 0.0, %v4248
        %4250 = vmatmul.bf16.gmra.mxu0 %v4226
        %v4251 = vpop.f32.mrf.mxu0
        %v4252 = vadd.f32 0.0, %v4251
        %v4253 = vpop.f32.mrf.mxu0
        %v4254 = vadd.f32 0.0, %v4253
        %4255 = vmatmul.bf16.gmra.mxu0 %v4229
        %v4256 = vpop.f32.mrf.mxu0
        %v4257 = vadd.f32 0.0, %v4256
        %v4258 = vpop.f32.mrf.mxu0
        %v4259 = vadd.f32 0.0, %v4258
        %4260 = vmatmul.bf16.gmra.mxu0 %v4232
        %v4261 = vpop.f32.mrf.mxu0
        %v4262 = vadd.f32 0.0, %v4261
        %v4263 = vpop.f32.mrf.mxu0
        %4264 = vdwg.mxu0
        %4272 = vrot.lane.b32.xlu0 %v4247, 32
        %v4273 = vpop.permute.xlu0 %4272
        %4274 = vrot.lane.b32.xlu0 %v4249, 32
        %v4275 = vpop.permute.xlu0 %4274
        %4276 = vrot.lane.b32.xlu0 %v4252, 32
        %v4277 = vpop.permute.xlu0 %4276
        %4278 = vrot.lane.b32.xlu0 %v4254, 32
        %v4279 = vpop.permute.xlu0 %4278
        %4280 = vrot.lane.b32.xlu0 %v4257, 32
        %v4281 = vpop.permute.xlu0 %4280
        %4282 = vrot.lane.b32.xlu0 %v4259, 32
        %v4283 = vpop.permute.xlu0 %4282
        %4284 = vrot.lane.b32.xlu0 %v4262, 32
        %v4285 = vpop.permute.xlu0 %4284
        %4293 = vst.msk [vmem:[#allocation2] sm:$0xff] %vm1784, %v4273
        %4294 = vst.msk [vmem:[#allocation2 + $0x8] sm:$0xff] %vm1784, %v4275
        %4295 = vst.msk [vmem:[#allocation2 + $0x10] sm:$0xff] %vm1784, %v4277
        %4296 = vst.msk [vmem:[#allocation2 + $0x18] sm:$0xff] %vm1784, %v4279
        %4297 = vst.msk [vmem:[#allocation2 + $0x20] sm:$0xff] %vm1784, %v4281
        %4298 = vst.msk [vmem:[#allocation2 + $0x28] sm:$0xff] %vm1784, %v4283
        %4299 = vst.msk [vmem:[#allocation2 + $0x30] sm:$0xff] %vm1784, %v4285
        %4300 = vrot.lane.b32.xlu0 %v3545, 80
        %v4301 = vpop.permute.xlu0 %4300
        %4302 = vrot.lane.b32.xlu0 %v3546, 80
        %v4303 = vpop.permute.xlu0 %4302
        %4304 = vrot.lane.b32.xlu0 %v3547, 80
        %v4305 = vpop.permute.xlu0 %4304
        %4306 = vrot.lane.b32.xlu0 %v3548, 80
        %v4307 = vpop.permute.xlu0 %4306
        %4308 = vrot.lane.b32.xlu0 %v3545, 16
        %v4309 = vpop.permute.xlu0 %4308
        %4310 = vrot.lane.b32.xlu0 %v3546, 16
        %v4311 = vpop.permute.xlu0 %4310
        %4312 = vrot.lane.b32.xlu0 %v3547, 16
        %v4313 = vpop.permute.xlu0 %4312
        %4314 = vrot.lane.b32.xlu0 %v3548, 16
        %v4315 = vpop.permute.xlu0 %4314
        %v4317 = vsel %vm636, %v4301, 0
        %v4320 = vsel %vm636, %v4303, 0
        %v4323 = vsel %vm636, %v4305, 0
        %v4326 = vsel %vm636, %v4307, 0
        %v4329 = vsel %vm636, %v4309, 0
        %v4332 = vsel %vm636, %v4311, 0
        %v4335 = vsel %vm636, %v4313, 0
        %v4338 = vsel %vm636, %v4315, 0
        %4340 = vmatpush.bf16.xpose.msra.mxu0 0
        %4341 = vmatpush.bf16.xpose.msra.mxu0 0
        %4342 = vmatpush.bf16.xpose.msra.mxu0 0
        %4343 = vmatpush.bf16.xpose.msra.mxu0 0
        %4344 = vmatpush.bf16.xpose.msra.mxu0 %v4338
        %4345 = vmatpush.bf16.xpose.msra.mxu0 %v4335
        %4346 = vmatpush.bf16.xpose.msra.mxu0 %v4332
        %4347 = vmatpush.bf16.xpose.msra.mxu0 %v4329
        %4348 = vmatmul.bf16.gmra.mxu0 %v4317
        %v4349 = vpop.f32.mrf.mxu0
        %v4350 = vadd.f32 %v694, %v4349
        %v4351 = vpop.f32.mrf.mxu0
        %v4352 = vadd.f32 %v694, %v4351
        %4353 = vmatmul.bf16.gmra.mxu0 %v4320
        %v4354 = vpop.f32.mrf.mxu0
        %v4355 = vadd.f32 %v694, %v4354
        %v4356 = vpop.f32.mrf.mxu0
        %v4357 = vadd.f32 %v694, %v4356
        %4358 = vmatmul.bf16.gmra.mxu0 %v4323
        %v4359 = vpop.f32.mrf.mxu0
        %v4360 = vadd.f32 %v694, %v4359
        %v4361 = vpop.f32.mrf.mxu0
        %v4362 = vadd.f32 %v694, %v4361
        %4363 = vmatmul.bf16.gmra.mxu0 %v4326
        %v4364 = vpop.f32.mrf.mxu0
        %v4365 = vadd.f32 %v694, %v4364
        %v4366 = vpop.f32.mrf.mxu0
        %4367 = vdwg.mxu0
        %v4368 = vsel %vm1097, %v4350, -inf
        %4369 = vmax.xlane.f32.xlu0 %v4368
        %v4370 = vpop.xlane.xlu0 %4369
        %v4371 = vsel %vm1097, %v4352, -inf
        %4372 = vmax.xlane.f32.xlu0 %v4371
        %v4373 = vpop.xlane.xlu0 %4372
        %v4374 = vsel %vm1097, %v4355, -inf
        %4375 = vmax.xlane.f32.xlu0 %v4374
        %v4376 = vpop.xlane.xlu0 %4375
        %v4377 = vsel %vm1097, %v4357, -inf
        %4378 = vmax.xlane.f32.xlu0 %v4377
        %v4379 = vpop.xlane.xlu0 %4378
        %v4380 = vsel %vm1097, %v4360, -inf
        %4381 = vmax.xlane.f32.xlu0 %v4380
        %v4382 = vpop.xlane.xlu0 %4381
        %v4383 = vsel %vm1097, %v4362, -inf
        %4384 = vmax.xlane.f32.xlu0 %v4383
        %v4385 = vpop.xlane.xlu0 %4384
        %v4386 = vsel %vm1097, %v4365, -inf
        %4387 = vmax.xlane.f32.xlu0 %v4386
        %v4388 = vpop.xlane.xlu0 %4387
        %v4389 = vsub.f32 %v4350, %v4370
        %v4390 = vsub.f32 %v4352, %v4373
        %v4391 = vsub.f32 %v4355, %v4376
        %v4392 = vsub.f32 %v4357, %v4379
        %v4393 = vsub.f32 %v4360, %v4382
        %v4394 = vsub.f32 %v4362, %v4385
        %v4395 = vsub.f32 %v4365, %v4388
        %v4396 = vmul.f32 %v4389, 1.442695
        %v4397 = vpow.pop %v4396
        %v4398 = vmul.f32 %v4390, 1.442695
        %v4399 = vpow.pop %v4398
        %v4400 = vmul.f32 %v4391, 1.442695
        %v4401 = vpow.pop %v4400
        %v4402 = vmul.f32 %v4392, 1.442695
        %v4403 = vpow.pop %v4402
        %v4404 = vmul.f32 %v4393, 1.442695
        %v4405 = vpow.pop %v4404
        %v4406 = vmul.f32 %v4394, 1.442695
        %v4407 = vpow.pop %v4406
        %v4408 = vmul.f32 %v4395, 1.442695
        %v4409 = vpow.pop %v4408
        %v4410 = vsel %vm1097, %v4397, 0.0
        %4411 = vadd.xlane.f32.xlu0 %v4410
        %v4412 = vpop.xlane.xlu0 %4411
        %v4413 = vsel %vm1097, %v4399, 0.0
        %4414 = vadd.xlane.f32.xlu0 %v4413
        %v4415 = vpop.xlane.xlu0 %4414
        %v4416 = vsel %vm1097, %v4401, 0.0
        %4417 = vadd.xlane.f32.xlu0 %v4416
        %v4418 = vpop.xlane.xlu0 %4417
        %v4419 = vsel %vm1097, %v4403, 0.0
        %4420 = vadd.xlane.f32.xlu0 %v4419
        %v4421 = vpop.xlane.xlu0 %4420
        %v4422 = vsel %vm1097, %v4405, 0.0
        %4423 = vadd.xlane.f32.xlu0 %v4422
        %v4424 = vpop.xlane.xlu0 %4423
        %v4425 = vsel %vm1097, %v4407, 0.0
        %4426 = vadd.xlane.f32.xlu0 %v4425
        %v4427 = vpop.xlane.xlu0 %4426
        %v4428 = vsel %vm1097, %v4409, 0.0
        %4429 = vadd.xlane.f32.xlu0 %v4428
        %v4430 = vpop.xlane.xlu0 %4429
        %v4431 = vrcp.pop %v4412
        %v4432 = vrcp.pop %v4415
        %v4433 = vrcp.pop %v4418
        %v4434 = vrcp.pop %v4421
        %v4435 = vrcp.pop %v4424
        %v4436 = vrcp.pop %v4427
        %v4437 = vrcp.pop %v4430
        %v4438 = vmul.f32 %v4397, %v4431
        %v4439 = vmul.f32 %v4399, %v4432
        %v4440 = vmul.f32 %v4401, %v4433
        %v4441 = vmul.f32 %v4403, %v4434
        %v4442 = vmul.f32 %v4405, %v4435
        %v4443 = vmul.f32 %v4407, %v4436
        %v4444 = vmul.f32 %v4409, %v4437
        %v4445 = vpack.c.bf16 %v4438, %v4438
        %v4446 = vpack.c.bf16 %v4439, %v4439
        %v4447 = vpack.c.bf16 %v4440, %v4440
        %v4448 = vpack.c.bf16 %v4441, %v4441
        %v4449 = vpack.c.bf16 %v4442, %v4442
        %v4450 = vpack.c.bf16 %v4443, %v4443
        %v4451 = vpack.c.bf16 %v4444, %v4444
        %v4459 = vunpack.c.l.b16 %v4445
        %v4460 = vunpack.c.l.b16 %v4446
        %v4461 = vunpack.c.l.b16 %v4447
        %v4462 = vunpack.c.l.b16 %v4448
        %v4463 = vunpack.c.l.b16 %v4449
        %v4464 = vunpack.c.l.b16 %v4450
        %v4465 = vunpack.c.l.b16 %v4451
        %v4466 = vpack.c.b16 %v4460, %v4459
        %v4467 = vpack.c.b16 %v4462, %v4461
        %v4468 = vpack.c.b16 %v4464, %v4463
        %v4469 = vpack.c.b16 %v4465, %v4465
        %4470 = vrot.lane.b32.xlu0 %v3725, 80
        %v4471 = vpop.permute.xlu0 %4470
        %4472 = vrot.lane.b32.xlu0 %v3726, 80
        %v4473 = vpop.permute.xlu0 %4472
        %4474 = vrot.lane.b32.xlu0 %v3727, 80
        %v4475 = vpop.permute.xlu0 %4474
        %4476 = vrot.lane.b32.xlu0 %v3728, 80
        %v4477 = vpop.permute.xlu0 %4476
        %v4482 = vsel %vm1097, %v4466, 0
        %v4485 = vsel %vm1097, %v4467, 0
        %v4488 = vsel %vm1097, %v4468, 0
        %v4491 = vsel %vm1097, %v4469, 0
        %v4494 = vsel %vm1233, %v4477, 0
        %4496 = vmatpush.bf16.msra.mxu0 0
        %4497 = vmatpush.bf16.msra.mxu0 0
        %4498 = vmatpush.bf16.msra.mxu0 0
        %4499 = vmatpush.bf16.msra.mxu0 0
        %4500 = vmatpush.bf16.msra.mxu0 %v4494
        %4501 = vmatpush.bf16.msra.mxu0 %v4475
        %4502 = vmatpush.bf16.msra.mxu0 %v4473
        %4503 = vmatpush.bf16.msra.mxu0 %v4471
        %4504 = vmatmul.bf16.gmra.mxu0 %v4482
        %v4505 = vpop.f32.mrf.mxu0
        %v4506 = vadd.f32 0.0, %v4505
        %v4507 = vpop.f32.mrf.mxu0
        %v4508 = vadd.f32 0.0, %v4507
        %4509 = vmatmul.bf16.gmra.mxu0 %v4485
        %v4510 = vpop.f32.mrf.mxu0
        %v4511 = vadd.f32 0.0, %v4510
        %v4512 = vpop.f32.mrf.mxu0
        %v4513 = vadd.f32 0.0, %v4512
        %4514 = vmatmul.bf16.gmra.mxu0 %v4488
        %v4515 = vpop.f32.mrf.mxu0
        %v4516 = vadd.f32 0.0, %v4515
        %v4517 = vpop.f32.mrf.mxu0
        %v4518 = vadd.f32 0.0, %v4517
        %4519 = vmatmul.bf16.gmra.mxu0 %v4491
        %v4520 = vpop.f32.mrf.mxu0
        %v4521 = vadd.f32 0.0, %v4520
        %v4522 = vpop.f32.mrf.mxu0
        %4523 = vdwg.mxu0
        %4531 = vrot.lane.b32.xlu0 %v4506, 48
        %v4532 = vpop.permute.xlu0 %4531
        %4533 = vrot.lane.b32.xlu0 %v4508, 48
        %v4534 = vpop.permute.xlu0 %4533
        %4535 = vrot.lane.b32.xlu0 %v4511, 48
        %v4536 = vpop.permute.xlu0 %4535
        %4537 = vrot.lane.b32.xlu0 %v4513, 48
        %v4538 = vpop.permute.xlu0 %4537
        %4539 = vrot.lane.b32.xlu0 %v4516, 48
        %v4540 = vpop.permute.xlu0 %4539
        %4541 = vrot.lane.b32.xlu0 %v4518, 48
        %v4542 = vpop.permute.xlu0 %4541
        %4543 = vrot.lane.b32.xlu0 %v4521, 48
        %v4544 = vpop.permute.xlu0 %4543
        %4552 = vst.msk [vmem:[#allocation2] sm:$0xff] %vm2044, %v4532
        %4553 = vst.msk [vmem:[#allocation2 + $0x8] sm:$0xff] %vm2044, %v4534
        %4554 = vst.msk [vmem:[#allocation2 + $0x10] sm:$0xff] %vm2044, %v4536
        %4555 = vst.msk [vmem:[#allocation2 + $0x18] sm:$0xff] %vm2044, %v4538
        %4556 = vst.msk [vmem:[#allocation2 + $0x20] sm:$0xff] %vm2044, %v4540
        %4557 = vst.msk [vmem:[#allocation2 + $0x28] sm:$0xff] %vm2044, %v4542
        %4558 = vst.msk [vmem:[#allocation2 + $0x30] sm:$0xff] %vm2044, %v4544
        %v4559 = vld [vmem:[#allocation2] sm:$0xff]
        %v4560 = vld [vmem:[#allocation2 + $0x8] sm:$0xff]
        %v4561 = vld [vmem:[#allocation2 + $0x10] sm:$0xff]
        %v4562 = vld [vmem:[#allocation2 + $0x18] sm:$0xff]
        %v4563 = vld [vmem:[#allocation2 + $0x20] sm:$0xff]
        %v4564 = vld [vmem:[#allocation2 + $0x28] sm:$0xff]
        %v4565 = vld [vmem:[#allocation2 + $0x30] sm:$0xff]
        %v4566 = vpack.c.bf16 %v4560, %v4559
        %v4567 = vpack.c.bf16 %v4562, %v4561
        %v4568 = vpack.c.bf16 %v4564, %v4563
        %v4569 = vpack.c.bf16 %v4565, %v4565
        %s4570 = scalar_lea.vmem %s7, 32
        %v4571 = vld [vmem:[%s4570] sm:$0xf]
        %v4572 = vld [vmem:[%s4570 + $0x4] sm:$0xf]
        %v4573 = vld [vmem:[%s4570 + $0x8] sm:$0xf]
        %v4574 = vld [vmem:[%s4570 + $0xc] sm:$0xf]
        %v4575 = vld [vmem:[%s4570 + $0x10] sm:$0xf]
        %v4576 = vld [vmem:[%s4570 + $0x14] sm:$0xf]
        %v4577 = vld [vmem:[%s4570 + $0x18] sm:$0xf]
        %v4578 = vld [vmem:[%s4570 + $0x1c] sm:$0xf]
        %s4579 = scalar_lea.vmem %s8, 1
        %v4580 = vld [vmem:[%s4579] sm:$0x1]
        %v4582 = vperm.slane %v4580, 0
        %v4592 = vunpack.c.l.b16 %v4571
        %v4593 = vunpack.c.l.b16 %v4572
        %v4594 = vunpack.c.l.b16 %v4573
        %v4595 = vunpack.c.l.b16 %v4574
        %v4596 = vunpack.c.l.b16 %v4575
        %v4597 = vunpack.c.l.b16 %v4576
        %v4598 = vunpack.c.l.b16 %v4577
        %v4599 = vunpack.c.l.b16 %v4578
        %v4600 = vpack.c.b16 %v4593, %v4592
        %v4601 = vpack.c.b16 %v4595, %v4594
        %v4602 = vpack.c.b16 %v4597, %v4596
        %v4603 = vpack.c.b16 %v4599, %v4598
        %v4609 = vsel %vm697, %v4566, 0
        %v4612 = vsel %vm697, %v4567, 0
        %v4615 = vsel %vm697, %v4568, 0
        %v4618 = vsel %vm697, %v4569, 0
        %4620 = vmatpush.bf16.msra.mxu0 0
        %4621 = vmatpush.bf16.msra.mxu0 0
        %4622 = vmatpush.bf16.msra.mxu0 0
        %4623 = vmatpush.bf16.msra.mxu0 0
        %4624 = vmatpush.bf16.msra.mxu0 %v4603
        %4625 = vmatpush.bf16.msra.mxu0 %v4602
        %4626 = vmatpush.bf16.msra.mxu0 %v4601
        %4627 = vmatpush.bf16.msra.mxu0 %v4600
        %4628 = vmatmul.bf16.gmra.mxu0 %v4609
        %v4629 = vpop.f32.mrf.mxu0
        %v4630 = vadd.f32 %v4582, %v4629
        %v4631 = vpop.f32.mrf.mxu0
        %v4632 = vadd.f32 %v4582, %v4631
        %4633 = vmatmul.bf16.gmra.mxu0 %v4612
        %v4634 = vpop.f32.mrf.mxu0
        %v4635 = vadd.f32 %v4582, %v4634
        %v4636 = vpop.f32.mrf.mxu0
        %v4637 = vadd.f32 %v4582, %v4636
        %4638 = vmatmul.bf16.gmra.mxu0 %v4615
        %v4639 = vpop.f32.mrf.mxu0
        %v4640 = vadd.f32 %v4582, %v4639
        %v4641 = vpop.f32.mrf.mxu0
        %v4642 = vadd.f32 %v4582, %v4641
        %4643 = vmatmul.bf16.gmra.mxu0 %v4618
        %v4644 = vpop.f32.mrf.mxu0
        %v4645 = vadd.f32 %v4582, %v4644
        %v4646 = vpop.f32.mrf.mxu0
        %4647 = vdwg.mxu0
        %v4648 = vadd.f32 %v3204, %v4630
        %v4649 = vadd.f32 %v3205, %v4632
        %v4650 = vadd.f32 %v3206, %v4635
        %v4651 = vadd.f32 %v3207, %v4637
        %v4652 = vadd.f32 %v3208, %v4640
        %v4653 = vadd.f32 %v3209, %v4642
        %v4654 = vadd.f32 %v3210, %v4645
        %s4655 = scalar_lea.vmem %s9, 1
        %v4656 = vld [vmem:[%s4655] sm:$0x1]
        %s4657 = scalar_lea.vmem %s10, 1
        %v4658 = vld [vmem:[%s4657] sm:$0x1]
        %v4659 = vsel %vm697, %v4648, 0.0
        %4660 = vadd.xlane.f32.xlu0 %v4659
        %v4661 = vpop.xlane.xlu0 %4660
        %v4662 = vsel %vm697, %v4649, 0.0
        %4663 = vadd.xlane.f32.xlu0 %v4662
        %v4664 = vpop.xlane.xlu0 %4663
        %v4665 = vsel %vm697, %v4650, 0.0
        %4666 = vadd.xlane.f32.xlu0 %v4665
        %v4667 = vpop.xlane.xlu0 %4666
        %v4668 = vsel %vm697, %v4651, 0.0
        %4669 = vadd.xlane.f32.xlu0 %v4668
        %v4670 = vpop.xlane.xlu0 %4669
        %v4671 = vsel %vm697, %v4652, 0.0
        %4672 = vadd.xlane.f32.xlu0 %v4671
        %v4673 = vpop.xlane.xlu0 %4672
        %v4674 = vsel %vm697, %v4653, 0.0
        %4675 = vadd.xlane.f32.xlu0 %v4674
        %v4676 = vpop.xlane.xlu0 %4675
        %v4677 = vsel %vm697, %v4654, 0.0
        %4678 = vadd.xlane.f32.xlu0 %v4677
        %v4679 = vpop.xlane.xlu0 %4678
        %v4680 = vmul.f32 %v4661, %v725
        %v4681 = vmul.f32 %v4664, %v725
        %v4682 = vmul.f32 %v4667, %v725
        %v4683 = vmul.f32 %v4670, %v725
        %v4684 = vmul.f32 %v4673, %v725
        %v4685 = vmul.f32 %v4676, %v725
        %v4686 = vmul.f32 %v4679, %v725
        %v4687 = vsub.f32 %v4648, %v4680
        %v4688 = vsub.f32 %v4649, %v4681
        %v4689 = vsub.f32 %v4650, %v4682
        %v4690 = vsub.f32 %v4651, %v4683
        %v4691 = vsub.f32 %v4652, %v4684
        %v4692 = vsub.f32 %v4653, %v4685
        %v4693 = vsub.f32 %v4654, %v4686
        %v4694 = vmul.f32 %v4687, %v4687
        %v4695 = vmul.f32 %v4688, %v4688
        %v4696 = vmul.f32 %v4689, %v4689
        %v4697 = vmul.f32 %v4690, %v4690
        %v4698 = vmul.f32 %v4691, %v4691
        %v4699 = vmul.f32 %v4692, %v4692
        %v4700 = vmul.f32 %v4693, %v4693
        %v4701 = vsel %vm697, %v4694, 0.0
        %4702 = vadd.xlane.f32.xlu0 %v4701
        %v4703 = vpop.xlane.xlu0 %4702
        %v4704 = vsel %vm697, %v4695, 0.0
        %4705 = vadd.xlane.f32.xlu0 %v4704
        %v4706 = vpop.xlane.xlu0 %4705
        %v4707 = vsel %vm697, %v4696, 0.0
        %4708 = vadd.xlane.f32.xlu0 %v4707
        %v4709 = vpop.xlane.xlu0 %4708
        %v4710 = vsel %vm697, %v4697, 0.0
        %4711 = vadd.xlane.f32.xlu0 %v4710
        %v4712 = vpop.xlane.xlu0 %4711
        %v4713 = vsel %vm697, %v4698, 0.0
        %4714 = vadd.xlane.f32.xlu0 %v4713
        %v4715 = vpop.xlane.xlu0 %4714
        %v4716 = vsel %vm697, %v4699, 0.0
        %4717 = vadd.xlane.f32.xlu0 %v4716
        %v4718 = vpop.xlane.xlu0 %4717
        %v4719 = vsel %vm697, %v4700, 0.0
        %4720 = vadd.xlane.f32.xlu0 %v4719
        %v4721 = vpop.xlane.xlu0 %4720
        %v4722 = vmul.f32 %v4703, %v725
        %v4723 = vmul.f32 %v4706, %v725
        %v4724 = vmul.f32 %v4709, %v725
        %v4725 = vmul.f32 %v4712, %v725
        %v4726 = vmul.f32 %v4715, %v725
        %v4727 = vmul.f32 %v4718, %v725
        %v4728 = vmul.f32 %v4721, %v725
        %v4729 = vadd.f32 %v4722, 1e-05
        %v4730 = vadd.f32 %v4723, 1e-05
        %v4731 = vadd.f32 %v4724, 1e-05
        %v4732 = vadd.f32 %v4725, 1e-05
        %v4733 = vadd.f32 %v4726, 1e-05
        %v4734 = vadd.f32 %v4727, 1e-05
        %v4735 = vadd.f32 %v4728, 1e-05
        %v4736 = vrsqrt.pop %v4729
        %v4737 = vmul.f32 %v4736, %v4729
        %v4738 = vmul.f32 %v4737, %v4736
        %v4739 = vmul.f32 0.5, %v4738
        %v4740 = vsub.f32 1.5, %v4739
        %v4741 = vmul.f32 %v4736, %v4740
        %vm4742 = vweird.f32 %v4729
        %vm4743 = vweird.f32 %v4736
        %vm4744 = vmor %vm4742, %vm4743
        %v4745 = vsel %vm4744, %v4736, %v4741
        %v4746 = vrsqrt.pop %v4730
        %v4747 = vmul.f32 %v4746, %v4730
        %v4748 = vmul.f32 %v4747, %v4746
        %v4749 = vmul.f32 0.5, %v4748
        %v4750 = vsub.f32 1.5, %v4749
        %v4751 = vmul.f32 %v4746, %v4750
        %vm4752 = vweird.f32 %v4730
        %vm4753 = vweird.f32 %v4746
        %vm4754 = vmor %vm4752, %vm4753
        %v4755 = vsel %vm4754, %v4746, %v4751
        %v4756 = vrsqrt.pop %v4731
        %v4757 = vmul.f32 %v4756, %v4731
        %v4758 = vmul.f32 %v4757, %v4756
        %v4759 = vmul.f32 0.5, %v4758
        %v4760 = vsub.f32 1.5, %v4759
        %v4761 = vmul.f32 %v4756, %v4760
        %vm4762 = vweird.f32 %v4731
        %vm4763 = vweird.f32 %v4756
        %vm4764 = vmor %vm4762, %vm4763
        %v4765 = vsel %vm4764, %v4756, %v4761
        %v4766 = vrsqrt.pop %v4732
        %v4767 = vmul.f32 %v4766, %v4732
        %v4768 = vmul.f32 %v4767, %v4766
        %v4769 = vmul.f32 0.5, %v4768
        %v4770 = vsub.f32 1.5, %v4769
        %v4771 = vmul.f32 %v4766, %v4770
        %vm4772 = vweird.f32 %v4732
        %vm4773 = vweird.f32 %v4766
        %vm4774 = vmor %vm4772, %vm4773
        %v4775 = vsel %vm4774, %v4766, %v4771
        %v4776 = vrsqrt.pop %v4733
        %v4777 = vmul.f32 %v4776, %v4733
        %v4778 = vmul.f32 %v4777, %v4776
        %v4779 = vmul.f32 0.5, %v4778
        %v4780 = vsub.f32 1.5, %v4779
        %v4781 = vmul.f32 %v4776, %v4780
        %vm4782 = vweird.f32 %v4733
        %vm4783 = vweird.f32 %v4776
        %vm4784 = vmor %vm4782, %vm4783
        %v4785 = vsel %vm4784, %v4776, %v4781
        %v4786 = vrsqrt.pop %v4734
        %v4787 = vmul.f32 %v4786, %v4734
        %v4788 = vmul.f32 %v4787, %v4786
        %v4789 = vmul.f32 0.5, %v4788
        %v4790 = vsub.f32 1.5, %v4789
        %v4791 = vmul.f32 %v4786, %v4790
        %vm4792 = vweird.f32 %v4734
        %vm4793 = vweird.f32 %v4786
        %vm4794 = vmor %vm4792, %vm4793
        %v4795 = vsel %vm4794, %v4786, %v4791
        %v4796 = vrsqrt.pop %v4735
        %v4797 = vmul.f32 %v4796, %v4735
        %v4798 = vmul.f32 %v4797, %v4796
        %v4799 = vmul.f32 0.5, %v4798
        %v4800 = vsub.f32 1.5, %v4799
        %v4801 = vmul.f32 %v4796, %v4800
        %vm4802 = vweird.f32 %v4735
        %vm4803 = vweird.f32 %v4796
        %vm4804 = vmor %vm4802, %vm4803
        %v4805 = vsel %vm4804, %v4796, %v4801
        %v4806 = vmul.f32 %v4687, %v4745
        %v4807 = vmul.f32 %v4688, %v4755
        %v4808 = vmul.f32 %v4689, %v4765
        %v4809 = vmul.f32 %v4690, %v4775
        %v4810 = vmul.f32 %v4691, %v4785
        %v4811 = vmul.f32 %v4692, %v4795
        %v4812 = vmul.f32 %v4693, %v4805
        %v4814 = vperm.slane %v4656, 0
        %v4816 = vmul.f32 %v4806, %v4814
        %v4817 = vmul.f32 %v4807, %v4814
        %v4818 = vmul.f32 %v4808, %v4814
        %v4819 = vmul.f32 %v4809, %v4814
        %v4820 = vmul.f32 %v4810, %v4814
        %v4821 = vmul.f32 %v4811, %v4814
        %v4822 = vmul.f32 %v4812, %v4814
        %v4824 = vperm.slane %v4658, 0
        %v4826 = vadd.f32 %v4816, %v4824
        %v4827 = vadd.f32 %v4817, %v4824
        %v4828 = vadd.f32 %v4818, %v4824
        %v4829 = vadd.f32 %v4819, %v4824
        %v4830 = vadd.f32 %v4820, %v4824
        %v4831 = vadd.f32 %v4821, %v4824
        %v4832 = vadd.f32 %v4822, %v4824
        %v4833 = vpack.c.bf16 %v4827, %v4826
        %v4834 = vpack.c.bf16 %v4829, %v4828
        %v4835 = vpack.c.bf16 %v4831, %v4830
        %v4836 = vpack.c.bf16 %v4832, %v4832
        %s4837 = scalar_lea.vmem %s11, 64
        %v4838 = vld [vmem:[%s4837] sm:$0xff]
        %v4839 = vld [vmem:[%s4837 + $0x8] sm:$0xff]
        %v4840 = vld [vmem:[%s4837 + $0x10] sm:$0xff]
        %v4841 = vld [vmem:[%s4837 + $0x18] sm:$0xff]
        %v4842 = vld [vmem:[%s4837 + $0x20] sm:$0xff]
        %v4843 = vld [vmem:[%s4837 + $0x28] sm:$0xff]
        %v4844 = vld [vmem:[%s4837 + $0x30] sm:$0xff]
        %v4845 = vld [vmem:[%s4837 + $0x38] sm:$0xff]
        %s4846 = scalar_lea.vmem %s12, 2
        %v4847 = vld [vmem:[%s4846] sm:$0x3]
        %v4849 = vperm.slane %v4847, 0
        %v4850 = vperm.slane %v4847, 1
        %v4861 = vunpack.c.l.b16 %v4838
        %v4862 = vunpack.c.h.b16 %v4838
        %v4863 = vunpack.c.l.b16 %v4839
        %v4864 = vunpack.c.h.b16 %v4839
        %v4865 = vunpack.c.l.b16 %v4840
        %v4866 = vunpack.c.h.b16 %v4840
        %v4867 = vunpack.c.l.b16 %v4841
        %v4868 = vunpack.c.h.b16 %v4841
        %v4869 = vunpack.c.l.b16 %v4842
        %v4870 = vunpack.c.h.b16 %v4842
        %v4871 = vunpack.c.l.b16 %v4843
        %v4872 = vunpack.c.h.b16 %v4843
        %v4873 = vunpack.c.l.b16 %v4844
        %v4874 = vunpack.c.h.b16 %v4844
        %v4875 = vunpack.c.l.b16 %v4845
        %v4876 = vunpack.c.h.b16 %v4845
        %v4877 = vpack.c.b16 %v4863, %v4861
        %v4878 = vpack.c.b16 %v4864, %v4862
        %v4879 = vpack.c.b16 %v4867, %v4865
        %v4880 = vpack.c.b16 %v4868, %v4866
        %v4881 = vpack.c.b16 %v4871, %v4869
        %v4882 = vpack.c.b16 %v4872, %v4870
        %v4883 = vpack.c.b16 %v4875, %v4873
        %v4884 = vpack.c.b16 %v4876, %v4874
        %v4894 = vsel %vm697, %v4833, 0
        %v4897 = vsel %vm697, %v4834, 0
        %v4900 = vsel %vm697, %v4835, 0
        %v4903 = vsel %vm697, %v4836, 0
        %4905 = vmatpush.bf16.msra.mxu0 0
        %4906 = vmatpush.bf16.msra.mxu0 0
        %4907 = vmatpush.bf16.msra.mxu0 0
        %4908 = vmatpush.bf16.msra.mxu0 0
        %4909 = vmatpush.bf16.msra.mxu0 %v4883
        %4910 = vmatpush.bf16.msra.mxu0 %v4881
        %4911 = vmatpush.bf16.msra.mxu0 %v4879
        %4912 = vmatpush.bf16.msra.mxu0 %v4877
        %4913 = vmatmul.bf16.gmra.mxu0 %v4894
        %v4914 = vpop.f32.mrf.mxu0
        %v4915 = vadd.f32 %v4849, %v4914
        %v4916 = vpop.f32.mrf.mxu0
        %v4917 = vadd.f32 %v4849, %v4916
        %4918 = vmatmul.bf16.gmra.mxu0 %v4897
        %v4919 = vpop.f32.mrf.mxu0
        %v4920 = vadd.f32 %v4849, %v4919
        %v4921 = vpop.f32.mrf.mxu0
        %v4922 = vadd.f32 %v4849, %v4921
        %4923 = vmatmul.bf16.gmra.mxu0 %v4900
        %v4924 = vpop.f32.mrf.mxu0
        %v4925 = vadd.f32 %v4849, %v4924
        %v4926 = vpop.f32.mrf.mxu0
        %v4927 = vadd.f32 %v4849, %v4926
        %4928 = vmatmul.bf16.gmra.mxu0 %v4903
        %v4929 = vpop.f32.mrf.mxu0
        %v4930 = vadd.f32 %v4849, %v4929
        %v4931 = vpop.f32.mrf.mxu0
        %4932 = vdwg.mxu0
        %4933 = vmatpush.bf16.msra.mxu0 0
        %4934 = vmatpush.bf16.msra.mxu0 0
        %4935 = vmatpush.bf16.msra.mxu0 0
        %4936 = vmatpush.bf16.msra.mxu0 0
        %4937 = vmatpush.bf16.msra.mxu0 %v4884
        %4938 = vmatpush.bf16.msra.mxu0 %v4882
        %4939 = vmatpush.bf16.msra.mxu0 %v4880
        %4940 = vmatpush.bf16.msra.mxu0 %v4878
        %4941 = vmatmul.bf16.gmra.mxu0 %v4894
        %v4942 = vpop.f32.mrf.mxu0
        %v4943 = vadd.f32 %v4850, %v4942
        %v4944 = vpop.f32.mrf.mxu0
        %v4945 = vadd.f32 %v4850, %v4944
        %4946 = vmatmul.bf16.gmra.mxu0 %v4897
        %v4947 = vpop.f32.mrf.mxu0
        %v4948 = vadd.f32 %v4850, %v4947
        %v4949 = vpop.f32.mrf.mxu0
        %v4950 = vadd.f32 %v4850, %v4949
        %4951 = vmatmul.bf16.gmra.mxu0 %v4900
        %v4952 = vpop.f32.mrf.mxu0
        %v4953 = vadd.f32 %v4850, %v4952
        %v4954 = vpop.f32.mrf.mxu0
        %v4955 = vadd.f32 %v4850, %v4954
        %4956 = vmatmul.bf16.gmra.mxu0 %v4903
        %v4957 = vpop.f32.mrf.mxu0
        %v4958 = vadd.f32 %v4850, %v4957
        %v4959 = vpop.f32.mrf.mxu0
        %4960 = vdwg.mxu0
        %v4961 = vmul.f32 %v4915, 0.5
        %v4962 = vmul.f32 %v4943, 0.5
        %v4963 = vmul.f32 %v4917, 0.5
        %v4964 = vmul.f32 %v4945, 0.5
        %v4965 = vmul.f32 %v4920, 0.5
        %v4966 = vmul.f32 %v4948, 0.5
        %v4967 = vmul.f32 %v4922, 0.5
        %v4968 = vmul.f32 %v4950, 0.5
        %v4969 = vmul.f32 %v4925, 0.5
        %v4970 = vmul.f32 %v4953, 0.5
        %v4971 = vmul.f32 %v4927, 0.5
        %v4972 = vmul.f32 %v4955, 0.5
        %v4973 = vmul.f32 %v4930, 0.5
        %v4974 = vmul.f32 %v4958, 0.5
        %v4975 = vmul.f32 %v4915, 0.70710677
        %v4976 = vmul.f32 %v4943, 0.70710677
        %v4977 = vmul.f32 %v4917, 0.70710677
        %v4978 = vmul.f32 %v4945, 0.70710677
        %v4979 = vmul.f32 %v4920, 0.70710677
        %v4980 = vmul.f32 %v4948, 0.70710677
        %v4981 = vmul.f32 %v4922, 0.70710677
        %v4982 = vmul.f32 %v4950, 0.70710677
        %v4983 = vmul.f32 %v4925, 0.70710677
        %v4984 = vmul.f32 %v4953, 0.70710677
        %v4985 = vmul.f32 %v4927, 0.70710677
        %v4986 = vmul.f32 %v4955, 0.70710677
        %v4987 = vmul.f32 %v4930, 0.70710677
        %v4988 = vmul.f32 %v4958, 0.70710677
        %v4989 = vand.u32 2147483647, %v4975
        %v4990 = vand.u32 2147483647, %v4976
        %v4991 = vand.u32 2147483647, %v4977
        %v4992 = vand.u32 2147483647, %v4978
        %v4993 = vand.u32 2147483647, %v4979
        %v4994 = vand.u32 2147483647, %v4980
        %v4995 = vand.u32 2147483647, %v4981
        %v4996 = vand.u32 2147483647, %v4982
        %v4997 = vand.u32 2147483647, %v4983
        %v4998 = vand.u32 2147483647, %v4984
        %v4999 = vand.u32 2147483647, %v4985
        %v5000 = vand.u32 2147483647, %v4986
        %v5001 = vand.u32 2147483647, %v4987
        %v5002 = vand.u32 2147483647, %v4988
        %v5003 = vmul.f32 %v4989, 0.3275911
        %v5004 = vmul.f32 %v4990, 0.3275911
        %v5005 = vmul.f32 %v4991, 0.3275911
        %v5006 = vmul.f32 %v4992, 0.3275911
        %v5007 = vmul.f32 %v4993, 0.3275911
        %v5008 = vmul.f32 %v4994, 0.3275911
        %v5009 = vmul.f32 %v4995, 0.3275911
        %v5010 = vmul.f32 %v4996, 0.3275911
        %v5011 = vmul.f32 %v4997, 0.3275911
        %v5012 = vmul.f32 %v4998, 0.3275911
        %v5013 = vmul.f32 %v4999, 0.3275911
        %v5014 = vmul.f32 %v5000, 0.3275911
        %v5015 = vmul.f32 %v5001, 0.3275911
        %v5016 = vmul.f32 %v5002, 0.3275911
        %v5017 = vadd.f32 %v5003, 1.0
        %v5018 = vadd.f32 %v5004, 1.0
        %v5019 = vadd.f32 %v5005, 1.0
        %v5020 = vadd.f32 %v5006, 1.0
        %v5021 = vadd.f32 %v5007, 1.0
        %v5022 = vadd.f32 %v5008, 1.0
        %v5023 = vadd.f32 %v5009, 1.0
        %v5024 = vadd.f32 %v5010, 1.0
        %v5025 = vadd.f32 %v5011, 1.0
        %v5026 = vadd.f32 %v5012, 1.0
        %v5027 = vadd.f32 %v5013, 1.0
        %v5028 = vadd.f32 %v5014, 1.0
        %v5029 = vadd.f32 %v5015, 1.0
        %v5030 = vadd.f32 %v5016, 1.0
        %v5031 = vrcp.pop %v5017
        %v5032 = vmul.f32 %v5017, %v5031
        %v5033 = vsub.f32 1.0, %v5032
        %v5034 = vmul.f32 %v5031, %v5033
        %v5035 = vadd.f32 %v5031, %v5034
        %vm5036 = vweird.f32 %v5017
        %vm5037 = vweird.f32 %v5031
        %vm5038 = vmor %vm5036, %vm5037
        %v5039 = vsel %vm5038, %v5031, %v5035
        %v5040 = vand.u32 2147483647, %v5017
        %vm5041 = vcmp.eq.f32.partialorder %v5040, 8.507059e+37
        %v5042 = vand.u32 %v5017, 2147483648
        %v5043 = vor.u32 1.1754944e-38, %v5042
        %v5044 = vsel %vm5041, %v5043, %v5039
        %v5045 = vmul.f32 1.0, %v5044
        %v5046 = vrcp.pop %v5018
        %v5047 = vmul.f32 %v5018, %v5046
        %v5048 = vsub.f32 1.0, %v5047
        %v5049 = vmul.f32 %v5046, %v5048
        %v5050 = vadd.f32 %v5046, %v5049
        %vm5051 = vweird.f32 %v5018
        %vm5052 = vweird.f32 %v5046
        %vm5053 = vmor %vm5051, %vm5052
        %v5054 = vsel %vm5053, %v5046, %v5050
        %v5055 = vand.u32 2147483647, %v5018
        %vm5056 = vcmp.eq.f32.partialorder %v5055, 8.507059e+37
        %v5057 = vand.u32 %v5018, 2147483648
        %v5058 = vor.u32 1.1754944e-38, %v5057
        %v5059 = vsel %vm5056, %v5058, %v5054
        %v5060 = vmul.f32 1.0, %v5059
        %v5061 = vrcp.pop %v5019
        %v5062 = vmul.f32 %v5019, %v5061
        %v5063 = vsub.f32 1.0, %v5062
        %v5064 = vmul.f32 %v5061, %v5063
        %v5065 = vadd.f32 %v5061, %v5064
        %vm5066 = vweird.f32 %v5019
        %vm5067 = vweird.f32 %v5061
        %vm5068 = vmor %vm5066, %vm5067
        %v5069 = vsel %vm5068, %v5061, %v5065
        %v5070 = vand.u32 2147483647, %v5019
        %vm5071 = vcmp.eq.f32.partialorder %v5070, 8.507059e+37
        %v5072 = vand.u32 %v5019, 2147483648
        %v5073 = vor.u32 1.1754944e-38, %v5072
        %v5074 = vsel %vm5071, %v5073, %v5069
        %v5075 = vmul.f32 1.0, %v5074
        %v5076 = vrcp.pop %v5020
        %v5077 = vmul.f32 %v5020, %v5076
        %v5078 = vsub.f32 1.0, %v5077
        %v5079 = vmul.f32 %v5076, %v5078
        %v5080 = vadd.f32 %v5076, %v5079
        %vm5081 = vweird.f32 %v5020
        %vm5082 = vweird.f32 %v5076
        %vm5083 = vmor %vm5081, %vm5082
        %v5084 = vsel %vm5083, %v5076, %v5080
        %v5085 = vand.u32 2147483647, %v5020
        %vm5086 = vcmp.eq.f32.partialorder %v5085, 8.507059e+37
        %v5087 = vand.u32 %v5020, 2147483648
        %v5088 = vor.u32 1.1754944e-38, %v5087
        %v5089 = vsel %vm5086, %v5088, %v5084
        %v5090 = vmul.f32 1.0, %v5089
        %v5091 = vrcp.pop %v5021
        %v5092 = vmul.f32 %v5021, %v5091
        %v5093 = vsub.f32 1.0, %v5092
        %v5094 = vmul.f32 %v5091, %v5093
        %v5095 = vadd.f32 %v5091, %v5094
        %vm5096 = vweird.f32 %v5021
        %vm5097 = vweird.f32 %v5091
        %vm5098 = vmor %vm5096, %vm5097
        %v5099 = vsel %vm5098, %v5091, %v5095
        %v5100 = vand.u32 2147483647, %v5021
        %vm5101 = vcmp.eq.f32.partialorder %v5100, 8.507059e+37
        %v5102 = vand.u32 %v5021, 2147483648
        %v5103 = vor.u32 1.1754944e-38, %v5102
        %v5104 = vsel %vm5101, %v5103, %v5099
        %v5105 = vmul.f32 1.0, %v5104
        %v5106 = vrcp.pop %v5022
        %v5107 = vmul.f32 %v5022, %v5106
        %v5108 = vsub.f32 1.0, %v5107
        %v5109 = vmul.f32 %v5106, %v5108
        %v5110 = vadd.f32 %v5106, %v5109
        %vm5111 = vweird.f32 %v5022
        %vm5112 = vweird.f32 %v5106
        %vm5113 = vmor %vm5111, %vm5112
        %v5114 = vsel %vm5113, %v5106, %v5110
        %v5115 = vand.u32 2147483647, %v5022
        %vm5116 = vcmp.eq.f32.partialorder %v5115, 8.507059e+37
        %v5117 = vand.u32 %v5022, 2147483648
        %v5118 = vor.u32 1.1754944e-38, %v5117
        %v5119 = vsel %vm5116, %v5118, %v5114
        %v5120 = vmul.f32 1.0, %v5119
        %v5121 = vrcp.pop %v5023
        %v5122 = vmul.f32 %v5023, %v5121
        %v5123 = vsub.f32 1.0, %v5122
        %v5124 = vmul.f32 %v5121, %v5123
        %v5125 = vadd.f32 %v5121, %v5124
        %vm5126 = vweird.f32 %v5023
        %vm5127 = vweird.f32 %v5121
        %vm5128 = vmor %vm5126, %vm5127
        %v5129 = vsel %vm5128, %v5121, %v5125
        %v5130 = vand.u32 2147483647, %v5023
        %vm5131 = vcmp.eq.f32.partialorder %v5130, 8.507059e+37
        %v5132 = vand.u32 %v5023, 2147483648
        %v5133 = vor.u32 1.1754944e-38, %v5132
        %v5134 = vsel %vm5131, %v5133, %v5129
        %v5135 = vmul.f32 1.0, %v5134
        %v5136 = vrcp.pop %v5024
        %v5137 = vmul.f32 %v5024, %v5136
        %v5138 = vsub.f32 1.0, %v5137
        %v5139 = vmul.f32 %v5136, %v5138
        %v5140 = vadd.f32 %v5136, %v5139
        %vm5141 = vweird.f32 %v5024
        %vm5142 = vweird.f32 %v5136
        %vm5143 = vmor %vm5141, %vm5142
        %v5144 = vsel %vm5143, %v5136, %v5140
        %v5145 = vand.u32 2147483647, %v5024
        %vm5146 = vcmp.eq.f32.partialorder %v5145, 8.507059e+37
        %v5147 = vand.u32 %v5024, 2147483648
        %v5148 = vor.u32 1.1754944e-38, %v5147
        %v5149 = vsel %vm5146, %v5148, %v5144
        %v5150 = vmul.f32 1.0, %v5149
        %v5151 = vrcp.pop %v5025
        %v5152 = vmul.f32 %v5025, %v5151
        %v5153 = vsub.f32 1.0, %v5152
        %v5154 = vmul.f32 %v5151, %v5153
        %v5155 = vadd.f32 %v5151, %v5154
        %vm5156 = vweird.f32 %v5025
        %vm5157 = vweird.f32 %v5151
        %vm5158 = vmor %vm5156, %vm5157
        %v5159 = vsel %vm5158, %v5151, %v5155
        %v5160 = vand.u32 2147483647, %v5025
        %vm5161 = vcmp.eq.f32.partialorder %v5160, 8.507059e+37
        %v5162 = vand.u32 %v5025, 2147483648
        %v5163 = vor.u32 1.1754944e-38, %v5162
        %v5164 = vsel %vm5161, %v5163, %v5159
        %v5165 = vmul.f32 1.0, %v5164
        %v5166 = vrcp.pop %v5026
        %v5167 = vmul.f32 %v5026, %v5166
        %v5168 = vsub.f32 1.0, %v5167
        %v5169 = vmul.f32 %v5166, %v5168
        %v5170 = vadd.f32 %v5166, %v5169
        %vm5171 = vweird.f32 %v5026
        %vm5172 = vweird.f32 %v5166
        %vm5173 = vmor %vm5171, %vm5172
        %v5174 = vsel %vm5173, %v5166, %v5170
        %v5175 = vand.u32 2147483647, %v5026
        %vm5176 = vcmp.eq.f32.partialorder %v5175, 8.507059e+37
        %v5177 = vand.u32 %v5026, 2147483648
        %v5178 = vor.u32 1.1754944e-38, %v5177
        %v5179 = vsel %vm5176, %v5178, %v5174
        %v5180 = vmul.f32 1.0, %v5179
        %v5181 = vrcp.pop %v5027
        %v5182 = vmul.f32 %v5027, %v5181
        %v5183 = vsub.f32 1.0, %v5182
        %v5184 = vmul.f32 %v5181, %v5183
        %v5185 = vadd.f32 %v5181, %v5184
        %vm5186 = vweird.f32 %v5027
        %vm5187 = vweird.f32 %v5181
        %vm5188 = vmor %vm5186, %vm5187
        %v5189 = vsel %vm5188, %v5181, %v5185
        %v5190 = vand.u32 2147483647, %v5027
        %vm5191 = vcmp.eq.f32.partialorder %v5190, 8.507059e+37
        %v5192 = vand.u32 %v5027, 2147483648
        %v5193 = vor.u32 1.1754944e-38, %v5192
        %v5194 = vsel %vm5191, %v5193, %v5189
        %v5195 = vmul.f32 1.0, %v5194
        %v5196 = vrcp.pop %v5028
        %v5197 = vmul.f32 %v5028, %v5196
        %v5198 = vsub.f32 1.0, %v5197
        %v5199 = vmul.f32 %v5196, %v5198
        %v5200 = vadd.f32 %v5196, %v5199
        %vm5201 = vweird.f32 %v5028
        %vm5202 = vweird.f32 %v5196
        %vm5203 = vmor %vm5201, %vm5202
        %v5204 = vsel %vm5203, %v5196, %v5200
        %v5205 = vand.u32 2147483647, %v5028
        %vm5206 = vcmp.eq.f32.partialorder %v5205, 8.507059e+37
        %v5207 = vand.u32 %v5028, 2147483648
        %v5208 = vor.u32 1.1754944e-38, %v5207
        %v5209 = vsel %vm5206, %v5208, %v5204
        %v5210 = vmul.f32 1.0, %v5209
        %v5211 = vrcp.pop %v5029
        %v5212 = vmul.f32 %v5029, %v5211
        %v5213 = vsub.f32 1.0, %v5212
        %v5214 = vmul.f32 %v5211, %v5213
        %v5215 = vadd.f32 %v5211, %v5214
        %vm5216 = vweird.f32 %v5029
        %vm5217 = vweird.f32 %v5211
        %vm5218 = vmor %vm5216, %vm5217
        %v5219 = vsel %vm5218, %v5211, %v5215
        %v5220 = vand.u32 2147483647, %v5029
        %vm5221 = vcmp.eq.f32.partialorder %v5220, 8.507059e+37
        %v5222 = vand.u32 %v5029, 2147483648
        %v5223 = vor.u32 1.1754944e-38, %v5222
        %v5224 = vsel %vm5221, %v5223, %v5219
        %v5225 = vmul.f32 1.0, %v5224
        %v5226 = vrcp.pop %v5030
        %v5227 = vmul.f32 %v5030, %v5226
        %v5228 = vsub.f32 1.0, %v5227
        %v5229 = vmul.f32 %v5226, %v5228
        %v5230 = vadd.f32 %v5226, %v5229
        %vm5231 = vweird.f32 %v5030
        %vm5232 = vweird.f32 %v5226
        %vm5233 = vmor %vm5231, %vm5232
        %v5234 = vsel %vm5233, %v5226, %v5230
        %v5235 = vand.u32 2147483647, %v5030
        %vm5236 = vcmp.eq.f32.partialorder %v5235, 8.507059e+37
        %v5237 = vand.u32 %v5030, 2147483648
        %v5238 = vor.u32 1.1754944e-38, %v5237
        %v5239 = vsel %vm5236, %v5238, %v5234
        %v5240 = vmul.f32 1.0, %v5239
        %v5241 = vmul.f32 %v5045, 1.0614054
        %v5242 = vmul.f32 %v5060, 1.0614054
        %v5243 = vmul.f32 %v5075, 1.0614054
        %v5244 = vmul.f32 %v5090, 1.0614054
        %v5245 = vmul.f32 %v5105, 1.0614054
        %v5246 = vmul.f32 %v5120, 1.0614054
        %v5247 = vmul.f32 %v5135, 1.0614054
        %v5248 = vmul.f32 %v5150, 1.0614054
        %v5249 = vmul.f32 %v5165, 1.0614054
        %v5250 = vmul.f32 %v5180, 1.0614054
        %v5251 = vmul.f32 %v5195, 1.0614054
        %v5252 = vmul.f32 %v5210, 1.0614054
        %v5253 = vmul.f32 %v5225, 1.0614054
        %v5254 = vmul.f32 %v5240, 1.0614054
        %v5255 = vadd.f32 %v5241, -1.4531521
        %v5256 = vadd.f32 %v5242, -1.4531521
        %v5257 = vadd.f32 %v5243, -1.4531521
        %v5258 = vadd.f32 %v5244, -1.4531521
        %v5259 = vadd.f32 %v5245, -1.4531521
        %v5260 = vadd.f32 %v5246, -1.4531521
        %v5261 = vadd.f32 %v5247, -1.4531521
        %v5262 = vadd.f32 %v5248, -1.4531521
        %v5263 = vadd.f32 %v5249, -1.4531521
        %v5264 = vadd.f32 %v5250, -1.4531521
        %v5265 = vadd.f32 %v5251, -1.4531521
        %v5266 = vadd.f32 %v5252, -1.4531521
        %v5267 = vadd.f32 %v5253, -1.4531521
        %v5268 = vadd.f32 %v5254, -1.4531521
        %v5269 = vmul.f32 %v5255, %v5045
        %v5270 = vmul.f32 %v5256, %v5060
        %v5271 = vmul.f32 %v5257, %v5075
        %v5272 = vmul.f32 %v5258, %v5090
        %v5273 = vmul.f32 %v5259, %v5105
        %v5274 = vmul.f32 %v5260, %v5120
        %v5275 = vmul.f32 %v5261, %v5135
        %v5276 = vmul.f32 %v5262, %v5150
        %v5277 = vmul.f32 %v5263, %v5165
        %v5278 = vmul.f32 %v5264, %v5180
        %v5279 = vmul.f32 %v5265, %v5195
        %v5280 = vmul.f32 %v5266, %v5210
        %v5281 = vmul.f32 %v5267, %v5225
        %v5282 = vmul.f32 %v5268, %v5240
        %v5283 = vadd.f32 %v5269, 1.4214138
        %v5284 = vadd.f32 %v5270, 1.4214138
        %v5285 = vadd.f32 %v5271, 1.4214138
        %v5286 = vadd.f32 %v5272, 1.4214138
        %v5287 = vadd.f32 %v5273, 1.4214138
        %v5288 = vadd.f32 %v5274, 1.4214138
        %v5289 = vadd.f32 %v5275, 1.4214138
        %v5290 = vadd.f32 %v5276, 1.4214138
        %v5291 = vadd.f32 %v5277, 1.4214138
        %v5292 = vadd.f32 %v5278, 1.4214138
        %v5293 = vadd.f32 %v5279, 1.4214138
        %v5294 = vadd.f32 %v5280, 1.4214138
        %v5295 = vadd.f32 %v5281, 1.4214138
        %v5296 = vadd.f32 %v5282, 1.4214138
        %v5297 = vmul.f32 %v5283, %v5045
        %v5298 = vmul.f32 %v5284, %v5060
        %v5299 = vmul.f32 %v5285, %v5075
        %v5300 = vmul.f32 %v5286, %v5090
        %v5301 = vmul.f32 %v5287, %v5105
        %v5302 = vmul.f32 %v5288, %v5120
        %v5303 = vmul.f32 %v5289, %v5135
        %v5304 = vmul.f32 %v5290, %v5150
        %v5305 = vmul.f32 %v5291, %v5165
        %v5306 = vmul.f32 %v5292, %v5180
        %v5307 = vmul.f32 %v5293, %v5195
        %v5308 = vmul.f32 %v5294, %v5210
        %v5309 = vmul.f32 %v5295, %v5225
        %v5310 = vmul.f32 %v5296, %v5240
        %v5311 = vadd.f32 %v5297, -0.28449672
        %v5312 = vadd.f32 %v5298, -0.28449672
        %v5313 = vadd.f32 %v5299, -0.28449672
        %v5314 = vadd.f32 %v5300, -0.28449672
        %v5315 = vadd.f32 %v5301, -0.28449672
        %v5316 = vadd.f32 %v5302, -0.28449672
        %v5317 = vadd.f32 %v5303, -0.28449672
        %v5318 = vadd.f32 %v5304, -0.28449672
        %v5319 = vadd.f32 %v5305, -0.28449672
        %v5320 = vadd.f32 %v5306, -0.28449672
        %v5321 = vadd.f32 %v5307, -0.28449672
        %v5322 = vadd.f32 %v5308, -0.28449672
        %v5323 = vadd.f32 %v5309, -0.28449672
        %v5324 = vadd.f32 %v5310, -0.28449672
        %v5325 = vmul.f32 %v5311, %v5045
        %v5326 = vmul.f32 %v5312, %v5060
        %v5327 = vmul.f32 %v5313, %v5075
        %v5328 = vmul.f32 %v5314, %v5090
        %v5329 = vmul.f32 %v5315, %v5105
        %v5330 = vmul.f32 %v5316, %v5120
        %v5331 = vmul.f32 %v5317, %v5135
        %v5332 = vmul.f32 %v5318, %v5150
        %v5333 = vmul.f32 %v5319, %v5165
        %v5334 = vmul.f32 %v5320, %v5180
        %v5335 = vmul.f32 %v5321, %v5195
        %v5336 = vmul.f32 %v5322, %v5210
        %v5337 = vmul.f32 %v5323, %v5225
        %v5338 = vmul.f32 %v5324, %v5240
        %v5339 = vadd.f32 %v5325, 0.2548296
        %v5340 = vadd.f32 %v5326, 0.2548296
        %v5341 = vadd.f32 %v5327, 0.2548296
        %v5342 = vadd.f32 %v5328, 0.2548296
        %v5343 = vadd.f32 %v5329, 0.2548296
        %v5344 = vadd.f32 %v5330, 0.2548296
        %v5345 = vadd.f32 %v5331, 0.2548296
        %v5346 = vadd.f32 %v5332, 0.2548296
        %v5347 = vadd.f32 %v5333, 0.2548296
        %v5348 = vadd.f32 %v5334, 0.2548296
        %v5349 = vadd.f32 %v5335, 0.2548296
        %v5350 = vadd.f32 %v5336, 0.2548296
        %v5351 = vadd.f32 %v5337, 0.2548296
        %v5352 = vadd.f32 %v5338, 0.2548296
        %v5353 = vmul.f32 %v5339, %v5045
        %v5354 = vmul.f32 %v5340, %v5060
        %v5355 = vmul.f32 %v5341, %v5075
        %v5356 = vmul.f32 %v5342, %v5090
        %v5357 = vmul.f32 %v5343, %v5105
        %v5358 = vmul.f32 %v5344, %v5120
        %v5359 = vmul.f32 %v5345, %v5135
        %v5360 = vmul.f32 %v5346, %v5150
        %v5361 = vmul.f32 %v5347, %v5165
        %v5362 = vmul.f32 %v5348, %v5180
        %v5363 = vmul.f32 %v5349, %v5195
        %v5364 = vmul.f32 %v5350, %v5210
        %v5365 = vmul.f32 %v5351, %v5225
        %v5366 = vmul.f32 %v5352, %v5240
        %v5367 = vsub.f32 0.0, %v4989
        %v5368 = vsub.f32 0.0, %v4990
        %v5369 = vsub.f32 0.0, %v4991
        %v5370 = vsub.f32 0.0, %v4992
        %v5371 = vsub.f32 0.0, %v4993
        %v5372 = vsub.f32 0.0, %v4994
        %v5373 = vsub.f32 0.0, %v4995
        %v5374 = vsub.f32 0.0, %v4996
        %v5375 = vsub.f32 0.0, %v4997
        %v5376 = vsub.f32 0.0, %v4998
        %v5377 = vsub.f32 0.0, %v4999
        %v5378 = vsub.f32 0.0, %v5000
        %v5379 = vsub.f32 0.0, %v5001
        %v5380 = vsub.f32 0.0, %v5002
        %v5381 = vmul.f32 %v5367, %v4989
        %v5382 = vmul.f32 %v5368, %v4990
        %v5383 = vmul.f32 %v5369, %v4991
        %v5384 = vmul.f32 %v5370, %v4992
        %v5385 = vmul.f32 %v5371, %v4993
        %v5386 = vmul.f32 %v5372, %v4994
        %v5387 = vmul.f32 %v5373, %v4995
        %v5388 = vmul.f32 %v5374, %v4996
        %v5389 = vmul.f32 %v5375, %v4997
        %v5390 = vmul.f32 %v5376, %v4998
        %v5391 = vmul.f32 %v5377, %v4999
        %v5392 = vmul.f32 %v5378, %v5000
        %v5393 = vmul.f32 %v5379, %v5001
        %v5394 = vmul.f32 %v5380, %v5002
        %v5395 = vmul.f32 %v5381, 1.442695
        %v5396 = vpow.pop %v5395
        %v5397 = vmul.f32 %v5382, 1.442695
        %v5398 = vpow.pop %v5397
        %v5399 = vmul.f32 %v5383, 1.442695
        %v5400 = vpow.pop %v5399
        %v5401 = vmul.f32 %v5384, 1.442695
        %v5402 = vpow.pop %v5401
        %v5403 = vmul.f32 %v5385, 1.442695
        %v5404 = vpow.pop %v5403
        %v5405 = vmul.f32 %v5386, 1.442695
        %v5406 = vpow.pop %v5405
        %v5407 = vmul.f32 %v5387, 1.442695
        %v5408 = vpow.pop %v5407
        %v5409 = vmul.f32 %v5388, 1.442695
        %v5410 = vpow.pop %v5409
        %v5411 = vmul.f32 %v5389, 1.442695
        %v5412 = vpow.pop %v5411
        %v5413 = vmul.f32 %v5390, 1.442695
        %v5414 = vpow.pop %v5413
        %v5415 = vmul.f32 %v5391, 1.442695
        %v5416 = vpow.pop %v5415
        %v5417 = vmul.f32 %v5392, 1.442695
        %v5418 = vpow.pop %v5417
        %v5419 = vmul.f32 %v5393, 1.442695
        %v5420 = vpow.pop %v5419
        %v5421 = vmul.f32 %v5394, 1.442695
        %v5422 = vpow.pop %v5421
        %v5423 = vmul.f32 %v5353, %v5396
        %v5424 = vmul.f32 %v5354, %v5398
        %v5425 = vmul.f32 %v5355, %v5400
        %v5426 = vmul.f32 %v5356, %v5402
        %v5427 = vmul.f32 %v5357, %v5404
        %v5428 = vmul.f32 %v5358, %v5406
        %v5429 = vmul.f32 %v5359, %v5408
        %v5430 = vmul.f32 %v5360, %v5410
        %v5431 = vmul.f32 %v5361, %v5412
        %v5432 = vmul.f32 %v5362, %v5414
        %v5433 = vmul.f32 %v5363, %v5416
        %v5434 = vmul.f32 %v5364, %v5418
        %v5435 = vmul.f32 %v5365, %v5420
        %v5436 = vmul.f32 %v5366, %v5422
        %v5437 = vsub.f32 1.0, %v5423
        %v5438 = vsub.f32 1.0, %v5424
        %v5439 = vsub.f32 1.0, %v5425
        %v5440 = vsub.f32 1.0, %v5426
        %v5441 = vsub.f32 1.0, %v5427
        %v5442 = vsub.f32 1.0, %v5428
        %v5443 = vsub.f32 1.0, %v5429
        %v5444 = vsub.f32 1.0, %v5430
        %v5445 = vsub.f32 1.0, %v5431
        %v5446 = vsub.f32 1.0, %v5432
        %v5447 = vsub.f32 1.0, %v5433
        %v5448 = vsub.f32 1.0, %v5434
        %v5449 = vsub.f32 1.0, %v5435
        %v5450 = vsub.f32 1.0, %v5436
        %vm5451 = vcmp.ge.f32.partialorder %v4975, 0.0
        %vm5452 = vcmp.ge.f32.partialorder %v4976, 0.0
        %vm5453 = vcmp.ge.f32.partialorder %v4977, 0.0
        %vm5454 = vcmp.ge.f32.partialorder %v4978, 0.0
        %vm5455 = vcmp.ge.f32.partialorder %v4979, 0.0
        %vm5456 = vcmp.ge.f32.partialorder %v4980, 0.0
        %vm5457 = vcmp.ge.f32.partialorder %v4981, 0.0
        %vm5458 = vcmp.ge.f32.partialorder %v4982, 0.0
        %vm5459 = vcmp.ge.f32.partialorder %v4983, 0.0
        %vm5460 = vcmp.ge.f32.partialorder %v4984, 0.0
        %vm5461 = vcmp.ge.f32.partialorder %v4985, 0.0
        %vm5462 = vcmp.ge.f32.partialorder %v4986, 0.0
        %vm5463 = vcmp.ge.f32.partialorder %v4987, 0.0
        %vm5464 = vcmp.ge.f32.partialorder %v4988, 0.0
        %v5465 = vsub.f32 0.0, %v5437
        %v5466 = vsub.f32 0.0, %v5438
        %v5467 = vsub.f32 0.0, %v5439
        %v5468 = vsub.f32 0.0, %v5440
        %v5469 = vsub.f32 0.0, %v5441
        %v5470 = vsub.f32 0.0, %v5442
        %v5471 = vsub.f32 0.0, %v5443
        %v5472 = vsub.f32 0.0, %v5444
        %v5473 = vsub.f32 0.0, %v5445
        %v5474 = vsub.f32 0.0, %v5446
        %v5475 = vsub.f32 0.0, %v5447
        %v5476 = vsub.f32 0.0, %v5448
        %v5477 = vsub.f32 0.0, %v5449
        %v5478 = vsub.f32 0.0, %v5450
        %v5479 = vsel %vm5451, %v5437, %v5465
        %v5480 = vsel %vm5452, %v5438, %v5466
        %v5481 = vsel %vm5453, %v5439, %v5467
        %v5482 = vsel %vm5454, %v5440, %v5468
        %v5483 = vsel %vm5455, %v5441, %v5469
        %v5484 = vsel %vm5456, %v5442, %v5470
        %v5485 = vsel %vm5457, %v5443, %v5471
        %v5486 = vsel %vm5458, %v5444, %v5472
        %v5487 = vsel %vm5459, %v5445, %v5473
        %v5488 = vsel %vm5460, %v5446, %v5474
        %v5489 = vsel %vm5461, %v5447, %v5475
        %v5490 = vsel %vm5462, %v5448, %v5476
        %v5491 = vsel %vm5463, %v5449, %v5477
        %v5492 = vsel %vm5464, %v5450, %v5478
        %v5493 = vadd.f32 %v5479, 1.0
        %v5494 = vadd.f32 %v5480, 1.0
        %v5495 = vadd.f32 %v5481, 1.0
        %v5496 = vadd.f32 %v5482, 1.0
        %v5497 = vadd.f32 %v5483, 1.0
        %v5498 = vadd.f32 %v5484, 1.0
        %v5499 = vadd.f32 %v5485, 1.0
        %v5500 = vadd.f32 %v5486, 1.0
        %v5501 = vadd.f32 %v5487, 1.0
        %v5502 = vadd.f32 %v5488, 1.0
        %v5503 = vadd.f32 %v5489, 1.0
        %v5504 = vadd.f32 %v5490, 1.0
        %v5505 = vadd.f32 %v5491, 1.0
        %v5506 = vadd.f32 %v5492, 1.0
        %v5507 = vmul.f32 %v4961, %v5493
        %v5508 = vmul.f32 %v4962, %v5494
        %v5509 = vmul.f32 %v4963, %v5495
        %v5510 = vmul.f32 %v4964, %v5496
        %v5511 = vmul.f32 %v4965, %v5497
        %v5512 = vmul.f32 %v4966, %v5498
        %v5513 = vmul.f32 %v4967, %v5499
        %v5514 = vmul.f32 %v4968, %v5500
        %v5515 = vmul.f32 %v4969, %v5501
        %v5516 = vmul.f32 %v4970, %v5502
        %v5517 = vmul.f32 %v4971, %v5503
        %v5518 = vmul.f32 %v4972, %v5504
        %v5519 = vmul.f32 %v4973, %v5505
        %v5520 = vmul.f32 %v4974, %v5506
        %v5521 = vpack.c.bf16 %v5509, %v5507
        %v5522 = vpack.c.bf16 %v5510, %v5508
        %v5523 = vpack.c.bf16 %v5513, %v5511
        %v5524 = vpack.c.bf16 %v5514, %v5512
        %v5525 = vpack.c.bf16 %v5517, %v5515
        %v5526 = vpack.c.bf16 %v5518, %v5516
        %v5527 = vpack.c.bf16 %v5519, %v5519
        %v5528 = vpack.c.bf16 %v5520, %v5520
        %s5529 = scalar_lea.vmem %s13, 128
        %v5530 = vld [vmem:[%s5529] sm:$0xf]
        %v5531 = vld [vmem:[%s5529 + $0x4] sm:$0xf]
        %v5532 = vld [vmem:[%s5529 + $0x8] sm:$0xf]
        %v5533 = vld [vmem:[%s5529 + $0xc] sm:$0xf]
        %v5534 = vld [vmem:[%s5529 + $0x10] sm:$0xf]
        %v5535 = vld [vmem:[%s5529 + $0x14] sm:$0xf]
        %v5536 = vld [vmem:[%s5529 + $0x18] sm:$0xf]
        %v5537 = vld [vmem:[%s5529 + $0x1c] sm:$0xf]
        %v5538 = vld [vmem:[%s5529 + $0x20] sm:$0xf]
        %v5539 = vld [vmem:[%s5529 + $0x24] sm:$0xf]
        %v5540 = vld [vmem:[%s5529 + $0x28] sm:$0xf]
        %v5541 = vld [vmem:[%s5529 + $0x2c] sm:$0xf]
        %v5542 = vld [vmem:[%s5529 + $0x30] sm:$0xf]
        %v5543 = vld [vmem:[%s5529 + $0x34] sm:$0xf]
        %v5544 = vld [vmem:[%s5529 + $0x38] sm:$0xf]
        %v5545 = vld [vmem:[%s5529 + $0x3c] sm:$0xf]
        %v5546 = vld [vmem:[%s5529 + $0x40] sm:$0xf]
        %v5547 = vld [vmem:[%s5529 + $0x44] sm:$0xf]
        %v5548 = vld [vmem:[%s5529 + $0x48] sm:$0xf]
        %v5549 = vld [vmem:[%s5529 + $0x4c] sm:$0xf]
        %v5550 = vld [vmem:[%s5529 + $0x50] sm:$0xf]
        %v5551 = vld [vmem:[%s5529 + $0x54] sm:$0xf]
        %v5552 = vld [vmem:[%s5529 + $0x58] sm:$0xf]
        %v5553 = vld [vmem:[%s5529 + $0x5c] sm:$0xf]
        %v5554 = vld [vmem:[%s5529 + $0x60] sm:$0xf]
        %v5555 = vld [vmem:[%s5529 + $0x64] sm:$0xf]
        %v5556 = vld [vmem:[%s5529 + $0x68] sm:$0xf]
        %v5557 = vld [vmem:[%s5529 + $0x6c] sm:$0xf]
        %v5558 = vld [vmem:[%s5529 + $0x70] sm:$0xf]
        %v5559 = vld [vmem:[%s5529 + $0x74] sm:$0xf]
        %v5560 = vld [vmem:[%s5529 + $0x78] sm:$0xf]
        %v5561 = vld [vmem:[%s5529 + $0x7c] sm:$0xf]
        %s5562 = scalar_lea.vmem %s14, 1
        %v5563 = vld [vmem:[%s5562] sm:$0x1]
        %v5565 = vperm.slane %v5563, 0
        %v5599 = vunpack.c.l.b16 %v5530
        %v5600 = vunpack.c.l.b16 %v5531
        %v5601 = vunpack.c.l.b16 %v5532
        %v5602 = vunpack.c.l.b16 %v5533
        %v5603 = vunpack.c.l.b16 %v5534
        %v5604 = vunpack.c.l.b16 %v5535
        %v5605 = vunpack.c.l.b16 %v5536
        %v5606 = vunpack.c.l.b16 %v5537
        %v5607 = vunpack.c.l.b16 %v5538
        %v5608 = vunpack.c.l.b16 %v5539
        %v5609 = vunpack.c.l.b16 %v5540
        %v5610 = vunpack.c.l.b16 %v5541
        %v5611 = vunpack.c.l.b16 %v5542
        %v5612 = vunpack.c.l.b16 %v5543
        %v5613 = vunpack.c.l.b16 %v5544
        %v5614 = vunpack.c.l.b16 %v5545
        %v5615 = vunpack.c.l.b16 %v5546
        %v5616 = vunpack.c.l.b16 %v5547
        %v5617 = vunpack.c.l.b16 %v5548
        %v5618 = vunpack.c.l.b16 %v5549
        %v5619 = vunpack.c.l.b16 %v5550
        %v5620 = vunpack.c.l.b16 %v5551
        %v5621 = vunpack.c.l.b16 %v5552
        %v5622 = vunpack.c.l.b16 %v5553
        %v5623 = vunpack.c.l.b16 %v5554
        %v5624 = vunpack.c.l.b16 %v5555
        %v5625 = vunpack.c.l.b16 %v5556
        %v5626 = vunpack.c.l.b16 %v5557
        %v5627 = vunpack.c.l.b16 %v5558
        %v5628 = vunpack.c.l.b16 %v5559
        %v5629 = vunpack.c.l.b16 %v5560
        %v5630 = vunpack.c.l.b16 %v5561
        %v5631 = vpack.c.b16 %v5600, %v5599
        %v5632 = vpack.c.b16 %v5602, %v5601
        %v5633 = vpack.c.b16 %v5604, %v5603
        %v5634 = vpack.c.b16 %v5606, %v5605
        %v5635 = vpack.c.b16 %v5608, %v5607
        %v5636 = vpack.c.b16 %v5610, %v5609
        %v5637 = vpack.c.b16 %v5612, %v5611
        %v5638 = vpack.c.b16 %v5614, %v5613
        %v5639 = vpack.c.b16 %v5616, %v5615
        %v5640 = vpack.c.b16 %v5618, %v5617
        %v5641 = vpack.c.b16 %v5620, %v5619
        %v5642 = vpack.c.b16 %v5622, %v5621
        %v5643 = vpack.c.b16 %v5624, %v5623
        %v5644 = vpack.c.b16 %v5626, %v5625
        %v5645 = vpack.c.b16 %v5628, %v5627
        %v5646 = vpack.c.b16 %v5630, %v5629
        %5663 = vmatpush.bf16.msra.mxu0 %v5638
        %5664 = vmatpush.bf16.msra.mxu0 %v5637
        %5665 = vmatpush.bf16.msra.mxu0 %v5636
        %5666 = vmatpush.bf16.msra.mxu0 %v5635
        %5667 = vmatpush.bf16.msra.mxu0 %v5634
        %5668 = vmatpush.bf16.msra.mxu0 %v5633
        %5669 = vmatpush.bf16.msra.mxu0 %v5632
        %5670 = vmatpush.bf16.msra.mxu0 %v5631
        %5671 = vmatmul.bf16.gmra.mxu0 %v5521
        %v5672 = vpop.f32.mrf.mxu0
        %v5673 = vadd.f32 %v5565, %v5672
        %v5674 = vpop.f32.mrf.mxu0
        %v5675 = vadd.f32 %v5565, %v5674
        %5676 = vmatmul.bf16.gmra.mxu0 %v5523
        %v5677 = vpop.f32.mrf.mxu0
        %v5678 = vadd.f32 %v5565, %v5677
        %v5679 = vpop.f32.mrf.mxu0
        %v5680 = vadd.f32 %v5565, %v5679
        %5681 = vmatmul.bf16.gmra.mxu0 %v5525
        %v5682 = vpop.f32.mrf.mxu0
        %v5683 = vadd.f32 %v5565, %v5682
        %v5684 = vpop.f32.mrf.mxu0
        %v5685 = vadd.f32 %v5565, %v5684
        %5686 = vmatmul.bf16.gmra.mxu0 %v5527
        %v5687 = vpop.f32.mrf.mxu0
        %v5688 = vadd.f32 %v5565, %v5687
        %v5689 = vpop.f32.mrf.mxu0
        %5690 = vdwg.mxu0
        %5691 = vmatpush.bf16.msra.mxu0 %v5646
        %5692 = vmatpush.bf16.msra.mxu0 %v5645
        %5693 = vmatpush.bf16.msra.mxu0 %v5644
        %5694 = vmatpush.bf16.msra.mxu0 %v5643
        %5695 = vmatpush.bf16.msra.mxu0 %v5642
        %5696 = vmatpush.bf16.msra.mxu0 %v5641
        %5697 = vmatpush.bf16.msra.mxu0 %v5640
        %5698 = vmatpush.bf16.msra.mxu0 %v5639
        %5699 = vmatmul.bf16.gmra.mxu0 %v5522
        %v5700 = vpop.f32.mrf.mxu0
        %v5701 = vadd.f32 %v5673, %v5700
        %v5702 = vpop.f32.mrf.mxu0
        %v5703 = vadd.f32 %v5675, %v5702
        %5704 = vmatmul.bf16.gmra.mxu0 %v5524
        %v5705 = vpop.f32.mrf.mxu0
        %v5706 = vadd.f32 %v5678, %v5705
        %v5707 = vpop.f32.mrf.mxu0
        %v5708 = vadd.f32 %v5680, %v5707
        %5709 = vmatmul.bf16.gmra.mxu0 %v5526
        %v5710 = vpop.f32.mrf.mxu0
        %v5711 = vadd.f32 %v5683, %v5710
        %v5712 = vpop.f32.mrf.mxu0
        %v5713 = vadd.f32 %v5685, %v5712
        %5714 = vmatmul.bf16.gmra.mxu0 %v5528
        %v5715 = vpop.f32.mrf.mxu0
        %v5716 = vadd.f32 %v5688, %v5715
        %v5717 = vpop.f32.mrf.mxu0
        %5718 = vdwg.mxu0
        %v5719 = vadd.f32 %v4648, %v5701
        %v5720 = vadd.f32 %v4649, %v5703
        %v5721 = vadd.f32 %v4650, %v5706
        %v5722 = vadd.f32 %v4651, %v5708
        %v5723 = vadd.f32 %v4652, %v5711
        %v5724 = vadd.f32 %v4653, %v5713
        %v5725 = vadd.f32 %v4654, %v5716
        %s5726 = scalar_lea.vmem %s3, 2
        %v5727 = vld [vmem:[%s5726] sm:$0x1]
        %s5728 = scalar_lea.vmem %s4, 2
        %v5729 = vld [vmem:[%s5728] sm:$0x1]
        %v5730 = vsel %vm697, %v5719, 0.0
        %5731 = vadd.xlane.f32.xlu0 %v5730
        %v5732 = vpop.xlane.xlu0 %5731
        %v5733 = vsel %vm697, %v5720, 0.0
        %5734 = vadd.xlane.f32.xlu0 %v5733
        %v5735 = vpop.xlane.xlu0 %5734
        %v5736 = vsel %vm697, %v5721, 0.0
        %5737 = vadd.xlane.f32.xlu0 %v5736
        %v5738 = vpop.xlane.xlu0 %5737
        %v5739 = vsel %vm697, %v5722, 0.0
        %5740 = vadd.xlane.f32.xlu0 %v5739
        %v5741 = vpop.xlane.xlu0 %5740
        %v5742 = vsel %vm697, %v5723, 0.0
        %5743 = vadd.xlane.f32.xlu0 %v5742
        %v5744 = vpop.xlane.xlu0 %5743
        %v5745 = vsel %vm697, %v5724, 0.0
        %5746 = vadd.xlane.f32.xlu0 %v5745
        %v5747 = vpop.xlane.xlu0 %5746
        %v5748 = vsel %vm697, %v5725, 0.0
        %5749 = vadd.xlane.f32.xlu0 %v5748
        %v5750 = vpop.xlane.xlu0 %5749
        %v5751 = vmul.f32 %v5732, %v725
        %v5752 = vmul.f32 %v5735, %v725
        %v5753 = vmul.f32 %v5738, %v725
        %v5754 = vmul.f32 %v5741, %v725
        %v5755 = vmul.f32 %v5744, %v725
        %v5756 = vmul.f32 %v5747, %v725
        %v5757 = vmul.f32 %v5750, %v725
        %v5758 = vsub.f32 %v5719, %v5751
        %v5759 = vsub.f32 %v5720, %v5752
        %v5760 = vsub.f32 %v5721, %v5753
        %v5761 = vsub.f32 %v5722, %v5754
        %v5762 = vsub.f32 %v5723, %v5755
        %v5763 = vsub.f32 %v5724, %v5756
        %v5764 = vsub.f32 %v5725, %v5757
        %v5765 = vmul.f32 %v5758, %v5758
        %v5766 = vmul.f32 %v5759, %v5759
        %v5767 = vmul.f32 %v5760, %v5760
        %v5768 = vmul.f32 %v5761, %v5761
        %v5769 = vmul.f32 %v5762, %v5762
        %v5770 = vmul.f32 %v5763, %v5763
        %v5771 = vmul.f32 %v5764, %v5764
        %v5772 = vsel %vm697, %v5765, 0.0
        %5773 = vadd.xlane.f32.xlu0 %v5772
        %v5774 = vpop.xlane.xlu0 %5773
        %v5775 = vsel %vm697, %v5766, 0.0
        %5776 = vadd.xlane.f32.xlu0 %v5775
        %v5777 = vpop.xlane.xlu0 %5776
        %v5778 = vsel %vm697, %v5767, 0.0
        %5779 = vadd.xlane.f32.xlu0 %v5778
        %v5780 = vpop.xlane.xlu0 %5779
        %v5781 = vsel %vm697, %v5768, 0.0
        %5782 = vadd.xlane.f32.xlu0 %v5781
        %v5783 = vpop.xlane.xlu0 %5782
        %v5784 = vsel %vm697, %v5769, 0.0
        %5785 = vadd.xlane.f32.xlu0 %v5784
        %v5786 = vpop.xlane.xlu0 %5785
        %v5787 = vsel %vm697, %v5770, 0.0
        %5788 = vadd.xlane.f32.xlu0 %v5787
        %v5789 = vpop.xlane.xlu0 %5788
        %v5790 = vsel %vm697, %v5771, 0.0
        %5791 = vadd.xlane.f32.xlu0 %v5790
        %v5792 = vpop.xlane.xlu0 %5791
        %v5793 = vmul.f32 %v5774, %v725
        %v5794 = vmul.f32 %v5777, %v725
        %v5795 = vmul.f32 %v5780, %v725
        %v5796 = vmul.f32 %v5783, %v725
        %v5797 = vmul.f32 %v5786, %v725
        %v5798 = vmul.f32 %v5789, %v725
        %v5799 = vmul.f32 %v5792, %v725
        %v5800 = vadd.f32 %v5793, 1e-05
        %v5801 = vadd.f32 %v5794, 1e-05
        %v5802 = vadd.f32 %v5795, 1e-05
        %v5803 = vadd.f32 %v5796, 1e-05
        %v5804 = vadd.f32 %v5797, 1e-05
        %v5805 = vadd.f32 %v5798, 1e-05
        %v5806 = vadd.f32 %v5799, 1e-05
        %v5807 = vrsqrt.pop %v5800
        %v5808 = vmul.f32 %v5807, %v5800
        %v5809 = vmul.f32 %v5808, %v5807
        %v5810 = vmul.f32 0.5, %v5809
        %v5811 = vsub.f32 1.5, %v5810
        %v5812 = vmul.f32 %v5807, %v5811
        %vm5813 = vweird.f32 %v5800
        %vm5814 = vweird.f32 %v5807
        %vm5815 = vmor %vm5813, %vm5814
        %v5816 = vsel %vm5815, %v5807, %v5812
        %v5817 = vrsqrt.pop %v5801
        %v5818 = vmul.f32 %v5817, %v5801
        %v5819 = vmul.f32 %v5818, %v5817
        %v5820 = vmul.f32 0.5, %v5819
        %v5821 = vsub.f32 1.5, %v5820
        %v5822 = vmul.f32 %v5817, %v5821
        %vm5823 = vweird.f32 %v5801
        %vm5824 = vweird.f32 %v5817
        %vm5825 = vmor %vm5823, %vm5824
        %v5826 = vsel %vm5825, %v5817, %v5822
        %v5827 = vrsqrt.pop %v5802
        %v5828 = vmul.f32 %v5827, %v5802
        %v5829 = vmul.f32 %v5828, %v5827
        %v5830 = vmul.f32 0.5, %v5829
        %v5831 = vsub.f32 1.5, %v5830
        %v5832 = vmul.f32 %v5827, %v5831
        %vm5833 = vweird.f32 %v5802
        %vm5834 = vweird.f32 %v5827
        %vm5835 = vmor %vm5833, %vm5834
        %v5836 = vsel %vm5835, %v5827, %v5832
        %v5837 = vrsqrt.pop %v5803
        %v5838 = vmul.f32 %v5837, %v5803
        %v5839 = vmul.f32 %v5838, %v5837
        %v5840 = vmul.f32 0.5, %v5839
        %v5841 = vsub.f32 1.5, %v5840
        %v5842 = vmul.f32 %v5837, %v5841
        %vm5843 = vweird.f32 %v5803
        %vm5844 = vweird.f32 %v5837
        %vm5845 = vmor %vm5843, %vm5844
        %v5846 = vsel %vm5845, %v5837, %v5842
        %v5847 = vrsqrt.pop %v5804
        %v5848 = vmul.f32 %v5847, %v5804
        %v5849 = vmul.f32 %v5848, %v5847
        %v5850 = vmul.f32 0.5, %v5849
        %v5851 = vsub.f32 1.5, %v5850
        %v5852 = vmul.f32 %v5847, %v5851
        %vm5853 = vweird.f32 %v5804
        %vm5854 = vweird.f32 %v5847
        %vm5855 = vmor %vm5853, %vm5854
        %v5856 = vsel %vm5855, %v5847, %v5852
        %v5857 = vrsqrt.pop %v5805
        %v5858 = vmul.f32 %v5857, %v5805
        %v5859 = vmul.f32 %v5858, %v5857
        %v5860 = vmul.f32 0.5, %v5859
        %v5861 = vsub.f32 1.5, %v5860
        %v5862 = vmul.f32 %v5857, %v5861
        %vm5863 = vweird.f32 %v5805
        %vm5864 = vweird.f32 %v5857
        %vm5865 = vmor %vm5863, %vm5864
        %v5866 = vsel %vm5865, %v5857, %v5862
        %v5867 = vrsqrt.pop %v5806
        %v5868 = vmul.f32 %v5867, %v5806
        %v5869 = vmul.f32 %v5868, %v5867
        %v5870 = vmul.f32 0.5, %v5869
        %v5871 = vsub.f32 1.5, %v5870
        %v5872 = vmul.f32 %v5867, %v5871
        %vm5873 = vweird.f32 %v5806
        %vm5874 = vweird.f32 %v5867
        %vm5875 = vmor %vm5873, %vm5874
        %v5876 = vsel %vm5875, %v5867, %v5872
        %v5877 = vmul.f32 %v5758, %v5816
        %v5878 = vmul.f32 %v5759, %v5826
        %v5879 = vmul.f32 %v5760, %v5836
        %v5880 = vmul.f32 %v5761, %v5846
        %v5881 = vmul.f32 %v5762, %v5856
        %v5882 = vmul.f32 %v5763, %v5866
        %v5883 = vmul.f32 %v5764, %v5876
        %v5885 = vperm.slane %v5727, 0
        %v5887 = vmul.f32 %v5877, %v5885
        %v5888 = vmul.f32 %v5878, %v5885
        %v5889 = vmul.f32 %v5879, %v5885
        %v5890 = vmul.f32 %v5880, %v5885
        %v5891 = vmul.f32 %v5881, %v5885
        %v5892 = vmul.f32 %v5882, %v5885
        %v5893 = vmul.f32 %v5883, %v5885
        %v5895 = vperm.slane %v5729, 0
        %v5897 = vadd.f32 %v5887, %v5895
        %v5898 = vadd.f32 %v5888, %v5895
        %v5899 = vadd.f32 %v5889, %v5895
        %v5900 = vadd.f32 %v5890, %v5895
        %v5901 = vadd.f32 %v5891, %v5895
        %v5902 = vadd.f32 %v5892, %v5895
        %v5903 = vadd.f32 %v5893, %v5895
        %v5904 = vpack.c.bf16 %v5898, %v5897
        %v5905 = vpack.c.bf16 %v5900, %v5899
        %v5906 = vpack.c.bf16 %v5902, %v5901
        %v5907 = vpack.c.bf16 %v5903, %v5903
        %s5908 = scalar_lea.vmem %s5, 128
        %v5909 = vld [vmem:[%s5908] sm:$0xff]
        %v5910 = vld [vmem:[%s5908 + $0x8] sm:$0xff]
        %v5911 = vld [vmem:[%s5908 + $0x10] sm:$0xff]
        %v5912 = vld [vmem:[%s5908 + $0x18] sm:$0xff]
        %v5913 = vld [vmem:[%s5908 + $0x20] sm:$0xff]
        %v5914 = vld [vmem:[%s5908 + $0x28] sm:$0xff]
        %v5915 = vld [vmem:[%s5908 + $0x30] sm:$0xff]
        %v5916 = vld [vmem:[%s5908 + $0x38] sm:$0xff]
        %s5917 = scalar_lea.vmem %s6, 4
        %v5918 = vld [vmem:[%s5917] sm:$0x3]
        %v5920 = vperm.slane %v5918, 0
        %v5921 = vperm.slane %v5918, 1
        %v5932 = vunpack.c.l.b16 %v5909
        %v5933 = vunpack.c.h.b16 %v5909
        %v5934 = vunpack.c.l.b16 %v5910
        %v5935 = vunpack.c.h.b16 %v5910
        %v5936 = vunpack.c.l.b16 %v5911
        %v5937 = vunpack.c.h.b16 %v5911
        %v5938 = vunpack.c.l.b16 %v5912
        %v5939 = vunpack.c.h.b16 %v5912
        %v5940 = vunpack.c.l.b16 %v5913
        %v5941 = vunpack.c.h.b16 %v5913
        %v5942 = vunpack.c.l.b16 %v5914
        %v5943 = vunpack.c.h.b16 %v5914
        %v5944 = vunpack.c.l.b16 %v5915
        %v5945 = vunpack.c.h.b16 %v5915
        %v5946 = vunpack.c.l.b16 %v5916
        %v5947 = vunpack.c.h.b16 %v5916
        %v5948 = vpack.c.b16 %v5934, %v5932
        %v5949 = vpack.c.b16 %v5935, %v5933
        %v5950 = vpack.c.b16 %v5938, %v5936
        %v5951 = vpack.c.b16 %v5939, %v5937
        %v5952 = vpack.c.b16 %v5942, %v5940
        %v5953 = vpack.c.b16 %v5943, %v5941
        %v5954 = vpack.c.b16 %v5946, %v5944
        %v5955 = vpack.c.b16 %v5947, %v5945
        %v5965 = vsel %vm697, %v5904, 0
        %v5968 = vsel %vm697, %v5905, 0
        %v5971 = vsel %vm697, %v5906, 0
        %v5974 = vsel %vm697, %v5907, 0
        %5976 = vmatpush.bf16.msra.mxu0 0
        %5977 = vmatpush.bf16.msra.mxu0 0
        %5978 = vmatpush.bf16.msra.mxu0 0
        %5979 = vmatpush.bf16.msra.mxu0 0
        %5980 = vmatpush.bf16.msra.mxu0 %v5954
        %5981 = vmatpush.bf16.msra.mxu0 %v5952
        %5982 = vmatpush.bf16.msra.mxu0 %v5950
        %5983 = vmatpush.bf16.msra.mxu0 %v5948
        %5984 = vmatmul.bf16.gmra.mxu0 %v5965
        %v5985 = vpop.f32.mrf.mxu0
        %v5986 = vadd.f32 %v5920, %v5985
        %v5987 = vpop.f32.mrf.mxu0
        %v5988 = vadd.f32 %v5920, %v5987
        %5989 = vmatmul.bf16.gmra.mxu0 %v5968
        %v5990 = vpop.f32.mrf.mxu0
        %v5991 = vadd.f32 %v5920, %v5990
        %v5992 = vpop.f32.mrf.mxu0
        %v5993 = vadd.f32 %v5920, %v5992
        %5994 = vmatmul.bf16.gmra.mxu0 %v5971
        %v5995 = vpop.f32.mrf.mxu0
        %v5996 = vadd.f32 %v5920, %v5995
        %v5997 = vpop.f32.mrf.mxu0
        %v5998 = vadd.f32 %v5920, %v5997
        %5999 = vmatmul.bf16.gmra.mxu0 %v5974
        %v6000 = vpop.f32.mrf.mxu0
        %v6001 = vadd.f32 %v5920, %v6000
        %v6002 = vpop.f32.mrf.mxu0
        %6003 = vdwg.mxu0
        %6004 = vmatpush.bf16.msra.mxu0 0
        %6005 = vmatpush.bf16.msra.mxu0 0
        %6006 = vmatpush.bf16.msra.mxu0 0
        %6007 = vmatpush.bf16.msra.mxu0 0
        %6008 = vmatpush.bf16.msra.mxu0 %v5955
        %6009 = vmatpush.bf16.msra.mxu0 %v5953
        %6010 = vmatpush.bf16.msra.mxu0 %v5951
        %6011 = vmatpush.bf16.msra.mxu0 %v5949
        %6012 = vmatmul.bf16.gmra.mxu0 %v5965
        %v6013 = vpop.f32.mrf.mxu0
        %v6014 = vadd.f32 %v5921, %v6013
        %v6015 = vpop.f32.mrf.mxu0
        %v6016 = vadd.f32 %v5921, %v6015
        %6017 = vmatmul.bf16.gmra.mxu0 %v5968
        %v6018 = vpop.f32.mrf.mxu0
        %v6019 = vadd.f32 %v5921, %v6018
        %v6020 = vpop.f32.mrf.mxu0
        %v6021 = vadd.f32 %v5921, %v6020
        %6022 = vmatmul.bf16.gmra.mxu0 %v5971
        %v6023 = vpop.f32.mrf.mxu0
        %v6024 = vadd.f32 %v5921, %v6023
        %v6025 = vpop.f32.mrf.mxu0
        %v6026 = vadd.f32 %v5921, %v6025
        %6027 = vmatmul.bf16.gmra.mxu0 %v5974
        %v6028 = vpop.f32.mrf.mxu0
        %v6029 = vadd.f32 %v5921, %v6028
        %v6030 = vpop.f32.mrf.mxu0
        %6031 = vdwg.mxu0
        %v6032 = vpack.c.bf16 %v5986, %v5986
        %v6033 = vpack.c.bf16 %v5988, %v5988
        %v6034 = vpack.c.bf16 %v5991, %v5991
        %v6035 = vpack.c.bf16 %v5993, %v5993
        %v6036 = vpack.c.bf16 %v5996, %v5996
        %v6037 = vpack.c.bf16 %v5998, %v5998
        %v6038 = vpack.c.bf16 %v6001, %v6001
        %v6039 = vpack.c.bf16 %v6014, %v6014
        %v6040 = vpack.c.bf16 %v6016, %v6016
        %v6041 = vpack.c.bf16 %v6019, %v6019
        %v6042 = vpack.c.bf16 %v6021, %v6021
        %v6043 = vpack.c.bf16 %v6024, %v6024
        %v6044 = vpack.c.bf16 %v6026, %v6026
        %v6045 = vpack.c.bf16 %v6029, %v6029
        %v6053 = vunpack.c.l.b16 %v6032
        %v6054 = vunpack.c.l.b16 %v6033
        %v6055 = vunpack.c.l.b16 %v6034
        %v6056 = vunpack.c.l.b16 %v6035
        %v6057 = vunpack.c.l.b16 %v6036
        %v6058 = vunpack.c.l.b16 %v6037
        %v6059 = vunpack.c.l.b16 %v6038
        %v6060 = vpack.c.b16 %v6054, %v6053
        %v6061 = vpack.c.b16 %v6056, %v6055
        %v6062 = vpack.c.b16 %v6058, %v6057
        %v6063 = vpack.c.b16 %v6059, %v6059
        %6064 = vrot.lane.b32.xlu0 %v6060, 64
        %v6065 = vpop.permute.xlu0 %6064
        %6066 = vrot.lane.b32.xlu0 %v6061, 64
        %v6067 = vpop.permute.xlu0 %6066
        %6068 = vrot.lane.b32.xlu0 %v6062, 64
        %v6069 = vpop.permute.xlu0 %6068
        %6070 = vrot.lane.b32.xlu0 %v6063, 64
        %v6071 = vpop.permute.xlu0 %6070
        %v6073 = vsel %vm636, %v6060, 0
        %v6076 = vsel %vm636, %v6061, 0
        %v6079 = vsel %vm636, %v6062, 0
        %v6082 = vsel %vm636, %v6063, 0
        %v6085 = vsel %vm636, %v6065, 0
        %v6088 = vsel %vm636, %v6067, 0
        %v6091 = vsel %vm636, %v6069, 0
        %v6094 = vsel %vm636, %v6071, 0
        %6096 = vmatpush.bf16.xpose.msra.mxu0 0
        %6097 = vmatpush.bf16.xpose.msra.mxu0 0
        %6098 = vmatpush.bf16.xpose.msra.mxu0 0
        %6099 = vmatpush.bf16.xpose.msra.mxu0 0
        %6100 = vmatpush.bf16.xpose.msra.mxu0 %v6094
        %6101 = vmatpush.bf16.xpose.msra.mxu0 %v6091
        %6102 = vmatpush.bf16.xpose.msra.mxu0 %v6088
        %6103 = vmatpush.bf16.xpose.msra.mxu0 %v6085
        %6104 = vmatmul.bf16.gmra.mxu0 %v6073
        %v6105 = vpop.f32.mrf.mxu0
        %v6106 = vadd.f32 %v694, %v6105
        %v6107 = vpop.f32.mrf.mxu0
        %v6108 = vadd.f32 %v694, %v6107
        %6109 = vmatmul.bf16.gmra.mxu0 %v6076
        %v6110 = vpop.f32.mrf.mxu0
        %v6111 = vadd.f32 %v694, %v6110
        %v6112 = vpop.f32.mrf.mxu0
        %v6113 = vadd.f32 %v694, %v6112
        %6114 = vmatmul.bf16.gmra.mxu0 %v6079
        %v6115 = vpop.f32.mrf.mxu0
        %v6116 = vadd.f32 %v694, %v6115
        %v6117 = vpop.f32.mrf.mxu0
        %v6118 = vadd.f32 %v694, %v6117
        %6119 = vmatmul.bf16.gmra.mxu0 %v6082
        %v6120 = vpop.f32.mrf.mxu0
        %v6121 = vadd.f32 %v694, %v6120
        %v6122 = vpop.f32.mrf.mxu0
        %6123 = vdwg.mxu0
        %v6124 = vsel %vm1097, %v6106, -inf
        %6125 = vmax.xlane.f32.xlu0 %v6124
        %v6126 = vpop.xlane.xlu0 %6125
        %v6127 = vsel %vm1097, %v6108, -inf
        %6128 = vmax.xlane.f32.xlu0 %v6127
        %v6129 = vpop.xlane.xlu0 %6128
        %v6130 = vsel %vm1097, %v6111, -inf
        %6131 = vmax.xlane.f32.xlu0 %v6130
        %v6132 = vpop.xlane.xlu0 %6131
        %v6133 = vsel %vm1097, %v6113, -inf
        %6134 = vmax.xlane.f32.xlu0 %v6133
        %v6135 = vpop.xlane.xlu0 %6134
        %v6136 = vsel %vm1097, %v6116, -inf
        %6137 = vmax.xlane.f32.xlu0 %v6136
        %v6138 = vpop.xlane.xlu0 %6137
        %v6139 = vsel %vm1097, %v6118, -inf
        %6140 = vmax.xlane.f32.xlu0 %v6139
        %v6141 = vpop.xlane.xlu0 %6140
        %v6142 = vsel %vm1097, %v6121, -inf
        %6143 = vmax.xlane.f32.xlu0 %v6142
        %v6144 = vpop.xlane.xlu0 %6143
        %v6145 = vsub.f32 %v6106, %v6126
        %v6146 = vsub.f32 %v6108, %v6129
        %v6147 = vsub.f32 %v6111, %v6132
        %v6148 = vsub.f32 %v6113, %v6135
        %v6149 = vsub.f32 %v6116, %v6138
        %v6150 = vsub.f32 %v6118, %v6141
        %v6151 = vsub.f32 %v6121, %v6144
        %v6152 = vmul.f32 %v6145, 1.442695
        %v6153 = vpow.pop %v6152
        %v6154 = vmul.f32 %v6146, 1.442695
        %v6155 = vpow.pop %v6154
        %v6156 = vmul.f32 %v6147, 1.442695
        %v6157 = vpow.pop %v6156
        %v6158 = vmul.f32 %v6148, 1.442695
        %v6159 = vpow.pop %v6158
        %v6160 = vmul.f32 %v6149, 1.442695
        %v6161 = vpow.pop %v6160
        %v6162 = vmul.f32 %v6150, 1.442695
        %v6163 = vpow.pop %v6162
        %v6164 = vmul.f32 %v6151, 1.442695
        %v6165 = vpow.pop %v6164
        %v6166 = vsel %vm1097, %v6153, 0.0
        %6167 = vadd.xlane.f32.xlu0 %v6166
        %v6168 = vpop.xlane.xlu0 %6167
        %v6169 = vsel %vm1097, %v6155, 0.0
        %6170 = vadd.xlane.f32.xlu0 %v6169
        %v6171 = vpop.xlane.xlu0 %6170
        %v6172 = vsel %vm1097, %v6157, 0.0
        %6173 = vadd.xlane.f32.xlu0 %v6172
        %v6174 = vpop.xlane.xlu0 %6173
        %v6175 = vsel %vm1097, %v6159, 0.0
        %6176 = vadd.xlane.f32.xlu0 %v6175
        %v6177 = vpop.xlane.xlu0 %6176
        %v6178 = vsel %vm1097, %v6161, 0.0
        %6179 = vadd.xlane.f32.xlu0 %v6178
        %v6180 = vpop.xlane.xlu0 %6179
        %v6181 = vsel %vm1097, %v6163, 0.0
        %6182 = vadd.xlane.f32.xlu0 %v6181
        %v6183 = vpop.xlane.xlu0 %6182
        %v6184 = vsel %vm1097, %v6165, 0.0
        %6185 = vadd.xlane.f32.xlu0 %v6184
        %v6186 = vpop.xlane.xlu0 %6185
        %v6187 = vrcp.pop %v6168
        %v6188 = vrcp.pop %v6171
        %v6189 = vrcp.pop %v6174
        %v6190 = vrcp.pop %v6177
        %v6191 = vrcp.pop %v6180
        %v6192 = vrcp.pop %v6183
        %v6193 = vrcp.pop %v6186
        %v6194 = vmul.f32 %v6153, %v6187
        %v6195 = vmul.f32 %v6155, %v6188
        %v6196 = vmul.f32 %v6157, %v6189
        %v6197 = vmul.f32 %v6159, %v6190
        %v6198 = vmul.f32 %v6161, %v6191
        %v6199 = vmul.f32 %v6163, %v6192
        %v6200 = vmul.f32 %v6165, %v6193
        %v6201 = vpack.c.bf16 %v6194, %v6194
        %v6202 = vpack.c.bf16 %v6195, %v6195
        %v6203 = vpack.c.bf16 %v6196, %v6196
        %v6204 = vpack.c.bf16 %v6197, %v6197
        %v6205 = vpack.c.bf16 %v6198, %v6198
        %v6206 = vpack.c.bf16 %v6199, %v6199
        %v6207 = vpack.c.bf16 %v6200, %v6200
        %v6215 = vunpack.c.l.b16 %v6201
        %v6216 = vunpack.c.l.b16 %v6202
        %v6217 = vunpack.c.l.b16 %v6203
        %v6218 = vunpack.c.l.b16 %v6204
        %v6219 = vunpack.c.l.b16 %v6205
        %v6220 = vunpack.c.l.b16 %v6206
        %v6221 = vunpack.c.l.b16 %v6207
        %v6222 = vpack.c.b16 %v6216, %v6215
        %v6223 = vpack.c.b16 %v6218, %v6217
        %v6224 = vpack.c.b16 %v6220, %v6219
        %v6225 = vpack.c.b16 %v6221, %v6221
        %v6233 = vunpack.c.l.b16 %v6039
        %v6234 = vunpack.c.l.b16 %v6040
        %v6235 = vunpack.c.l.b16 %v6041
        %v6236 = vunpack.c.l.b16 %v6042
        %v6237 = vunpack.c.l.b16 %v6043
        %v6238 = vunpack.c.l.b16 %v6044
        %v6239 = vunpack.c.l.b16 %v6045
        %v6240 = vpack.c.b16 %v6234, %v6233
        %v6241 = vpack.c.b16 %v6236, %v6235
        %v6242 = vpack.c.b16 %v6238, %v6237
        %v6243 = vpack.c.b16 %v6239, %v6239
        %v6248 = vsel %vm1097, %v6222, 0
        %v6251 = vsel %vm1097, %v6223, 0
        %v6254 = vsel %vm1097, %v6224, 0
        %v6257 = vsel %vm1097, %v6225, 0
        %v6260 = vsel %vm1233, %v6243, 0
        %6262 = vmatpush.bf16.msra.mxu0 0
        %6263 = vmatpush.bf16.msra.mxu0 0
        %6264 = vmatpush.bf16.msra.mxu0 0
        %6265 = vmatpush.bf16.msra.mxu0 0
        %6266 = vmatpush.bf16.msra.mxu0 %v6260
        %6267 = vmatpush.bf16.msra.mxu0 %v6242
        %6268 = vmatpush.bf16.msra.mxu0 %v6241
        %6269 = vmatpush.bf16.msra.mxu0 %v6240
        %6270 = vmatmul.bf16.gmra.mxu0 %v6248
        %v6271 = vpop.f32.mrf.mxu0
        %v6272 = vadd.f32 0.0, %v6271
        %v6273 = vpop.f32.mrf.mxu0
        %v6274 = vadd.f32 0.0, %v6273
        %6275 = vmatmul.bf16.gmra.mxu0 %v6251
        %v6276 = vpop.f32.mrf.mxu0
        %v6277 = vadd.f32 0.0, %v6276
        %v6278 = vpop.f32.mrf.mxu0
        %v6279 = vadd.f32 0.0, %v6278
        %6280 = vmatmul.bf16.gmra.mxu0 %v6254
        %v6281 = vpop.f32.mrf.mxu0
        %v6282 = vadd.f32 0.0, %v6281
        %v6283 = vpop.f32.mrf.mxu0
        %v6284 = vadd.f32 0.0, %v6283
        %6285 = vmatmul.bf16.gmra.mxu0 %v6257
        %v6286 = vpop.f32.mrf.mxu0
        %v6287 = vadd.f32 0.0, %v6286
        %v6288 = vpop.f32.mrf.mxu0
        %6289 = vdwg.mxu0
        %6290 = vst.msk [vmem:[#allocation2] sm:$0xff] %vm636, %v6272
        %6291 = vst.msk [vmem:[#allocation2 + $0x8] sm:$0xff] %vm636, %v6274
        %6292 = vst.msk [vmem:[#allocation2 + $0x10] sm:$0xff] %vm636, %v6277
        %6293 = vst.msk [vmem:[#allocation2 + $0x18] sm:$0xff] %vm636, %v6279
        %6294 = vst.msk [vmem:[#allocation2 + $0x20] sm:$0xff] %vm636, %v6282
        %6295 = vst.msk [vmem:[#allocation2 + $0x28] sm:$0xff] %vm636, %v6284
        %6296 = vst.msk [vmem:[#allocation2 + $0x30] sm:$0xff] %vm636, %v6287
        %6297 = vrot.lane.b32.xlu0 %v6060, 112
        %v6298 = vpop.permute.xlu0 %6297
        %6299 = vrot.lane.b32.xlu0 %v6061, 112
        %v6300 = vpop.permute.xlu0 %6299
        %6301 = vrot.lane.b32.xlu0 %v6062, 112
        %v6302 = vpop.permute.xlu0 %6301
        %6303 = vrot.lane.b32.xlu0 %v6063, 112
        %v6304 = vpop.permute.xlu0 %6303
        %6305 = vrot.lane.b32.xlu0 %v6060, 48
        %v6306 = vpop.permute.xlu0 %6305
        %6307 = vrot.lane.b32.xlu0 %v6061, 48
        %v6308 = vpop.permute.xlu0 %6307
        %6309 = vrot.lane.b32.xlu0 %v6062, 48
        %v6310 = vpop.permute.xlu0 %6309
        %6311 = vrot.lane.b32.xlu0 %v6063, 48
        %v6312 = vpop.permute.xlu0 %6311
        %v6314 = vsel %vm636, %v6298, 0
        %v6317 = vsel %vm636, %v6300, 0
        %v6320 = vsel %vm636, %v6302, 0
        %v6323 = vsel %vm636, %v6304, 0
        %v6326 = vsel %vm636, %v6306, 0
        %v6329 = vsel %vm636, %v6308, 0
        %v6332 = vsel %vm636, %v6310, 0
        %v6335 = vsel %vm636, %v6312, 0
        %6337 = vmatpush.bf16.xpose.msra.mxu0 0
        %6338 = vmatpush.bf16.xpose.msra.mxu0 0
        %6339 = vmatpush.bf16.xpose.msra.mxu0 0
        %6340 = vmatpush.bf16.xpose.msra.mxu0 0
        %6341 = vmatpush.bf16.xpose.msra.mxu0 %v6335
        %6342 = vmatpush.bf16.xpose.msra.mxu0 %v6332
        %6343 = vmatpush.bf16.xpose.msra.mxu0 %v6329
        %6344 = vmatpush.bf16.xpose.msra.mxu0 %v6326
        %6345 = vmatmul.bf16.gmra.mxu0 %v6314
        %v6346 = vpop.f32.mrf.mxu0
        %v6347 = vadd.f32 %v694, %v6346
        %v6348 = vpop.f32.mrf.mxu0
        %v6349 = vadd.f32 %v694, %v6348
        %6350 = vmatmul.bf16.gmra.mxu0 %v6317
        %v6351 = vpop.f32.mrf.mxu0
        %v6352 = vadd.f32 %v694, %v6351
        %v6353 = vpop.f32.mrf.mxu0
        %v6354 = vadd.f32 %v694, %v6353
        %6355 = vmatmul.bf16.gmra.mxu0 %v6320
        %v6356 = vpop.f32.mrf.mxu0
        %v6357 = vadd.f32 %v694, %v6356
        %v6358 = vpop.f32.mrf.mxu0
        %v6359 = vadd.f32 %v694, %v6358
        %6360 = vmatmul.bf16.gmra.mxu0 %v6323
        %v6361 = vpop.f32.mrf.mxu0
        %v6362 = vadd.f32 %v694, %v6361
        %v6363 = vpop.f32.mrf.mxu0
        %6364 = vdwg.mxu0
        %v6365 = vsel %vm1097, %v6347, -inf
        %6366 = vmax.xlane.f32.xlu0 %v6365
        %v6367 = vpop.xlane.xlu0 %6366
        %v6368 = vsel %vm1097, %v6349, -inf
        %6369 = vmax.xlane.f32.xlu0 %v6368
        %v6370 = vpop.xlane.xlu0 %6369
        %v6371 = vsel %vm1097, %v6352, -inf
        %6372 = vmax.xlane.f32.xlu0 %v6371
        %v6373 = vpop.xlane.xlu0 %6372
        %v6374 = vsel %vm1097, %v6354, -inf
        %6375 = vmax.xlane.f32.xlu0 %v6374
        %v6376 = vpop.xlane.xlu0 %6375
        %v6377 = vsel %vm1097, %v6357, -inf
        %6378 = vmax.xlane.f32.xlu0 %v6377
        %v6379 = vpop.xlane.xlu0 %6378
        %v6380 = vsel %vm1097, %v6359, -inf
        %6381 = vmax.xlane.f32.xlu0 %v6380
        %v6382 = vpop.xlane.xlu0 %6381
        %v6383 = vsel %vm1097, %v6362, -inf
        %6384 = vmax.xlane.f32.xlu0 %v6383
        %v6385 = vpop.xlane.xlu0 %6384
        %v6386 = vsub.f32 %v6347, %v6367
        %v6387 = vsub.f32 %v6349, %v6370
        %v6388 = vsub.f32 %v6352, %v6373
        %v6389 = vsub.f32 %v6354, %v6376
        %v6390 = vsub.f32 %v6357, %v6379
        %v6391 = vsub.f32 %v6359, %v6382
        %v6392 = vsub.f32 %v6362, %v6385
        %v6393 = vmul.f32 %v6386, 1.442695
        %v6394 = vpow.pop %v6393
        %v6395 = vmul.f32 %v6387, 1.442695
        %v6396 = vpow.pop %v6395
        %v6397 = vmul.f32 %v6388, 1.442695
        %v6398 = vpow.pop %v6397
        %v6399 = vmul.f32 %v6389, 1.442695
        %v6400 = vpow.pop %v6399
        %v6401 = vmul.f32 %v6390, 1.442695
        %v6402 = vpow.pop %v6401
        %v6403 = vmul.f32 %v6391, 1.442695
        %v6404 = vpow.pop %v6403
        %v6405 = vmul.f32 %v6392, 1.442695
        %v6406 = vpow.pop %v6405
        %v6407 = vsel %vm1097, %v6394, 0.0
        %6408 = vadd.xlane.f32.xlu0 %v6407
        %v6409 = vpop.xlane.xlu0 %6408
        %v6410 = vsel %vm1097, %v6396, 0.0
        %6411 = vadd.xlane.f32.xlu0 %v6410
        %v6412 = vpop.xlane.xlu0 %6411
        %v6413 = vsel %vm1097, %v6398, 0.0
        %6414 = vadd.xlane.f32.xlu0 %v6413
        %v6415 = vpop.xlane.xlu0 %6414
        %v6416 = vsel %vm1097, %v6400, 0.0
        %6417 = vadd.xlane.f32.xlu0 %v6416
        %v6418 = vpop.xlane.xlu0 %6417
        %v6419 = vsel %vm1097, %v6402, 0.0
        %6420 = vadd.xlane.f32.xlu0 %v6419
        %v6421 = vpop.xlane.xlu0 %6420
        %v6422 = vsel %vm1097, %v6404, 0.0
        %6423 = vadd.xlane.f32.xlu0 %v6422
        %v6424 = vpop.xlane.xlu0 %6423
        %v6425 = vsel %vm1097, %v6406, 0.0
        %6426 = vadd.xlane.f32.xlu0 %v6425
        %v6427 = vpop.xlane.xlu0 %6426
        %v6428 = vrcp.pop %v6409
        %v6429 = vrcp.pop %v6412
        %v6430 = vrcp.pop %v6415
        %v6431 = vrcp.pop %v6418
        %v6432 = vrcp.pop %v6421
        %v6433 = vrcp.pop %v6424
        %v6434 = vrcp.pop %v6427
        %v6435 = vmul.f32 %v6394, %v6428
        %v6436 = vmul.f32 %v6396, %v6429
        %v6437 = vmul.f32 %v6398, %v6430
        %v6438 = vmul.f32 %v6400, %v6431
        %v6439 = vmul.f32 %v6402, %v6432
        %v6440 = vmul.f32 %v6404, %v6433
        %v6441 = vmul.f32 %v6406, %v6434
        %v6442 = vpack.c.bf16 %v6435, %v6435
        %v6443 = vpack.c.bf16 %v6436, %v6436
        %v6444 = vpack.c.bf16 %v6437, %v6437
        %v6445 = vpack.c.bf16 %v6438, %v6438
        %v6446 = vpack.c.bf16 %v6439, %v6439
        %v6447 = vpack.c.bf16 %v6440, %v6440
        %v6448 = vpack.c.bf16 %v6441, %v6441
        %v6456 = vunpack.c.l.b16 %v6442
        %v6457 = vunpack.c.l.b16 %v6443
        %v6458 = vunpack.c.l.b16 %v6444
        %v6459 = vunpack.c.l.b16 %v6445
        %v6460 = vunpack.c.l.b16 %v6446
        %v6461 = vunpack.c.l.b16 %v6447
        %v6462 = vunpack.c.l.b16 %v6448
        %v6463 = vpack.c.b16 %v6457, %v6456
        %v6464 = vpack.c.b16 %v6459, %v6458
        %v6465 = vpack.c.b16 %v6461, %v6460
        %v6466 = vpack.c.b16 %v6462, %v6462
        %6467 = vrot.lane.b32.xlu0 %v6240, 112
        %v6468 = vpop.permute.xlu0 %6467
        %6469 = vrot.lane.b32.xlu0 %v6241, 112
        %v6470 = vpop.permute.xlu0 %6469
        %6471 = vrot.lane.b32.xlu0 %v6242, 112
        %v6472 = vpop.permute.xlu0 %6471
        %6473 = vrot.lane.b32.xlu0 %v6243, 112
        %v6474 = vpop.permute.xlu0 %6473
        %v6479 = vsel %vm1097, %v6463, 0
        %v6482 = vsel %vm1097, %v6464, 0
        %v6485 = vsel %vm1097, %v6465, 0
        %v6488 = vsel %vm1097, %v6466, 0
        %v6491 = vsel %vm1233, %v6474, 0
        %6493 = vmatpush.bf16.msra.mxu0 0
        %6494 = vmatpush.bf16.msra.mxu0 0
        %6495 = vmatpush.bf16.msra.mxu0 0
        %6496 = vmatpush.bf16.msra.mxu0 0
        %6497 = vmatpush.bf16.msra.mxu0 %v6491
        %6498 = vmatpush.bf16.msra.mxu0 %v6472
        %6499 = vmatpush.bf16.msra.mxu0 %v6470
        %6500 = vmatpush.bf16.msra.mxu0 %v6468
        %6501 = vmatmul.bf16.gmra.mxu0 %v6479
        %v6502 = vpop.f32.mrf.mxu0
        %v6503 = vadd.f32 0.0, %v6502
        %v6504 = vpop.f32.mrf.mxu0
        %v6505 = vadd.f32 0.0, %v6504
        %6506 = vmatmul.bf16.gmra.mxu0 %v6482
        %v6507 = vpop.f32.mrf.mxu0
        %v6508 = vadd.f32 0.0, %v6507
        %v6509 = vpop.f32.mrf.mxu0
        %v6510 = vadd.f32 0.0, %v6509
        %6511 = vmatmul.bf16.gmra.mxu0 %v6485
        %v6512 = vpop.f32.mrf.mxu0
        %v6513 = vadd.f32 0.0, %v6512
        %v6514 = vpop.f32.mrf.mxu0
        %v6515 = vadd.f32 0.0, %v6514
        %6516 = vmatmul.bf16.gmra.mxu0 %v6488
        %v6517 = vpop.f32.mrf.mxu0
        %v6518 = vadd.f32 0.0, %v6517
        %v6519 = vpop.f32.mrf.mxu0
        %6520 = vdwg.mxu0
        %6528 = vrot.lane.b32.xlu0 %v6503, 16
        %v6529 = vpop.permute.xlu0 %6528
        %6530 = vrot.lane.b32.xlu0 %v6505, 16
        %v6531 = vpop.permute.xlu0 %6530
        %6532 = vrot.lane.b32.xlu0 %v6508, 16
        %v6533 = vpop.permute.xlu0 %6532
        %6534 = vrot.lane.b32.xlu0 %v6510, 16
        %v6535 = vpop.permute.xlu0 %6534
        %6536 = vrot.lane.b32.xlu0 %v6513, 16
        %v6537 = vpop.permute.xlu0 %6536
        %6538 = vrot.lane.b32.xlu0 %v6515, 16
        %v6539 = vpop.permute.xlu0 %6538
        %6540 = vrot.lane.b32.xlu0 %v6518, 16
        %v6541 = vpop.permute.xlu0 %6540
        %6549 = vst.msk [vmem:[#allocation2] sm:$0xff] %vm1524, %v6529
        %6550 = vst.msk [vmem:[#allocation2 + $0x8] sm:$0xff] %vm1524, %v6531
        %6551 = vst.msk [vmem:[#allocation2 + $0x10] sm:$0xff] %vm1524, %v6533
        %6552 = vst.msk [vmem:[#allocation2 + $0x18] sm:$0xff] %vm1524, %v6535
        %6553 = vst.msk [vmem:[#allocation2 + $0x20] sm:$0xff] %vm1524, %v6537
        %6554 = vst.msk [vmem:[#allocation2 + $0x28] sm:$0xff] %vm1524, %v6539
        %6555 = vst.msk [vmem:[#allocation2 + $0x30] sm:$0xff] %vm1524, %v6541
        %6556 = vrot.lane.b32.xlu0 %v6060, 96
        %v6557 = vpop.permute.xlu0 %6556
        %6558 = vrot.lane.b32.xlu0 %v6061, 96
        %v6559 = vpop.permute.xlu0 %6558
        %6560 = vrot.lane.b32.xlu0 %v6062, 96
        %v6561 = vpop.permute.xlu0 %6560
        %6562 = vrot.lane.b32.xlu0 %v6063, 96
        %v6563 = vpop.permute.xlu0 %6562
        %6564 = vrot.lane.b32.xlu0 %v6060, 32
        %v6565 = vpop.permute.xlu0 %6564
        %6566 = vrot.lane.b32.xlu0 %v6061, 32
        %v6567 = vpop.permute.xlu0 %6566
        %6568 = vrot.lane.b32.xlu0 %v6062, 32
        %v6569 = vpop.permute.xlu0 %6568
        %6570 = vrot.lane.b32.xlu0 %v6063, 32
        %v6571 = vpop.permute.xlu0 %6570
        %v6573 = vsel %vm636, %v6557, 0
        %v6576 = vsel %vm636, %v6559, 0
        %v6579 = vsel %vm636, %v6561, 0
        %v6582 = vsel %vm636, %v6563, 0
        %v6585 = vsel %vm636, %v6565, 0
        %v6588 = vsel %vm636, %v6567, 0
        %v6591 = vsel %vm636, %v6569, 0
        %v6594 = vsel %vm636, %v6571, 0
        %6596 = vmatpush.bf16.xpose.msra.mxu0 0
        %6597 = vmatpush.bf16.xpose.msra.mxu0 0
        %6598 = vmatpush.bf16.xpose.msra.mxu0 0
        %6599 = vmatpush.bf16.xpose.msra.mxu0 0
        %6600 = vmatpush.bf16.xpose.msra.mxu0 %v6594
        %6601 = vmatpush.bf16.xpose.msra.mxu0 %v6591
        %6602 = vmatpush.bf16.xpose.msra.mxu0 %v6588
        %6603 = vmatpush.bf16.xpose.msra.mxu0 %v6585
        %6604 = vmatmul.bf16.gmra.mxu0 %v6573
        %v6605 = vpop.f32.mrf.mxu0
        %v6606 = vadd.f32 %v694, %v6605
        %v6607 = vpop.f32.mrf.mxu0
        %v6608 = vadd.f32 %v694, %v6607
        %6609 = vmatmul.bf16.gmra.mxu0 %v6576
        %v6610 = vpop.f32.mrf.mxu0
        %v6611 = vadd.f32 %v694, %v6610
        %v6612 = vpop.f32.mrf.mxu0
        %v6613 = vadd.f32 %v694, %v6612
        %6614 = vmatmul.bf16.gmra.mxu0 %v6579
        %v6615 = vpop.f32.mrf.mxu0
        %v6616 = vadd.f32 %v694, %v6615
        %v6617 = vpop.f32.mrf.mxu0
        %v6618 = vadd.f32 %v694, %v6617
        %6619 = vmatmul.bf16.gmra.mxu0 %v6582
        %v6620 = vpop.f32.mrf.mxu0
        %v6621 = vadd.f32 %v694, %v6620
        %v6622 = vpop.f32.mrf.mxu0
        %6623 = vdwg.mxu0
        %v6624 = vsel %vm1097, %v6606, -inf
        %6625 = vmax.xlane.f32.xlu0 %v6624
        %v6626 = vpop.xlane.xlu0 %6625
        %v6627 = vsel %vm1097, %v6608, -inf
        %6628 = vmax.xlane.f32.xlu0 %v6627
        %v6629 = vpop.xlane.xlu0 %6628
        %v6630 = vsel %vm1097, %v6611, -inf
        %6631 = vmax.xlane.f32.xlu0 %v6630
        %v6632 = vpop.xlane.xlu0 %6631
        %v6633 = vsel %vm1097, %v6613, -inf
        %6634 = vmax.xlane.f32.xlu0 %v6633
        %v6635 = vpop.xlane.xlu0 %6634
        %v6636 = vsel %vm1097, %v6616, -inf
        %6637 = vmax.xlane.f32.xlu0 %v6636
        %v6638 = vpop.xlane.xlu0 %6637
        %v6639 = vsel %vm1097, %v6618, -inf
        %6640 = vmax.xlane.f32.xlu0 %v6639
        %v6641 = vpop.xlane.xlu0 %6640
        %v6642 = vsel %vm1097, %v6621, -inf
        %6643 = vmax.xlane.f32.xlu0 %v6642
        %v6644 = vpop.xlane.xlu0 %6643
        %v6645 = vsub.f32 %v6606, %v6626
        %v6646 = vsub.f32 %v6608, %v6629
        %v6647 = vsub.f32 %v6611, %v6632
        %v6648 = vsub.f32 %v6613, %v6635
        %v6649 = vsub.f32 %v6616, %v6638
        %v6650 = vsub.f32 %v6618, %v6641
        %v6651 = vsub.f32 %v6621, %v6644
        %v6652 = vmul.f32 %v6645, 1.442695
        %v6653 = vpow.pop %v6652
        %v6654 = vmul.f32 %v6646, 1.442695
        %v6655 = vpow.pop %v6654
        %v6656 = vmul.f32 %v6647, 1.442695
        %v6657 = vpow.pop %v6656
        %v6658 = vmul.f32 %v6648, 1.442695
        %v6659 = vpow.pop %v6658
        %v6660 = vmul.f32 %v6649, 1.442695
        %v6661 = vpow.pop %v6660
        %v6662 = vmul.f32 %v6650, 1.442695
        %v6663 = vpow.pop %v6662
        %v6664 = vmul.f32 %v6651, 1.442695
        %v6665 = vpow.pop %v6664
        %v6666 = vsel %vm1097, %v6653, 0.0
        %6667 = vadd.xlane.f32.xlu0 %v6666
        %v6668 = vpop.xlane.xlu0 %6667
        %v6669 = vsel %vm1097, %v6655, 0.0
        %6670 = vadd.xlane.f32.xlu0 %v6669
        %v6671 = vpop.xlane.xlu0 %6670
        %v6672 = vsel %vm1097, %v6657, 0.0
        %6673 = vadd.xlane.f32.xlu0 %v6672
        %v6674 = vpop.xlane.xlu0 %6673
        %v6675 = vsel %vm1097, %v6659, 0.0
        %6676 = vadd.xlane.f32.xlu0 %v6675
        %v6677 = vpop.xlane.xlu0 %6676
        %v6678 = vsel %vm1097, %v6661, 0.0
        %6679 = vadd.xlane.f32.xlu0 %v6678
        %v6680 = vpop.xlane.xlu0 %6679
        %v6681 = vsel %vm1097, %v6663, 0.0
        %6682 = vadd.xlane.f32.xlu0 %v6681
        %v6683 = vpop.xlane.xlu0 %6682
        %v6684 = vsel %vm1097, %v6665, 0.0
        %6685 = vadd.xlane.f32.xlu0 %v6684
        %v6686 = vpop.xlane.xlu0 %6685
        %v6687 = vrcp.pop %v6668
        %v6688 = vrcp.pop %v6671
        %v6689 = vrcp.pop %v6674
        %v6690 = vrcp.pop %v6677
        %v6691 = vrcp.pop %v6680
        %v6692 = vrcp.pop %v6683
        %v6693 = vrcp.pop %v6686
        %v6694 = vmul.f32 %v6653, %v6687
        %v6695 = vmul.f32 %v6655, %v6688
        %v6696 = vmul.f32 %v6657, %v6689
        %v6697 = vmul.f32 %v6659, %v6690
        %v6698 = vmul.f32 %v6661, %v6691
        %v6699 = vmul.f32 %v6663, %v6692
        %v6700 = vmul.f32 %v6665, %v6693
        %v6701 = vpack.c.bf16 %v6694, %v6694
        %v6702 = vpack.c.bf16 %v6695, %v6695
        %v6703 = vpack.c.bf16 %v6696, %v6696
        %v6704 = vpack.c.bf16 %v6697, %v6697
        %v6705 = vpack.c.bf16 %v6698, %v6698
        %v6706 = vpack.c.bf16 %v6699, %v6699
        %v6707 = vpack.c.bf16 %v6700, %v6700
        %v6715 = vunpack.c.l.b16 %v6701
        %v6716 = vunpack.c.l.b16 %v6702
        %v6717 = vunpack.c.l.b16 %v6703
        %v6718 = vunpack.c.l.b16 %v6704
        %v6719 = vunpack.c.l.b16 %v6705
        %v6720 = vunpack.c.l.b16 %v6706
        %v6721 = vunpack.c.l.b16 %v6707
        %v6722 = vpack.c.b16 %v6716, %v6715
        %v6723 = vpack.c.b16 %v6718, %v6717
        %v6724 = vpack.c.b16 %v6720, %v6719
        %v6725 = vpack.c.b16 %v6721, %v6721
        %6726 = vrot.lane.b32.xlu0 %v6240, 96
        %v6727 = vpop.permute.xlu0 %6726
        %6728 = vrot.lane.b32.xlu0 %v6241, 96
        %v6729 = vpop.permute.xlu0 %6728
        %6730 = vrot.lane.b32.xlu0 %v6242, 96
        %v6731 = vpop.permute.xlu0 %6730
        %6732 = vrot.lane.b32.xlu0 %v6243, 96
        %v6733 = vpop.permute.xlu0 %6732
        %v6738 = vsel %vm1097, %v6722, 0
        %v6741 = vsel %vm1097, %v6723, 0
        %v6744 = vsel %vm1097, %v6724, 0
        %v6747 = vsel %vm1097, %v6725, 0
        %v6750 = vsel %vm1233, %v6733, 0
        %6752 = vmatpush.bf16.msra.mxu0 0
        %6753 = vmatpush.bf16.msra.mxu0 0
        %6754 = vmatpush.bf16.msra.mxu0 0
        %6755 = vmatpush.bf16.msra.mxu0 0
        %6756 = vmatpush.bf16.msra.mxu0 %v6750
        %6757 = vmatpush.bf16.msra.mxu0 %v6731
        %6758 = vmatpush.bf16.msra.mxu0 %v6729
        %6759 = vmatpush.bf16.msra.mxu0 %v6727
        %6760 = vmatmul.bf16.gmra.mxu0 %v6738
        %v6761 = vpop.f32.mrf.mxu0
        %v6762 = vadd.f32 0.0, %v6761
        %v6763 = vpop.f32.mrf.mxu0
        %v6764 = vadd.f32 0.0, %v6763
        %6765 = vmatmul.bf16.gmra.mxu0 %v6741
        %v6766 = vpop.f32.mrf.mxu0
        %v6767 = vadd.f32 0.0, %v6766
        %v6768 = vpop.f32.mrf.mxu0
        %v6769 = vadd.f32 0.0, %v6768
        %6770 = vmatmul.bf16.gmra.mxu0 %v6744
        %v6771 = vpop.f32.mrf.mxu0
        %v6772 = vadd.f32 0.0, %v6771
        %v6773 = vpop.f32.mrf.mxu0
        %v6774 = vadd.f32 0.0, %v6773
        %6775 = vmatmul.bf16.gmra.mxu0 %v6747
        %v6776 = vpop.f32.mrf.mxu0
        %v6777 = vadd.f32 0.0, %v6776
        %v6778 = vpop.f32.mrf.mxu0
        %6779 = vdwg.mxu0
        %6787 = vrot.lane.b32.xlu0 %v6762, 32
        %v6788 = vpop.permute.xlu0 %6787
        %6789 = vrot.lane.b32.xlu0 %v6764, 32
        %v6790 = vpop.permute.xlu0 %6789
        %6791 = vrot.lane.b32.xlu0 %v6767, 32
        %v6792 = vpop.permute.xlu0 %6791
        %6793 = vrot.lane.b32.xlu0 %v6769, 32
        %v6794 = vpop.permute.xlu0 %6793
        %6795 = vrot.lane.b32.xlu0 %v6772, 32
        %v6796 = vpop.permute.xlu0 %6795
        %6797 = vrot.lane.b32.xlu0 %v6774, 32
        %v6798 = vpop.permute.xlu0 %6797
        %6799 = vrot.lane.b32.xlu0 %v6777, 32
        %v6800 = vpop.permute.xlu0 %6799
        %6808 = vst.msk [vmem:[#allocation2] sm:$0xff] %vm1784, %v6788
        %6809 = vst.msk [vmem:[#allocation2 + $0x8] sm:$0xff] %vm1784, %v6790
        %6810 = vst.msk [vmem:[#allocation2 + $0x10] sm:$0xff] %vm1784, %v6792
        %6811 = vst.msk [vmem:[#allocation2 + $0x18] sm:$0xff] %vm1784, %v6794
        %6812 = vst.msk [vmem:[#allocation2 + $0x20] sm:$0xff] %vm1784, %v6796
        %6813 = vst.msk [vmem:[#allocation2 + $0x28] sm:$0xff] %vm1784, %v6798
        %6814 = vst.msk [vmem:[#allocation2 + $0x30] sm:$0xff] %vm1784, %v6800
        %6815 = vrot.lane.b32.xlu0 %v6060, 80
        %v6816 = vpop.permute.xlu0 %6815
        %6817 = vrot.lane.b32.xlu0 %v6061, 80
        %v6818 = vpop.permute.xlu0 %6817
        %6819 = vrot.lane.b32.xlu0 %v6062, 80
        %v6820 = vpop.permute.xlu0 %6819
        %6821 = vrot.lane.b32.xlu0 %v6063, 80
        %v6822 = vpop.permute.xlu0 %6821
        %6823 = vrot.lane.b32.xlu0 %v6060, 16
        %v6824 = vpop.permute.xlu0 %6823
        %6825 = vrot.lane.b32.xlu0 %v6061, 16
        %v6826 = vpop.permute.xlu0 %6825
        %6827 = vrot.lane.b32.xlu0 %v6062, 16
        %v6828 = vpop.permute.xlu0 %6827
        %6829 = vrot.lane.b32.xlu0 %v6063, 16
        %v6830 = vpop.permute.xlu0 %6829
        %v6832 = vsel %vm636, %v6816, 0
        %v6835 = vsel %vm636, %v6818, 0
        %v6838 = vsel %vm636, %v6820, 0
        %v6841 = vsel %vm636, %v6822, 0
        %v6844 = vsel %vm636, %v6824, 0
        %v6847 = vsel %vm636, %v6826, 0
        %v6850 = vsel %vm636, %v6828, 0
        %v6853 = vsel %vm636, %v6830, 0
        %6855 = vmatpush.bf16.xpose.msra.mxu0 0
        %6856 = vmatpush.bf16.xpose.msra.mxu0 0
        %6857 = vmatpush.bf16.xpose.msra.mxu0 0
        %6858 = vmatpush.bf16.xpose.msra.mxu0 0
        %6859 = vmatpush.bf16.xpose.msra.mxu0 %v6853
        %6860 = vmatpush.bf16.xpose.msra.mxu0 %v6850
        %6861 = vmatpush.bf16.xpose.msra.mxu0 %v6847
        %6862 = vmatpush.bf16.xpose.msra.mxu0 %v6844
        %6863 = vmatmul.bf16.gmra.mxu0 %v6832
        %v6864 = vpop.f32.mrf.mxu0
        %v6865 = vadd.f32 %v694, %v6864
        %v6866 = vpop.f32.mrf.mxu0
        %v6867 = vadd.f32 %v694, %v6866
        %6868 = vmatmul.bf16.gmra.mxu0 %v6835
        %v6869 = vpop.f32.mrf.mxu0
        %v6870 = vadd.f32 %v694, %v6869
        %v6871 = vpop.f32.mrf.mxu0
        %v6872 = vadd.f32 %v694, %v6871
        %6873 = vmatmul.bf16.gmra.mxu0 %v6838
        %v6874 = vpop.f32.mrf.mxu0
        %v6875 = vadd.f32 %v694, %v6874
        %v6876 = vpop.f32.mrf.mxu0
        %v6877 = vadd.f32 %v694, %v6876
        %6878 = vmatmul.bf16.gmra.mxu0 %v6841
        %v6879 = vpop.f32.mrf.mxu0
        %v6880 = vadd.f32 %v694, %v6879
        %v6881 = vpop.f32.mrf.mxu0
        %6882 = vdwg.mxu0
        %v6883 = vsel %vm1097, %v6865, -inf
        %6884 = vmax.xlane.f32.xlu0 %v6883
        %v6885 = vpop.xlane.xlu0 %6884
        %v6886 = vsel %vm1097, %v6867, -inf
        %6887 = vmax.xlane.f32.xlu0 %v6886
        %v6888 = vpop.xlane.xlu0 %6887
        %v6889 = vsel %vm1097, %v6870, -inf
        %6890 = vmax.xlane.f32.xlu0 %v6889
        %v6891 = vpop.xlane.xlu0 %6890
        %v6892 = vsel %vm1097, %v6872, -inf
        %6893 = vmax.xlane.f32.xlu0 %v6892
        %v6894 = vpop.xlane.xlu0 %6893
        %v6895 = vsel %vm1097, %v6875, -inf
        %6896 = vmax.xlane.f32.xlu0 %v6895
        %v6897 = vpop.xlane.xlu0 %6896
        %v6898 = vsel %vm1097, %v6877, -inf
        %6899 = vmax.xlane.f32.xlu0 %v6898
        %v6900 = vpop.xlane.xlu0 %6899
        %v6901 = vsel %vm1097, %v6880, -inf
        %6902 = vmax.xlane.f32.xlu0 %v6901
        %v6903 = vpop.xlane.xlu0 %6902
        %v6904 = vsub.f32 %v6865, %v6885
        %v6905 = vsub.f32 %v6867, %v6888
        %v6906 = vsub.f32 %v6870, %v6891
        %v6907 = vsub.f32 %v6872, %v6894
        %v6908 = vsub.f32 %v6875, %v6897
        %v6909 = vsub.f32 %v6877, %v6900
        %v6910 = vsub.f32 %v6880, %v6903
        %v6911 = vmul.f32 %v6904, 1.442695
        %v6912 = vpow.pop %v6911
        %v6913 = vmul.f32 %v6905, 1.442695
        %v6914 = vpow.pop %v6913
        %v6915 = vmul.f32 %v6906, 1.442695
        %v6916 = vpow.pop %v6915
        %v6917 = vmul.f32 %v6907, 1.442695
        %v6918 = vpow.pop %v6917
        %v6919 = vmul.f32 %v6908, 1.442695
        %v6920 = vpow.pop %v6919
        %v6921 = vmul.f32 %v6909, 1.442695
        %v6922 = vpow.pop %v6921
        %v6923 = vmul.f32 %v6910, 1.442695
        %v6924 = vpow.pop %v6923
        %v6925 = vsel %vm1097, %v6912, 0.0
        %6926 = vadd.xlane.f32.xlu0 %v6925
        %v6927 = vpop.xlane.xlu0 %6926
        %v6928 = vsel %vm1097, %v6914, 0.0
        %6929 = vadd.xlane.f32.xlu0 %v6928
        %v6930 = vpop.xlane.xlu0 %6929
        %v6931 = vsel %vm1097, %v6916, 0.0
        %6932 = vadd.xlane.f32.xlu0 %v6931
        %v6933 = vpop.xlane.xlu0 %6932
        %v6934 = vsel %vm1097, %v6918, 0.0
        %6935 = vadd.xlane.f32.xlu0 %v6934
        %v6936 = vpop.xlane.xlu0 %6935
        %v6937 = vsel %vm1097, %v6920, 0.0
        %6938 = vadd.xlane.f32.xlu0 %v6937
        %v6939 = vpop.xlane.xlu0 %6938
        %v6940 = vsel %vm1097, %v6922, 0.0
        %6941 = vadd.xlane.f32.xlu0 %v6940
        %v6942 = vpop.xlane.xlu0 %6941
        %v6943 = vsel %vm1097, %v6924, 0.0
        %6944 = vadd.xlane.f32.xlu0 %v6943
        %v6945 = vpop.xlane.xlu0 %6944
        %v6946 = vrcp.pop %v6927
        %v6947 = vrcp.pop %v6930
        %v6948 = vrcp.pop %v6933
        %v6949 = vrcp.pop %v6936
        %v6950 = vrcp.pop %v6939
        %v6951 = vrcp.pop %v6942
        %v6952 = vrcp.pop %v6945
        %v6953 = vmul.f32 %v6912, %v6946
        %v6954 = vmul.f32 %v6914, %v6947
        %v6955 = vmul.f32 %v6916, %v6948
        %v6956 = vmul.f32 %v6918, %v6949
        %v6957 = vmul.f32 %v6920, %v6950
        %v6958 = vmul.f32 %v6922, %v6951
        %v6959 = vmul.f32 %v6924, %v6952
        %v6960 = vpack.c.bf16 %v6953, %v6953
        %v6961 = vpack.c.bf16 %v6954, %v6954
        %v6962 = vpack.c.bf16 %v6955, %v6955
        %v6963 = vpack.c.bf16 %v6956, %v6956
        %v6964 = vpack.c.bf16 %v6957, %v6957
        %v6965 = vpack.c.bf16 %v6958, %v6958
        %v6966 = vpack.c.bf16 %v6959, %v6959
        %v6974 = vunpack.c.l.b16 %v6960
        %v6975 = vunpack.c.l.b16 %v6961
        %v6976 = vunpack.c.l.b16 %v6962
        %v6977 = vunpack.c.l.b16 %v6963
        %v6978 = vunpack.c.l.b16 %v6964
        %v6979 = vunpack.c.l.b16 %v6965
        %v6980 = vunpack.c.l.b16 %v6966
        %v6981 = vpack.c.b16 %v6975, %v6974
        %v6982 = vpack.c.b16 %v6977, %v6976
        %v6983 = vpack.c.b16 %v6979, %v6978
        %v6984 = vpack.c.b16 %v6980, %v6980
        %6985 = vrot.lane.b32.xlu0 %v6240, 80
        %v6986 = vpop.permute.xlu0 %6985
        %6987 = vrot.lane.b32.xlu0 %v6241, 80
        %v6988 = vpop.permute.xlu0 %6987
        %6989 = vrot.lane.b32.xlu0 %v6242, 80
        %v6990 = vpop.permute.xlu0 %6989
        %6991 = vrot.lane.b32.xlu0 %v6243, 80
        %v6992 = vpop.permute.xlu0 %6991
        %v6997 = vsel %vm1097, %v6981, 0
        %v7000 = vsel %vm1097, %v6982, 0
        %v7003 = vsel %vm1097, %v6983, 0
        %v7006 = vsel %vm1097, %v6984, 0
        %v7009 = vsel %vm1233, %v6992, 0
        %7011 = vmatpush.bf16.msra.mxu0 0
        %7012 = vmatpush.bf16.msra.mxu0 0
        %7013 = vmatpush.bf16.msra.mxu0 0
        %7014 = vmatpush.bf16.msra.mxu0 0
        %7015 = vmatpush.bf16.msra.mxu0 %v7009
        %7016 = vmatpush.bf16.msra.mxu0 %v6990
        %7017 = vmatpush.bf16.msra.mxu0 %v6988
        %7018 = vmatpush.bf16.msra.mxu0 %v6986
        %7019 = vmatmul.bf16.gmra.mxu0 %v6997
        %v7020 = vpop.f32.mrf.mxu0
        %v7021 = vadd.f32 0.0, %v7020
        %v7022 = vpop.f32.mrf.mxu0
        %v7023 = vadd.f32 0.0, %v7022
        %7024 = vmatmul.bf16.gmra.mxu0 %v7000
        %v7025 = vpop.f32.mrf.mxu0
        %v7026 = vadd.f32 0.0, %v7025
        %v7027 = vpop.f32.mrf.mxu0
        %v7028 = vadd.f32 0.0, %v7027
        %7029 = vmatmul.bf16.gmra.mxu0 %v7003
        %v7030 = vpop.f32.mrf.mxu0
        %v7031 = vadd.f32 0.0, %v7030
        %v7032 = vpop.f32.mrf.mxu0
        %v7033 = vadd.f32 0.0, %v7032
        %7034 = vmatmul.bf16.gmra.mxu0 %v7006
        %v7035 = vpop.f32.mrf.mxu0
        %v7036 = vadd.f32 0.0, %v7035
        %v7037 = vpop.f32.mrf.mxu0
        %7038 = vdwg.mxu0
        %7046 = vrot.lane.b32.xlu0 %v7021, 48
        %v7047 = vpop.permute.xlu0 %7046
        %7048 = vrot.lane.b32.xlu0 %v7023, 48
        %v7049 = vpop.permute.xlu0 %7048
        %7050 = vrot.lane.b32.xlu0 %v7026, 48
        %v7051 = vpop.permute.xlu0 %7050
        %7052 = vrot.lane.b32.xlu0 %v7028, 48
        %v7053 = vpop.permute.xlu0 %7052
        %7054 = vrot.lane.b32.xlu0 %v7031, 48
        %v7055 = vpop.permute.xlu0 %7054
        %7056 = vrot.lane.b32.xlu0 %v7033, 48
        %v7057 = vpop.permute.xlu0 %7056
        %7058 = vrot.lane.b32.xlu0 %v7036, 48
        %v7059 = vpop.permute.xlu0 %7058
        %7067 = vst.msk [vmem:[#allocation2] sm:$0xff] %vm2044, %v7047
        %7068 = vst.msk [vmem:[#allocation2 + $0x8] sm:$0xff] %vm2044, %v7049
        %7069 = vst.msk [vmem:[#allocation2 + $0x10] sm:$0xff] %vm2044, %v7051
        %7070 = vst.msk [vmem:[#allocation2 + $0x18] sm:$0xff] %vm2044, %v7053
        %7071 = vst.msk [vmem:[#allocation2 + $0x20] sm:$0xff] %vm2044, %v7055
        %7072 = vst.msk [vmem:[#allocation2 + $0x28] sm:$0xff] %vm2044, %v7057
        %7073 = vst.msk [vmem:[#allocation2 + $0x30] sm:$0xff] %vm2044, %v7059
        %v7074 = vld [vmem:[#allocation2] sm:$0xff]
        %v7075 = vld [vmem:[#allocation2 + $0x8] sm:$0xff]
        %v7076 = vld [vmem:[#allocation2 + $0x10] sm:$0xff]
        %v7077 = vld [vmem:[#allocation2 + $0x18] sm:$0xff]
        %v7078 = vld [vmem:[#allocation2 + $0x20] sm:$0xff]
        %v7079 = vld [vmem:[#allocation2 + $0x28] sm:$0xff]
        %v7080 = vld [vmem:[#allocation2 + $0x30] sm:$0xff]
        %v7081 = vpack.c.bf16 %v7075, %v7074
        %v7082 = vpack.c.bf16 %v7077, %v7076
        %v7083 = vpack.c.bf16 %v7079, %v7078
        %v7084 = vpack.c.bf16 %v7080, %v7080
        %s7085 = scalar_lea.vmem %s7, 64
        %v7086 = vld [vmem:[%s7085] sm:$0xf]
        %v7087 = vld [vmem:[%s7085 + $0x4] sm:$0xf]
        %v7088 = vld [vmem:[%s7085 + $0x8] sm:$0xf]
        %v7089 = vld [vmem:[%s7085 + $0xc] sm:$0xf]
        %v7090 = vld [vmem:[%s7085 + $0x10] sm:$0xf]
        %v7091 = vld [vmem:[%s7085 + $0x14] sm:$0xf]
        %v7092 = vld [vmem:[%s7085 + $0x18] sm:$0xf]
        %v7093 = vld [vmem:[%s7085 + $0x1c] sm:$0xf]
        %s7094 = scalar_lea.vmem %s8, 2
        %v7095 = vld [vmem:[%s7094] sm:$0x1]
        %v7097 = vperm.slane %v7095, 0
        %v7107 = vunpack.c.l.b16 %v7086
        %v7108 = vunpack.c.l.b16 %v7087
        %v7109 = vunpack.c.l.b16 %v7088
        %v7110 = vunpack.c.l.b16 %v7089
        %v7111 = vunpack.c.l.b16 %v7090
        %v7112 = vunpack.c.l.b16 %v7091
        %v7113 = vunpack.c.l.b16 %v7092
        %v7114 = vunpack.c.l.b16 %v7093
        %v7115 = vpack.c.b16 %v7108, %v7107
        %v7116 = vpack.c.b16 %v7110, %v7109
        %v7117 = vpack.c.b16 %v7112, %v7111
        %v7118 = vpack.c.b16 %v7114, %v7113
        %v7124 = vsel %vm697, %v7081, 0
        %v7127 = vsel %vm697, %v7082, 0
        %v7130 = vsel %vm697, %v7083, 0
        %v7133 = vsel %vm697, %v7084, 0
        %7135 = vmatpush.bf16.msra.mxu0 0
        %7136 = vmatpush.bf16.msra.mxu0 0
        %7137 = vmatpush.bf16.msra.mxu0 0
        %7138 = vmatpush.bf16.msra.mxu0 0
        %7139 = vmatpush.bf16.msra.mxu0 %v7118
        %7140 = vmatpush.bf16.msra.mxu0 %v7117
        %7141 = vmatpush.bf16.msra.mxu0 %v7116
        %7142 = vmatpush.bf16.msra.mxu0 %v7115
        %7143 = vmatmul.bf16.gmra.mxu0 %v7124
        %v7144 = vpop.f32.mrf.mxu0
        %v7145 = vadd.f32 %v7097, %v7144
        %v7146 = vpop.f32.mrf.mxu0
        %v7147 = vadd.f32 %v7097, %v7146
        %7148 = vmatmul.bf16.gmra.mxu0 %v7127
        %v7149 = vpop.f32.mrf.mxu0
        %v7150 = vadd.f32 %v7097, %v7149
        %v7151 = vpop.f32.mrf.mxu0
        %v7152 = vadd.f32 %v7097, %v7151
        %7153 = vmatmul.bf16.gmra.mxu0 %v7130
        %v7154 = vpop.f32.mrf.mxu0
        %v7155 = vadd.f32 %v7097, %v7154
        %v7156 = vpop.f32.mrf.mxu0
        %v7157 = vadd.f32 %v7097, %v7156
        %7158 = vmatmul.bf16.gmra.mxu0 %v7133
        %v7159 = vpop.f32.mrf.mxu0
        %v7160 = vadd.f32 %v7097, %v7159
        %v7161 = vpop.f32.mrf.mxu0
        %7162 = vdwg.mxu0
        %v7163 = vadd.f32 %v5719, %v7145
        %v7164 = vadd.f32 %v5720, %v7147
        %v7165 = vadd.f32 %v5721, %v7150
        %v7166 = vadd.f32 %v5722, %v7152
        %v7167 = vadd.f32 %v5723, %v7155
        %v7168 = vadd.f32 %v5724, %v7157
        %v7169 = vadd.f32 %v5725, %v7160
        %s7170 = scalar_lea.vmem %s9, 2
        %v7171 = vld [vmem:[%s7170] sm:$0x1]
        %s7172 = scalar_lea.vmem %s10, 2
        %v7173 = vld [vmem:[%s7172] sm:$0x1]
        %v7174 = vsel %vm697, %v7163, 0.0
        %7175 = vadd.xlane.f32.xlu0 %v7174
        %v7176 = vpop.xlane.xlu0 %7175
        %v7177 = vsel %vm697, %v7164, 0.0
        %7178 = vadd.xlane.f32.xlu0 %v7177
        %v7179 = vpop.xlane.xlu0 %7178
        %v7180 = vsel %vm697, %v7165, 0.0
        %7181 = vadd.xlane.f32.xlu0 %v7180
        %v7182 = vpop.xlane.xlu0 %7181
        %v7183 = vsel %vm697, %v7166, 0.0
        %7184 = vadd.xlane.f32.xlu0 %v7183
        %v7185 = vpop.xlane.xlu0 %7184
        %v7186 = vsel %vm697, %v7167, 0.0
        %7187 = vadd.xlane.f32.xlu0 %v7186
        %v7188 = vpop.xlane.xlu0 %7187
        %v7189 = vsel %vm697, %v7168, 0.0
        %7190 = vadd.xlane.f32.xlu0 %v7189
        %v7191 = vpop.xlane.xlu0 %7190
        %v7192 = vsel %vm697, %v7169, 0.0
        %7193 = vadd.xlane.f32.xlu0 %v7192
        %v7194 = vpop.xlane.xlu0 %7193
        %v7195 = vmul.f32 %v7176, %v725
        %v7196 = vmul.f32 %v7179, %v725
        %v7197 = vmul.f32 %v7182, %v725
        %v7198 = vmul.f32 %v7185, %v725
        %v7199 = vmul.f32 %v7188, %v725
        %v7200 = vmul.f32 %v7191, %v725
        %v7201 = vmul.f32 %v7194, %v725
        %v7202 = vsub.f32 %v7163, %v7195
        %v7203 = vsub.f32 %v7164, %v7196
        %v7204 = vsub.f32 %v7165, %v7197
        %v7205 = vsub.f32 %v7166, %v7198
        %v7206 = vsub.f32 %v7167, %v7199
        %v7207 = vsub.f32 %v7168, %v7200
        %v7208 = vsub.f32 %v7169, %v7201
        %v7209 = vmul.f32 %v7202, %v7202
        %v7210 = vmul.f32 %v7203, %v7203
        %v7211 = vmul.f32 %v7204, %v7204
        %v7212 = vmul.f32 %v7205, %v7205
        %v7213 = vmul.f32 %v7206, %v7206
        %v7214 = vmul.f32 %v7207, %v7207
        %v7215 = vmul.f32 %v7208, %v7208
        %v7216 = vsel %vm697, %v7209, 0.0
        %7217 = vadd.xlane.f32.xlu0 %v7216
        %v7218 = vpop.xlane.xlu0 %7217
        %v7219 = vsel %vm697, %v7210, 0.0
        %7220 = vadd.xlane.f32.xlu0 %v7219
        %v7221 = vpop.xlane.xlu0 %7220
        %v7222 = vsel %vm697, %v7211, 0.0
        %7223 = vadd.xlane.f32.xlu0 %v7222
        %v7224 = vpop.xlane.xlu0 %7223
        %v7225 = vsel %vm697, %v7212, 0.0
        %7226 = vadd.xlane.f32.xlu0 %v7225
        %v7227 = vpop.xlane.xlu0 %7226
        %v7228 = vsel %vm697, %v7213, 0.0
        %7229 = vadd.xlane.f32.xlu0 %v7228
        %v7230 = vpop.xlane.xlu0 %7229
        %v7231 = vsel %vm697, %v7214, 0.0
        %7232 = vadd.xlane.f32.xlu0 %v7231
        %v7233 = vpop.xlane.xlu0 %7232
        %v7234 = vsel %vm697, %v7215, 0.0
        %7235 = vadd.xlane.f32.xlu0 %v7234
        %v7236 = vpop.xlane.xlu0 %7235
        %v7237 = vmul.f32 %v7218, %v725
        %v7238 = vmul.f32 %v7221, %v725
        %v7239 = vmul.f32 %v7224, %v725
        %v7240 = vmul.f32 %v7227, %v725
        %v7241 = vmul.f32 %v7230, %v725
        %v7242 = vmul.f32 %v7233, %v725
        %v7243 = vmul.f32 %v7236, %v725
        %v7244 = vadd.f32 %v7237, 1e-05
        %v7245 = vadd.f32 %v7238, 1e-05
        %v7246 = vadd.f32 %v7239, 1e-05
        %v7247 = vadd.f32 %v7240, 1e-05
        %v7248 = vadd.f32 %v7241, 1e-05
        %v7249 = vadd.f32 %v7242, 1e-05
        %v7250 = vadd.f32 %v7243, 1e-05
        %v7251 = vrsqrt.pop %v7244
        %v7252 = vmul.f32 %v7251, %v7244
        %v7253 = vmul.f32 %v7252, %v7251
        %v7254 = vmul.f32 0.5, %v7253
        %v7255 = vsub.f32 1.5, %v7254
        %v7256 = vmul.f32 %v7251, %v7255
        %vm7257 = vweird.f32 %v7244
        %vm7258 = vweird.f32 %v7251
        %vm7259 = vmor %vm7257, %vm7258
        %v7260 = vsel %vm7259, %v7251, %v7256
        %v7261 = vrsqrt.pop %v7245
        %v7262 = vmul.f32 %v7261, %v7245
        %v7263 = vmul.f32 %v7262, %v7261
        %v7264 = vmul.f32 0.5, %v7263
        %v7265 = vsub.f32 1.5, %v7264
        %v7266 = vmul.f32 %v7261, %v7265
        %vm7267 = vweird.f32 %v7245
        %vm7268 = vweird.f32 %v7261
        %vm7269 = vmor %vm7267, %vm7268
        %v7270 = vsel %vm7269, %v7261, %v7266
        %v7271 = vrsqrt.pop %v7246
        %v7272 = vmul.f32 %v7271, %v7246
        %v7273 = vmul.f32 %v7272, %v7271
        %v7274 = vmul.f32 0.5, %v7273
        %v7275 = vsub.f32 1.5, %v7274
        %v7276 = vmul.f32 %v7271, %v7275
        %vm7277 = vweird.f32 %v7246
        %vm7278 = vweird.f32 %v7271
        %vm7279 = vmor %vm7277, %vm7278
        %v7280 = vsel %vm7279, %v7271, %v7276
        %v7281 = vrsqrt.pop %v7247
        %v7282 = vmul.f32 %v7281, %v7247
        %v7283 = vmul.f32 %v7282, %v7281
        %v7284 = vmul.f32 0.5, %v7283
        %v7285 = vsub.f32 1.5, %v7284
        %v7286 = vmul.f32 %v7281, %v7285
        %vm7287 = vweird.f32 %v7247
        %vm7288 = vweird.f32 %v7281
        %vm7289 = vmor %vm7287, %vm7288
        %v7290 = vsel %vm7289, %v7281, %v7286
        %v7291 = vrsqrt.pop %v7248
        %v7292 = vmul.f32 %v7291, %v7248
        %v7293 = vmul.f32 %v7292, %v7291
        %v7294 = vmul.f32 0.5, %v7293
        %v7295 = vsub.f32 1.5, %v7294
        %v7296 = vmul.f32 %v7291, %v7295
        %vm7297 = vweird.f32 %v7248
        %vm7298 = vweird.f32 %v7291
        %vm7299 = vmor %vm7297, %vm7298
        %v7300 = vsel %vm7299, %v7291, %v7296
        %v7301 = vrsqrt.pop %v7249
        %v7302 = vmul.f32 %v7301, %v7249
        %v7303 = vmul.f32 %v7302, %v7301
        %v7304 = vmul.f32 0.5, %v7303
        %v7305 = vsub.f32 1.5, %v7304
        %v7306 = vmul.f32 %v7301, %v7305
        %vm7307 = vweird.f32 %v7249
        %vm7308 = vweird.f32 %v7301
        %vm7309 = vmor %vm7307, %vm7308
        %v7310 = vsel %vm7309, %v7301, %v7306
        %v7311 = vrsqrt.pop %v7250
        %v7312 = vmul.f32 %v7311, %v7250
        %v7313 = vmul.f32 %v7312, %v7311
        %v7314 = vmul.f32 0.5, %v7313
        %v7315 = vsub.f32 1.5, %v7314
        %v7316 = vmul.f32 %v7311, %v7315
        %vm7317 = vweird.f32 %v7250
        %vm7318 = vweird.f32 %v7311
        %vm7319 = vmor %vm7317, %vm7318
        %v7320 = vsel %vm7319, %v7311, %v7316
        %v7321 = vmul.f32 %v7202, %v7260
        %v7322 = vmul.f32 %v7203, %v7270
        %v7323 = vmul.f32 %v7204, %v7280
        %v7324 = vmul.f32 %v7205, %v7290
        %v7325 = vmul.f32 %v7206, %v7300
        %v7326 = vmul.f32 %v7207, %v7310
        %v7327 = vmul.f32 %v7208, %v7320
        %v7329 = vperm.slane %v7171, 0
        %v7331 = vmul.f32 %v7321, %v7329
        %v7332 = vmul.f32 %v7322, %v7329
        %v7333 = vmul.f32 %v7323, %v7329
        %v7334 = vmul.f32 %v7324, %v7329
        %v7335 = vmul.f32 %v7325, %v7329
        %v7336 = vmul.f32 %v7326, %v7329
        %v7337 = vmul.f32 %v7327, %v7329
        %v7339 = vperm.slane %v7173, 0
        %v7341 = vadd.f32 %v7331, %v7339
        %v7342 = vadd.f32 %v7332, %v7339
        %v7343 = vadd.f32 %v7333, %v7339
        %v7344 = vadd.f32 %v7334, %v7339
        %v7345 = vadd.f32 %v7335, %v7339
        %v7346 = vadd.f32 %v7336, %v7339
        %v7347 = vadd.f32 %v7337, %v7339
        %v7348 = vpack.c.bf16 %v7342, %v7341
        %v7349 = vpack.c.bf16 %v7344, %v7343
        %v7350 = vpack.c.bf16 %v7346, %v7345
        %v7351 = vpack.c.bf16 %v7347, %v7347
        %s7352 = scalar_lea.vmem %s11, 128
        %v7353 = vld [vmem:[%s7352] sm:$0xff]
        %v7354 = vld [vmem:[%s7352 + $0x8] sm:$0xff]
        %v7355 = vld [vmem:[%s7352 + $0x10] sm:$0xff]
        %v7356 = vld [vmem:[%s7352 + $0x18] sm:$0xff]
        %v7357 = vld [vmem:[%s7352 + $0x20] sm:$0xff]
        %v7358 = vld [vmem:[%s7352 + $0x28] sm:$0xff]
        %v7359 = vld [vmem:[%s7352 + $0x30] sm:$0xff]
        %v7360 = vld [vmem:[%s7352 + $0x38] sm:$0xff]
        %s7361 = scalar_lea.vmem %s12, 4
        %v7362 = vld [vmem:[%s7361] sm:$0x3]
        %v7364 = vperm.slane %v7362, 0
        %v7365 = vperm.slane %v7362, 1
        %v7376 = vunpack.c.l.b16 %v7353
        %v7377 = vunpack.c.h.b16 %v7353
        %v7378 = vunpack.c.l.b16 %v7354
        %v7379 = vunpack.c.h.b16 %v7354
        %v7380 = vunpack.c.l.b16 %v7355
        %v7381 = vunpack.c.h.b16 %v7355
        %v7382 = vunpack.c.l.b16 %v7356
        %v7383 = vunpack.c.h.b16 %v7356
        %v7384 = vunpack.c.l.b16 %v7357
        %v7385 = vunpack.c.h.b16 %v7357
        %v7386 = vunpack.c.l.b16 %v7358
        %v7387 = vunpack.c.h.b16 %v7358
        %v7388 = vunpack.c.l.b16 %v7359
        %v7389 = vunpack.c.h.b16 %v7359
        %v7390 = vunpack.c.l.b16 %v7360
        %v7391 = vunpack.c.h.b16 %v7360
        %v7392 = vpack.c.b16 %v7378, %v7376
        %v7393 = vpack.c.b16 %v7379, %v7377
        %v7394 = vpack.c.b16 %v7382, %v7380
        %v7395 = vpack.c.b16 %v7383, %v7381
        %v7396 = vpack.c.b16 %v7386, %v7384
        %v7397 = vpack.c.b16 %v7387, %v7385
        %v7398 = vpack.c.b16 %v7390, %v7388
        %v7399 = vpack.c.b16 %v7391, %v7389
        %v7409 = vsel %vm697, %v7348, 0
        %v7412 = vsel %vm697, %v7349, 0
        %v7415 = vsel %vm697, %v7350, 0
        %v7418 = vsel %vm697, %v7351, 0
        %7420 = vmatpush.bf16.msra.mxu0 0
        %7421 = vmatpush.bf16.msra.mxu0 0
        %7422 = vmatpush.bf16.msra.mxu0 0
        %7423 = vmatpush.bf16.msra.mxu0 0
        %7424 = vmatpush.bf16.msra.mxu0 %v7398
        %7425 = vmatpush.bf16.msra.mxu0 %v7396
        %7426 = vmatpush.bf16.msra.mxu0 %v7394
        %7427 = vmatpush.bf16.msra.mxu0 %v7392
        %7428 = vmatmul.bf16.gmra.mxu0 %v7409
        %v7429 = vpop.f32.mrf.mxu0
        %v7430 = vadd.f32 %v7364, %v7429
        %v7431 = vpop.f32.mrf.mxu0
        %v7432 = vadd.f32 %v7364, %v7431
        %7433 = vmatmul.bf16.gmra.mxu0 %v7412
        %v7434 = vpop.f32.mrf.mxu0
        %v7435 = vadd.f32 %v7364, %v7434
        %v7436 = vpop.f32.mrf.mxu0
        %v7437 = vadd.f32 %v7364, %v7436
        %7438 = vmatmul.bf16.gmra.mxu0 %v7415
        %v7439 = vpop.f32.mrf.mxu0
        %v7440 = vadd.f32 %v7364, %v7439
        %v7441 = vpop.f32.mrf.mxu0
        %v7442 = vadd.f32 %v7364, %v7441
        %7443 = vmatmul.bf16.gmra.mxu0 %v7418
        %v7444 = vpop.f32.mrf.mxu0
        %v7445 = vadd.f32 %v7364, %v7444
        %v7446 = vpop.f32.mrf.mxu0
        %7447 = vdwg.mxu0
        %7448 = vmatpush.bf16.msra.mxu0 0
        %7449 = vmatpush.bf16.msra.mxu0 0
        %7450 = vmatpush.bf16.msra.mxu0 0
        %7451 = vmatpush.bf16.msra.mxu0 0
        %7452 = vmatpush.bf16.msra.mxu0 %v7399
        %7453 = vmatpush.bf16.msra.mxu0 %v7397
        %7454 = vmatpush.bf16.msra.mxu0 %v7395
        %7455 = vmatpush.bf16.msra.mxu0 %v7393
        %7456 = vmatmul.bf16.gmra.mxu0 %v7409
        %v7457 = vpop.f32.mrf.mxu0
        %v7458 = vadd.f32 %v7365, %v7457
        %v7459 = vpop.f32.mrf.mxu0
        %v7460 = vadd.f32 %v7365, %v7459
        %7461 = vmatmul.bf16.gmra.mxu0 %v7412
        %v7462 = vpop.f32.mrf.mxu0
        %v7463 = vadd.f32 %v7365, %v7462
        %v7464 = vpop.f32.mrf.mxu0
        %v7465 = vadd.f32 %v7365, %v7464
        %7466 = vmatmul.bf16.gmra.mxu0 %v7415
        %v7467 = vpop.f32.mrf.mxu0
        %v7468 = vadd.f32 %v7365, %v7467
        %v7469 = vpop.f32.mrf.mxu0
        %v7470 = vadd.f32 %v7365, %v7469
        %7471 = vmatmul.bf16.gmra.mxu0 %v7418
        %v7472 = vpop.f32.mrf.mxu0
        %v7473 = vadd.f32 %v7365, %v7472
        %v7474 = vpop.f32.mrf.mxu0
        %7475 = vdwg.mxu0
        %v7476 = vmul.f32 %v7430, 0.5
        %v7477 = vmul.f32 %v7458, 0.5
        %v7478 = vmul.f32 %v7432, 0.5
        %v7479 = vmul.f32 %v7460, 0.5
        %v7480 = vmul.f32 %v7435, 0.5
        %v7481 = vmul.f32 %v7463, 0.5
        %v7482 = vmul.f32 %v7437, 0.5
        %v7483 = vmul.f32 %v7465, 0.5
        %v7484 = vmul.f32 %v7440, 0.5
        %v7485 = vmul.f32 %v7468, 0.5
        %v7486 = vmul.f32 %v7442, 0.5
        %v7487 = vmul.f32 %v7470, 0.5
        %v7488 = vmul.f32 %v7445, 0.5
        %v7489 = vmul.f32 %v7473, 0.5
        %v7490 = vmul.f32 %v7430, 0.70710677
        %v7491 = vmul.f32 %v7458, 0.70710677
        %v7492 = vmul.f32 %v7432, 0.70710677
        %v7493 = vmul.f32 %v7460, 0.70710677
        %v7494 = vmul.f32 %v7435, 0.70710677
        %v7495 = vmul.f32 %v7463, 0.70710677
        %v7496 = vmul.f32 %v7437, 0.70710677
        %v7497 = vmul.f32 %v7465, 0.70710677
        %v7498 = vmul.f32 %v7440, 0.70710677
        %v7499 = vmul.f32 %v7468, 0.70710677
        %v7500 = vmul.f32 %v7442, 0.70710677
        %v7501 = vmul.f32 %v7470, 0.70710677
        %v7502 = vmul.f32 %v7445, 0.70710677
        %v7503 = vmul.f32 %v7473, 0.70710677
        %v7504 = vand.u32 2147483647, %v7490
        %v7505 = vand.u32 2147483647, %v7491
        %v7506 = vand.u32 2147483647, %v7492
        %v7507 = vand.u32 2147483647, %v7493
        %v7508 = vand.u32 2147483647, %v7494
        %v7509 = vand.u32 2147483647, %v7495
        %v7510 = vand.u32 2147483647, %v7496
        %v7511 = vand.u32 2147483647, %v7497
        %v7512 = vand.u32 2147483647, %v7498
        %v7513 = vand.u32 2147483647, %v7499
        %v7514 = vand.u32 2147483647, %v7500
        %v7515 = vand.u32 2147483647, %v7501
        %v7516 = vand.u32 2147483647, %v7502
        %v7517 = vand.u32 2147483647, %v7503
        %v7518 = vmul.f32 %v7504, 0.3275911
        %v7519 = vmul.f32 %v7505, 0.3275911
        %v7520 = vmul.f32 %v7506, 0.3275911
        %v7521 = vmul.f32 %v7507, 0.3275911
        %v7522 = vmul.f32 %v7508, 0.3275911
        %v7523 = vmul.f32 %v7509, 0.3275911
        %v7524 = vmul.f32 %v7510, 0.3275911
        %v7525 = vmul.f32 %v7511, 0.3275911
        %v7526 = vmul.f32 %v7512, 0.3275911
        %v7527 = vmul.f32 %v7513, 0.3275911
        %v7528 = vmul.f32 %v7514, 0.3275911
        %v7529 = vmul.f32 %v7515, 0.3275911
        %v7530 = vmul.f32 %v7516, 0.3275911
        %v7531 = vmul.f32 %v7517, 0.3275911
        %v7532 = vadd.f32 %v7518, 1.0
        %v7533 = vadd.f32 %v7519, 1.0
        %v7534 = vadd.f32 %v7520, 1.0
        %v7535 = vadd.f32 %v7521, 1.0
        %v7536 = vadd.f32 %v7522, 1.0
        %v7537 = vadd.f32 %v7523, 1.0
        %v7538 = vadd.f32 %v7524, 1.0
        %v7539 = vadd.f32 %v7525, 1.0
        %v7540 = vadd.f32 %v7526, 1.0
        %v7541 = vadd.f32 %v7527, 1.0
        %v7542 = vadd.f32 %v7528, 1.0
        %v7543 = vadd.f32 %v7529, 1.0
        %v7544 = vadd.f32 %v7530, 1.0
        %v7545 = vadd.f32 %v7531, 1.0
        %v7546 = vrcp.pop %v7532
        %v7547 = vmul.f32 %v7532, %v7546
        %v7548 = vsub.f32 1.0, %v7547
        %v7549 = vmul.f32 %v7546, %v7548
        %v7550 = vadd.f32 %v7546, %v7549
        %vm7551 = vweird.f32 %v7532
        %vm7552 = vweird.f32 %v7546
        %vm7553 = vmor %vm7551, %vm7552
        %v7554 = vsel %vm7553, %v7546, %v7550
        %v7555 = vand.u32 2147483647, %v7532
        %vm7556 = vcmp.eq.f32.partialorder %v7555, 8.507059e+37
        %v7557 = vand.u32 %v7532, 2147483648
        %v7558 = vor.u32 1.1754944e-38, %v7557
        %v7559 = vsel %vm7556, %v7558, %v7554
        %v7560 = vmul.f32 1.0, %v7559
        %v7561 = vrcp.pop %v7533
        %v7562 = vmul.f32 %v7533, %v7561
        %v7563 = vsub.f32 1.0, %v7562
        %v7564 = vmul.f32 %v7561, %v7563
        %v7565 = vadd.f32 %v7561, %v7564
        %vm7566 = vweird.f32 %v7533
        %vm7567 = vweird.f32 %v7561
        %vm7568 = vmor %vm7566, %vm7567
        %v7569 = vsel %vm7568, %v7561, %v7565
        %v7570 = vand.u32 2147483647, %v7533
        %vm7571 = vcmp.eq.f32.partialorder %v7570, 8.507059e+37
        %v7572 = vand.u32 %v7533, 2147483648
        %v7573 = vor.u32 1.1754944e-38, %v7572
        %v7574 = vsel %vm7571, %v7573, %v7569
        %v7575 = vmul.f32 1.0, %v7574
        %v7576 = vrcp.pop %v7534
        %v7577 = vmul.f32 %v7534, %v7576
        %v7578 = vsub.f32 1.0, %v7577
        %v7579 = vmul.f32 %v7576, %v7578
        %v7580 = vadd.f32 %v7576, %v7579
        %vm7581 = vweird.f32 %v7534
        %vm7582 = vweird.f32 %v7576
        %vm7583 = vmor %vm7581, %vm7582
        %v7584 = vsel %vm7583, %v7576, %v7580
        %v7585 = vand.u32 2147483647, %v7534
        %vm7586 = vcmp.eq.f32.partialorder %v7585, 8.507059e+37
        %v7587 = vand.u32 %v7534, 2147483648
        %v7588 = vor.u32 1.1754944e-38, %v7587
        %v7589 = vsel %vm7586, %v7588, %v7584
        %v7590 = vmul.f32 1.0, %v7589
        %v7591 = vrcp.pop %v7535
        %v7592 = vmul.f32 %v7535, %v7591
        %v7593 = vsub.f32 1.0, %v7592
        %v7594 = vmul.f32 %v7591, %v7593
        %v7595 = vadd.f32 %v7591, %v7594
        %vm7596 = vweird.f32 %v7535
        %vm7597 = vweird.f32 %v7591
        %vm7598 = vmor %vm7596, %vm7597
        %v7599 = vsel %vm7598, %v7591, %v7595
        %v7600 = vand.u32 2147483647, %v7535
        %vm7601 = vcmp.eq.f32.partialorder %v7600, 8.507059e+37
        %v7602 = vand.u32 %v7535, 2147483648
        %v7603 = vor.u32 1.1754944e-38, %v7602
        %v7604 = vsel %vm7601, %v7603, %v7599
        %v7605 = vmul.f32 1.0, %v7604
        %v7606 = vrcp.pop %v7536
        %v7607 = vmul.f32 %v7536, %v7606
        %v7608 = vsub.f32 1.0, %v7607
        %v7609 = vmul.f32 %v7606, %v7608
        %v7610 = vadd.f32 %v7606, %v7609
        %vm7611 = vweird.f32 %v7536
        %vm7612 = vweird.f32 %v7606
        %vm7613 = vmor %vm7611, %vm7612
        %v7614 = vsel %vm7613, %v7606, %v7610
        %v7615 = vand.u32 2147483647, %v7536
        %vm7616 = vcmp.eq.f32.partialorder %v7615, 8.507059e+37
        %v7617 = vand.u32 %v7536, 2147483648
        %v7618 = vor.u32 1.1754944e-38, %v7617
        %v7619 = vsel %vm7616, %v7618, %v7614
        %v7620 = vmul.f32 1.0, %v7619
        %v7621 = vrcp.pop %v7537
        %v7622 = vmul.f32 %v7537, %v7621
        %v7623 = vsub.f32 1.0, %v7622
        %v7624 = vmul.f32 %v7621, %v7623
        %v7625 = vadd.f32 %v7621, %v7624
        %vm7626 = vweird.f32 %v7537
        %vm7627 = vweird.f32 %v7621
        %vm7628 = vmor %vm7626, %vm7627
        %v7629 = vsel %vm7628, %v7621, %v7625
        %v7630 = vand.u32 2147483647, %v7537
        %vm7631 = vcmp.eq.f32.partialorder %v7630, 8.507059e+37
        %v7632 = vand.u32 %v7537, 2147483648
        %v7633 = vor.u32 1.1754944e-38, %v7632
        %v7634 = vsel %vm7631, %v7633, %v7629
        %v7635 = vmul.f32 1.0, %v7634
        %v7636 = vrcp.pop %v7538
        %v7637 = vmul.f32 %v7538, %v7636
        %v7638 = vsub.f32 1.0, %v7637
        %v7639 = vmul.f32 %v7636, %v7638
        %v7640 = vadd.f32 %v7636, %v7639
        %vm7641 = vweird.f32 %v7538
        %vm7642 = vweird.f32 %v7636
        %vm7643 = vmor %vm7641, %vm7642
        %v7644 = vsel %vm7643, %v7636, %v7640
        %v7645 = vand.u32 2147483647, %v7538
        %vm7646 = vcmp.eq.f32.partialorder %v7645, 8.507059e+37
        %v7647 = vand.u32 %v7538, 2147483648
        %v7648 = vor.u32 1.1754944e-38, %v7647
        %v7649 = vsel %vm7646, %v7648, %v7644
        %v7650 = vmul.f32 1.0, %v7649
        %v7651 = vrcp.pop %v7539
        %v7652 = vmul.f32 %v7539, %v7651
        %v7653 = vsub.f32 1.0, %v7652
        %v7654 = vmul.f32 %v7651, %v7653
        %v7655 = vadd.f32 %v7651, %v7654
        %vm7656 = vweird.f32 %v7539
        %vm7657 = vweird.f32 %v7651
        %vm7658 = vmor %vm7656, %vm7657
        %v7659 = vsel %vm7658, %v7651, %v7655
        %v7660 = vand.u32 2147483647, %v7539
        %vm7661 = vcmp.eq.f32.partialorder %v7660, 8.507059e+37
        %v7662 = vand.u32 %v7539, 2147483648
        %v7663 = vor.u32 1.1754944e-38, %v7662
        %v7664 = vsel %vm7661, %v7663, %v7659
        %v7665 = vmul.f32 1.0, %v7664
        %v7666 = vrcp.pop %v7540
        %v7667 = vmul.f32 %v7540, %v7666
        %v7668 = vsub.f32 1.0, %v7667
        %v7669 = vmul.f32 %v7666, %v7668
        %v7670 = vadd.f32 %v7666, %v7669
        %vm7671 = vweird.f32 %v7540
        %vm7672 = vweird.f32 %v7666
        %vm7673 = vmor %vm7671, %vm7672
        %v7674 = vsel %vm7673, %v7666, %v7670
        %v7675 = vand.u32 2147483647, %v7540
        %vm7676 = vcmp.eq.f32.partialorder %v7675, 8.507059e+37
        %v7677 = vand.u32 %v7540, 2147483648
        %v7678 = vor.u32 1.1754944e-38, %v7677
        %v7679 = vsel %vm7676, %v7678, %v7674
        %v7680 = vmul.f32 1.0, %v7679
        %v7681 = vrcp.pop %v7541
        %v7682 = vmul.f32 %v7541, %v7681
        %v7683 = vsub.f32 1.0, %v7682
        %v7684 = vmul.f32 %v7681, %v7683
        %v7685 = vadd.f32 %v7681, %v7684
        %vm7686 = vweird.f32 %v7541
        %vm7687 = vweird.f32 %v7681
        %vm7688 = vmor %vm7686, %vm7687
        %v7689 = vsel %vm7688, %v7681, %v7685
        %v7690 = vand.u32 2147483647, %v7541
        %vm7691 = vcmp.eq.f32.partialorder %v7690, 8.507059e+37
        %v7692 = vand.u32 %v7541, 2147483648
        %v7693 = vor.u32 1.1754944e-38, %v7692
        %v7694 = vsel %vm7691, %v7693, %v7689
        %v7695 = vmul.f32 1.0, %v7694
        %v7696 = vrcp.pop %v7542
        %v7697 = vmul.f32 %v7542, %v7696
        %v7698 = vsub.f32 1.0, %v7697
        %v7699 = vmul.f32 %v7696, %v7698
        %v7700 = vadd.f32 %v7696, %v7699
        %vm7701 = vweird.f32 %v7542
        %vm7702 = vweird.f32 %v7696
        %vm7703 = vmor %vm7701, %vm7702
        %v7704 = vsel %vm7703, %v7696, %v7700
        %v7705 = vand.u32 2147483647, %v7542
        %vm7706 = vcmp.eq.f32.partialorder %v7705, 8.507059e+37
        %v7707 = vand.u32 %v7542, 2147483648
        %v7708 = vor.u32 1.1754944e-38, %v7707
        %v7709 = vsel %vm7706, %v7708, %v7704
        %v7710 = vmul.f32 1.0, %v7709
        %v7711 = vrcp.pop %v7543
        %v7712 = vmul.f32 %v7543, %v7711
        %v7713 = vsub.f32 1.0, %v7712
        %v7714 = vmul.f32 %v7711, %v7713
        %v7715 = vadd.f32 %v7711, %v7714
        %vm7716 = vweird.f32 %v7543
        %vm7717 = vweird.f32 %v7711
        %vm7718 = vmor %vm7716, %vm7717
        %v7719 = vsel %vm7718, %v7711, %v7715
        %v7720 = vand.u32 2147483647, %v7543
        %vm7721 = vcmp.eq.f32.partialorder %v7720, 8.507059e+37
        %v7722 = vand.u32 %v7543, 2147483648
        %v7723 = vor.u32 1.1754944e-38, %v7722
        %v7724 = vsel %vm7721, %v7723, %v7719
        %v7725 = vmul.f32 1.0, %v7724
        %v7726 = vrcp.pop %v7544
        %v7727 = vmul.f32 %v7544, %v7726
        %v7728 = vsub.f32 1.0, %v7727
        %v7729 = vmul.f32 %v7726, %v7728
        %v7730 = vadd.f32 %v7726, %v7729
        %vm7731 = vweird.f32 %v7544
        %vm7732 = vweird.f32 %v7726
        %vm7733 = vmor %vm7731, %vm7732
        %v7734 = vsel %vm7733, %v7726, %v7730
        %v7735 = vand.u32 2147483647, %v7544
        %vm7736 = vcmp.eq.f32.partialorder %v7735, 8.507059e+37
        %v7737 = vand.u32 %v7544, 2147483648
        %v7738 = vor.u32 1.1754944e-38, %v7737
        %v7739 = vsel %vm7736, %v7738, %v7734
        %v7740 = vmul.f32 1.0, %v7739
        %v7741 = vrcp.pop %v7545
        %v7742 = vmul.f32 %v7545, %v7741
        %v7743 = vsub.f32 1.0, %v7742
        %v7744 = vmul.f32 %v7741, %v7743
        %v7745 = vadd.f32 %v7741, %v7744
        %vm7746 = vweird.f32 %v7545
        %vm7747 = vweird.f32 %v7741
        %vm7748 = vmor %vm7746, %vm7747
        %v7749 = vsel %vm7748, %v7741, %v7745
        %v7750 = vand.u32 2147483647, %v7545
        %vm7751 = vcmp.eq.f32.partialorder %v7750, 8.507059e+37
        %v7752 = vand.u32 %v7545, 2147483648
        %v7753 = vor.u32 1.1754944e-38, %v7752
        %v7754 = vsel %vm7751, %v7753, %v7749
        %v7755 = vmul.f32 1.0, %v7754
        %v7756 = vmul.f32 %v7560, 1.0614054
        %v7757 = vmul.f32 %v7575, 1.0614054
        %v7758 = vmul.f32 %v7590, 1.0614054
        %v7759 = vmul.f32 %v7605, 1.0614054
        %v7760 = vmul.f32 %v7620, 1.0614054
        %v7761 = vmul.f32 %v7635, 1.0614054
        %v7762 = vmul.f32 %v7650, 1.0614054
        %v7763 = vmul.f32 %v7665, 1.0614054
        %v7764 = vmul.f32 %v7680, 1.0614054
        %v7765 = vmul.f32 %v7695, 1.0614054
        %v7766 = vmul.f32 %v7710, 1.0614054
        %v7767 = vmul.f32 %v7725, 1.0614054
        %v7768 = vmul.f32 %v7740, 1.0614054
        %v7769 = vmul.f32 %v7755, 1.0614054
        %v7770 = vadd.f32 %v7756, -1.4531521
        %v7771 = vadd.f32 %v7757, -1.4531521
        %v7772 = vadd.f32 %v7758, -1.4531521
        %v7773 = vadd.f32 %v7759, -1.4531521
        %v7774 = vadd.f32 %v7760, -1.4531521
        %v7775 = vadd.f32 %v7761, -1.4531521
        %v7776 = vadd.f32 %v7762, -1.4531521
        %v7777 = vadd.f32 %v7763, -1.4531521
        %v7778 = vadd.f32 %v7764, -1.4531521
        %v7779 = vadd.f32 %v7765, -1.4531521
        %v7780 = vadd.f32 %v7766, -1.4531521
        %v7781 = vadd.f32 %v7767, -1.4531521
        %v7782 = vadd.f32 %v7768, -1.4531521
        %v7783 = vadd.f32 %v7769, -1.4531521
        %v7784 = vmul.f32 %v7770, %v7560
        %v7785 = vmul.f32 %v7771, %v7575
        %v7786 = vmul.f32 %v7772, %v7590
        %v7787 = vmul.f32 %v7773, %v7605
        %v7788 = vmul.f32 %v7774, %v7620
        %v7789 = vmul.f32 %v7775, %v7635
        %v7790 = vmul.f32 %v7776, %v7650
        %v7791 = vmul.f32 %v7777, %v7665
        %v7792 = vmul.f32 %v7778, %v7680
        %v7793 = vmul.f32 %v7779, %v7695
        %v7794 = vmul.f32 %v7780, %v7710
        %v7795 = vmul.f32 %v7781, %v7725
        %v7796 = vmul.f32 %v7782, %v7740
        %v7797 = vmul.f32 %v7783, %v7755
        %v7798 = vadd.f32 %v7784, 1.4214138
        %v7799 = vadd.f32 %v7785, 1.4214138
        %v7800 = vadd.f32 %v7786, 1.4214138
        %v7801 = vadd.f32 %v7787, 1.4214138
        %v7802 = vadd.f32 %v7788, 1.4214138
        %v7803 = vadd.f32 %v7789, 1.4214138
        %v7804 = vadd.f32 %v7790, 1.4214138
        %v7805 = vadd.f32 %v7791, 1.4214138
        %v7806 = vadd.f32 %v7792, 1.4214138
        %v7807 = vadd.f32 %v7793, 1.4214138
        %v7808 = vadd.f32 %v7794, 1.4214138
        %v7809 = vadd.f32 %v7795, 1.4214138
        %v7810 = vadd.f32 %v7796, 1.4214138
        %v7811 = vadd.f32 %v7797, 1.4214138
        %v7812 = vmul.f32 %v7798, %v7560
        %v7813 = vmul.f32 %v7799, %v7575
        %v7814 = vmul.f32 %v7800, %v7590
        %v7815 = vmul.f32 %v7801, %v7605
        %v7816 = vmul.f32 %v7802, %v7620
        %v7817 = vmul.f32 %v7803, %v7635
        %v7818 = vmul.f32 %v7804, %v7650
        %v7819 = vmul.f32 %v7805, %v7665
        %v7820 = vmul.f32 %v7806, %v7680
        %v7821 = vmul.f32 %v7807, %v7695
        %v7822 = vmul.f32 %v7808, %v7710
        %v7823 = vmul.f32 %v7809, %v7725
        %v7824 = vmul.f32 %v7810, %v7740
        %v7825 = vmul.f32 %v7811, %v7755
        %v7826 = vadd.f32 %v7812, -0.28449672
        %v7827 = vadd.f32 %v7813, -0.28449672
        %v7828 = vadd.f32 %v7814, -0.28449672
        %v7829 = vadd.f32 %v7815, -0.28449672
        %v7830 = vadd.f32 %v7816, -0.28449672
        %v7831 = vadd.f32 %v7817, -0.28449672
        %v7832 = vadd.f32 %v7818, -0.28449672
        %v7833 = vadd.f32 %v7819, -0.28449672
        %v7834 = vadd.f32 %v7820, -0.28449672
        %v7835 = vadd.f32 %v7821, -0.28449672
        %v7836 = vadd.f32 %v7822, -0.28449672
        %v7837 = vadd.f32 %v7823, -0.28449672
        %v7838 = vadd.f32 %v7824, -0.28449672
        %v7839 = vadd.f32 %v7825, -0.28449672
        %v7840 = vmul.f32 %v7826, %v7560
        %v7841 = vmul.f32 %v7827, %v7575
        %v7842 = vmul.f32 %v7828, %v7590
        %v7843 = vmul.f32 %v7829, %v7605
        %v7844 = vmul.f32 %v7830, %v7620
        %v7845 = vmul.f32 %v7831, %v7635
        %v7846 = vmul.f32 %v7832, %v7650
        %v7847 = vmul.f32 %v7833, %v7665
        %v7848 = vmul.f32 %v7834, %v7680
        %v7849 = vmul.f32 %v7835, %v7695
        %v7850 = vmul.f32 %v7836, %v7710
        %v7851 = vmul.f32 %v7837, %v7725
        %v7852 = vmul.f32 %v7838, %v7740
        %v7853 = vmul.f32 %v7839, %v7755
        %v7854 = vadd.f32 %v7840, 0.2548296
        %v7855 = vadd.f32 %v7841, 0.2548296
        %v7856 = vadd.f32 %v7842, 0.2548296
        %v7857 = vadd.f32 %v7843, 0.2548296
        %v7858 = vadd.f32 %v7844, 0.2548296
        %v7859 = vadd.f32 %v7845, 0.2548296
        %v7860 = vadd.f32 %v7846, 0.2548296
        %v7861 = vadd.f32 %v7847, 0.2548296
        %v7862 = vadd.f32 %v7848, 0.2548296
        %v7863 = vadd.f32 %v7849, 0.2548296
        %v7864 = vadd.f32 %v7850, 0.2548296
        %v7865 = vadd.f32 %v7851, 0.2548296
        %v7866 = vadd.f32 %v7852, 0.2548296
        %v7867 = vadd.f32 %v7853, 0.2548296
        %v7868 = vmul.f32 %v7854, %v7560
        %v7869 = vmul.f32 %v7855, %v7575
        %v7870 = vmul.f32 %v7856, %v7590
        %v7871 = vmul.f32 %v7857, %v7605
        %v7872 = vmul.f32 %v7858, %v7620
        %v7873 = vmul.f32 %v7859, %v7635
        %v7874 = vmul.f32 %v7860, %v7650
        %v7875 = vmul.f32 %v7861, %v7665
        %v7876 = vmul.f32 %v7862, %v7680
        %v7877 = vmul.f32 %v7863, %v7695
        %v7878 = vmul.f32 %v7864, %v7710
        %v7879 = vmul.f32 %v7865, %v7725
        %v7880 = vmul.f32 %v7866, %v7740
        %v7881 = vmul.f32 %v7867, %v7755
        %v7882 = vsub.f32 0.0, %v7504
        %v7883 = vsub.f32 0.0, %v7505
        %v7884 = vsub.f32 0.0, %v7506
        %v7885 = vsub.f32 0.0, %v7507
        %v7886 = vsub.f32 0.0, %v7508
        %v7887 = vsub.f32 0.0, %v7509
        %v7888 = vsub.f32 0.0, %v7510
        %v7889 = vsub.f32 0.0, %v7511
        %v7890 = vsub.f32 0.0, %v7512
        %v7891 = vsub.f32 0.0, %v7513
        %v7892 = vsub.f32 0.0, %v7514
        %v7893 = vsub.f32 0.0, %v7515
        %v7894 = vsub.f32 0.0, %v7516
        %v7895 = vsub.f32 0.0, %v7517
        %v7896 = vmul.f32 %v7882, %v7504
        %v7897 = vmul.f32 %v7883, %v7505
        %v7898 = vmul.f32 %v7884, %v7506
        %v7899 = vmul.f32 %v7885, %v7507
        %v7900 = vmul.f32 %v7886, %v7508
        %v7901 = vmul.f32 %v7887, %v7509
        %v7902 = vmul.f32 %v7888, %v7510
        %v7903 = vmul.f32 %v7889, %v7511
        %v7904 = vmul.f32 %v7890, %v7512
        %v7905 = vmul.f32 %v7891, %v7513
        %v7906 = vmul.f32 %v7892, %v7514
        %v7907 = vmul.f32 %v7893, %v7515
        %v7908 = vmul.f32 %v7894, %v7516
        %v7909 = vmul.f32 %v7895, %v7517
        %v7910 = vmul.f32 %v7896, 1.442695
        %v7911 = vpow.pop %v7910
        %v7912 = vmul.f32 %v7897, 1.442695
        %v7913 = vpow.pop %v7912
        %v7914 = vmul.f32 %v7898, 1.442695
        %v7915 = vpow.pop %v7914
        %v7916 = vmul.f32 %v7899, 1.442695
        %v7917 = vpow.pop %v7916
        %v7918 = vmul.f32 %v7900, 1.442695
        %v7919 = vpow.pop %v7918
        %v7920 = vmul.f32 %v7901, 1.442695
        %v7921 = vpow.pop %v7920
        %v7922 = vmul.f32 %v7902, 1.442695
        %v7923 = vpow.pop %v7922
        %v7924 = vmul.f32 %v7903, 1.442695
        %v7925 = vpow.pop %v7924
        %v7926 = vmul.f32 %v7904, 1.442695
        %v7927 = vpow.pop %v7926
        %v7928 = vmul.f32 %v7905, 1.442695
        %v7929 = vpow.pop %v7928
        %v7930 = vmul.f32 %v7906, 1.442695
        %v7931 = vpow.pop %v7930
        %v7932 = vmul.f32 %v7907, 1.442695
        %v7933 = vpow.pop %v7932
        %v7934 = vmul.f32 %v7908, 1.442695
        %v7935 = vpow.pop %v7934
        %v7936 = vmul.f32 %v7909, 1.442695
        %v7937 = vpow.pop %v7936
        %v7938 = vmul.f32 %v7868, %v7911
        %v7939 = vmul.f32 %v7869, %v7913
        %v7940 = vmul.f32 %v7870, %v7915
        %v7941 = vmul.f32 %v7871, %v7917
        %v7942 = vmul.f32 %v7872, %v7919
        %v7943 = vmul.f32 %v7873, %v7921
        %v7944 = vmul.f32 %v7874, %v7923
        %v7945 = vmul.f32 %v7875, %v7925
        %v7946 = vmul.f32 %v7876, %v7927
        %v7947 = vmul.f32 %v7877, %v7929
        %v7948 = vmul.f32 %v7878, %v7931
        %v7949 = vmul.f32 %v7879, %v7933
        %v7950 = vmul.f32 %v7880, %v7935
        %v7951 = vmul.f32 %v7881, %v7937
        %v7952 = vsub.f32 1.0, %v7938
        %v7953 = vsub.f32 1.0, %v7939
        %v7954 = vsub.f32 1.0, %v7940
        %v7955 = vsub.f32 1.0, %v7941
        %v7956 = vsub.f32 1.0, %v7942
        %v7957 = vsub.f32 1.0, %v7943
        %v7958 = vsub.f32 1.0, %v7944
        %v7959 = vsub.f32 1.0, %v7945
        %v7960 = vsub.f32 1.0, %v7946
        %v7961 = vsub.f32 1.0, %v7947
        %v7962 = vsub.f32 1.0, %v7948
        %v7963 = vsub.f32 1.0, %v7949
        %v7964 = vsub.f32 1.0, %v7950
        %v7965 = vsub.f32 1.0, %v7951
        %vm7966 = vcmp.ge.f32.partialorder %v7490, 0.0
        %vm7967 = vcmp.ge.f32.partialorder %v7491, 0.0
        %vm7968 = vcmp.ge.f32.partialorder %v7492, 0.0
        %vm7969 = vcmp.ge.f32.partialorder %v7493, 0.0
        %vm7970 = vcmp.ge.f32.partialorder %v7494, 0.0
        %vm7971 = vcmp.ge.f32.partialorder %v7495, 0.0
        %vm7972 = vcmp.ge.f32.partialorder %v7496, 0.0
        %vm7973 = vcmp.ge.f32.partialorder %v7497, 0.0
        %vm7974 = vcmp.ge.f32.partialorder %v7498, 0.0
        %vm7975 = vcmp.ge.f32.partialorder %v7499, 0.0
        %vm7976 = vcmp.ge.f32.partialorder %v7500, 0.0
        %vm7977 = vcmp.ge.f32.partialorder %v7501, 0.0
        %vm7978 = vcmp.ge.f32.partialorder %v7502, 0.0
        %vm7979 = vcmp.ge.f32.partialorder %v7503, 0.0
        %v7980 = vsub.f32 0.0, %v7952
        %v7981 = vsub.f32 0.0, %v7953
        %v7982 = vsub.f32 0.0, %v7954
        %v7983 = vsub.f32 0.0, %v7955
        %v7984 = vsub.f32 0.0, %v7956
        %v7985 = vsub.f32 0.0, %v7957
        %v7986 = vsub.f32 0.0, %v7958
        %v7987 = vsub.f32 0.0, %v7959
        %v7988 = vsub.f32 0.0, %v7960
        %v7989 = vsub.f32 0.0, %v7961
        %v7990 = vsub.f32 0.0, %v7962
        %v7991 = vsub.f32 0.0, %v7963
        %v7992 = vsub.f32 0.0, %v7964
        %v7993 = vsub.f32 0.0, %v7965
        %v7994 = vsel %vm7966, %v7952, %v7980
        %v7995 = vsel %vm7967, %v7953, %v7981
        %v7996 = vsel %vm7968, %v7954, %v7982
        %v7997 = vsel %vm7969, %v7955, %v7983
        %v7998 = vsel %vm7970, %v7956, %v7984
        %v7999 = vsel %vm7971, %v7957, %v7985
        %v8000 = vsel %vm7972, %v7958, %v7986
        %v8001 = vsel %vm7973, %v7959, %v7987
        %v8002 = vsel %vm7974, %v7960, %v7988
        %v8003 = vsel %vm7975, %v7961, %v7989
        %v8004 = vsel %vm7976, %v7962, %v7990
        %v8005 = vsel %vm7977, %v7963, %v7991
        %v8006 = vsel %vm7978, %v7964, %v7992
        %v8007 = vsel %vm7979, %v7965, %v7993
        %v8008 = vadd.f32 %v7994, 1.0
        %v8009 = vadd.f32 %v7995, 1.0
        %v8010 = vadd.f32 %v7996, 1.0
        %v8011 = vadd.f32 %v7997, 1.0
        %v8012 = vadd.f32 %v7998, 1.0
        %v8013 = vadd.f32 %v7999, 1.0
        %v8014 = vadd.f32 %v8000, 1.0
        %v8015 = vadd.f32 %v8001, 1.0
        %v8016 = vadd.f32 %v8002, 1.0
        %v8017 = vadd.f32 %v8003, 1.0
        %v8018 = vadd.f32 %v8004, 1.0
        %v8019 = vadd.f32 %v8005, 1.0
        %v8020 = vadd.f32 %v8006, 1.0
        %v8021 = vadd.f32 %v8007, 1.0
        %v8022 = vmul.f32 %v7476, %v8008
        %v8023 = vmul.f32 %v7477, %v8009
        %v8024 = vmul.f32 %v7478, %v8010
        %v8025 = vmul.f32 %v7479, %v8011
        %v8026 = vmul.f32 %v7480, %v8012
        %v8027 = vmul.f32 %v7481, %v8013
        %v8028 = vmul.f32 %v7482, %v8014
        %v8029 = vmul.f32 %v7483, %v8015
        %v8030 = vmul.f32 %v7484, %v8016
        %v8031 = vmul.f32 %v7485, %v8017
        %v8032 = vmul.f32 %v7486, %v8018
        %v8033 = vmul.f32 %v7487, %v8019
        %v8034 = vmul.f32 %v7488, %v8020
        %v8035 = vmul.f32 %v7489, %v8021
        %v8036 = vpack.c.bf16 %v8024, %v8022
        %v8037 = vpack.c.bf16 %v8025, %v8023
        %v8038 = vpack.c.bf16 %v8028, %v8026
        %v8039 = vpack.c.bf16 %v8029, %v8027
        %v8040 = vpack.c.bf16 %v8032, %v8030
        %v8041 = vpack.c.bf16 %v8033, %v8031
        %v8042 = vpack.c.bf16 %v8034, %v8034
        %v8043 = vpack.c.bf16 %v8035, %v8035
        %s8044 = scalar_lea.vmem %s13, 256
        %v8045 = vld [vmem:[%s8044] sm:$0xf]
        %v8046 = vld [vmem:[%s8044 + $0x4] sm:$0xf]
        %v8047 = vld [vmem:[%s8044 + $0x8] sm:$0xf]
        %v8048 = vld [vmem:[%s8044 + $0xc] sm:$0xf]
        %v8049 = vld [vmem:[%s8044 + $0x10] sm:$0xf]
        %v8050 = vld [vmem:[%s8044 + $0x14] sm:$0xf]
        %v8051 = vld [vmem:[%s8044 + $0x18] sm:$0xf]
        %v8052 = vld [vmem:[%s8044 + $0x1c] sm:$0xf]
        %v8053 = vld [vmem:[%s8044 + $0x20] sm:$0xf]
        %v8054 = vld [vmem:[%s8044 + $0x24] sm:$0xf]
        %v8055 = vld [vmem:[%s8044 + $0x28] sm:$0xf]
        %v8056 = vld [vmem:[%s8044 + $0x2c] sm:$0xf]
        %v8057 = vld [vmem:[%s8044 + $0x30] sm:$0xf]
        %v8058 = vld [vmem:[%s8044 + $0x34] sm:$0xf]
        %v8059 = vld [vmem:[%s8044 + $0x38] sm:$0xf]
        %v8060 = vld [vmem:[%s8044 + $0x3c] sm:$0xf]
        %v8061 = vld [vmem:[%s8044 + $0x40] sm:$0xf]
        %v8062 = vld [vmem:[%s8044 + $0x44] sm:$0xf]
        %v8063 = vld [vmem:[%s8044 + $0x48] sm:$0xf]
        %v8064 = vld [vmem:[%s8044 + $0x4c] sm:$0xf]
        %v8065 = vld [vmem:[%s8044 + $0x50] sm:$0xf]
        %v8066 = vld [vmem:[%s8044 + $0x54] sm:$0xf]
        %v8067 = vld [vmem:[%s8044 + $0x58] sm:$0xf]
        %v8068 = vld [vmem:[%s8044 + $0x5c] sm:$0xf]
        %v8069 = vld [vmem:[%s8044 + $0x60] sm:$0xf]
        %v8070 = vld [vmem:[%s8044 + $0x64] sm:$0xf]
        %v8071 = vld [vmem:[%s8044 + $0x68] sm:$0xf]
        %v8072 = vld [vmem:[%s8044 + $0x6c] sm:$0xf]
        %v8073 = vld [vmem:[%s8044 + $0x70] sm:$0xf]
        %v8074 = vld [vmem:[%s8044 + $0x74] sm:$0xf]
        %v8075 = vld [vmem:[%s8044 + $0x78] sm:$0xf]
        %v8076 = vld [vmem:[%s8044 + $0x7c] sm:$0xf]
        %s8077 = scalar_lea.vmem %s14, 2
        %v8078 = vld [vmem:[%s8077] sm:$0x1]
        %v8080 = vperm.slane %v8078, 0
        %v8114 = vunpack.c.l.b16 %v8045
        %v8115 = vunpack.c.l.b16 %v8046
        %v8116 = vunpack.c.l.b16 %v8047
        %v8117 = vunpack.c.l.b16 %v8048
        %v8118 = vunpack.c.l.b16 %v8049
        %v8119 = vunpack.c.l.b16 %v8050
        %v8120 = vunpack.c.l.b16 %v8051
        %v8121 = vunpack.c.l.b16 %v8052
        %v8122 = vunpack.c.l.b16 %v8053
        %v8123 = vunpack.c.l.b16 %v8054
        %v8124 = vunpack.c.l.b16 %v8055
        %v8125 = vunpack.c.l.b16 %v8056
        %v8126 = vunpack.c.l.b16 %v8057
        %v8127 = vunpack.c.l.b16 %v8058
        %v8128 = vunpack.c.l.b16 %v8059
        %v8129 = vunpack.c.l.b16 %v8060
        %v8130 = vunpack.c.l.b16 %v8061
        %v8131 = vunpack.c.l.b16 %v8062
        %v8132 = vunpack.c.l.b16 %v8063
        %v8133 = vunpack.c.l.b16 %v8064
        %v8134 = vunpack.c.l.b16 %v8065
        %v8135 = vunpack.c.l.b16 %v8066
        %v8136 = vunpack.c.l.b16 %v8067
        %v8137 = vunpack.c.l.b16 %v8068
        %v8138 = vunpack.c.l.b16 %v8069
        %v8139 = vunpack.c.l.b16 %v8070
        %v8140 = vunpack.c.l.b16 %v8071
        %v8141 = vunpack.c.l.b16 %v8072
        %v8142 = vunpack.c.l.b16 %v8073
        %v8143 = vunpack.c.l.b16 %v8074
        %v8144 = vunpack.c.l.b16 %v8075
        %v8145 = vunpack.c.l.b16 %v8076
        %v8146 = vpack.c.b16 %v8115, %v8114
        %v8147 = vpack.c.b16 %v8117, %v8116
        %v8148 = vpack.c.b16 %v8119, %v8118
        %v8149 = vpack.c.b16 %v8121, %v8120
        %v8150 = vpack.c.b16 %v8123, %v8122
        %v8151 = vpack.c.b16 %v8125, %v8124
        %v8152 = vpack.c.b16 %v8127, %v8126
        %v8153 = vpack.c.b16 %v8129, %v8128
        %v8154 = vpack.c.b16 %v8131, %v8130
        %v8155 = vpack.c.b16 %v8133, %v8132
        %v8156 = vpack.c.b16 %v8135, %v8134
        %v8157 = vpack.c.b16 %v8137, %v8136
        %v8158 = vpack.c.b16 %v8139, %v8138
        %v8159 = vpack.c.b16 %v8141, %v8140
        %v8160 = vpack.c.b16 %v8143, %v8142
        %v8161 = vpack.c.b16 %v8145, %v8144
        %8178 = vmatpush.bf16.msra.mxu0 %v8153
        %8179 = vmatpush.bf16.msra.mxu0 %v8152
        %8180 = vmatpush.bf16.msra.mxu0 %v8151
        %8181 = vmatpush.bf16.msra.mxu0 %v8150
        %8182 = vmatpush.bf16.msra.mxu0 %v8149
        %8183 = vmatpush.bf16.msra.mxu0 %v8148
        %8184 = vmatpush.bf16.msra.mxu0 %v8147
        %8185 = vmatpush.bf16.msra.mxu0 %v8146
        %8186 = vmatmul.bf16.gmra.mxu0 %v8036
        %v8187 = vpop.f32.mrf.mxu0
        %v8188 = vadd.f32 %v8080, %v8187
        %v8189 = vpop.f32.mrf.mxu0
        %8190 = vmatmul.bf16.gmra.mxu0 %v8038
        %v8191 = vpop.f32.mrf.mxu0
        %v8192 = vpop.f32.mrf.mxu0
        %8193 = vmatmul.bf16.gmra.mxu0 %v8040
        %v8194 = vpop.f32.mrf.mxu0
        %v8195 = vpop.f32.mrf.mxu0
        %8196 = vmatmul.bf16.gmra.mxu0 %v8042
        %v8197 = vpop.f32.mrf.mxu0
        %v8198 = vpop.f32.mrf.mxu0
        %8199 = vdwg.mxu0
        %8200 = vmatpush.bf16.msra.mxu0 %v8161
        %8201 = vmatpush.bf16.msra.mxu0 %v8160
        %8202 = vmatpush.bf16.msra.mxu0 %v8159
        %8203 = vmatpush.bf16.msra.mxu0 %v8158
        %8204 = vmatpush.bf16.msra.mxu0 %v8157
        %8205 = vmatpush.bf16.msra.mxu0 %v8156
        %8206 = vmatpush.bf16.msra.mxu0 %v8155
        %8207 = vmatpush.bf16.msra.mxu0 %v8154
        %8208 = vmatmul.bf16.gmra.mxu0 %v8037
        %v8209 = vpop.f32.mrf.mxu0
        %v8210 = vadd.f32 %v8188, %v8209
        %v8211 = vpop.f32.mrf.mxu0
        %8212 = vmatmul.bf16.gmra.mxu0 %v8039
        %v8213 = vpop.f32.mrf.mxu0
        %v8214 = vpop.f32.mrf.mxu0
        %8215 = vmatmul.bf16.gmra.mxu0 %v8041
        %v8216 = vpop.f32.mrf.mxu0
        %v8217 = vpop.f32.mrf.mxu0
        %8218 = vmatmul.bf16.gmra.mxu0 %v8043
        %v8219 = vpop.f32.mrf.mxu0
        %v8220 = vpop.f32.mrf.mxu0
        %8221 = vdwg.mxu0
        %v8222 = vadd.f32 %v7163, %v8210
        %v8223 = vld [vmem:[%s15] sm:$0x1]
        %v8224 = vld [vmem:[%s16] sm:$0x1]
        %vm8225 = vcmask 516096
        %v8226 = vsel %vm8225, %v8222, 0.0
        %8227 = vadd.xlane.f32.xlu0 %v8226
        %v8228 = vpop.xlane.xlu0 %8227
        %v8229 = vmul.f32 %v8228, %v725
        %v8230 = vsub.f32 %v8222, %v8229
        %v8231 = vmul.f32 %v8230, %v8230
        %v8232 = vsel %vm8225, %v8231, 0.0
        %8233 = vadd.xlane.f32.xlu0 %v8232
        %v8234 = vpop.xlane.xlu0 %8233
        %v8235 = vmul.f32 %v8234, %v725
        %v8236 = vadd.f32 %v8235, 1e-05
        %v8237 = vrsqrt.pop %v8236
        %v8238 = vmul.f32 %v8237, %v8236
        %v8239 = vmul.f32 %v8238, %v8237
        %v8240 = vmul.f32 0.5, %v8239
        %v8241 = vsub.f32 1.5, %v8240
        %v8242 = vmul.f32 %v8237, %v8241
        %vm8243 = vweird.f32 %v8236
        %vm8244 = vweird.f32 %v8237
        %vm8245 = vmor %vm8243, %vm8244
        %v8246 = vsel %vm8245, %v8237, %v8242
        %v8247 = vmul.f32 %v8230, %v8246
        %v8248 = vmul.f32 %v8247, %v8223
        %v8249 = vadd.f32 %v8248, %v8224
        %v8250 = vpack.c.bf16 %v8249, %v8249
        %v8251 = vld [vmem:[%s17] sm:$0xf]
        %v8252 = vld [vmem:[%s17 + $0x4] sm:$0xf]
        %v8253 = vld [vmem:[%s17 + $0x8] sm:$0xf]
        %v8254 = vld [vmem:[%s17 + $0xc] sm:$0xf]
        %v8255 = vld [vmem:[%s17 + $0x10] sm:$0xf]
        %v8256 = vld [vmem:[%s17 + $0x14] sm:$0xf]
        %v8257 = vld [vmem:[%s17 + $0x18] sm:$0xf]
        %v8258 = vld [vmem:[%s17 + $0x1c] sm:$0xf]
        %v8259 = vld [vmem:[%s18] sm:$0x1]
        %v8268 = vunpack.c.l.b16 %v8251
        %v8269 = vunpack.c.l.b16 %v8252
        %v8270 = vunpack.c.l.b16 %v8253
        %v8271 = vunpack.c.l.b16 %v8254
        %v8272 = vunpack.c.l.b16 %v8255
        %v8273 = vunpack.c.l.b16 %v8256
        %v8274 = vunpack.c.l.b16 %v8257
        %v8275 = vunpack.c.l.b16 %v8258
        %v8276 = vpack.c.b16 %v8269, %v8268
        %v8277 = vpack.c.b16 %v8271, %v8270
        %v8278 = vpack.c.b16 %v8273, %v8272
        %v8279 = vpack.c.b16 %v8275, %v8274
        %v8285 = vsel %vm697, %v8250, 0
        %8287 = vmatpush.bf16.msra.mxu0 0
        %8288 = vmatpush.bf16.msra.mxu0 0
        %8289 = vmatpush.bf16.msra.mxu0 0
        %8290 = vmatpush.bf16.msra.mxu0 0
        %8291 = vmatpush.bf16.msra.mxu0 %v8279
        %8292 = vmatpush.bf16.msra.mxu0 %v8278
        %8293 = vmatpush.bf16.msra.mxu0 %v8277
        %8294 = vmatpush.bf16.msra.mxu0 %v8276
        %8295 = vmatmul.bf16.gmra.mxu0 %v8285
        %v8296 = vpop.f32.mrf.mxu0
        %v8297 = vadd.f32 %v8259, %v8296
        %v8298 = vpop.f32.mrf.mxu0
        %8299 = vdwg.mxu0
        %8300 = vst [vmem:[%s595] sm:$0x1] %v8297
        %s8301 = sand.u32 %s445, 1
        %s8302 = scalar_lea.sflag [#allocation4], %s8301
        %s8303 = sand.u32 %s445, 1
        %s8304 = scalar_lea.vmem [#allocation3], %s8303
        // Predicated region
        $region97: #{vit_forward.1} parent=95 // pred_check
          %p8305 = pneg %p455
        $region98: #{vit_forward.1} parent=95 // pred_check_branch
          %8307 = sbr.rel (%p8305) target = $region100
        $region99: #{vit_forward.1} parent=95 // pred_region
          %8309 = vsyncadd %s8302, 0
          %s8310 = scalar_lea.hbm %s19, %s33
          %s8312 = sshll.u32 %s8304, 4
          %s8313 = int_to_ptr.vmem [resolvable:$true] %s8312
          %s8314 = sshll.u32 %s8310, 4
          %s8315 = int_to_ptr.hbm [resolvable:$true] %s8314
          %8317 = dma.vmem_to_hbm [thread:$0]  %s8313, 16, %s8315, %s8302
        $region100: #{vit_forward.1} parent=95 // pred_fallthru
          _
      $region96: #{vit_forward.1} parent=5 // pred_fallthru
        _
      %p8318 = scmp.le.s32.totalorder 2, %s28
      // Predicated region
      $region101: #{vit_forward.1} parent=5 // pred_check
        %p8319 = pneg %p8318
      $region102: #{vit_forward.1} parent=5 // pred_check_branch
        %8321 = sbr.rel (%p8319) target = $region104
      $region103: #{vit_forward.1} parent=5 // pred_region
        %s8322 = ssub.s32 %s28, 2
        // Predicated region
        $region105: #{vit_forward.1} parent=103 // pred_check
          %p8323 = pneg %p461
        $region106: #{vit_forward.1} parent=103 // pred_check_branch
          %8325 = sbr.rel (%p8323) target = $region108
        $region107: #{vit_forward.1} parent=103 // pred_region
          %s8326 = sand.u32 %s446, 1
          %s8327 = scalar_lea.sflag [#allocation4], %s8326
          %s8328 = sand.u32 %s446, 1
          %s8329 = scalar_lea.vmem [#allocation3], %s8328
          %8331 = dma.done %s8327, 16
        $region108: #{vit_forward.1} parent=103 // pred_fallthru
          _
      $region104: #{vit_forward.1} parent=5 // pred_fallthru
        _
    $region6: #{vit_forward.1} parent=1 // loop_footer
      %s32 = sadd.s32 1, %s28
    $region7: #{vit_forward.1} parent=1 // loop_footer_branch
      %27 = sbr.rel target = $region3
    $region8: #{vit_forward.1} parent=1 // loop_exit
      _
    %8332 = vsyncpa [#allocation4], 1
    %s8333 = scalar_lea.sflag [#allocation4], 1
    %8334 = vsyncpa %s8333, 1

</llo_original>
